<compile_context>
chip_gen: v7x
topology: tpu7x:2x2x1
jax: 0.10.0
libtpu: 0.0.40
codegen_flags: <defaults>
</compile_context>

<pallas_src>
import functools

import numpy as np
import jax
import jax.numpy as jnp
from jax.experimental import pallas as pl
from jax.experimental.pallas import tpu as pltpu


# ----------------------------------------------------------------------------
# Fused RSU4F kernel (single invocation, whole batch)
# ----------------------------------------------------------------------------
def _rsu4f_kernel(*refs, L, N, H, W, in_c, mid_c, out_c, conv_dils, mask_dils):
    """refs layout:
         refs[0]                      x_ref   (N, in_c, H*W)
         refs[1 : 1+n_masks]          column masks, one per distinct dilation
         refs[... : ...+4L]           (w2d, bias) per conv, execution order
         refs[next]                   o_ref   (N, out_c, H*W)
         refs[rest]                   scratch: a_x, a_init, a_enc[0..L-2],
                                               a_cur, im2col
    """
    HW = H * W
    PAD = max(conv_dils)              # largest dilation = 2**(L-1)
    PADF = PAD * W + PAD              # flat (row-major) halo per image side
    Lp = HW + 2 * PADF                # padded flat length of one image

    n_masks = len(mask_dils)
    n_w = 4 * L                       # 2L convs x (weight, bias)

    x_ref = refs[0]
    mask_refs = refs[1:1 + n_masks]
    w_refs = refs[1 + n_masks:1 + n_masks + n_w]
    o_ref = refs[1 + n_masks + n_w]
    scratch = refs[2 + n_masks + n_w:]
    a_x, a_init = scratch[0], scratch[1]
    a_enc = scratch[2:2 + (L - 1)]
    a_cur = scratch[2 + (L - 1)]
    im2col = scratch[3 + (L - 1)]

    # One-time zero of the padded activation buffers.  This runs ONCE per
    # pallas_call (there is no grid), not per image/step; interiors are fully
    # overwritten below, only the halo/pad regions actually need the zeros.
    for buf in (a_x, a_init, *a_enc, a_cur):
        buf[...] = jnp.zeros_like(buf)

    def write_interior(buf, y):
        """Scatter a (C, N*HW) conv result into a padded (C, N*Lp) buffer."""
        for n in range(N):
            buf[:, pl.ds(n * Lp + PADF, HW)] = y[:, n * HW:(n + 1) * HW]

    w_iter = iter(w_refs)

    def conv_relu(src_bufs, d):
        """Dilated 3x3 conv + bias + ReLU as ONE im2col MXU matmul.

        src_bufs: padded activation buffers whose channels are concatenated in
        order (this replaces torch.cat(dim=1) for the decoder convs)."""
        w_ref, b_ref = next(w_iter), next(w_iter)
        mref = mask_refs[mask_dils.index(d)]
        cin = sum(int(b.shape[0]) for b in src_bufs)

        for t in range(9):                          # 3x3 taps
            dy = (t // 3 - 1) * d
            dx = (t % 3 - 1) * d
            off = dy * W + dx
            m = mref[pl.ds(t, 1), :]                # (1, HW) column validity
            r = t * cin
            for buf in src_bufs:
                c = int(buf.shape[0])
                for n in range(N):
                    # Vertical out-of-range taps land in the flat zero halo;
                    # horizontal out-of-range taps are killed by the mask.
                    win = buf[:, pl.ds(n * Lp + PADF + off, HW)]   # (c, HW)
                    im2col[pl.ds(r, c), pl.ds(n * HW, HW)] = win * m
                r += c

        # Single lane-dense matmul: (Cout, 9*Cin) @ (9*Cin, N*HW), bf16 in,
        # f32 accumulate.
        patch = im2col[pl.ds(0, 9 * cin), :].astype(jnp.bfloat16)
        acc = jnp.dot(w_ref[...], patch, preferred_element_type=jnp.float32)
        return jnp.maximum(acc + b_ref[...], 0.0)   # (Cout, N*HW) f32

    # Stage the input (N, Cin, HW) into its padded buffer (lane-dense copies).
    for n in range(N):
        a_x[:, pl.ds(n * Lp + PADF, HW)] = x_ref[n].astype(jnp.float32)

    # init conv (dilation 1)
    write_interior(a_init, conv_relu([a_x], conv_dils[0]))

    # encoders (dilations 1, 2, ..., 2**(L-2))
    prev = a_init
    for i in range(L - 1):
        write_interior(a_enc[i], conv_relu([prev], conv_dils[1 + i]))
        prev = a_enc[i]

    # dilation conv (dilation 2**(L-1))
    write_interior(a_cur, conv_relu([a_enc[L - 2]], conv_dils[L]))

    # decoders: conv(cat(feat, cur)) folded into a single K = 9*2*mid matmul
    y = None
    for j in range(L - 1):
        y = conv_relu([a_enc[L - 2 - j], a_cur], conv_dils[L + 1 + j])
        if j < L - 2:
            write_interior(a_cur, y)

    # Fused residual add (init + out); per-image lane-dense writeback.
    for n in range(N):
        res = a_init[:, pl.ds(n * Lp + PADF, HW)]
        o_ref[n] = (y[:, n * HW:(n + 1) * HW] + res).astype(o_ref.dtype)


# ----------------------------------------------------------------------------
# Host-side parameter / mask preparation
# ----------------------------------------------------------------------------
def _prep_conv(w_hwio, b):
    """HWIO weight -> (Cout, 9*Cin) bf16 matching the im2col row order."""
    cout = w_hwio.shape[-1]
    w2d = jnp.transpose(w_hwio, (3, 0, 1, 2)).reshape(cout, -1)
    return [w2d.astype(jnp.bfloat16), b.reshape(cout, 1).astype(jnp.float32)]


def _flatten_params(params):
    flat, dils = [], []
    (w, b), d = params["init"]
    flat += _prep_conv(w, b); dils.append(int(d))
    for (w, b), d in params["enc"]:
        flat += _prep_conv(w, b); dils.append(int(d))
    (w, b), d = params["dil"]
    flat += _prep_conv(w, b); dils.append(int(d))
    for (w, b), d in params["dec"]:
        flat += _prep_conv(w, b); dils.append(int(d))
    return flat, tuple(dils)


def _col_masks(d, H, W):
    """(9, H*W) f32: per-tap horizontal validity (vertical handled by halo)."""
    x = np.arange(W)
    rows = []
    for t in range(9):
        dx = (t % 3 - 1) * d
        valid_x = ((x + dx >= 0) & (x + dx < W)).astype(np.float32)
        rows.append(np.tile(valid_x, H))
    return jnp.asarray(np.stack(rows))


def rsu4f_forward_fused(x, params, *, L, in_c, mid_c, out_c):
    """RSU4F forward pass as a single fused Pallas call.  x is NCHW."""
    N, C, H, W = x.shape
    assert C == in_c
    HW = H * W

    flat, conv_dils = _flatten_params(params)
    mask_dils = tuple(sorted(set(conv_dils)))
    masks = [_col_masks(d, H, W) for d in mask_dils]

    PAD = max(conv_dils)
    PADF = PAD * W + PAD
    Lp = HW + 2 * PADF
    max_cin = max(in_c, out_c, 2 * mid_c)

    scratch = ([pltpu.VMEM((in_c, N * Lp), jnp.float32),       # padded x
                pltpu.VMEM((out_c, N * Lp), jnp.float32)]      # padded init
               + [pltpu.VMEM((mid_c, N * Lp), jnp.float32)     # enc features
                  for _ in range(L - 1)]
               + [pltpu.VMEM((mid_c, N * Lp), jnp.float32),    # current stream
                  pltpu.VMEM((9 * max_cin, N * HW), jnp.float32)])  # im2col

    kern = functools.partial(_rsu4f_kernel, L=L, N=N, H=H, W=W, in_c=in_c,
                             mid_c=mid_c, out_c=out_c,
                             conv_dils=conv_dils, mask_dils=mask_dils)
    y = pl.pallas_call(
        kern,
        out_shape=jax.ShapeDtypeStruct((N, out_c, HW), x.dtype),
        scratch_shapes=scratch,
    )(x.reshape(N, C, HW), *masks, *flat)
    return y.reshape(N, out_c, H, W)


# ----------------------------------------------------------------------------
# Pure-JAX reference (independent path, NCHW, f32)
# ----------------------------------------------------------------------------
def conv_bn_relu_ref(x, w, b, dil):
    y = jax.lax.conv_general_dilated(
        x, w, window_strides=(1, 1),
        padding=[(dil, dil), (dil, dil)],
        rhs_dilation=(dil, dil),
        dimension_numbers=("NCHW", "HWIO", "NCHW"))
    return jnp.maximum(y + b.reshape(1, -1, 1, 1), 0.0)


def rsu4f_forward_ref(x, params):
    (w, b), d = params["init"]
    init = conv_bn_relu_ref(x, w, b, d)
    out = init
    feats = []
    for (w, b), d in params["enc"]:
        out = conv_bn_relu_ref(out, w, b, d)
        feats.insert(0, out)
    (w, b), d = params["dil"]
    out = conv_bn_relu_ref(out, w, b, d)
    for feat, ((w, b), d) in zip(feats, params["dec"]):
        out = conv_bn_relu_ref(jnp.concatenate([feat, out], axis=1), w, b, d)
    return init + out


# ----------------------------------------------------------------------------
# Deterministic parameters (BN folded into the conv, eval mode)
# ----------------------------------------------------------------------------
def _make_conv_params(key, cin, cout, eps=1e-5):
    kw, kb, kg, kbeta, km, kv = jax.random.split(key, 6)
    w = jax.random.normal(kw, (3, 3, cin, cout), jnp.float32) * jnp.sqrt(
        2.0 / (9 * cin))
    b = jax.random.normal(kb, (cout,), jnp.float32) * 0.05
    gamma = jax.random.uniform(kg, (cout,), jnp.float32, 0.5, 1.5)
    beta = jax.random.normal(kbeta, (cout,), jnp.float32) * 0.1
    mean = jax.random.normal(km, (cout,), jnp.float32) * 0.1
    var = jax.random.uniform(kv, (cout,), jnp.float32, 0.5, 1.5)
    # TODO(synk): training-mode BatchNorm (batch statistics + running-stat
    # update) has no clean Pallas equivalent here; eval-mode BN is folded.
    scale = gamma / jnp.sqrt(var + eps)
    w_eff = w * scale                       # broadcast over Cout (last axis)
    b_eff = (b - mean) * scale + beta
    return w_eff, b_eff


def build_rsu4f_params(key, L, in_c, mid_c, out_c):
    keys = jax.random.split(key, 2 + 2 * (L - 1))
    ki = iter(keys)
    params = {}
    params["init"] = (_make_conv_params(next(ki), in_c, out_c), 1)
    enc = [(_make_conv_params(next(ki), out_c, mid_c), 1)]
    for i in range(1, L - 1):
        enc.append((_make_conv_params(next(ki), mid_c, mid_c), 2 ** i))
    params["enc"] = enc
    params["dil"] = (_make_conv_params(next(ki), mid_c, mid_c), 2 ** (L - 1))
    dec = []
    for i in range(L - 2, 0, -1):
        dec.append((_make_conv_params(next(ki), 2 * mid_c, mid_c), 2 ** i))
    dec.append((_make_conv_params(next(ki), 2 * mid_c, out_c), 1))
    params["dec"] = dec
    return params


if __name__ == "__main__":
    key = jax.random.PRNGKey(0)
    kx, kp = jax.random.split(key)

    N, Cin, H, W = 2, 4, 16, 16          # {"x": [2, 4, 16, 16]} in NCHW
    L, mid_c, out_c = 4, 8, 4

    x = jax.random.normal(kx, (N, Cin, H, W), jnp.float32)   # NCHW like PyTorch
    params = build_rsu4f_params(kp, L, Cin, mid_c, out_c)

    fused = jax.jit(lambda v: rsu4f_forward_fused(
        v, params, L=L, in_c=Cin, mid_c=mid_c, out_c=out_c))
    y = jax.block_until_ready(fused(x))

    y_ref = rsu4f_forward_ref(x, params)

    assert y.shape == (N, out_c, H, W), y.shape
    assert bool(jnp.all(jnp.isfinite(y)))
    max_err = float(jnp.max(jnp.abs(y - y_ref)))
    # Tolerance sized for an 8-conv-deep pipeline with bf16 MXU operands
    # (f32 accumulation) vs an all-f32 reference.
    assert bool(jnp.allclose(y, y_ref, atol=1e-1, rtol=5e-2)), max_err

    print("KERNEL_OK")
</pallas_src>

<mosaic_0001>
module attributes {stable_mosaic.version = 11 : i64} {
  func.func @_rsu4f_kernel(%arg0: memref<2x4x256xf32, #tpu.memory_space<vmem>>, %arg1: memref<9x256xf32, #tpu.memory_space<vmem>>, %arg2: memref<9x256xf32, #tpu.memory_space<vmem>>, %arg3: memref<9x256xf32, #tpu.memory_space<vmem>>, %arg4: memref<9x256xf32, #tpu.memory_space<vmem>>, %arg5: memref<4x36xbf16, #tpu.memory_space<vmem>>, %arg6: memref<4x1xf32, #tpu.memory_space<vmem>>, %arg7: memref<8x36xbf16, #tpu.memory_space<vmem>>, %arg8: memref<8x1xf32, #tpu.memory_space<vmem>>, %arg9: memref<8x72xbf16, #tpu.memory_space<vmem>>, %arg10: memref<8x1xf32, #tpu.memory_space<vmem>>, %arg11: memref<8x72xbf16, #tpu.memory_space<vmem>>, %arg12: memref<8x1xf32, #tpu.memory_space<vmem>>, %arg13: memref<8x72xbf16, #tpu.memory_space<vmem>>, %arg14: memref<8x1xf32, #tpu.memory_space<vmem>>, %arg15: memref<8x144xbf16, #tpu.memory_space<vmem>>, %arg16: memref<8x1xf32, #tpu.memory_space<vmem>>, %arg17: memref<8x144xbf16, #tpu.memory_space<vmem>>, %arg18: memref<8x1xf32, #tpu.memory_space<vmem>>, %arg19: memref<4x144xbf16, #tpu.memory_space<vmem>>, %arg20: memref<4x1xf32, #tpu.memory_space<vmem>>, %arg21: memref<2x4x256xf32, #tpu.memory_space<vmem>>, %arg22: memref<4x1056xf32, #tpu.memory_space<vmem>>, %arg23: memref<4x1056xf32, #tpu.memory_space<vmem>>, %arg24: memref<8x1056xf32, #tpu.memory_space<vmem>>, %arg25: memref<8x1056xf32, #tpu.memory_space<vmem>>, %arg26: memref<8x1056xf32, #tpu.memory_space<vmem>>, %arg27: memref<8x1056xf32, #tpu.memory_space<vmem>>, %arg28: memref<144x512xf32, #tpu.memory_space<vmem>>) attributes {dimension_semantics = [], scalar_prefetch = 0 : i64, scratch_operands = 7 : i64, tpu.core_type = #tpu.core_type<tc>} {
    %cst = arith.constant 0.000000e+00 : f32
    %0 = vector.broadcast %cst : f32 to vector<4x1056xf32>
    %c0 = arith.constant 0 : index
    %c0_0 = arith.constant 0 : index
    %1 = vector.load %arg22[%c0, %c0_0] : memref<4x1056xf32, #tpu.memory_space<vmem>>, vector<4x1056xf32>
    tpu.vector_store %arg22[%c0, %c0_0], %0 {strides = array<i32>} : memref<4x1056xf32, #tpu.memory_space<vmem>>, vector<4x1056xf32>,
    %cst_1 = arith.constant 0.000000e+00 : f32
    %2 = vector.broadcast %cst_1 : f32 to vector<4x1056xf32>
    %c0_2 = arith.constant 0 : index
    %c0_3 = arith.constant 0 : index
    %3 = vector.load %arg23[%c0_2, %c0_3] : memref<4x1056xf32, #tpu.memory_space<vmem>>, vector<4x1056xf32>
    tpu.vector_store %arg23[%c0_2, %c0_3], %2 {strides = array<i32>} : memref<4x1056xf32, #tpu.memory_space<vmem>>, vector<4x1056xf32>,
    %cst_4 = arith.constant 0.000000e+00 : f32
    %4 = vector.broadcast %cst_4 : f32 to vector<8x1056xf32>
    %c0_5 = arith.constant 0 : index
    %c0_6 = arith.constant 0 : index
    %5 = vector.load %arg24[%c0_5, %c0_6] : memref<8x1056xf32, #tpu.memory_space<vmem>>, vector<8x1056xf32>
    tpu.vector_store %arg24[%c0_5, %c0_6], %4 {strides = array<i32>} : memref<8x1056xf32, #tpu.memory_space<vmem>>, vector<8x1056xf32>,
    %cst_7 = arith.constant 0.000000e+00 : f32
    %6 = vector.broadcast %cst_7 : f32 to vector<8x1056xf32>
    %c0_8 = arith.constant 0 : index
    %c0_9 = arith.constant 0 : index
    %7 = vector.load %arg25[%c0_8, %c0_9] : memref<8x1056xf32, #tpu.memory_space<vmem>>, vector<8x1056xf32>
    tpu.vector_store %arg25[%c0_8, %c0_9], %6 {strides = array<i32>} : memref<8x1056xf32, #tpu.memory_space<vmem>>, vector<8x1056xf32>,
    %cst_10 = arith.constant 0.000000e+00 : f32
    %8 = vector.broadcast %cst_10 : f32 to vector<8x1056xf32>
    %c0_11 = arith.constant 0 : index
    %c0_12 = arith.constant 0 : index
    %9 = vector.load %arg26[%c0_11, %c0_12] : memref<8x1056xf32, #tpu.memory_space<vmem>>, vector<8x1056xf32>
    tpu.vector_store %arg26[%c0_11, %c0_12], %8 {strides = array<i32>} : memref<8x1056xf32, #tpu.memory_space<vmem>>, vector<8x1056xf32>,
    %cst_13 = arith.constant 0.000000e+00 : f32
    %10 = vector.broadcast %cst_13 : f32 to vector<8x1056xf32>
    %c0_14 = arith.constant 0 : index
    %c0_15 = arith.constant 0 : index
    %11 = vector.load %arg27[%c0_14, %c0_15] : memref<8x1056xf32, #tpu.memory_space<vmem>>, vector<8x1056xf32>
    tpu.vector_store %arg27[%c0_14, %c0_15], %10 {strides = array<i32>} : memref<8x1056xf32, #tpu.memory_space<vmem>>, vector<8x1056xf32>,
    %c0_16 = arith.constant 0 : index
    %c0_17 = arith.constant 0 : index
    %c0_18 = arith.constant 0 : index
    %12 = vector.load %arg0[%c0_16, %c0_17, %c0_18] : memref<2x4x256xf32, #tpu.memory_space<vmem>>, vector<1x4x256xf32>
    %13 = vector.shape_cast %12 : vector<1x4x256xf32> to vector<4x256xf32>
    %c0_19 = arith.constant 0 : index
    %c136 = arith.constant 136 : index
    %14 = vector.load %arg22[%c0_19, %c136] : memref<4x1056xf32, #tpu.memory_space<vmem>>, vector<4x256xf32>
    tpu.vector_store %arg22[%c0_19, %c136], %13 {strides = array<i32>} : memref<4x1056xf32, #tpu.memory_space<vmem>>, vector<4x256xf32>,
    %c1 = arith.constant 1 : index
    %c0_20 = arith.constant 0 : index
    %c0_21 = arith.constant 0 : index
    %15 = vector.load %arg0[%c1, %c0_20, %c0_21] : memref<2x4x256xf32, #tpu.memory_space<vmem>>, vector<1x4x256xf32>
    %16 = vector.shape_cast %15 : vector<1x4x256xf32> to vector<4x256xf32>
    %c0_22 = arith.constant 0 : index
    %c664 = arith.constant 664 : index
    %17 = vector.load %arg22[%c0_22, %c664] : memref<4x1056xf32, #tpu.memory_space<vmem>>, vector<4x256xf32>
    tpu.vector_store %arg22[%c0_22, %c664], %16 {strides = array<i32>} : memref<4x1056xf32, #tpu.memory_space<vmem>>, vector<4x256xf32>,
    %c0_23 = arith.constant 0 : index
    %c0_24 = arith.constant 0 : index
    %18 = vector.load %arg1[%c0_23, %c0_24] : memref<9x256xf32, #tpu.memory_space<vmem>>, vector<1x256xf32>
    %c0_25 = arith.constant 0 : index
    %c119 = arith.constant 119 : index
    %19 = vector.load %arg22[%c0_25, %c119] : memref<4x1056xf32, #tpu.memory_space<vmem>>, vector<4x256xf32>
    %20 = vector.broadcast %18 : vector<1x256xf32> to vector<4x256xf32>
    %21 = arith.mulf %19, %20 : vector<4x256xf32>
    %c0_26 = arith.constant 0 : index
    %c0_27 = arith.constant 0 : index
    %22 = vector.load %arg28[%c0_26, %c0_27] : memref<144x512xf32, #tpu.memory_space<vmem>>, vector<4x256xf32>
    tpu.vector_store %arg28[%c0_26, %c0_27], %21 {strides = array<i32>} : memref<144x512xf32, #tpu.memory_space<vmem>>, vector<4x256xf32>,
    %c0_28 = arith.constant 0 : index
    %c647 = arith.constant 647 : index
    %23 = vector.load %arg22[%c0_28, %c647] : memref<4x1056xf32, #tpu.memory_space<vmem>>, vector<4x256xf32>
    %24 = vector.broadcast %18 : vector<1x256xf32> to vector<4x256xf32>
    %25 = arith.mulf %23, %24 : vector<4x256xf32>
    %c0_29 = arith.constant 0 : index
    %c256 = arith.constant 256 : index
    %26 = vector.load %arg28[%c0_29, %c256] : memref<144x512xf32, #tpu.memory_space<vmem>>, vector<4x256xf32>
    tpu.vector_store %arg28[%c0_29, %c256], %25 {strides = array<i32>} : memref<144x512xf32, #tpu.memory_space<vmem>>, vector<4x256xf32>,
    %c1_30 = arith.constant 1 : index
    %c0_31 = arith.constant 0 : index
    %27 = vector.load %arg1[%c1_30, %c0_31] : memref<9x256xf32, #tpu.memory_space<vmem>>, vector<1x256xf32>
    %c0_32 = arith.constant 0 : index
    %c120 = arith.constant 120 : index
    %28 = vector.load %arg22[%c0_32, %c120] : memref<4x1056xf32, #tpu.memory_space<vmem>>, vector<4x256xf32>
    %29 = vector.broadcast %27 : vector<1x256xf32> to vector<4x256xf32>
    %30 = arith.mulf %28, %29 : vector<4x256xf32>
    %c4 = arith.constant 4 : index
    %c0_33 = arith.constant 0 : index
    %31 = vector.load %arg28[%c4, %c0_33] : memref<144x512xf32, #tpu.memory_space<vmem>>, vector<4x256xf32>
    tpu.vector_store %arg28[%c4, %c0_33], %30 {strides = array<i32>} : memref<144x512xf32, #tpu.memory_space<vmem>>, vector<4x256xf32>,
    %c0_34 = arith.constant 0 : index
    %c648 = arith.constant 648 : index
    %32 = vector.load %arg22[%c0_34, %c648] : memref<4x1056xf32, #tpu.memory_space<vmem>>, vector<4x256xf32>
    %33 = vector.broadcast %27 : vector<1x256xf32> to vector<4x256xf32>
    %34 = arith.mulf %32, %33 : vector<4x256xf32>
    %c4_35 = arith.constant 4 : index
    %c256_36 = arith.constant 256 : index
    %35 = vector.load %arg28[%c4_35, %c256_36] : memref<144x512xf32, #tpu.memory_space<vmem>>, vector<4x256xf32>
    tpu.vector_store %arg28[%c4_35, %c256_36], %34 {strides = array<i32>} : memref<144x512xf32, #tpu.memory_space<vmem>>, vector<4x256xf32>,
    %c2 = arith.constant 2 : index
    %c0_37 = arith.constant 0 : index
    %36 = vector.load %arg1[%c2, %c0_37] : memref<9x256xf32, #tpu.memory_space<vmem>>, vector<1x256xf32>
    %c0_38 = arith.constant 0 : index
    %c121 = arith.constant 121 : index
    %37 = vector.load %arg22[%c0_38, %c121] : memref<4x1056xf32, #tpu.memory_space<vmem>>, vector<4x256xf32>
    %38 = vector.broadcast %36 : vector<1x256xf32> to vector<4x256xf32>
    %39 = arith.mulf %37, %38 : vector<4x256xf32>
    %c8 = arith.constant 8 : index
    %c0_39 = arith.constant 0 : index
    %40 = vector.load %arg28[%c8, %c0_39] : memref<144x512xf32, #tpu.memory_space<vmem>>, vector<4x256xf32>
    tpu.vector_store %arg28[%c8, %c0_39], %39 {strides = array<i32>} : memref<144x512xf32, #tpu.memory_space<vmem>>, vector<4x256xf32>,
    %c0_40 = arith.constant 0 : index
    %c649 = arith.constant 649 : index
    %41 = vector.load %arg22[%c0_40, %c649] : memref<4x1056xf32, #tpu.memory_space<vmem>>, vector<4x256xf32>
    %42 = vector.broadcast %36 : vector<1x256xf32> to vector<4x256xf32>
    %43 = arith.mulf %41, %42 : vector<4x256xf32>
    %c8_41 = arith.constant 8 : index
    %c256_42 = arith.constant 256 : index
    %44 = vector.load %arg28[%c8_41, %c256_42] : memref<144x512xf32, #tpu.memory_space<vmem>>, vector<4x256xf32>
    tpu.vector_store %arg28[%c8_41, %c256_42], %43 {strides = array<i32>} : memref<144x512xf32, #tpu.memory_space<vmem>>, vector<4x256xf32>,
    %c3 = arith.constant 3 : index
    %c0_43 = arith.constant 0 : index
    %45 = vector.load %arg1[%c3, %c0_43] : memref<9x256xf32, #tpu.memory_space<vmem>>, vector<1x256xf32>
    %c0_44 = arith.constant 0 : index
    %c135 = arith.constant 135 : index
    %46 = vector.load %arg22[%c0_44, %c135] : memref<4x1056xf32, #tpu.memory_space<vmem>>, vector<4x256xf32>
    %47 = vector.broadcast %45 : vector<1x256xf32> to vector<4x256xf32>
    %48 = arith.mulf %46, %47 : vector<4x256xf32>
    %c12 = arith.constant 12 : index
    %c0_45 = arith.constant 0 : index
    %49 = vector.load %arg28[%c12, %c0_45] : memref<144x512xf32, #tpu.memory_space<vmem>>, vector<4x256xf32>
    tpu.vector_store %arg28[%c12, %c0_45], %48 {strides = array<i32>} : memref<144x512xf32, #tpu.memory_space<vmem>>, vector<4x256xf32>,
    %c0_46 = arith.constant 0 : index
    %c663 = arith.constant 663 : index
    %50 = vector.load %arg22[%c0_46, %c663] : memref<4x1056xf32, #tpu.memory_space<vmem>>, vector<4x256xf32>
    %51 = vector.broadcast %45 : vector<1x256xf32> to vector<4x256xf32>
    %52 = arith.mulf %50, %51 : vector<4x256xf32>
    %c12_47 = arith.constant 12 : index
    %c256_48 = arith.constant 256 : index
    %53 = vector.load %arg28[%c12_47, %c256_48] : memref<144x512xf32, #tpu.memory_space<vmem>>, vector<4x256xf32>
    tpu.vector_store %arg28[%c12_47, %c256_48], %52 {strides = array<i32>} : memref<144x512xf32, #tpu.memory_space<vmem>>, vector<4x256xf32>,
    %c4_49 = arith.constant 4 : index
    %c0_50 = arith.constant 0 : index
    %54 = vector.load %arg1[%c4_49, %c0_50] : memref<9x256xf32, #tpu.memory_space<vmem>>, vector<1x256xf32>
    %c0_51 = arith.constant 0 : index
    %c136_52 = arith.constant 136 : index
    %55 = vector.load %arg22[%c0_51, %c136_52] : memref<4x1056xf32, #tpu.memory_space<vmem>>, vector<4x256xf32>
    %56 = vector.broadcast %54 : vector<1x256xf32> to vector<4x256xf32>
    %57 = arith.mulf %55, %56 : vector<4x256xf32>
    %c16 = arith.constant 16 : index
    %c0_53 = arith.constant 0 : index
    %58 = vector.load %arg28[%c16, %c0_53] : memref<144x512xf32, #tpu.memory_space<vmem>>, vector<4x256xf32>
    tpu.vector_store %arg28[%c16, %c0_53], %57 {strides = array<i32>} : memref<144x512xf32, #tpu.memory_space<vmem>>, vector<4x256xf32>,
    %c0_54 = arith.constant 0 : index
    %c664_55 = arith.constant 664 : index
    %59 = vector.load %arg22[%c0_54, %c664_55] : memref<4x1056xf32, #tpu.memory_space<vmem>>, vector<4x256xf32>
    %60 = vector.broadcast %54 : vector<1x256xf32> to vector<4x256xf32>
    %61 = arith.mulf %59, %60 : vector<4x256xf32>
    %c16_56 = arith.constant 16 : index
    %c256_57 = arith.constant 256 : index
    %62 = vector.load %arg28[%c16_56, %c256_57] : memref<144x512xf32, #tpu.memory_space<vmem>>, vector<4x256xf32>
    tpu.vector_store %arg28[%c16_56, %c256_57], %61 {strides = array<i32>} : memref<144x512xf32, #tpu.memory_space<vmem>>, vector<4x256xf32>,
    %c5 = arith.constant 5 : index
    %c0_58 = arith.constant 0 : index
    %63 = vector.load %arg1[%c5, %c0_58] : memref<9x256xf32, #tpu.memory_space<vmem>>, vector<1x256xf32>
    %c0_59 = arith.constant 0 : index
    %c137 = arith.constant 137 : index
    %64 = vector.load %arg22[%c0_59, %c137] : memref<4x1056xf32, #tpu.memory_space<vmem>>, vector<4x256xf32>
    %65 = vector.broadcast %63 : vector<1x256xf32> to vector<4x256xf32>
    %66 = arith.mulf %64, %65 : vector<4x256xf32>
    %c20 = arith.constant 20 : index
    %c0_60 = arith.constant 0 : index
    %67 = vector.load %arg28[%c20, %c0_60] : memref<144x512xf32, #tpu.memory_space<vmem>>, vector<4x256xf32>
    tpu.vector_store %arg28[%c20, %c0_60], %66 {strides = array<i32>} : memref<144x512xf32, #tpu.memory_space<vmem>>, vector<4x256xf32>,
    %c0_61 = arith.constant 0 : index
    %c665 = arith.constant 665 : index
    %68 = vector.load %arg22[%c0_61, %c665] : memref<4x1056xf32, #tpu.memory_space<vmem>>, vector<4x256xf32>
    %69 = vector.broadcast %63 : vector<1x256xf32> to vector<4x256xf32>
    %70 = arith.mulf %68, %69 : vector<4x256xf32>
    %c20_62 = arith.constant 20 : index
    %c256_63 = arith.constant 256 : index
    %71 = vector.load %arg28[%c20_62, %c256_63] : memref<144x512xf32, #tpu.memory_space<vmem>>, vector<4x256xf32>
    tpu.vector_store %arg28[%c20_62, %c256_63], %70 {strides = array<i32>} : memref<144x512xf32, #tpu.memory_space<vmem>>, vector<4x256xf32>,
    %c6 = arith.constant 6 : index
    %c0_64 = arith.constant 0 : index
    %72 = vector.load %arg1[%c6, %c0_64] : memref<9x256xf32, #tpu.memory_space<vmem>>, vector<1x256xf32>
    %c0_65 = arith.constant 0 : index
    %c151 = arith.constant 151 : index
    %73 = vector.load %arg22[%c0_65, %c151] : memref<4x1056xf32, #tpu.memory_space<vmem>>, vector<4x256xf32>
    %74 = vector.broadcast %72 : vector<1x256xf32> to vector<4x256xf32>
    %75 = arith.mulf %73, %74 : vector<4x256xf32>
    %c24 = arith.constant 24 : index
    %c0_66 = arith.constant 0 : index
    %76 = vector.load %arg28[%c24, %c0_66] : memref<144x512xf32, #tpu.memory_space<vmem>>, vector<4x256xf32>
    tpu.vector_store %arg28[%c24, %c0_66], %75 {strides = array<i32>} : memref<144x512xf32, #tpu.memory_space<vmem>>, vector<4x256xf32>,
    %c0_67 = arith.constant 0 : index
    %c679 = arith.constant 679 : index
    %77 = vector.load %arg22[%c0_67, %c679] : memref<4x1056xf32, #tpu.memory_space<vmem>>, vector<4x256xf32>
    %78 = vector.broadcast %72 : vector<1x256xf32> to vector<4x256xf32>
    %79 = arith.mulf %77, %78 : vector<4x256xf32>
    %c24_68 = arith.constant 24 : index
    %c256_69 = arith.constant 256 : index
    %80 = vector.load %arg28[%c24_68, %c256_69] : memref<144x512xf32, #tpu.memory_space<vmem>>, vector<4x256xf32>
    tpu.vector_store %arg28[%c24_68, %c256_69], %79 {strides = array<i32>} : memref<144x512xf32, #tpu.memory_space<vmem>>, vector<4x256xf32>,
    %c7 = arith.constant 7 : index
    %c0_70 = arith.constant 0 : index
    %81 = vector.load %arg1[%c7, %c0_70] : memref<9x256xf32, #tpu.memory_space<vmem>>, vector<1x256xf32>
    %c0_71 = arith.constant 0 : index
    %c152 = arith.constant 152 : index
    %82 = vector.load %arg22[%c0_71, %c152] : memref<4x1056xf32, #tpu.memory_space<vmem>>, vector<4x256xf32>
    %83 = vector.broadcast %81 : vector<1x256xf32> to vector<4x256xf32>
    %84 = arith.mulf %82, %83 : vector<4x256xf32>
    %c28 = arith.constant 28 : index
    %c0_72 = arith.constant 0 : index
    %85 = vector.load %arg28[%c28, %c0_72] : memref<144x512xf32, #tpu.memory_space<vmem>>, vector<4x256xf32>
    tpu.vector_store %arg28[%c28, %c0_72], %84 {strides = array<i32>} : memref<144x512xf32, #tpu.memory_space<vmem>>, vector<4x256xf32>,
    %c0_73 = arith.constant 0 : index
    %c680 = arith.constant 680 : index
    %86 = vector.load %arg22[%c0_73, %c680] : memref<4x1056xf32, #tpu.memory_space<vmem>>, vector<4x256xf32>
    %87 = vector.broadcast %81 : vector<1x256xf32> to vector<4x256xf32>
    %88 = arith.mulf %86, %87 : vector<4x256xf32>
    %c28_74 = arith.constant 28 : index
    %c256_75 = arith.constant 256 : index
    %89 = vector.load %arg28[%c28_74, %c256_75] : memref<144x512xf32, #tpu.memory_space<vmem>>, vector<4x256xf32>
    tpu.vector_store %arg28[%c28_74, %c256_75], %88 {strides = array<i32>} : memref<144x512xf32, #tpu.memory_space<vmem>>, vector<4x256xf32>,
    %c8_76 = arith.constant 8 : index
    %c0_77 = arith.constant 0 : index
    %90 = vector.load %arg1[%c8_76, %c0_77] : memref<9x256xf32, #tpu.memory_space<vmem>>, vector<1x256xf32>
    %c0_78 = arith.constant 0 : index
    %c153 = arith.constant 153 : index
    %91 = vector.load %arg22[%c0_78, %c153] : memref<4x1056xf32, #tpu.memory_space<vmem>>, vector<4x256xf32>
    %92 = vector.broadcast %90 : vector<1x256xf32> to vector<4x256xf32>
    %93 = arith.mulf %91, %92 : vector<4x256xf32>
    %c32 = arith.constant 32 : index
    %c0_79 = arith.constant 0 : index
    %94 = vector.load %arg28[%c32, %c0_79] : memref<144x512xf32, #tpu.memory_space<vmem>>, vector<4x256xf32>
    tpu.vector_store %arg28[%c32, %c0_79], %93 {strides = array<i32>} : memref<144x512xf32, #tpu.memory_space<vmem>>, vector<4x256xf32>,
    %c0_80 = arith.constant 0 : index
    %c681 = arith.constant 681 : index
    %95 = vector.load %arg22[%c0_80, %c681] : memref<4x1056xf32, #tpu.memory_space<vmem>>, vector<4x256xf32>
    %96 = vector.broadcast %90 : vector<1x256xf32> to vector<4x256xf32>
    %97 = arith.mulf %95, %96 : vector<4x256xf32>
    %c32_81 = arith.constant 32 : index
    %c256_82 = arith.constant 256 : index
    %98 = vector.load %arg28[%c32_81, %c256_82] : memref<144x512xf32, #tpu.memory_space<vmem>>, vector<4x256xf32>
    tpu.vector_store %arg28[%c32_81, %c256_82], %97 {strides = array<i32>} : memref<144x512xf32, #tpu.memory_space<vmem>>, vector<4x256xf32>,
    %c0_83 = arith.constant 0 : index
    %c0_84 = arith.constant 0 : index
    %99 = vector.load %arg28[%c0_83, %c0_84] : memref<144x512xf32, #tpu.memory_space<vmem>>, vector<36x512xf32>
    %100 = arith.truncf %99 : vector<36x512xf32> to vector<36x512xbf16>
    %c0_85 = arith.constant 0 : index
    %c0_86 = arith.constant 0 : index
    %101 = vector.load %arg5[%c0_85, %c0_86] : memref<4x36xbf16, #tpu.memory_space<vmem>>, vector<4x36xbf16>
    %cst_87 = arith.constant dense<0.000000e+00> : vector<4x512xf32>
    %102 = tpu.matmul %101, %100, %cst_87 {dimension_numbers = #tpu.dot_dimension_numbers<[1], [0], [0], [1], [0, 0, 1, 1], [], []>} : vector<4x36xbf16>, vector<36x512xbf16>, vector<4x512xf32> -> vector<4x512xf32>
    %c0_88 = arith.constant 0 : index
    %c0_89 = arith.constant 0 : index
    %103 = vector.load %arg6[%c0_88, %c0_89] : memref<4x1xf32, #tpu.memory_space<vmem>>, vector<4x1xf32>
    %104 = vector.broadcast %103 : vector<4x1xf32> to vector<4x512xf32>
    %105 = arith.addf %102, %104 : vector<4x512xf32>
    %cst_90 = arith.constant 0.000000e+00 : f32
    %106 = vector.broadcast %cst_90 : f32 to vector<4x512xf32>
    %107 = arith.maximumf %105, %106 : vector<4x512xf32>
    %108 = vector.extract_strided_slice %107 {offsets = [0, 0], sizes = [4, 256], strides = [1, 1]} : vector<4x512xf32> to vector<4x256xf32>
    %c0_91 = arith.constant 0 : index
    %c136_92 = arith.constant 136 : index
    %109 = vector.load %arg23[%c0_91, %c136_92] : memref<4x1056xf32, #tpu.memory_space<vmem>>, vector<4x256xf32>
    tpu.vector_store %arg23[%c0_91, %c136_92], %108 {strides = array<i32>} : memref<4x1056xf32, #tpu.memory_space<vmem>>, vector<4x256xf32>,
    %110 = vector.extract_strided_slice %107 {offsets = [0, 256], sizes = [4, 256], strides = [1, 1]} : vector<4x512xf32> to vector<4x256xf32>
    %c0_93 = arith.constant 0 : index
    %c664_94 = arith.constant 664 : index
    %111 = vector.load %arg23[%c0_93, %c664_94] : memref<4x1056xf32, #tpu.memory_space<vmem>>, vector<4x256xf32>
    tpu.vector_store %arg23[%c0_93, %c664_94], %110 {strides = array<i32>} : memref<4x1056xf32, #tpu.memory_space<vmem>>, vector<4x256xf32>,
    %c0_95 = arith.constant 0 : index
    %c0_96 = arith.constant 0 : index
    %112 = vector.load %arg1[%c0_95, %c0_96] : memref<9x256xf32, #tpu.memory_space<vmem>>, vector<1x256xf32>
    %c0_97 = arith.constant 0 : index
    %c119_98 = arith.constant 119 : index
    %113 = vector.load %arg23[%c0_97, %c119_98] : memref<4x1056xf32, #tpu.memory_space<vmem>>, vector<4x256xf32>
    %114 = vector.broadcast %112 : vector<1x256xf32> to vector<4x256xf32>
    %115 = arith.mulf %113, %114 : vector<4x256xf32>
    %c0_99 = arith.constant 0 : index
    %c0_100 = arith.constant 0 : index
    %116 = vector.load %arg28[%c0_99, %c0_100] : memref<144x512xf32, #tpu.memory_space<vmem>>, vector<4x256xf32>
    tpu.vector_store %arg28[%c0_99, %c0_100], %115 {strides = array<i32>} : memref<144x512xf32, #tpu.memory_space<vmem>>, vector<4x256xf32>,
    %c0_101 = arith.constant 0 : index
    %c647_102 = arith.constant 647 : index
    %117 = vector.load %arg23[%c0_101, %c647_102] : memref<4x1056xf32, #tpu.memory_space<vmem>>, vector<4x256xf32>
    %118 = vector.broadcast %112 : vector<1x256xf32> to vector<4x256xf32>
    %119 = arith.mulf %117, %118 : vector<4x256xf32>
    %c0_103 = arith.constant 0 : index
    %c256_104 = arith.constant 256 : index
    %120 = vector.load %arg28[%c0_103, %c256_104] : memref<144x512xf32, #tpu.memory_space<vmem>>, vector<4x256xf32>
    tpu.vector_store %arg28[%c0_103, %c256_104], %119 {strides = array<i32>} : memref<144x512xf32, #tpu.memory_space<vmem>>, vector<4x256xf32>,
    %c1_105 = arith.constant 1 : index
    %c0_106 = arith.constant 0 : index
    %121 = vector.load %arg1[%c1_105, %c0_106] : memref<9x256xf32, #tpu.memory_space<vmem>>, vector<1x256xf32>
    %c0_107 = arith.constant 0 : index
    %c120_108 = arith.constant 120 : index
    %122 = vector.load %arg23[%c0_107, %c120_108] : memref<4x1056xf32, #tpu.memory_space<vmem>>, vector<4x256xf32>
    %123 = vector.broadcast %121 : vector<1x256xf32> to vector<4x256xf32>
    %124 = arith.mulf %122, %123 : vector<4x256xf32>
    %c4_109 = arith.constant 4 : index
    %c0_110 = arith.constant 0 : index
    %125 = vector.load %arg28[%c4_109, %c0_110] : memref<144x512xf32, #tpu.memory_space<vmem>>, vector<4x256xf32>
    tpu.vector_store %arg28[%c4_109, %c0_110], %124 {strides = array<i32>} : memref<144x512xf32, #tpu.memory_space<vmem>>, vector<4x256xf32>,
    %c0_111 = arith.constant 0 : index
    %c648_112 = arith.constant 648 : index
    %126 = vector.load %arg23[%c0_111, %c648_112] : memref<4x1056xf32, #tpu.memory_space<vmem>>, vector<4x256xf32>
    %127 = vector.broadcast %121 : vector<1x256xf32> to vector<4x256xf32>
    %128 = arith.mulf %126, %127 : vector<4x256xf32>
    %c4_113 = arith.constant 4 : index
    %c256_114 = arith.constant 256 : index
    %129 = vector.load %arg28[%c4_113, %c256_114] : memref<144x512xf32, #tpu.memory_space<vmem>>, vector<4x256xf32>
    tpu.vector_store %arg28[%c4_113, %c256_114], %128 {strides = array<i32>} : memref<144x512xf32, #tpu.memory_space<vmem>>, vector<4x256xf32>,
    %c2_115 = arith.constant 2 : index
    %c0_116 = arith.constant 0 : index
    %130 = vector.load %arg1[%c2_115, %c0_116] : memref<9x256xf32, #tpu.memory_space<vmem>>, vector<1x256xf32>
    %c0_117 = arith.constant 0 : index
    %c121_118 = arith.constant 121 : index
    %131 = vector.load %arg23[%c0_117, %c121_118] : memref<4x1056xf32, #tpu.memory_space<vmem>>, vector<4x256xf32>
    %132 = vector.broadcast %130 : vector<1x256xf32> to vector<4x256xf32>
    %133 = arith.mulf %131, %132 : vector<4x256xf32>
    %c8_119 = arith.constant 8 : index
    %c0_120 = arith.constant 0 : index
    %134 = vector.load %arg28[%c8_119, %c0_120] : memref<144x512xf32, #tpu.memory_space<vmem>>, vector<4x256xf32>
    tpu.vector_store %arg28[%c8_119, %c0_120], %133 {strides = array<i32>} : memref<144x512xf32, #tpu.memory_space<vmem>>, vector<4x256xf32>,
    %c0_121 = arith.constant 0 : index
    %c649_122 = arith.constant 649 : index
    %135 = vector.load %arg23[%c0_121, %c649_122] : memref<4x1056xf32, #tpu.memory_space<vmem>>, vector<4x256xf32>
    %136 = vector.broadcast %130 : vector<1x256xf32> to vector<4x256xf32>
    %137 = arith.mulf %135, %136 : vector<4x256xf32>
    %c8_123 = arith.constant 8 : index
    %c256_124 = arith.constant 256 : index
    %138 = vector.load %arg28[%c8_123, %c256_124] : memref<144x512xf32, #tpu.memory_space<vmem>>, vector<4x256xf32>
    tpu.vector_store %arg28[%c8_123, %c256_124], %137 {strides = array<i32>} : memref<144x512xf32, #tpu.memory_space<vmem>>, vector<4x256xf32>,
    %c3_125 = arith.constant 3 : index
    %c0_126 = arith.constant 0 : index
    %139 = vector.load %arg1[%c3_125, %c0_126] : memref<9x256xf32, #tpu.memory_space<vmem>>, vector<1x256xf32>
    %c0_127 = arith.constant 0 : index
    %c135_128 = arith.constant 135 : index
    %140 = vector.load %arg23[%c0_127, %c135_128] : memref<4x1056xf32, #tpu.memory_space<vmem>>, vector<4x256xf32>
    %141 = vector.broadcast %139 : vector<1x256xf32> to vector<4x256xf32>
    %142 = arith.mulf %140, %141 : vector<4x256xf32>
    %c12_129 = arith.constant 12 : index
    %c0_130 = arith.constant 0 : index
    %143 = vector.load %arg28[%c12_129, %c0_130] : memref<144x512xf32, #tpu.memory_space<vmem>>, vector<4x256xf32>
    tpu.vector_store %arg28[%c12_129, %c0_130], %142 {strides = array<i32>} : memref<144x512xf32, #tpu.memory_space<vmem>>, vector<4x256xf32>,
    %c0_131 = arith.constant 0 : index
    %c663_132 = arith.constant 663 : index
    %144 = vector.load %arg23[%c0_131, %c663_132] : memref<4x1056xf32, #tpu.memory_space<vmem>>, vector<4x256xf32>
    %145 = vector.broadcast %139 : vector<1x256xf32> to vector<4x256xf32>
    %146 = arith.mulf %144, %145 : vector<4x256xf32>
    %c12_133 = arith.constant 12 : index
    %c256_134 = arith.constant 256 : index
    %147 = vector.load %arg28[%c12_133, %c256_134] : memref<144x512xf32, #tpu.memory_space<vmem>>, vector<4x256xf32>
    tpu.vector_store %arg28[%c12_133, %c256_134], %146 {strides = array<i32>} : memref<144x512xf32, #tpu.memory_space<vmem>>, vector<4x256xf32>,
    %c4_135 = arith.constant 4 : index
    %c0_136 = arith.constant 0 : index
    %148 = vector.load %arg1[%c4_135, %c0_136] : memref<9x256xf32, #tpu.memory_space<vmem>>, vector<1x256xf32>
    %c0_137 = arith.constant 0 : index
    %c136_138 = arith.constant 136 : index
    %149 = vector.load %arg23[%c0_137, %c136_138] : memref<4x1056xf32, #tpu.memory_space<vmem>>, vector<4x256xf32>
    %150 = vector.broadcast %148 : vector<1x256xf32> to vector<4x256xf32>
    %151 = arith.mulf %149, %150 : vector<4x256xf32>
    %c16_139 = arith.constant 16 : index
    %c0_140 = arith.constant 0 : index
    %152 = vector.load %arg28[%c16_139, %c0_140] : memref<144x512xf32, #tpu.memory_space<vmem>>, vector<4x256xf32>
    tpu.vector_store %arg28[%c16_139, %c0_140], %151 {strides = array<i32>} : memref<144x512xf32, #tpu.memory_space<vmem>>, vector<4x256xf32>,
    %c0_141 = arith.constant 0 : index
    %c664_142 = arith.constant 664 : index
    %153 = vector.load %arg23[%c0_141, %c664_142] : memref<4x1056xf32, #tpu.memory_space<vmem>>, vector<4x256xf32>
    %154 = vector.broadcast %148 : vector<1x256xf32> to vector<4x256xf32>
    %155 = arith.mulf %153, %154 : vector<4x256xf32>
    %c16_143 = arith.constant 16 : index
    %c256_144 = arith.constant 256 : index
    %156 = vector.load %arg28[%c16_143, %c256_144] : memref<144x512xf32, #tpu.memory_space<vmem>>, vector<4x256xf32>
    tpu.vector_store %arg28[%c16_143, %c256_144], %155 {strides = array<i32>} : memref<144x512xf32, #tpu.memory_space<vmem>>, vector<4x256xf32>,
    %c5_145 = arith.constant 5 : index
    %c0_146 = arith.constant 0 : index
    %157 = vector.load %arg1[%c5_145, %c0_146] : memref<9x256xf32, #tpu.memory_space<vmem>>, vector<1x256xf32>
    %c0_147 = arith.constant 0 : index
    %c137_148 = arith.constant 137 : index
    %158 = vector.load %arg23[%c0_147, %c137_148] : memref<4x1056xf32, #tpu.memory_space<vmem>>, vector<4x256xf32>
    %159 = vector.broadcast %157 : vector<1x256xf32> to vector<4x256xf32>
    %160 = arith.mulf %158, %159 : vector<4x256xf32>
    %c20_149 = arith.constant 20 : index
    %c0_150 = arith.constant 0 : index
    %161 = vector.load %arg28[%c20_149, %c0_150] : memref<144x512xf32, #tpu.memory_space<vmem>>, vector<4x256xf32>
    tpu.vector_store %arg28[%c20_149, %c0_150], %160 {strides = array<i32>} : memref<144x512xf32, #tpu.memory_space<vmem>>, vector<4x256xf32>,
    %c0_151 = arith.constant 0 : index
    %c665_152 = arith.constant 665 : index
    %162 = vector.load %arg23[%c0_151, %c665_152] : memref<4x1056xf32, #tpu.memory_space<vmem>>, vector<4x256xf32>
    %163 = vector.broadcast %157 : vector<1x256xf32> to vector<4x256xf32>
    %164 = arith.mulf %162, %163 : vector<4x256xf32>
    %c20_153 = arith.constant 20 : index
    %c256_154 = arith.constant 256 : index
    %165 = vector.load %arg28[%c20_153, %c256_154] : memref<144x512xf32, #tpu.memory_space<vmem>>, vector<4x256xf32>
    tpu.vector_store %arg28[%c20_153, %c256_154], %164 {strides = array<i32>} : memref<144x512xf32, #tpu.memory_space<vmem>>, vector<4x256xf32>,
    %c6_155 = arith.constant 6 : index
    %c0_156 = arith.constant 0 : index
    %166 = vector.load %arg1[%c6_155, %c0_156] : memref<9x256xf32, #tpu.memory_space<vmem>>, vector<1x256xf32>
    %c0_157 = arith.constant 0 : index
    %c151_158 = arith.constant 151 : index
    %167 = vector.load %arg23[%c0_157, %c151_158] : memref<4x1056xf32, #tpu.memory_space<vmem>>, vector<4x256xf32>
    %168 = vector.broadcast %166 : vector<1x256xf32> to vector<4x256xf32>
    %169 = arith.mulf %167, %168 : vector<4x256xf32>
    %c24_159 = arith.constant 24 : index
    %c0_160 = arith.constant 0 : index
    %170 = vector.load %arg28[%c24_159, %c0_160] : memref<144x512xf32, #tpu.memory_space<vmem>>, vector<4x256xf32>
    tpu.vector_store %arg28[%c24_159, %c0_160], %169 {strides = array<i32>} : memref<144x512xf32, #tpu.memory_space<vmem>>, vector<4x256xf32>,
    %c0_161 = arith.constant 0 : index
    %c679_162 = arith.constant 679 : index
    %171 = vector.load %arg23[%c0_161, %c679_162] : memref<4x1056xf32, #tpu.memory_space<vmem>>, vector<4x256xf32>
    %172 = vector.broadcast %166 : vector<1x256xf32> to vector<4x256xf32>
    %173 = arith.mulf %171, %172 : vector<4x256xf32>
    %c24_163 = arith.constant 24 : index
    %c256_164 = arith.constant 256 : index
    %174 = vector.load %arg28[%c24_163, %c256_164] : memref<144x512xf32, #tpu.memory_space<vmem>>, vector<4x256xf32>
    tpu.vector_store %arg28[%c24_163, %c256_164], %173 {strides = array<i32>} : memref<144x512xf32, #tpu.memory_space<vmem>>, vector<4x256xf32>,
    %c7_165 = arith.constant 7 : index
    %c0_166 = arith.constant 0 : index
    %175 = vector.load %arg1[%c7_165, %c0_166] : memref<9x256xf32, #tpu.memory_space<vmem>>, vector<1x256xf32>
    %c0_167 = arith.constant 0 : index
    %c152_168 = arith.constant 152 : index
    %176 = vector.load %arg23[%c0_167, %c152_168] : memref<4x1056xf32, #tpu.memory_space<vmem>>, vector<4x256xf32>
    %177 = vector.broadcast %175 : vector<1x256xf32> to vector<4x256xf32>
    %178 = arith.mulf %176, %177 : vector<4x256xf32>
    %c28_169 = arith.constant 28 : index
    %c0_170 = arith.constant 0 : index
    %179 = vector.load %arg28[%c28_169, %c0_170] : memref<144x512xf32, #tpu.memory_space<vmem>>, vector<4x256xf32>
    tpu.vector_store %arg28[%c28_169, %c0_170], %178 {strides = array<i32>} : memref<144x512xf32, #tpu.memory_space<vmem>>, vector<4x256xf32>,
    %c0_171 = arith.constant 0 : index
    %c680_172 = arith.constant 680 : index
    %180 = vector.load %arg23[%c0_171, %c680_172] : memref<4x1056xf32, #tpu.memory_space<vmem>>, vector<4x256xf32>
    %181 = vector.broadcast %175 : vector<1x256xf32> to vector<4x256xf32>
    %182 = arith.mulf %180, %181 : vector<4x256xf32>
    %c28_173 = arith.constant 28 : index
    %c256_174 = arith.constant 256 : index
    %183 = vector.load %arg28[%c28_173, %c256_174] : memref<144x512xf32, #tpu.memory_space<vmem>>, vector<4x256xf32>
    tpu.vector_store %arg28[%c28_173, %c256_174], %182 {strides = array<i32>} : memref<144x512xf32, #tpu.memory_space<vmem>>, vector<4x256xf32>,
    %c8_175 = arith.constant 8 : index
    %c0_176 = arith.constant 0 : index
    %184 = vector.load %arg1[%c8_175, %c0_176] : memref<9x256xf32, #tpu.memory_space<vmem>>, vector<1x256xf32>
    %c0_177 = arith.constant 0 : index
    %c153_178 = arith.constant 153 : index
    %185 = vector.load %arg23[%c0_177, %c153_178] : memref<4x1056xf32, #tpu.memory_space<vmem>>, vector<4x256xf32>
    %186 = vector.broadcast %184 : vector<1x256xf32> to vector<4x256xf32>
    %187 = arith.mulf %185, %186 : vector<4x256xf32>
    %c32_179 = arith.constant 32 : index
    %c0_180 = arith.constant 0 : index
    %188 = vector.load %arg28[%c32_179, %c0_180] : memref<144x512xf32, #tpu.memory_space<vmem>>, vector<4x256xf32>
    tpu.vector_store %arg28[%c32_179, %c0_180], %187 {strides = array<i32>} : memref<144x512xf32, #tpu.memory_space<vmem>>, vector<4x256xf32>,
    %c0_181 = arith.constant 0 : index
    %c681_182 = arith.constant 681 : index
    %189 = vector.load %arg23[%c0_181, %c681_182] : memref<4x1056xf32, #tpu.memory_space<vmem>>, vector<4x256xf32>
    %190 = vector.broadcast %184 : vector<1x256xf32> to vector<4x256xf32>
    %191 = arith.mulf %189, %190 : vector<4x256xf32>
    %c32_183 = arith.constant 32 : index
    %c256_184 = arith.constant 256 : index
    %192 = vector.load %arg28[%c32_183, %c256_184] : memref<144x512xf32, #tpu.memory_space<vmem>>, vector<4x256xf32>
    tpu.vector_store %arg28[%c32_183, %c256_184], %191 {strides = array<i32>} : memref<144x512xf32, #tpu.memory_space<vmem>>, vector<4x256xf32>,
    %c0_185 = arith.constant 0 : index
    %c0_186 = arith.constant 0 : index
    %193 = vector.load %arg28[%c0_185, %c0_186] : memref<144x512xf32, #tpu.memory_space<vmem>>, vector<36x512xf32>
    %194 = arith.truncf %193 : vector<36x512xf32> to vector<36x512xbf16>
    %c0_187 = arith.constant 0 : index
    %c0_188 = arith.constant 0 : index
    %195 = vector.load %arg7[%c0_187, %c0_188] : memref<8x36xbf16, #tpu.memory_space<vmem>>, vector<8x36xbf16>
    %cst_189 = arith.constant dense<0.000000e+00> : vector<8x512xf32>
    %196 = tpu.matmul %195, %194, %cst_189 {dimension_numbers = #tpu.dot_dimension_numbers<[1], [0], [0], [1], [0, 0, 1, 1], [], []>} : vector<8x36xbf16>, vector<36x512xbf16>, vector<8x512xf32> -> vector<8x512xf32>
    %c0_190 = arith.constant 0 : index
    %c0_191 = arith.constant 0 : index
    %197 = vector.load %arg8[%c0_190, %c0_191] : memref<8x1xf32, #tpu.memory_space<vmem>>, vector<8x1xf32>
    %198 = vector.broadcast %197 : vector<8x1xf32> to vector<8x512xf32>
    %199 = arith.addf %196, %198 : vector<8x512xf32>
    %cst_192 = arith.constant 0.000000e+00 : f32
    %200 = vector.broadcast %cst_192 : f32 to vector<8x512xf32>
    %201 = arith.maximumf %199, %200 : vector<8x512xf32>
    %202 = vector.extract_strided_slice %201 {offsets = [0, 0], sizes = [8, 256], strides = [1, 1]} : vector<8x512xf32> to vector<8x256xf32>
    %c0_193 = arith.constant 0 : index
    %c136_194 = arith.constant 136 : index
    %203 = vector.load %arg24[%c0_193, %c136_194] : memref<8x1056xf32, #tpu.memory_space<vmem>>, vector<8x256xf32>
    tpu.vector_store %arg24[%c0_193, %c136_194], %202 {strides = array<i32>} : memref<8x1056xf32, #tpu.memory_space<vmem>>, vector<8x256xf32>,
    %204 = vector.extract_strided_slice %201 {offsets = [0, 256], sizes = [8, 256], strides = [1, 1]} : vector<8x512xf32> to vector<8x256xf32>
    %c0_195 = arith.constant 0 : index
    %c664_196 = arith.constant 664 : index
    %205 = vector.load %arg24[%c0_195, %c664_196] : memref<8x1056xf32, #tpu.memory_space<vmem>>, vector<8x256xf32>
    tpu.vector_store %arg24[%c0_195, %c664_196], %204 {strides = array<i32>} : memref<8x1056xf32, #tpu.memory_space<vmem>>, vector<8x256xf32>,
    %c0_197 = arith.constant 0 : index
    %c0_198 = arith.constant 0 : index
    %206 = vector.load %arg2[%c0_197, %c0_198] : memref<9x256xf32, #tpu.memory_space<vmem>>, vector<1x256xf32>
    %c0_199 = arith.constant 0 : index
    %c102 = arith.constant 102 : index
    %207 = vector.load %arg24[%c0_199, %c102] : memref<8x1056xf32, #tpu.memory_space<vmem>>, vector<8x256xf32>
    %208 = vector.broadcast %206 : vector<1x256xf32> to vector<8x256xf32>
    %209 = arith.mulf %207, %208 : vector<8x256xf32>
    %c0_200 = arith.constant 0 : index
    %c0_201 = arith.constant 0 : index
    %210 = vector.load %arg28[%c0_200, %c0_201] : memref<144x512xf32, #tpu.memory_space<vmem>>, vector<8x256xf32>
    tpu.vector_store %arg28[%c0_200, %c0_201], %209 {strides = array<i32>} : memref<144x512xf32, #tpu.memory_space<vmem>>, vector<8x256xf32>,
    %c0_202 = arith.constant 0 : index
    %c630 = arith.constant 630 : index
    %211 = vector.load %arg24[%c0_202, %c630] : memref<8x1056xf32, #tpu.memory_space<vmem>>, vector<8x256xf32>
    %212 = vector.broadcast %206 : vector<1x256xf32> to vector<8x256xf32>
    %213 = arith.mulf %211, %212 : vector<8x256xf32>
    %c0_203 = arith.constant 0 : index
    %c256_204 = arith.constant 256 : index
    %214 = vector.load %arg28[%c0_203, %c256_204] : memref<144x512xf32, #tpu.memory_space<vmem>>, vector<8x256xf32>
    tpu.vector_store %arg28[%c0_203, %c256_204], %213 {strides = array<i32>} : memref<144x512xf32, #tpu.memory_space<vmem>>, vector<8x256xf32>,
    %c1_205 = arith.constant 1 : index
    %c0_206 = arith.constant 0 : index
    %215 = vector.load %arg2[%c1_205, %c0_206] : memref<9x256xf32, #tpu.memory_space<vmem>>, vector<1x256xf32>
    %c0_207 = arith.constant 0 : index
    %c104 = arith.constant 104 : index
    %216 = vector.load %arg24[%c0_207, %c104] : memref<8x1056xf32, #tpu.memory_space<vmem>>, vector<8x256xf32>
    %217 = vector.broadcast %215 : vector<1x256xf32> to vector<8x256xf32>
    %218 = arith.mulf %216, %217 : vector<8x256xf32>
    %c8_208 = arith.constant 8 : index
    %c0_209 = arith.constant 0 : index
    %219 = vector.load %arg28[%c8_208, %c0_209] : memref<144x512xf32, #tpu.memory_space<vmem>>, vector<8x256xf32>
    tpu.vector_store %arg28[%c8_208, %c0_209], %218 {strides = array<i32>} : memref<144x512xf32, #tpu.memory_space<vmem>>, vector<8x256xf32>,
    %c0_210 = arith.constant 0 : index
    %c632 = arith.constant 632 : index
    %220 = vector.load %arg24[%c0_210, %c632] : memref<8x1056xf32, #tpu.memory_space<vmem>>, vector<8x256xf32>
    %221 = vector.broadcast %215 : vector<1x256xf32> to vector<8x256xf32>
    %222 = arith.mulf %220, %221 : vector<8x256xf32>
    %c8_211 = arith.constant 8 : index
    %c256_212 = arith.constant 256 : index
    %223 = vector.load %arg28[%c8_211, %c256_212] : memref<144x512xf32, #tpu.memory_space<vmem>>, vector<8x256xf32>
    tpu.vector_store %arg28[%c8_211, %c256_212], %222 {strides = array<i32>} : memref<144x512xf32, #tpu.memory_space<vmem>>, vector<8x256xf32>,
    %c2_213 = arith.constant 2 : index
    %c0_214 = arith.constant 0 : index
    %224 = vector.load %arg2[%c2_213, %c0_214] : memref<9x256xf32, #tpu.memory_space<vmem>>, vector<1x256xf32>
    %c0_215 = arith.constant 0 : index
    %c106 = arith.constant 106 : index
    %225 = vector.load %arg24[%c0_215, %c106] : memref<8x1056xf32, #tpu.memory_space<vmem>>, vector<8x256xf32>
    %226 = vector.broadcast %224 : vector<1x256xf32> to vector<8x256xf32>
    %227 = arith.mulf %225, %226 : vector<8x256xf32>
    %c16_216 = arith.constant 16 : index
    %c0_217 = arith.constant 0 : index
    %228 = vector.load %arg28[%c16_216, %c0_217] : memref<144x512xf32, #tpu.memory_space<vmem>>, vector<8x256xf32>
    tpu.vector_store %arg28[%c16_216, %c0_217], %227 {strides = array<i32>} : memref<144x512xf32, #tpu.memory_space<vmem>>, vector<8x256xf32>,
    %c0_218 = arith.constant 0 : index
    %c634 = arith.constant 634 : index
    %229 = vector.load %arg24[%c0_218, %c634] : memref<8x1056xf32, #tpu.memory_space<vmem>>, vector<8x256xf32>
    %230 = vector.broadcast %224 : vector<1x256xf32> to vector<8x256xf32>
    %231 = arith.mulf %229, %230 : vector<8x256xf32>
    %c16_219 = arith.constant 16 : index
    %c256_220 = arith.constant 256 : index
    %232 = vector.load %arg28[%c16_219, %c256_220] : memref<144x512xf32, #tpu.memory_space<vmem>>, vector<8x256xf32>
    tpu.vector_store %arg28[%c16_219, %c256_220], %231 {strides = array<i32>} : memref<144x512xf32, #tpu.memory_space<vmem>>, vector<8x256xf32>,
    %c3_221 = arith.constant 3 : index
    %c0_222 = arith.constant 0 : index
    %233 = vector.load %arg2[%c3_221, %c0_222] : memref<9x256xf32, #tpu.memory_space<vmem>>, vector<1x256xf32>
    %c0_223 = arith.constant 0 : index
    %c134 = arith.constant 134 : index
    %234 = vector.load %arg24[%c0_223, %c134] : memref<8x1056xf32, #tpu.memory_space<vmem>>, vector<8x256xf32>
    %235 = vector.broadcast %233 : vector<1x256xf32> to vector<8x256xf32>
    %236 = arith.mulf %234, %235 : vector<8x256xf32>
    %c24_224 = arith.constant 24 : index
    %c0_225 = arith.constant 0 : index
    %237 = vector.load %arg28[%c24_224, %c0_225] : memref<144x512xf32, #tpu.memory_space<vmem>>, vector<8x256xf32>
    tpu.vector_store %arg28[%c24_224, %c0_225], %236 {strides = array<i32>} : memref<144x512xf32, #tpu.memory_space<vmem>>, vector<8x256xf32>,
    %c0_226 = arith.constant 0 : index
    %c662 = arith.constant 662 : index
    %238 = vector.load %arg24[%c0_226, %c662] : memref<8x1056xf32, #tpu.memory_space<vmem>>, vector<8x256xf32>
    %239 = vector.broadcast %233 : vector<1x256xf32> to vector<8x256xf32>
    %240 = arith.mulf %238, %239 : vector<8x256xf32>
    %c24_227 = arith.constant 24 : index
    %c256_228 = arith.constant 256 : index
    %241 = vector.load %arg28[%c24_227, %c256_228] : memref<144x512xf32, #tpu.memory_space<vmem>>, vector<8x256xf32>
    tpu.vector_store %arg28[%c24_227, %c256_228], %240 {strides = array<i32>} : memref<144x512xf32, #tpu.memory_space<vmem>>, vector<8x256xf32>,
    %c4_229 = arith.constant 4 : index
    %c0_230 = arith.constant 0 : index
    %242 = vector.load %arg2[%c4_229, %c0_230] : memref<9x256xf32, #tpu.memory_space<vmem>>, vector<1x256xf32>
    %c0_231 = arith.constant 0 : index
    %c136_232 = arith.constant 136 : index
    %243 = vector.load %arg24[%c0_231, %c136_232] : memref<8x1056xf32, #tpu.memory_space<vmem>>, vector<8x256xf32>
    %244 = vector.broadcast %242 : vector<1x256xf32> to vector<8x256xf32>
    %245 = arith.mulf %243, %244 : vector<8x256xf32>
    %c32_233 = arith.constant 32 : index
    %c0_234 = arith.constant 0 : index
    %246 = vector.load %arg28[%c32_233, %c0_234] : memref<144x512xf32, #tpu.memory_space<vmem>>, vector<8x256xf32>
    tpu.vector_store %arg28[%c32_233, %c0_234], %245 {strides = array<i32>} : memref<144x512xf32, #tpu.memory_space<vmem>>, vector<8x256xf32>,
    %c0_235 = arith.constant 0 : index
    %c664_236 = arith.constant 664 : index
    %247 = vector.load %arg24[%c0_235, %c664_236] : memref<8x1056xf32, #tpu.memory_space<vmem>>, vector<8x256xf32>
    %248 = vector.broadcast %242 : vector<1x256xf32> to vector<8x256xf32>
    %249 = arith.mulf %247, %248 : vector<8x256xf32>
    %c32_237 = arith.constant 32 : index
    %c256_238 = arith.constant 256 : index
    %250 = vector.load %arg28[%c32_237, %c256_238] : memref<144x512xf32, #tpu.memory_space<vmem>>, vector<8x256xf32>
    tpu.vector_store %arg28[%c32_237, %c256_238], %249 {strides = array<i32>} : memref<144x512xf32, #tpu.memory_space<vmem>>, vector<8x256xf32>,
    %c5_239 = arith.constant 5 : index
    %c0_240 = arith.constant 0 : index
    %251 = vector.load %arg2[%c5_239, %c0_240] : memref<9x256xf32, #tpu.memory_space<vmem>>, vector<1x256xf32>
    %c0_241 = arith.constant 0 : index
    %c138 = arith.constant 138 : index
    %252 = vector.load %arg24[%c0_241, %c138] : memref<8x1056xf32, #tpu.memory_space<vmem>>, vector<8x256xf32>
    %253 = vector.broadcast %251 : vector<1x256xf32> to vector<8x256xf32>
    %254 = arith.mulf %252, %253 : vector<8x256xf32>
    %c40 = arith.constant 40 : index
    %c0_242 = arith.constant 0 : index
    %255 = vector.load %arg28[%c40, %c0_242] : memref<144x512xf32, #tpu.memory_space<vmem>>, vector<8x256xf32>
    tpu.vector_store %arg28[%c40, %c0_242], %254 {strides = array<i32>} : memref<144x512xf32, #tpu.memory_space<vmem>>, vector<8x256xf32>,
    %c0_243 = arith.constant 0 : index
    %c666 = arith.constant 666 : index
    %256 = vector.load %arg24[%c0_243, %c666] : memref<8x1056xf32, #tpu.memory_space<vmem>>, vector<8x256xf32>
    %257 = vector.broadcast %251 : vector<1x256xf32> to vector<8x256xf32>
    %258 = arith.mulf %256, %257 : vector<8x256xf32>
    %c40_244 = arith.constant 40 : index
    %c256_245 = arith.constant 256 : index
    %259 = vector.load %arg28[%c40_244, %c256_245] : memref<144x512xf32, #tpu.memory_space<vmem>>, vector<8x256xf32>
    tpu.vector_store %arg28[%c40_244, %c256_245], %258 {strides = array<i32>} : memref<144x512xf32, #tpu.memory_space<vmem>>, vector<8x256xf32>,
    %c6_246 = arith.constant 6 : index
    %c0_247 = arith.constant 0 : index
    %260 = vector.load %arg2[%c6_246, %c0_247] : memref<9x256xf32, #tpu.memory_space<vmem>>, vector<1x256xf32>
    %c0_248 = arith.constant 0 : index
    %c166 = arith.constant 166 : index
    %261 = vector.load %arg24[%c0_248, %c166] : memref<8x1056xf32, #tpu.memory_space<vmem>>, vector<8x256xf32>
    %262 = vector.broadcast %260 : vector<1x256xf32> to vector<8x256xf32>
    %263 = arith.mulf %261, %262 : vector<8x256xf32>
    %c48 = arith.constant 48 : index
    %c0_249 = arith.constant 0 : index
    %264 = vector.load %arg28[%c48, %c0_249] : memref<144x512xf32, #tpu.memory_space<vmem>>, vector<8x256xf32>
    tpu.vector_store %arg28[%c48, %c0_249], %263 {strides = array<i32>} : memref<144x512xf32, #tpu.memory_space<vmem>>, vector<8x256xf32>,
    %c0_250 = arith.constant 0 : index
    %c694 = arith.constant 694 : index
    %265 = vector.load %arg24[%c0_250, %c694] : memref<8x1056xf32, #tpu.memory_space<vmem>>, vector<8x256xf32>
    %266 = vector.broadcast %260 : vector<1x256xf32> to vector<8x256xf32>
    %267 = arith.mulf %265, %266 : vector<8x256xf32>
    %c48_251 = arith.constant 48 : index
    %c256_252 = arith.constant 256 : index
    %268 = vector.load %arg28[%c48_251, %c256_252] : memref<144x512xf32, #tpu.memory_space<vmem>>, vector<8x256xf32>
    tpu.vector_store %arg28[%c48_251, %c256_252], %267 {strides = array<i32>} : memref<144x512xf32, #tpu.memory_space<vmem>>, vector<8x256xf32>,
    %c7_253 = arith.constant 7 : index
    %c0_254 = arith.constant 0 : index
    %269 = vector.load %arg2[%c7_253, %c0_254] : memref<9x256xf32, #tpu.memory_space<vmem>>, vector<1x256xf32>
    %c0_255 = arith.constant 0 : index
    %c168 = arith.constant 168 : index
    %270 = vector.load %arg24[%c0_255, %c168] : memref<8x1056xf32, #tpu.memory_space<vmem>>, vector<8x256xf32>
    %271 = vector.broadcast %269 : vector<1x256xf32> to vector<8x256xf32>
    %272 = arith.mulf %270, %271 : vector<8x256xf32>
    %c56 = arith.constant 56 : index
    %c0_256 = arith.constant 0 : index
    %273 = vector.load %arg28[%c56, %c0_256] : memref<144x512xf32, #tpu.memory_space<vmem>>, vector<8x256xf32>
    tpu.vector_store %arg28[%c56, %c0_256], %272 {strides = array<i32>} : memref<144x512xf32, #tpu.memory_space<vmem>>, vector<8x256xf32>,
    %c0_257 = arith.constant 0 : index
    %c696 = arith.constant 696 : index
    %274 = vector.load %arg24[%c0_257, %c696] : memref<8x1056xf32, #tpu.memory_space<vmem>>, vector<8x256xf32>
    %275 = vector.broadcast %269 : vector<1x256xf32> to vector<8x256xf32>
    %276 = arith.mulf %274, %275 : vector<8x256xf32>
    %c56_258 = arith.constant 56 : index
    %c256_259 = arith.constant 256 : index
    %277 = vector.load %arg28[%c56_258, %c256_259] : memref<144x512xf32, #tpu.memory_space<vmem>>, vector<8x256xf32>
    tpu.vector_store %arg28[%c56_258, %c256_259], %276 {strides = array<i32>} : memref<144x512xf32, #tpu.memory_space<vmem>>, vector<8x256xf32>,
    %c8_260 = arith.constant 8 : index
    %c0_261 = arith.constant 0 : index
    %278 = vector.load %arg2[%c8_260, %c0_261] : memref<9x256xf32, #tpu.memory_space<vmem>>, vector<1x256xf32>
    %c0_262 = arith.constant 0 : index
    %c170 = arith.constant 170 : index
    %279 = vector.load %arg24[%c0_262, %c170] : memref<8x1056xf32, #tpu.memory_space<vmem>>, vector<8x256xf32>
    %280 = vector.broadcast %278 : vector<1x256xf32> to vector<8x256xf32>
    %281 = arith.mulf %279, %280 : vector<8x256xf32>
    %c64 = arith.constant 64 : index
    %c0_263 = arith.constant 0 : index
    %282 = vector.load %arg28[%c64, %c0_263] : memref<144x512xf32, #tpu.memory_space<vmem>>, vector<8x256xf32>
    tpu.vector_store %arg28[%c64, %c0_263], %281 {strides = array<i32>} : memref<144x512xf32, #tpu.memory_space<vmem>>, vector<8x256xf32>,
    %c0_264 = arith.constant 0 : index
    %c698 = arith.constant 698 : index
    %283 = vector.load %arg24[%c0_264, %c698] : memref<8x1056xf32, #tpu.memory_space<vmem>>, vector<8x256xf32>
    %284 = vector.broadcast %278 : vector<1x256xf32> to vector<8x256xf32>
    %285 = arith.mulf %283, %284 : vector<8x256xf32>
    %c64_265 = arith.constant 64 : index
    %c256_266 = arith.constant 256 : index
    %286 = vector.load %arg28[%c64_265, %c256_266] : memref<144x512xf32, #tpu.memory_space<vmem>>, vector<8x256xf32>
    tpu.vector_store %arg28[%c64_265, %c256_266], %285 {strides = array<i32>} : memref<144x512xf32, #tpu.memory_space<vmem>>, vector<8x256xf32>,
    %c0_267 = arith.constant 0 : index
    %c0_268 = arith.constant 0 : index
    %287 = vector.load %arg28[%c0_267, %c0_268] : memref<144x512xf32, #tpu.memory_space<vmem>>, vector<72x512xf32>
    %288 = arith.truncf %287 : vector<72x512xf32> to vector<72x512xbf16>
    %c0_269 = arith.constant 0 : index
    %c0_270 = arith.constant 0 : index
    %289 = vector.load %arg9[%c0_269, %c0_270] : memref<8x72xbf16, #tpu.memory_space<vmem>>, vector<8x72xbf16>
    %cst_271 = arith.constant dense<0.000000e+00> : vector<8x512xf32>
    %290 = tpu.matmul %289, %288, %cst_271 {dimension_numbers = #tpu.dot_dimension_numbers<[1], [0], [0], [1], [0, 0, 1, 1], [], []>} : vector<8x72xbf16>, vector<72x512xbf16>, vector<8x512xf32> -> vector<8x512xf32>
    %c0_272 = arith.constant 0 : index
    %c0_273 = arith.constant 0 : index
    %291 = vector.load %arg10[%c0_272, %c0_273] : memref<8x1xf32, #tpu.memory_space<vmem>>, vector<8x1xf32>
    %292 = vector.broadcast %291 : vector<8x1xf32> to vector<8x512xf32>
    %293 = arith.addf %290, %292 : vector<8x512xf32>
    %cst_274 = arith.constant 0.000000e+00 : f32
    %294 = vector.broadcast %cst_274 : f32 to vector<8x512xf32>
    %295 = arith.maximumf %293, %294 : vector<8x512xf32>
    %296 = vector.extract_strided_slice %295 {offsets = [0, 0], sizes = [8, 256], strides = [1, 1]} : vector<8x512xf32> to vector<8x256xf32>
    %c0_275 = arith.constant 0 : index
    %c136_276 = arith.constant 136 : index
    %297 = vector.load %arg25[%c0_275, %c136_276] : memref<8x1056xf32, #tpu.memory_space<vmem>>, vector<8x256xf32>
    tpu.vector_store %arg25[%c0_275, %c136_276], %296 {strides = array<i32>} : memref<8x1056xf32, #tpu.memory_space<vmem>>, vector<8x256xf32>,
    %298 = vector.extract_strided_slice %295 {offsets = [0, 256], sizes = [8, 256], strides = [1, 1]} : vector<8x512xf32> to vector<8x256xf32>
    %c0_277 = arith.constant 0 : index
    %c664_278 = arith.constant 664 : index
    %299 = vector.load %arg25[%c0_277, %c664_278] : memref<8x1056xf32, #tpu.memory_space<vmem>>, vector<8x256xf32>
    tpu.vector_store %arg25[%c0_277, %c664_278], %298 {strides = array<i32>} : memref<8x1056xf32, #tpu.memory_space<vmem>>, vector<8x256xf32>,
    %c0_279 = arith.constant 0 : index
    %c0_280 = arith.constant 0 : index
    %300 = vector.load %arg3[%c0_279, %c0_280] : memref<9x256xf32, #tpu.memory_space<vmem>>, vector<1x256xf32>
    %c0_281 = arith.constant 0 : index
    %c68 = arith.constant 68 : index
    %301 = vector.load %arg25[%c0_281, %c68] : memref<8x1056xf32, #tpu.memory_space<vmem>>, vector<8x256xf32>
    %302 = vector.broadcast %300 : vector<1x256xf32> to vector<8x256xf32>
    %303 = arith.mulf %301, %302 : vector<8x256xf32>
    %c0_282 = arith.constant 0 : index
    %c0_283 = arith.constant 0 : index
    %304 = vector.load %arg28[%c0_282, %c0_283] : memref<144x512xf32, #tpu.memory_space<vmem>>, vector<8x256xf32>
    tpu.vector_store %arg28[%c0_282, %c0_283], %303 {strides = array<i32>} : memref<144x512xf32, #tpu.memory_space<vmem>>, vector<8x256xf32>,
    %c0_284 = arith.constant 0 : index
    %c596 = arith.constant 596 : index
    %305 = vector.load %arg25[%c0_284, %c596] : memref<8x1056xf32, #tpu.memory_space<vmem>>, vector<8x256xf32>
    %306 = vector.broadcast %300 : vector<1x256xf32> to vector<8x256xf32>
    %307 = arith.mulf %305, %306 : vector<8x256xf32>
    %c0_285 = arith.constant 0 : index
    %c256_286 = arith.constant 256 : index
    %308 = vector.load %arg28[%c0_285, %c256_286] : memref<144x512xf32, #tpu.memory_space<vmem>>, vector<8x256xf32>
    tpu.vector_store %arg28[%c0_285, %c256_286], %307 {strides = array<i32>} : memref<144x512xf32, #tpu.memory_space<vmem>>, vector<8x256xf32>,
    %c1_287 = arith.constant 1 : index
    %c0_288 = arith.constant 0 : index
    %309 = vector.load %arg3[%c1_287, %c0_288] : memref<9x256xf32, #tpu.memory_space<vmem>>, vector<1x256xf32>
    %c0_289 = arith.constant 0 : index
    %c72 = arith.constant 72 : index
    %310 = vector.load %arg25[%c0_289, %c72] : memref<8x1056xf32, #tpu.memory_space<vmem>>, vector<8x256xf32>
    %311 = vector.broadcast %309 : vector<1x256xf32> to vector<8x256xf32>
    %312 = arith.mulf %310, %311 : vector<8x256xf32>
    %c8_290 = arith.constant 8 : index
    %c0_291 = arith.constant 0 : index
    %313 = vector.load %arg28[%c8_290, %c0_291] : memref<144x512xf32, #tpu.memory_space<vmem>>, vector<8x256xf32>
    tpu.vector_store %arg28[%c8_290, %c0_291], %312 {strides = array<i32>} : memref<144x512xf32, #tpu.memory_space<vmem>>, vector<8x256xf32>,
    %c0_292 = arith.constant 0 : index
    %c600 = arith.constant 600 : index
    %314 = vector.load %arg25[%c0_292, %c600] : memref<8x1056xf32, #tpu.memory_space<vmem>>, vector<8x256xf32>
    %315 = vector.broadcast %309 : vector<1x256xf32> to vector<8x256xf32>
    %316 = arith.mulf %314, %315 : vector<8x256xf32>
    %c8_293 = arith.constant 8 : index
    %c256_294 = arith.constant 256 : index
    %317 = vector.load %arg28[%c8_293, %c256_294] : memref<144x512xf32, #tpu.memory_space<vmem>>, vector<8x256xf32>
    tpu.vector_store %arg28[%c8_293, %c256_294], %316 {strides = array<i32>} : memref<144x512xf32, #tpu.memory_space<vmem>>, vector<8x256xf32>,
    %c2_295 = arith.constant 2 : index
    %c0_296 = arith.constant 0 : index
    %318 = vector.load %arg3[%c2_295, %c0_296] : memref<9x256xf32, #tpu.memory_space<vmem>>, vector<1x256xf32>
    %c0_297 = arith.constant 0 : index
    %c76 = arith.constant 76 : index
    %319 = vector.load %arg25[%c0_297, %c76] : memref<8x1056xf32, #tpu.memory_space<vmem>>, vector<8x256xf32>
    %320 = vector.broadcast %318 : vector<1x256xf32> to vector<8x256xf32>
    %321 = arith.mulf %319, %320 : vector<8x256xf32>
    %c16_298 = arith.constant 16 : index
    %c0_299 = arith.constant 0 : index
    %322 = vector.load %arg28[%c16_298, %c0_299] : memref<144x512xf32, #tpu.memory_space<vmem>>, vector<8x256xf32>
    tpu.vector_store %arg28[%c16_298, %c0_299], %321 {strides = array<i32>} : memref<144x512xf32, #tpu.memory_space<vmem>>, vector<8x256xf32>,
    %c0_300 = arith.constant 0 : index
    %c604 = arith.constant 604 : index
    %323 = vector.load %arg25[%c0_300, %c604] : memref<8x1056xf32, #tpu.memory_space<vmem>>, vector<8x256xf32>
    %324 = vector.broadcast %318 : vector<1x256xf32> to vector<8x256xf32>
    %325 = arith.mulf %323, %324 : vector<8x256xf32>
    %c16_301 = arith.constant 16 : index
    %c256_302 = arith.constant 256 : index
    %326 = vector.load %arg28[%c16_301, %c256_302] : memref<144x512xf32, #tpu.memory_space<vmem>>, vector<8x256xf32>
    tpu.vector_store %arg28[%c16_301, %c256_302], %325 {strides = array<i32>} : memref<144x512xf32, #tpu.memory_space<vmem>>, vector<8x256xf32>,
    %c3_303 = arith.constant 3 : index
    %c0_304 = arith.constant 0 : index
    %327 = vector.load %arg3[%c3_303, %c0_304] : memref<9x256xf32, #tpu.memory_space<vmem>>, vector<1x256xf32>
    %c0_305 = arith.constant 0 : index
    %c132 = arith.constant 132 : index
    %328 = vector.load %arg25[%c0_305, %c132] : memref<8x1056xf32, #tpu.memory_space<vmem>>, vector<8x256xf32>
    %329 = vector.broadcast %327 : vector<1x256xf32> to vector<8x256xf32>
    %330 = arith.mulf %328, %329 : vector<8x256xf32>
    %c24_306 = arith.constant 24 : index
    %c0_307 = arith.constant 0 : index
    %331 = vector.load %arg28[%c24_306, %c0_307] : memref<144x512xf32, #tpu.memory_space<vmem>>, vector<8x256xf32>
    tpu.vector_store %arg28[%c24_306, %c0_307], %330 {strides = array<i32>} : memref<144x512xf32, #tpu.memory_space<vmem>>, vector<8x256xf32>,
    %c0_308 = arith.constant 0 : index
    %c660 = arith.constant 660 : index
    %332 = vector.load %arg25[%c0_308, %c660] : memref<8x1056xf32, #tpu.memory_space<vmem>>, vector<8x256xf32>
    %333 = vector.broadcast %327 : vector<1x256xf32> to vector<8x256xf32>
    %334 = arith.mulf %332, %333 : vector<8x256xf32>
    %c24_309 = arith.constant 24 : index
    %c256_310 = arith.constant 256 : index
    %335 = vector.load %arg28[%c24_309, %c256_310] : memref<144x512xf32, #tpu.memory_space<vmem>>, vector<8x256xf32>
    tpu.vector_store %arg28[%c24_309, %c256_310], %334 {strides = array<i32>} : memref<144x512xf32, #tpu.memory_space<vmem>>, vector<8x256xf32>,
    %c4_311 = arith.constant 4 : index
    %c0_312 = arith.constant 0 : index
    %336 = vector.load %arg3[%c4_311, %c0_312] : memref<9x256xf32, #tpu.memory_space<vmem>>, vector<1x256xf32>
    %c0_313 = arith.constant 0 : index
    %c136_314 = arith.constant 136 : index
    %337 = vector.load %arg25[%c0_313, %c136_314] : memref<8x1056xf32, #tpu.memory_space<vmem>>, vector<8x256xf32>
    %338 = vector.broadcast %336 : vector<1x256xf32> to vector<8x256xf32>
    %339 = arith.mulf %337, %338 : vector<8x256xf32>
    %c32_315 = arith.constant 32 : index
    %c0_316 = arith.constant 0 : index
    %340 = vector.load %arg28[%c32_315, %c0_316] : memref<144x512xf32, #tpu.memory_space<vmem>>, vector<8x256xf32>
    tpu.vector_store %arg28[%c32_315, %c0_316], %339 {strides = array<i32>} : memref<144x512xf32, #tpu.memory_space<vmem>>, vector<8x256xf32>,
    %c0_317 = arith.constant 0 : index
    %c664_318 = arith.constant 664 : index
    %341 = vector.load %arg25[%c0_317, %c664_318] : memref<8x1056xf32, #tpu.memory_space<vmem>>, vector<8x256xf32>
    %342 = vector.broadcast %336 : vector<1x256xf32> to vector<8x256xf32>
    %343 = arith.mulf %341, %342 : vector<8x256xf32>
    %c32_319 = arith.constant 32 : index
    %c256_320 = arith.constant 256 : index
    %344 = vector.load %arg28[%c32_319, %c256_320] : memref<144x512xf32, #tpu.memory_space<vmem>>, vector<8x256xf32>
    tpu.vector_store %arg28[%c32_319, %c256_320], %343 {strides = array<i32>} : memref<144x512xf32, #tpu.memory_space<vmem>>, vector<8x256xf32>,
    %c5_321 = arith.constant 5 : index
    %c0_322 = arith.constant 0 : index
    %345 = vector.load %arg3[%c5_321, %c0_322] : memref<9x256xf32, #tpu.memory_space<vmem>>, vector<1x256xf32>
    %c0_323 = arith.constant 0 : index
    %c140 = arith.constant 140 : index
    %346 = vector.load %arg25[%c0_323, %c140] : memref<8x1056xf32, #tpu.memory_space<vmem>>, vector<8x256xf32>
    %347 = vector.broadcast %345 : vector<1x256xf32> to vector<8x256xf32>
    %348 = arith.mulf %346, %347 : vector<8x256xf32>
    %c40_324 = arith.constant 40 : index
    %c0_325 = arith.constant 0 : index
    %349 = vector.load %arg28[%c40_324, %c0_325] : memref<144x512xf32, #tpu.memory_space<vmem>>, vector<8x256xf32>
    tpu.vector_store %arg28[%c40_324, %c0_325], %348 {strides = array<i32>} : memref<144x512xf32, #tpu.memory_space<vmem>>, vector<8x256xf32>,
    %c0_326 = arith.constant 0 : index
    %c668 = arith.constant 668 : index
    %350 = vector.load %arg25[%c0_326, %c668] : memref<8x1056xf32, #tpu.memory_space<vmem>>, vector<8x256xf32>
    %351 = vector.broadcast %345 : vector<1x256xf32> to vector<8x256xf32>
    %352 = arith.mulf %350, %351 : vector<8x256xf32>
    %c40_327 = arith.constant 40 : index
    %c256_328 = arith.constant 256 : index
    %353 = vector.load %arg28[%c40_327, %c256_328] : memref<144x512xf32, #tpu.memory_space<vmem>>, vector<8x256xf32>
    tpu.vector_store %arg28[%c40_327, %c256_328], %352 {strides = array<i32>} : memref<144x512xf32, #tpu.memory_space<vmem>>, vector<8x256xf32>,
    %c6_329 = arith.constant 6 : index
    %c0_330 = arith.constant 0 : index
    %354 = vector.load %arg3[%c6_329, %c0_330] : memref<9x256xf32, #tpu.memory_space<vmem>>, vector<1x256xf32>
    %c0_331 = arith.constant 0 : index
    %c196 = arith.constant 196 : index
    %355 = vector.load %arg25[%c0_331, %c196] : memref<8x1056xf32, #tpu.memory_space<vmem>>, vector<8x256xf32>
    %356 = vector.broadcast %354 : vector<1x256xf32> to vector<8x256xf32>
    %357 = arith.mulf %355, %356 : vector<8x256xf32>
    %c48_332 = arith.constant 48 : index
    %c0_333 = arith.constant 0 : index
    %358 = vector.load %arg28[%c48_332, %c0_333] : memref<144x512xf32, #tpu.memory_space<vmem>>, vector<8x256xf32>
    tpu.vector_store %arg28[%c48_332, %c0_333], %357 {strides = array<i32>} : memref<144x512xf32, #tpu.memory_space<vmem>>, vector<8x256xf32>,
    %c0_334 = arith.constant 0 : index
    %c724 = arith.constant 724 : index
    %359 = vector.load %arg25[%c0_334, %c724] : memref<8x1056xf32, #tpu.memory_space<vmem>>, vector<8x256xf32>
    %360 = vector.broadcast %354 : vector<1x256xf32> to vector<8x256xf32>
    %361 = arith.mulf %359, %360 : vector<8x256xf32>
    %c48_335 = arith.constant 48 : index
    %c256_336 = arith.constant 256 : index
    %362 = vector.load %arg28[%c48_335, %c256_336] : memref<144x512xf32, #tpu.memory_space<vmem>>, vector<8x256xf32>
    tpu.vector_store %arg28[%c48_335, %c256_336], %361 {strides = array<i32>} : memref<144x512xf32, #tpu.memory_space<vmem>>, vector<8x256xf32>,
    %c7_337 = arith.constant 7 : index
    %c0_338 = arith.constant 0 : index
    %363 = vector.load %arg3[%c7_337, %c0_338] : memref<9x256xf32, #tpu.memory_space<vmem>>, vector<1x256xf32>
    %c0_339 = arith.constant 0 : index
    %c200 = arith.constant 200 : index
    %364 = vector.load %arg25[%c0_339, %c200] : memref<8x1056xf32, #tpu.memory_space<vmem>>, vector<8x256xf32>
    %365 = vector.broadcast %363 : vector<1x256xf32> to vector<8x256xf32>
    %366 = arith.mulf %364, %365 : vector<8x256xf32>
    %c56_340 = arith.constant 56 : index
    %c0_341 = arith.constant 0 : index
    %367 = vector.load %arg28[%c56_340, %c0_341] : memref<144x512xf32, #tpu.memory_space<vmem>>, vector<8x256xf32>
    tpu.vector_store %arg28[%c56_340, %c0_341], %366 {strides = array<i32>} : memref<144x512xf32, #tpu.memory_space<vmem>>, vector<8x256xf32>,
    %c0_342 = arith.constant 0 : index
    %c728 = arith.constant 728 : index
    %368 = vector.load %arg25[%c0_342, %c728] : memref<8x1056xf32, #tpu.memory_space<vmem>>, vector<8x256xf32>
    %369 = vector.broadcast %363 : vector<1x256xf32> to vector<8x256xf32>
    %370 = arith.mulf %368, %369 : vector<8x256xf32>
    %c56_343 = arith.constant 56 : index
    %c256_344 = arith.constant 256 : index
    %371 = vector.load %arg28[%c56_343, %c256_344] : memref<144x512xf32, #tpu.memory_space<vmem>>, vector<8x256xf32>
    tpu.vector_store %arg28[%c56_343, %c256_344], %370 {strides = array<i32>} : memref<144x512xf32, #tpu.memory_space<vmem>>, vector<8x256xf32>,
    %c8_345 = arith.constant 8 : index
    %c0_346 = arith.constant 0 : index
    %372 = vector.load %arg3[%c8_345, %c0_346] : memref<9x256xf32, #tpu.memory_space<vmem>>, vector<1x256xf32>
    %c0_347 = arith.constant 0 : index
    %c204 = arith.constant 204 : index
    %373 = vector.load %arg25[%c0_347, %c204] : memref<8x1056xf32, #tpu.memory_space<vmem>>, vector<8x256xf32>
    %374 = vector.broadcast %372 : vector<1x256xf32> to vector<8x256xf32>
    %375 = arith.mulf %373, %374 : vector<8x256xf32>
    %c64_348 = arith.constant 64 : index
    %c0_349 = arith.constant 0 : index
    %376 = vector.load %arg28[%c64_348, %c0_349] : memref<144x512xf32, #tpu.memory_space<vmem>>, vector<8x256xf32>
    tpu.vector_store %arg28[%c64_348, %c0_349], %375 {strides = array<i32>} : memref<144x512xf32, #tpu.memory_space<vmem>>, vector<8x256xf32>,
    %c0_350 = arith.constant 0 : index
    %c732 = arith.constant 732 : index
    %377 = vector.load %arg25[%c0_350, %c732] : memref<8x1056xf32, #tpu.memory_space<vmem>>, vector<8x256xf32>
    %378 = vector.broadcast %372 : vector<1x256xf32> to vector<8x256xf32>
    %379 = arith.mulf %377, %378 : vector<8x256xf32>
    %c64_351 = arith.constant 64 : index
    %c256_352 = arith.constant 256 : index
    %380 = vector.load %arg28[%c64_351, %c256_352] : memref<144x512xf32, #tpu.memory_space<vmem>>, vector<8x256xf32>
    tpu.vector_store %arg28[%c64_351, %c256_352], %379 {strides = array<i32>} : memref<144x512xf32, #tpu.memory_space<vmem>>, vector<8x256xf32>,
    %c0_353 = arith.constant 0 : index
    %c0_354 = arith.constant 0 : index
    %381 = vector.load %arg28[%c0_353, %c0_354] : memref<144x512xf32, #tpu.memory_space<vmem>>, vector<72x512xf32>
    %382 = arith.truncf %381 : vector<72x512xf32> to vector<72x512xbf16>
    %c0_355 = arith.constant 0 : index
    %c0_356 = arith.constant 0 : index
    %383 = vector.load %arg11[%c0_355, %c0_356] : memref<8x72xbf16, #tpu.memory_space<vmem>>, vector<8x72xbf16>
    %cst_357 = arith.constant dense<0.000000e+00> : vector<8x512xf32>
    %384 = tpu.matmul %383, %382, %cst_357 {dimension_numbers = #tpu.dot_dimension_numbers<[1], [0], [0], [1], [0, 0, 1, 1], [], []>} : vector<8x72xbf16>, vector<72x512xbf16>, vector<8x512xf32> -> vector<8x512xf32>
    %c0_358 = arith.constant 0 : index
    %c0_359 = arith.constant 0 : index
    %385 = vector.load %arg12[%c0_358, %c0_359] : memref<8x1xf32, #tpu.memory_space<vmem>>, vector<8x1xf32>
    %386 = vector.broadcast %385 : vector<8x1xf32> to vector<8x512xf32>
    %387 = arith.addf %384, %386 : vector<8x512xf32>
    %cst_360 = arith.constant 0.000000e+00 : f32
    %388 = vector.broadcast %cst_360 : f32 to vector<8x512xf32>
    %389 = arith.maximumf %387, %388 : vector<8x512xf32>
    %390 = vector.extract_strided_slice %389 {offsets = [0, 0], sizes = [8, 256], strides = [1, 1]} : vector<8x512xf32> to vector<8x256xf32>
    %c0_361 = arith.constant 0 : index
    %c136_362 = arith.constant 136 : index
    %391 = vector.load %arg26[%c0_361, %c136_362] : memref<8x1056xf32, #tpu.memory_space<vmem>>, vector<8x256xf32>
    tpu.vector_store %arg26[%c0_361, %c136_362], %390 {strides = array<i32>} : memref<8x1056xf32, #tpu.memory_space<vmem>>, vector<8x256xf32>,
    %392 = vector.extract_strided_slice %389 {offsets = [0, 256], sizes = [8, 256], strides = [1, 1]} : vector<8x512xf32> to vector<8x256xf32>
    %c0_363 = arith.constant 0 : index
    %c664_364 = arith.constant 664 : index
    %393 = vector.load %arg26[%c0_363, %c664_364] : memref<8x1056xf32, #tpu.memory_space<vmem>>, vector<8x256xf32>
    tpu.vector_store %arg26[%c0_363, %c664_364], %392 {strides = array<i32>} : memref<8x1056xf32, #tpu.memory_space<vmem>>, vector<8x256xf32>,
    %c0_365 = arith.constant 0 : index
    %c0_366 = arith.constant 0 : index
    %394 = vector.load %arg4[%c0_365, %c0_366] : memref<9x256xf32, #tpu.memory_space<vmem>>, vector<1x256xf32>
    %c0_367 = arith.constant 0 : index
    %c0_368 = arith.constant 0 : index
    %395 = vector.load %arg26[%c0_367, %c0_368] : memref<8x1056xf32, #tpu.memory_space<vmem>>, vector<8x256xf32>
    %396 = vector.broadcast %394 : vector<1x256xf32> to vector<8x256xf32>
    %397 = arith.mulf %395, %396 : vector<8x256xf32>
    %c0_369 = arith.constant 0 : index
    %c0_370 = arith.constant 0 : index
    %398 = vector.load %arg28[%c0_369, %c0_370] : memref<144x512xf32, #tpu.memory_space<vmem>>, vector<8x256xf32>
    tpu.vector_store %arg28[%c0_369, %c0_370], %397 {strides = array<i32>} : memref<144x512xf32, #tpu.memory_space<vmem>>, vector<8x256xf32>,
    %c0_371 = arith.constant 0 : index
    %c528 = arith.constant 528 : index
    %399 = vector.load %arg26[%c0_371, %c528] : memref<8x1056xf32, #tpu.memory_space<vmem>>, vector<8x256xf32>
    %400 = vector.broadcast %394 : vector<1x256xf32> to vector<8x256xf32>
    %401 = arith.mulf %399, %400 : vector<8x256xf32>
    %c0_372 = arith.constant 0 : index
    %c256_373 = arith.constant 256 : index
    %402 = vector.load %arg28[%c0_372, %c256_373] : memref<144x512xf32, #tpu.memory_space<vmem>>, vector<8x256xf32>
    tpu.vector_store %arg28[%c0_372, %c256_373], %401 {strides = array<i32>} : memref<144x512xf32, #tpu.memory_space<vmem>>, vector<8x256xf32>,
    %c1_374 = arith.constant 1 : index
    %c0_375 = arith.constant 0 : index
    %403 = vector.load %arg4[%c1_374, %c0_375] : memref<9x256xf32, #tpu.memory_space<vmem>>, vector<1x256xf32>
    %c0_376 = arith.constant 0 : index
    %c8_377 = arith.constant 8 : index
    %404 = vector.load %arg26[%c0_376, %c8_377] : memref<8x1056xf32, #tpu.memory_space<vmem>>, vector<8x256xf32>
    %405 = vector.broadcast %403 : vector<1x256xf32> to vector<8x256xf32>
    %406 = arith.mulf %404, %405 : vector<8x256xf32>
    %c8_378 = arith.constant 8 : index
    %c0_379 = arith.constant 0 : index
    %407 = vector.load %arg28[%c8_378, %c0_379] : memref<144x512xf32, #tpu.memory_space<vmem>>, vector<8x256xf32>
    tpu.vector_store %arg28[%c8_378, %c0_379], %406 {strides = array<i32>} : memref<144x512xf32, #tpu.memory_space<vmem>>, vector<8x256xf32>,
    %c0_380 = arith.constant 0 : index
    %c536 = arith.constant 536 : index
    %408 = vector.load %arg26[%c0_380, %c536] : memref<8x1056xf32, #tpu.memory_space<vmem>>, vector<8x256xf32>
    %409 = vector.broadcast %403 : vector<1x256xf32> to vector<8x256xf32>
    %410 = arith.mulf %408, %409 : vector<8x256xf32>
    %c8_381 = arith.constant 8 : index
    %c256_382 = arith.constant 256 : index
    %411 = vector.load %arg28[%c8_381, %c256_382] : memref<144x512xf32, #tpu.memory_space<vmem>>, vector<8x256xf32>
    tpu.vector_store %arg28[%c8_381, %c256_382], %410 {strides = array<i32>} : memref<144x512xf32, #tpu.memory_space<vmem>>, vector<8x256xf32>,
    %c2_383 = arith.constant 2 : index
    %c0_384 = arith.constant 0 : index
    %412 = vector.load %arg4[%c2_383, %c0_384] : memref<9x256xf32, #tpu.memory_space<vmem>>, vector<1x256xf32>
    %c0_385 = arith.constant 0 : index
    %c16_386 = arith.constant 16 : index
    %413 = vector.load %arg26[%c0_385, %c16_386] : memref<8x1056xf32, #tpu.memory_space<vmem>>, vector<8x256xf32>
    %414 = vector.broadcast %412 : vector<1x256xf32> to vector<8x256xf32>
    %415 = arith.mulf %413, %414 : vector<8x256xf32>
    %c16_387 = arith.constant 16 : index
    %c0_388 = arith.constant 0 : index
    %416 = vector.load %arg28[%c16_387, %c0_388] : memref<144x512xf32, #tpu.memory_space<vmem>>, vector<8x256xf32>
    tpu.vector_store %arg28[%c16_387, %c0_388], %415 {strides = array<i32>} : memref<144x512xf32, #tpu.memory_space<vmem>>, vector<8x256xf32>,
    %c0_389 = arith.constant 0 : index
    %c544 = arith.constant 544 : index
    %417 = vector.load %arg26[%c0_389, %c544] : memref<8x1056xf32, #tpu.memory_space<vmem>>, vector<8x256xf32>
    %418 = vector.broadcast %412 : vector<1x256xf32> to vector<8x256xf32>
    %419 = arith.mulf %417, %418 : vector<8x256xf32>
    %c16_390 = arith.constant 16 : index
    %c256_391 = arith.constant 256 : index
    %420 = vector.load %arg28[%c16_390, %c256_391] : memref<144x512xf32, #tpu.memory_space<vmem>>, vector<8x256xf32>
    tpu.vector_store %arg28[%c16_390, %c256_391], %419 {strides = array<i32>} : memref<144x512xf32, #tpu.memory_space<vmem>>, vector<8x256xf32>,
    %c3_392 = arith.constant 3 : index
    %c0_393 = arith.constant 0 : index
    %421 = vector.load %arg4[%c3_392, %c0_393] : memref<9x256xf32, #tpu.memory_space<vmem>>, vector<1x256xf32>
    %c0_394 = arith.constant 0 : index
    %c128 = arith.constant 128 : index
    %422 = vector.load %arg26[%c0_394, %c128] : memref<8x1056xf32, #tpu.memory_space<vmem>>, vector<8x256xf32>
    %423 = vector.broadcast %421 : vector<1x256xf32> to vector<8x256xf32>
    %424 = arith.mulf %422, %423 : vector<8x256xf32>
    %c24_395 = arith.constant 24 : index
    %c0_396 = arith.constant 0 : index
    %425 = vector.load %arg28[%c24_395, %c0_396] : memref<144x512xf32, #tpu.memory_space<vmem>>, vector<8x256xf32>
    tpu.vector_store %arg28[%c24_395, %c0_396], %424 {strides = array<i32>} : memref<144x512xf32, #tpu.memory_space<vmem>>, vector<8x256xf32>,
    %c0_397 = arith.constant 0 : index
    %c656 = arith.constant 656 : index
    %426 = vector.load %arg26[%c0_397, %c656] : memref<8x1056xf32, #tpu.memory_space<vmem>>, vector<8x256xf32>
    %427 = vector.broadcast %421 : vector<1x256xf32> to vector<8x256xf32>
    %428 = arith.mulf %426, %427 : vector<8x256xf32>
    %c24_398 = arith.constant 24 : index
    %c256_399 = arith.constant 256 : index
    %429 = vector.load %arg28[%c24_398, %c256_399] : memref<144x512xf32, #tpu.memory_space<vmem>>, vector<8x256xf32>
    tpu.vector_store %arg28[%c24_398, %c256_399], %428 {strides = array<i32>} : memref<144x512xf32, #tpu.memory_space<vmem>>, vector<8x256xf32>,
    %c4_400 = arith.constant 4 : index
    %c0_401 = arith.constant 0 : index
    %430 = vector.load %arg4[%c4_400, %c0_401] : memref<9x256xf32, #tpu.memory_space<vmem>>, vector<1x256xf32>
    %c0_402 = arith.constant 0 : index
    %c136_403 = arith.constant 136 : index
    %431 = vector.load %arg26[%c0_402, %c136_403] : memref<8x1056xf32, #tpu.memory_space<vmem>>, vector<8x256xf32>
    %432 = vector.broadcast %430 : vector<1x256xf32> to vector<8x256xf32>
    %433 = arith.mulf %431, %432 : vector<8x256xf32>
    %c32_404 = arith.constant 32 : index
    %c0_405 = arith.constant 0 : index
    %434 = vector.load %arg28[%c32_404, %c0_405] : memref<144x512xf32, #tpu.memory_space<vmem>>, vector<8x256xf32>
    tpu.vector_store %arg28[%c32_404, %c0_405], %433 {strides = array<i32>} : memref<144x512xf32, #tpu.memory_space<vmem>>, vector<8x256xf32>,
    %c0_406 = arith.constant 0 : index
    %c664_407 = arith.constant 664 : index
    %435 = vector.load %arg26[%c0_406, %c664_407] : memref<8x1056xf32, #tpu.memory_space<vmem>>, vector<8x256xf32>
    %436 = vector.broadcast %430 : vector<1x256xf32> to vector<8x256xf32>
    %437 = arith.mulf %435, %436 : vector<8x256xf32>
    %c32_408 = arith.constant 32 : index
    %c256_409 = arith.constant 256 : index
    %438 = vector.load %arg28[%c32_408, %c256_409] : memref<144x512xf32, #tpu.memory_space<vmem>>, vector<8x256xf32>
    tpu.vector_store %arg28[%c32_408, %c256_409], %437 {strides = array<i32>} : memref<144x512xf32, #tpu.memory_space<vmem>>, vector<8x256xf32>,
    %c5_410 = arith.constant 5 : index
    %c0_411 = arith.constant 0 : index
    %439 = vector.load %arg4[%c5_410, %c0_411] : memref<9x256xf32, #tpu.memory_space<vmem>>, vector<1x256xf32>
    %c0_412 = arith.constant 0 : index
    %c144 = arith.constant 144 : index
    %440 = vector.load %arg26[%c0_412, %c144] : memref<8x1056xf32, #tpu.memory_space<vmem>>, vector<8x256xf32>
    %441 = vector.broadcast %439 : vector<1x256xf32> to vector<8x256xf32>
    %442 = arith.mulf %440, %441 : vector<8x256xf32>
    %c40_413 = arith.constant 40 : index
    %c0_414 = arith.constant 0 : index
    %443 = vector.load %arg28[%c40_413, %c0_414] : memref<144x512xf32, #tpu.memory_space<vmem>>, vector<8x256xf32>
    tpu.vector_store %arg28[%c40_413, %c0_414], %442 {strides = array<i32>} : memref<144x512xf32, #tpu.memory_space<vmem>>, vector<8x256xf32>,
    %c0_415 = arith.constant 0 : index
    %c672 = arith.constant 672 : index
    %444 = vector.load %arg26[%c0_415, %c672] : memref<8x1056xf32, #tpu.memory_space<vmem>>, vector<8x256xf32>
    %445 = vector.broadcast %439 : vector<1x256xf32> to vector<8x256xf32>
    %446 = arith.mulf %444, %445 : vector<8x256xf32>
    %c40_416 = arith.constant 40 : index
    %c256_417 = arith.constant 256 : index
    %447 = vector.load %arg28[%c40_416, %c256_417] : memref<144x512xf32, #tpu.memory_space<vmem>>, vector<8x256xf32>
    tpu.vector_store %arg28[%c40_416, %c256_417], %446 {strides = array<i32>} : memref<144x512xf32, #tpu.memory_space<vmem>>, vector<8x256xf32>,
    %c6_418 = arith.constant 6 : index
    %c0_419 = arith.constant 0 : index
    %448 = vector.load %arg4[%c6_418, %c0_419] : memref<9x256xf32, #tpu.memory_space<vmem>>, vector<1x256xf32>
    %c0_420 = arith.constant 0 : index
    %c256_421 = arith.constant 256 : index
    %449 = vector.load %arg26[%c0_420, %c256_421] : memref<8x1056xf32, #tpu.memory_space<vmem>>, vector<8x256xf32>
    %450 = vector.broadcast %448 : vector<1x256xf32> to vector<8x256xf32>
    %451 = arith.mulf %449, %450 : vector<8x256xf32>
    %c48_422 = arith.constant 48 : index
    %c0_423 = arith.constant 0 : index
    %452 = vector.load %arg28[%c48_422, %c0_423] : memref<144x512xf32, #tpu.memory_space<vmem>>, vector<8x256xf32>
    tpu.vector_store %arg28[%c48_422, %c0_423], %451 {strides = array<i32>} : memref<144x512xf32, #tpu.memory_space<vmem>>, vector<8x256xf32>,
    %c0_424 = arith.constant 0 : index
    %c784 = arith.constant 784 : index
    %453 = vector.load %arg26[%c0_424, %c784] : memref<8x1056xf32, #tpu.memory_space<vmem>>, vector<8x256xf32>
    %454 = vector.broadcast %448 : vector<1x256xf32> to vector<8x256xf32>
    %455 = arith.mulf %453, %454 : vector<8x256xf32>
    %c48_425 = arith.constant 48 : index
    %c256_426 = arith.constant 256 : index
    %456 = vector.load %arg28[%c48_425, %c256_426] : memref<144x512xf32, #tpu.memory_space<vmem>>, vector<8x256xf32>
    tpu.vector_store %arg28[%c48_425, %c256_426], %455 {strides = array<i32>} : memref<144x512xf32, #tpu.memory_space<vmem>>, vector<8x256xf32>,
    %c7_427 = arith.constant 7 : index
    %c0_428 = arith.constant 0 : index
    %457 = vector.load %arg4[%c7_427, %c0_428] : memref<9x256xf32, #tpu.memory_space<vmem>>, vector<1x256xf32>
    %c0_429 = arith.constant 0 : index
    %c264 = arith.constant 264 : index
    %458 = vector.load %arg26[%c0_429, %c264] : memref<8x1056xf32, #tpu.memory_space<vmem>>, vector<8x256xf32>
    %459 = vector.broadcast %457 : vector<1x256xf32> to vector<8x256xf32>
    %460 = arith.mulf %458, %459 : vector<8x256xf32>
    %c56_430 = arith.constant 56 : index
    %c0_431 = arith.constant 0 : index
    %461 = vector.load %arg28[%c56_430, %c0_431] : memref<144x512xf32, #tpu.memory_space<vmem>>, vector<8x256xf32>
    tpu.vector_store %arg28[%c56_430, %c0_431], %460 {strides = array<i32>} : memref<144x512xf32, #tpu.memory_space<vmem>>, vector<8x256xf32>,
    %c0_432 = arith.constant 0 : index
    %c792 = arith.constant 792 : index
    %462 = vector.load %arg26[%c0_432, %c792] : memref<8x1056xf32, #tpu.memory_space<vmem>>, vector<8x256xf32>
    %463 = vector.broadcast %457 : vector<1x256xf32> to vector<8x256xf32>
    %464 = arith.mulf %462, %463 : vector<8x256xf32>
    %c56_433 = arith.constant 56 : index
    %c256_434 = arith.constant 256 : index
    %465 = vector.load %arg28[%c56_433, %c256_434] : memref<144x512xf32, #tpu.memory_space<vmem>>, vector<8x256xf32>
    tpu.vector_store %arg28[%c56_433, %c256_434], %464 {strides = array<i32>} : memref<144x512xf32, #tpu.memory_space<vmem>>, vector<8x256xf32>,
    %c8_435 = arith.constant 8 : index
    %c0_436 = arith.constant 0 : index
    %466 = vector.load %arg4[%c8_435, %c0_436] : memref<9x256xf32, #tpu.memory_space<vmem>>, vector<1x256xf32>
    %c0_437 = arith.constant 0 : index
    %c272 = arith.constant 272 : index
    %467 = vector.load %arg26[%c0_437, %c272] : memref<8x1056xf32, #tpu.memory_space<vmem>>, vector<8x256xf32>
    %468 = vector.broadcast %466 : vector<1x256xf32> to vector<8x256xf32>
    %469 = arith.mulf %467, %468 : vector<8x256xf32>
    %c64_438 = arith.constant 64 : index
    %c0_439 = arith.constant 0 : index
    %470 = vector.load %arg28[%c64_438, %c0_439] : memref<144x512xf32, #tpu.memory_space<vmem>>, vector<8x256xf32>
    tpu.vector_store %arg28[%c64_438, %c0_439], %469 {strides = array<i32>} : memref<144x512xf32, #tpu.memory_space<vmem>>, vector<8x256xf32>,
    %c0_440 = arith.constant 0 : index
    %c800 = arith.constant 800 : index
    %471 = vector.load %arg26[%c0_440, %c800] : memref<8x1056xf32, #tpu.memory_space<vmem>>, vector<8x256xf32>
    %472 = vector.broadcast %466 : vector<1x256xf32> to vector<8x256xf32>
    %473 = arith.mulf %471, %472 : vector<8x256xf32>
    %c64_441 = arith.constant 64 : index
    %c256_442 = arith.constant 256 : index
    %474 = vector.load %arg28[%c64_441, %c256_442] : memref<144x512xf32, #tpu.memory_space<vmem>>, vector<8x256xf32>
    tpu.vector_store %arg28[%c64_441, %c256_442], %473 {strides = array<i32>} : memref<144x512xf32, #tpu.memory_space<vmem>>, vector<8x256xf32>,
    %c0_443 = arith.constant 0 : index
    %c0_444 = arith.constant 0 : index
    %475 = vector.load %arg28[%c0_443, %c0_444] : memref<144x512xf32, #tpu.memory_space<vmem>>, vector<72x512xf32>
    %476 = arith.truncf %475 : vector<72x512xf32> to vector<72x512xbf16>
    %c0_445 = arith.constant 0 : index
    %c0_446 = arith.constant 0 : index
    %477 = vector.load %arg13[%c0_445, %c0_446] : memref<8x72xbf16, #tpu.memory_space<vmem>>, vector<8x72xbf16>
    %cst_447 = arith.constant dense<0.000000e+00> : vector<8x512xf32>
    %478 = tpu.matmul %477, %476, %cst_447 {dimension_numbers = #tpu.dot_dimension_numbers<[1], [0], [0], [1], [0, 0, 1, 1], [], []>} : vector<8x72xbf16>, vector<72x512xbf16>, vector<8x512xf32> -> vector<8x512xf32>
    %c0_448 = arith.constant 0 : index
    %c0_449 = arith.constant 0 : index
    %479 = vector.load %arg14[%c0_448, %c0_449] : memref<8x1xf32, #tpu.memory_space<vmem>>, vector<8x1xf32>
    %480 = vector.broadcast %479 : vector<8x1xf32> to vector<8x512xf32>
    %481 = arith.addf %478, %480 : vector<8x512xf32>
    %cst_450 = arith.constant 0.000000e+00 : f32
    %482 = vector.broadcast %cst_450 : f32 to vector<8x512xf32>
    %483 = arith.maximumf %481, %482 : vector<8x512xf32>
    %484 = vector.extract_strided_slice %483 {offsets = [0, 0], sizes = [8, 256], strides = [1, 1]} : vector<8x512xf32> to vector<8x256xf32>
    %c0_451 = arith.constant 0 : index
    %c136_452 = arith.constant 136 : index
    %485 = vector.load %arg27[%c0_451, %c136_452] : memref<8x1056xf32, #tpu.memory_space<vmem>>, vector<8x256xf32>
    tpu.vector_store %arg27[%c0_451, %c136_452], %484 {strides = array<i32>} : memref<8x1056xf32, #tpu.memory_space<vmem>>, vector<8x256xf32>,
    %486 = vector.extract_strided_slice %483 {offsets = [0, 256], sizes = [8, 256], strides = [1, 1]} : vector<8x512xf32> to vector<8x256xf32>
    %c0_453 = arith.constant 0 : index
    %c664_454 = arith.constant 664 : index
    %487 = vector.load %arg27[%c0_453, %c664_454] : memref<8x1056xf32, #tpu.memory_space<vmem>>, vector<8x256xf32>
    tpu.vector_store %arg27[%c0_453, %c664_454], %486 {strides = array<i32>} : memref<8x1056xf32, #tpu.memory_space<vmem>>, vector<8x256xf32>,
    %c0_455 = arith.constant 0 : index
    %c0_456 = arith.constant 0 : index
    %488 = vector.load %arg3[%c0_455, %c0_456] : memref<9x256xf32, #tpu.memory_space<vmem>>, vector<1x256xf32>
    %c0_457 = arith.constant 0 : index
    %c68_458 = arith.constant 68 : index
    %489 = vector.load %arg26[%c0_457, %c68_458] : memref<8x1056xf32, #tpu.memory_space<vmem>>, vector<8x256xf32>
    %490 = vector.broadcast %488 : vector<1x256xf32> to vector<8x256xf32>
    %491 = arith.mulf %489, %490 : vector<8x256xf32>
    %c0_459 = arith.constant 0 : index
    %c0_460 = arith.constant 0 : index
    %492 = vector.load %arg28[%c0_459, %c0_460] : memref<144x512xf32, #tpu.memory_space<vmem>>, vector<8x256xf32>
    tpu.vector_store %arg28[%c0_459, %c0_460], %491 {strides = array<i32>} : memref<144x512xf32, #tpu.memory_space<vmem>>, vector<8x256xf32>,
    %c0_461 = arith.constant 0 : index
    %c596_462 = arith.constant 596 : index
    %493 = vector.load %arg26[%c0_461, %c596_462] : memref<8x1056xf32, #tpu.memory_space<vmem>>, vector<8x256xf32>
    %494 = vector.broadcast %488 : vector<1x256xf32> to vector<8x256xf32>
    %495 = arith.mulf %493, %494 : vector<8x256xf32>
    %c0_463 = arith.constant 0 : index
    %c256_464 = arith.constant 256 : index
    %496 = vector.load %arg28[%c0_463, %c256_464] : memref<144x512xf32, #tpu.memory_space<vmem>>, vector<8x256xf32>
    tpu.vector_store %arg28[%c0_463, %c256_464], %495 {strides = array<i32>} : memref<144x512xf32, #tpu.memory_space<vmem>>, vector<8x256xf32>,
    %c0_465 = arith.constant 0 : index
    %c68_466 = arith.constant 68 : index
    %497 = vector.load %arg27[%c0_465, %c68_466] : memref<8x1056xf32, #tpu.memory_space<vmem>>, vector<8x256xf32>
    %498 = vector.broadcast %488 : vector<1x256xf32> to vector<8x256xf32>
    %499 = arith.mulf %497, %498 : vector<8x256xf32>
    %c8_467 = arith.constant 8 : index
    %c0_468 = arith.constant 0 : index
    %500 = vector.load %arg28[%c8_467, %c0_468] : memref<144x512xf32, #tpu.memory_space<vmem>>, vector<8x256xf32>
    tpu.vector_store %arg28[%c8_467, %c0_468], %499 {strides = array<i32>} : memref<144x512xf32, #tpu.memory_space<vmem>>, vector<8x256xf32>,
    %c0_469 = arith.constant 0 : index
    %c596_470 = arith.constant 596 : index
    %501 = vector.load %arg27[%c0_469, %c596_470] : memref<8x1056xf32, #tpu.memory_space<vmem>>, vector<8x256xf32>
    %502 = vector.broadcast %488 : vector<1x256xf32> to vector<8x256xf32>
    %503 = arith.mulf %501, %502 : vector<8x256xf32>
    %c8_471 = arith.constant 8 : index
    %c256_472 = arith.constant 256 : index
    %504 = vector.load %arg28[%c8_471, %c256_472] : memref<144x512xf32, #tpu.memory_space<vmem>>, vector<8x256xf32>
    tpu.vector_store %arg28[%c8_471, %c256_472], %503 {strides = array<i32>} : memref<144x512xf32, #tpu.memory_space<vmem>>, vector<8x256xf32>,
    %c1_473 = arith.constant 1 : index
    %c0_474 = arith.constant 0 : index
    %505 = vector.load %arg3[%c1_473, %c0_474] : memref<9x256xf32, #tpu.memory_space<vmem>>, vector<1x256xf32>
    %c0_475 = arith.constant 0 : index
    %c72_476 = arith.constant 72 : index
    %506 = vector.load %arg26[%c0_475, %c72_476] : memref<8x1056xf32, #tpu.memory_space<vmem>>, vector<8x256xf32>
    %507 = vector.broadcast %505 : vector<1x256xf32> to vector<8x256xf32>
    %508 = arith.mulf %506, %507 : vector<8x256xf32>
    %c16_477 = arith.constant 16 : index
    %c0_478 = arith.constant 0 : index
    %509 = vector.load %arg28[%c16_477, %c0_478] : memref<144x512xf32, #tpu.memory_space<vmem>>, vector<8x256xf32>
    tpu.vector_store %arg28[%c16_477, %c0_478], %508 {strides = array<i32>} : memref<144x512xf32, #tpu.memory_space<vmem>>, vector<8x256xf32>,
    %c0_479 = arith.constant 0 : index
    %c600_480 = arith.constant 600 : index
    %510 = vector.load %arg26[%c0_479, %c600_480] : memref<8x1056xf32, #tpu.memory_space<vmem>>, vector<8x256xf32>
    %511 = vector.broadcast %505 : vector<1x256xf32> to vector<8x256xf32>
    %512 = arith.mulf %510, %511 : vector<8x256xf32>
    %c16_481 = arith.constant 16 : index
    %c256_482 = arith.constant 256 : index
    %513 = vector.load %arg28[%c16_481, %c256_482] : memref<144x512xf32, #tpu.memory_space<vmem>>, vector<8x256xf32>
    tpu.vector_store %arg28[%c16_481, %c256_482], %512 {strides = array<i32>} : memref<144x512xf32, #tpu.memory_space<vmem>>, vector<8x256xf32>,
    %c0_483 = arith.constant 0 : index
    %c72_484 = arith.constant 72 : index
    %514 = vector.load %arg27[%c0_483, %c72_484] : memref<8x1056xf32, #tpu.memory_space<vmem>>, vector<8x256xf32>
    %515 = vector.broadcast %505 : vector<1x256xf32> to vector<8x256xf32>
    %516 = arith.mulf %514, %515 : vector<8x256xf32>
    %c24_485 = arith.constant 24 : index
    %c0_486 = arith.constant 0 : index
    %517 = vector.load %arg28[%c24_485, %c0_486] : memref<144x512xf32, #tpu.memory_space<vmem>>, vector<8x256xf32>
    tpu.vector_store %arg28[%c24_485, %c0_486], %516 {strides = array<i32>} : memref<144x512xf32, #tpu.memory_space<vmem>>, vector<8x256xf32>,
    %c0_487 = arith.constant 0 : index
    %c600_488 = arith.constant 600 : index
    %518 = vector.load %arg27[%c0_487, %c600_488] : memref<8x1056xf32, #tpu.memory_space<vmem>>, vector<8x256xf32>
    %519 = vector.broadcast %505 : vector<1x256xf32> to vector<8x256xf32>
    %520 = arith.mulf %518, %519 : vector<8x256xf32>
    %c24_489 = arith.constant 24 : index
    %c256_490 = arith.constant 256 : index
    %521 = vector.load %arg28[%c24_489, %c256_490] : memref<144x512xf32, #tpu.memory_space<vmem>>, vector<8x256xf32>
    tpu.vector_store %arg28[%c24_489, %c256_490], %520 {strides = array<i32>} : memref<144x512xf32, #tpu.memory_space<vmem>>, vector<8x256xf32>,
    %c2_491 = arith.constant 2 : index
    %c0_492 = arith.constant 0 : index
    %522 = vector.load %arg3[%c2_491, %c0_492] : memref<9x256xf32, #tpu.memory_space<vmem>>, vector<1x256xf32>
    %c0_493 = arith.constant 0 : index
    %c76_494 = arith.constant 76 : index
    %523 = vector.load %arg26[%c0_493, %c76_494] : memref<8x1056xf32, #tpu.memory_space<vmem>>, vector<8x256xf32>
    %524 = vector.broadcast %522 : vector<1x256xf32> to vector<8x256xf32>
    %525 = arith.mulf %523, %524 : vector<8x256xf32>
    %c32_495 = arith.constant 32 : index
    %c0_496 = arith.constant 0 : index
    %526 = vector.load %arg28[%c32_495, %c0_496] : memref<144x512xf32, #tpu.memory_space<vmem>>, vector<8x256xf32>
    tpu.vector_store %arg28[%c32_495, %c0_496], %525 {strides = array<i32>} : memref<144x512xf32, #tpu.memory_space<vmem>>, vector<8x256xf32>,
    %c0_497 = arith.constant 0 : index
    %c604_498 = arith.constant 604 : index
    %527 = vector.load %arg26[%c0_497, %c604_498] : memref<8x1056xf32, #tpu.memory_space<vmem>>, vector<8x256xf32>
    %528 = vector.broadcast %522 : vector<1x256xf32> to vector<8x256xf32>
    %529 = arith.mulf %527, %528 : vector<8x256xf32>
    %c32_499 = arith.constant 32 : index
    %c256_500 = arith.constant 256 : index
    %530 = vector.load %arg28[%c32_499, %c256_500] : memref<144x512xf32, #tpu.memory_space<vmem>>, vector<8x256xf32>
    tpu.vector_store %arg28[%c32_499, %c256_500], %529 {strides = array<i32>} : memref<144x512xf32, #tpu.memory_space<vmem>>, vector<8x256xf32>,
    %c0_501 = arith.constant 0 : index
    %c76_502 = arith.constant 76 : index
    %531 = vector.load %arg27[%c0_501, %c76_502] : memref<8x1056xf32, #tpu.memory_space<vmem>>, vector<8x256xf32>
    %532 = vector.broadcast %522 : vector<1x256xf32> to vector<8x256xf32>
    %533 = arith.mulf %531, %532 : vector<8x256xf32>
    %c40_503 = arith.constant 40 : index
    %c0_504 = arith.constant 0 : index
    %534 = vector.load %arg28[%c40_503, %c0_504] : memref<144x512xf32, #tpu.memory_space<vmem>>, vector<8x256xf32>
    tpu.vector_store %arg28[%c40_503, %c0_504], %533 {strides = array<i32>} : memref<144x512xf32, #tpu.memory_space<vmem>>, vector<8x256xf32>,
    %c0_505 = arith.constant 0 : index
    %c604_506 = arith.constant 604 : index
    %535 = vector.load %arg27[%c0_505, %c604_506] : memref<8x1056xf32, #tpu.memory_space<vmem>>, vector<8x256xf32>
    %536 = vector.broadcast %522 : vector<1x256xf32> to vector<8x256xf32>
    %537 = arith.mulf %535, %536 : vector<8x256xf32>
    %c40_507 = arith.constant 40 : index
    %c256_508 = arith.constant 256 : index
    %538 = vector.load %arg28[%c40_507, %c256_508] : memref<144x512xf32, #tpu.memory_space<vmem>>, vector<8x256xf32>
    tpu.vector_store %arg28[%c40_507, %c256_508], %537 {strides = array<i32>} : memref<144x512xf32, #tpu.memory_space<vmem>>, vector<8x256xf32>,
    %c3_509 = arith.constant 3 : index
    %c0_510 = arith.constant 0 : index
    %539 = vector.load %arg3[%c3_509, %c0_510] : memref<9x256xf32, #tpu.memory_space<vmem>>, vector<1x256xf32>
    %c0_511 = arith.constant 0 : index
    %c132_512 = arith.constant 132 : index
    %540 = vector.load %arg26[%c0_511, %c132_512] : memref<8x1056xf32, #tpu.memory_space<vmem>>, vector<8x256xf32>
    %541 = vector.broadcast %539 : vector<1x256xf32> to vector<8x256xf32>
    %542 = arith.mulf %540, %541 : vector<8x256xf32>
    %c48_513 = arith.constant 48 : index
    %c0_514 = arith.constant 0 : index
    %543 = vector.load %arg28[%c48_513, %c0_514] : memref<144x512xf32, #tpu.memory_space<vmem>>, vector<8x256xf32>
    tpu.vector_store %arg28[%c48_513, %c0_514], %542 {strides = array<i32>} : memref<144x512xf32, #tpu.memory_space<vmem>>, vector<8x256xf32>,
    %c0_515 = arith.constant 0 : index
    %c660_516 = arith.constant 660 : index
    %544 = vector.load %arg26[%c0_515, %c660_516] : memref<8x1056xf32, #tpu.memory_space<vmem>>, vector<8x256xf32>
    %545 = vector.broadcast %539 : vector<1x256xf32> to vector<8x256xf32>
    %546 = arith.mulf %544, %545 : vector<8x256xf32>
    %c48_517 = arith.constant 48 : index
    %c256_518 = arith.constant 256 : index
    %547 = vector.load %arg28[%c48_517, %c256_518] : memref<144x512xf32, #tpu.memory_space<vmem>>, vector<8x256xf32>
    tpu.vector_store %arg28[%c48_517, %c256_518], %546 {strides = array<i32>} : memref<144x512xf32, #tpu.memory_space<vmem>>, vector<8x256xf32>,
    %c0_519 = arith.constant 0 : index
    %c132_520 = arith.constant 132 : index
    %548 = vector.load %arg27[%c0_519, %c132_520] : memref<8x1056xf32, #tpu.memory_space<vmem>>, vector<8x256xf32>
    %549 = vector.broadcast %539 : vector<1x256xf32> to vector<8x256xf32>
    %550 = arith.mulf %548, %549 : vector<8x256xf32>
    %c56_521 = arith.constant 56 : index
    %c0_522 = arith.constant 0 : index
    %551 = vector.load %arg28[%c56_521, %c0_522] : memref<144x512xf32, #tpu.memory_space<vmem>>, vector<8x256xf32>
    tpu.vector_store %arg28[%c56_521, %c0_522], %550 {strides = array<i32>} : memref<144x512xf32, #tpu.memory_space<vmem>>, vector<8x256xf32>,
    %c0_523 = arith.constant 0 : index
    %c660_524 = arith.constant 660 : index
    %552 = vector.load %arg27[%c0_523, %c660_524] : memref<8x1056xf32, #tpu.memory_space<vmem>>, vector<8x256xf32>
    %553 = vector.broadcast %539 : vector<1x256xf32> to vector<8x256xf32>
    %554 = arith.mulf %552, %553 : vector<8x256xf32>
    %c56_525 = arith.constant 56 : index
    %c256_526 = arith.constant 256 : index
    %555 = vector.load %arg28[%c56_525, %c256_526] : memref<144x512xf32, #tpu.memory_space<vmem>>, vector<8x256xf32>
    tpu.vector_store %arg28[%c56_525, %c256_526], %554 {strides = array<i32>} : memref<144x512xf32, #tpu.memory_space<vmem>>, vector<8x256xf32>,
    %c4_527 = arith.constant 4 : index
    %c0_528 = arith.constant 0 : index
    %556 = vector.load %arg3[%c4_527, %c0_528] : memref<9x256xf32, #tpu.memory_space<vmem>>, vector<1x256xf32>
    %c0_529 = arith.constant 0 : index
    %c136_530 = arith.constant 136 : index
    %557 = vector.load %arg26[%c0_529, %c136_530] : memref<8x1056xf32, #tpu.memory_space<vmem>>, vector<8x256xf32>
    %558 = vector.broadcast %556 : vector<1x256xf32> to vector<8x256xf32>
    %559 = arith.mulf %557, %558 : vector<8x256xf32>
    %c64_531 = arith.constant 64 : index
    %c0_532 = arith.constant 0 : index
    %560 = vector.load %arg28[%c64_531, %c0_532] : memref<144x512xf32, #tpu.memory_space<vmem>>, vector<8x256xf32>
    tpu.vector_store %arg28[%c64_531, %c0_532], %559 {strides = array<i32>} : memref<144x512xf32, #tpu.memory_space<vmem>>, vector<8x256xf32>,
    %c0_533 = arith.constant 0 : index
    %c664_534 = arith.constant 664 : index
    %561 = vector.load %arg26[%c0_533, %c664_534] : memref<8x1056xf32, #tpu.memory_space<vmem>>, vector<8x256xf32>
    %562 = vector.broadcast %556 : vector<1x256xf32> to vector<8x256xf32>
    %563 = arith.mulf %561, %562 : vector<8x256xf32>
    %c64_535 = arith.constant 64 : index
    %c256_536 = arith.constant 256 : index
    %564 = vector.load %arg28[%c64_535, %c256_536] : memref<144x512xf32, #tpu.memory_space<vmem>>, vector<8x256xf32>
    tpu.vector_store %arg28[%c64_535, %c256_536], %563 {strides = array<i32>} : memref<144x512xf32, #tpu.memory_space<vmem>>, vector<8x256xf32>,
    %c0_537 = arith.constant 0 : index
    %c136_538 = arith.constant 136 : index
    %565 = vector.load %arg27[%c0_537, %c136_538] : memref<8x1056xf32, #tpu.memory_space<vmem>>, vector<8x256xf32>
    %566 = vector.broadcast %556 : vector<1x256xf32> to vector<8x256xf32>
    %567 = arith.mulf %565, %566 : vector<8x256xf32>
    %c72_539 = arith.constant 72 : index
    %c0_540 = arith.constant 0 : index
    %568 = vector.load %arg28[%c72_539, %c0_540] : memref<144x512xf32, #tpu.memory_space<vmem>>, vector<8x256xf32>
    tpu.vector_store %arg28[%c72_539, %c0_540], %567 {strides = array<i32>} : memref<144x512xf32, #tpu.memory_space<vmem>>, vector<8x256xf32>,
    %c0_541 = arith.constant 0 : index
    %c664_542 = arith.constant 664 : index
    %569 = vector.load %arg27[%c0_541, %c664_542] : memref<8x1056xf32, #tpu.memory_space<vmem>>, vector<8x256xf32>
    %570 = vector.broadcast %556 : vector<1x256xf32> to vector<8x256xf32>
    %571 = arith.mulf %569, %570 : vector<8x256xf32>
    %c72_543 = arith.constant 72 : index
    %c256_544 = arith.constant 256 : index
    %572 = vector.load %arg28[%c72_543, %c256_544] : memref<144x512xf32, #tpu.memory_space<vmem>>, vector<8x256xf32>
    tpu.vector_store %arg28[%c72_543, %c256_544], %571 {strides = array<i32>} : memref<144x512xf32, #tpu.memory_space<vmem>>, vector<8x256xf32>,
    %c5_545 = arith.constant 5 : index
    %c0_546 = arith.constant 0 : index
    %573 = vector.load %arg3[%c5_545, %c0_546] : memref<9x256xf32, #tpu.memory_space<vmem>>, vector<1x256xf32>
    %c0_547 = arith.constant 0 : index
    %c140_548 = arith.constant 140 : index
    %574 = vector.load %arg26[%c0_547, %c140_548] : memref<8x1056xf32, #tpu.memory_space<vmem>>, vector<8x256xf32>
    %575 = vector.broadcast %573 : vector<1x256xf32> to vector<8x256xf32>
    %576 = arith.mulf %574, %575 : vector<8x256xf32>
    %c80 = arith.constant 80 : index
    %c0_549 = arith.constant 0 : index
    %577 = vector.load %arg28[%c80, %c0_549] : memref<144x512xf32, #tpu.memory_space<vmem>>, vector<8x256xf32>
    tpu.vector_store %arg28[%c80, %c0_549], %576 {strides = array<i32>} : memref<144x512xf32, #tpu.memory_space<vmem>>, vector<8x256xf32>,
    %c0_550 = arith.constant 0 : index
    %c668_551 = arith.constant 668 : index
    %578 = vector.load %arg26[%c0_550, %c668_551] : memref<8x1056xf32, #tpu.memory_space<vmem>>, vector<8x256xf32>
    %579 = vector.broadcast %573 : vector<1x256xf32> to vector<8x256xf32>
    %580 = arith.mulf %578, %579 : vector<8x256xf32>
    %c80_552 = arith.constant 80 : index
    %c256_553 = arith.constant 256 : index
    %581 = vector.load %arg28[%c80_552, %c256_553] : memref<144x512xf32, #tpu.memory_space<vmem>>, vector<8x256xf32>
    tpu.vector_store %arg28[%c80_552, %c256_553], %580 {strides = array<i32>} : memref<144x512xf32, #tpu.memory_space<vmem>>, vector<8x256xf32>,
    %c0_554 = arith.constant 0 : index
    %c140_555 = arith.constant 140 : index
    %582 = vector.load %arg27[%c0_554, %c140_555] : memref<8x1056xf32, #tpu.memory_space<vmem>>, vector<8x256xf32>
    %583 = vector.broadcast %573 : vector<1x256xf32> to vector<8x256xf32>
    %584 = arith.mulf %582, %583 : vector<8x256xf32>
    %c88 = arith.constant 88 : index
    %c0_556 = arith.constant 0 : index
    %585 = vector.load %arg28[%c88, %c0_556] : memref<144x512xf32, #tpu.memory_space<vmem>>, vector<8x256xf32>
    tpu.vector_store %arg28[%c88, %c0_556], %584 {strides = array<i32>} : memref<144x512xf32, #tpu.memory_space<vmem>>, vector<8x256xf32>,
    %c0_557 = arith.constant 0 : index
    %c668_558 = arith.constant 668 : index
    %586 = vector.load %arg27[%c0_557, %c668_558] : memref<8x1056xf32, #tpu.memory_space<vmem>>, vector<8x256xf32>
    %587 = vector.broadcast %573 : vector<1x256xf32> to vector<8x256xf32>
    %588 = arith.mulf %586, %587 : vector<8x256xf32>
    %c88_559 = arith.constant 88 : index
    %c256_560 = arith.constant 256 : index
    %589 = vector.load %arg28[%c88_559, %c256_560] : memref<144x512xf32, #tpu.memory_space<vmem>>, vector<8x256xf32>
    tpu.vector_store %arg28[%c88_559, %c256_560], %588 {strides = array<i32>} : memref<144x512xf32, #tpu.memory_space<vmem>>, vector<8x256xf32>,
    %c6_561 = arith.constant 6 : index
    %c0_562 = arith.constant 0 : index
    %590 = vector.load %arg3[%c6_561, %c0_562] : memref<9x256xf32, #tpu.memory_space<vmem>>, vector<1x256xf32>
    %c0_563 = arith.constant 0 : index
    %c196_564 = arith.constant 196 : index
    %591 = vector.load %arg26[%c0_563, %c196_564] : memref<8x1056xf32, #tpu.memory_space<vmem>>, vector<8x256xf32>
    %592 = vector.broadcast %590 : vector<1x256xf32> to vector<8x256xf32>
    %593 = arith.mulf %591, %592 : vector<8x256xf32>
    %c96 = arith.constant 96 : index
    %c0_565 = arith.constant 0 : index
    %594 = vector.load %arg28[%c96, %c0_565] : memref<144x512xf32, #tpu.memory_space<vmem>>, vector<8x256xf32>
    tpu.vector_store %arg28[%c96, %c0_565], %593 {strides = array<i32>} : memref<144x512xf32, #tpu.memory_space<vmem>>, vector<8x256xf32>,
    %c0_566 = arith.constant 0 : index
    %c724_567 = arith.constant 724 : index
    %595 = vector.load %arg26[%c0_566, %c724_567] : memref<8x1056xf32, #tpu.memory_space<vmem>>, vector<8x256xf32>
    %596 = vector.broadcast %590 : vector<1x256xf32> to vector<8x256xf32>
    %597 = arith.mulf %595, %596 : vector<8x256xf32>
    %c96_568 = arith.constant 96 : index
    %c256_569 = arith.constant 256 : index
    %598 = vector.load %arg28[%c96_568, %c256_569] : memref<144x512xf32, #tpu.memory_space<vmem>>, vector<8x256xf32>
    tpu.vector_store %arg28[%c96_568, %c256_569], %597 {strides = array<i32>} : memref<144x512xf32, #tpu.memory_space<vmem>>, vector<8x256xf32>,
    %c0_570 = arith.constant 0 : index
    %c196_571 = arith.constant 196 : index
    %599 = vector.load %arg27[%c0_570, %c196_571] : memref<8x1056xf32, #tpu.memory_space<vmem>>, vector<8x256xf32>
    %600 = vector.broadcast %590 : vector<1x256xf32> to vector<8x256xf32>
    %601 = arith.mulf %599, %600 : vector<8x256xf32>
    %c104_572 = arith.constant 104 : index
    %c0_573 = arith.constant 0 : index
    %602 = vector.load %arg28[%c104_572, %c0_573] : memref<144x512xf32, #tpu.memory_space<vmem>>, vector<8x256xf32>
    tpu.vector_store %arg28[%c104_572, %c0_573], %601 {strides = array<i32>} : memref<144x512xf32, #tpu.memory_space<vmem>>, vector<8x256xf32>,
    %c0_574 = arith.constant 0 : index
    %c724_575 = arith.constant 724 : index
    %603 = vector.load %arg27[%c0_574, %c724_575] : memref<8x1056xf32, #tpu.memory_space<vmem>>, vector<8x256xf32>
    %604 = vector.broadcast %590 : vector<1x256xf32> to vector<8x256xf32>
    %605 = arith.mulf %603, %604 : vector<8x256xf32>
    %c104_576 = arith.constant 104 : index
    %c256_577 = arith.constant 256 : index
    %606 = vector.load %arg28[%c104_576, %c256_577] : memref<144x512xf32, #tpu.memory_space<vmem>>, vector<8x256xf32>
    tpu.vector_store %arg28[%c104_576, %c256_577], %605 {strides = array<i32>} : memref<144x512xf32, #tpu.memory_space<vmem>>, vector<8x256xf32>,
    %c7_578 = arith.constant 7 : index
    %c0_579 = arith.constant 0 : index
    %607 = vector.load %arg3[%c7_578, %c0_579] : memref<9x256xf32, #tpu.memory_space<vmem>>, vector<1x256xf32>
    %c0_580 = arith.constant 0 : index
    %c200_581 = arith.constant 200 : index
    %608 = vector.load %arg26[%c0_580, %c200_581] : memref<8x1056xf32, #tpu.memory_space<vmem>>, vector<8x256xf32>
    %609 = vector.broadcast %607 : vector<1x256xf32> to vector<8x256xf32>
    %610 = arith.mulf %608, %609 : vector<8x256xf32>
    %c112 = arith.constant 112 : index
    %c0_582 = arith.constant 0 : index
    %611 = vector.load %arg28[%c112, %c0_582] : memref<144x512xf32, #tpu.memory_space<vmem>>, vector<8x256xf32>
    tpu.vector_store %arg28[%c112, %c0_582], %610 {strides = array<i32>} : memref<144x512xf32, #tpu.memory_space<vmem>>, vector<8x256xf32>,
    %c0_583 = arith.constant 0 : index
    %c728_584 = arith.constant 728 : index
    %612 = vector.load %arg26[%c0_583, %c728_584] : memref<8x1056xf32, #tpu.memory_space<vmem>>, vector<8x256xf32>
    %613 = vector.broadcast %607 : vector<1x256xf32> to vector<8x256xf32>
    %614 = arith.mulf %612, %613 : vector<8x256xf32>
    %c112_585 = arith.constant 112 : index
    %c256_586 = arith.constant 256 : index
    %615 = vector.load %arg28[%c112_585, %c256_586] : memref<144x512xf32, #tpu.memory_space<vmem>>, vector<8x256xf32>
    tpu.vector_store %arg28[%c112_585, %c256_586], %614 {strides = array<i32>} : memref<144x512xf32, #tpu.memory_space<vmem>>, vector<8x256xf32>,
    %c0_587 = arith.constant 0 : index
    %c200_588 = arith.constant 200 : index
    %616 = vector.load %arg27[%c0_587, %c200_588] : memref<8x1056xf32, #tpu.memory_space<vmem>>, vector<8x256xf32>
    %617 = vector.broadcast %607 : vector<1x256xf32> to vector<8x256xf32>
    %618 = arith.mulf %616, %617 : vector<8x256xf32>
    %c120_589 = arith.constant 120 : index
    %c0_590 = arith.constant 0 : index
    %619 = vector.load %arg28[%c120_589, %c0_590] : memref<144x512xf32, #tpu.memory_space<vmem>>, vector<8x256xf32>
    tpu.vector_store %arg28[%c120_589, %c0_590], %618 {strides = array<i32>} : memref<144x512xf32, #tpu.memory_space<vmem>>, vector<8x256xf32>,
    %c0_591 = arith.constant 0 : index
    %c728_592 = arith.constant 728 : index
    %620 = vector.load %arg27[%c0_591, %c728_592] : memref<8x1056xf32, #tpu.memory_space<vmem>>, vector<8x256xf32>
    %621 = vector.broadcast %607 : vector<1x256xf32> to vector<8x256xf32>
    %622 = arith.mulf %620, %621 : vector<8x256xf32>
    %c120_593 = arith.constant 120 : index
    %c256_594 = arith.constant 256 : index
    %623 = vector.load %arg28[%c120_593, %c256_594] : memref<144x512xf32, #tpu.memory_space<vmem>>, vector<8x256xf32>
    tpu.vector_store %arg28[%c120_593, %c256_594], %622 {strides = array<i32>} : memref<144x512xf32, #tpu.memory_space<vmem>>, vector<8x256xf32>,
    %c8_595 = arith.constant 8 : index
    %c0_596 = arith.constant 0 : index
    %624 = vector.load %arg3[%c8_595, %c0_596] : memref<9x256xf32, #tpu.memory_space<vmem>>, vector<1x256xf32>
    %c0_597 = arith.constant 0 : index
    %c204_598 = arith.constant 204 : index
    %625 = vector.load %arg26[%c0_597, %c204_598] : memref<8x1056xf32, #tpu.memory_space<vmem>>, vector<8x256xf32>
    %626 = vector.broadcast %624 : vector<1x256xf32> to vector<8x256xf32>
    %627 = arith.mulf %625, %626 : vector<8x256xf32>
    %c128_599 = arith.constant 128 : index
    %c0_600 = arith.constant 0 : index
    %628 = vector.load %arg28[%c128_599, %c0_600] : memref<144x512xf32, #tpu.memory_space<vmem>>, vector<8x256xf32>
    tpu.vector_store %arg28[%c128_599, %c0_600], %627 {strides = array<i32>} : memref<144x512xf32, #tpu.memory_space<vmem>>, vector<8x256xf32>,
    %c0_601 = arith.constant 0 : index
    %c732_602 = arith.constant 732 : index
    %629 = vector.load %arg26[%c0_601, %c732_602] : memref<8x1056xf32, #tpu.memory_space<vmem>>, vector<8x256xf32>
    %630 = vector.broadcast %624 : vector<1x256xf32> to vector<8x256xf32>
    %631 = arith.mulf %629, %630 : vector<8x256xf32>
    %c128_603 = arith.constant 128 : index
    %c256_604 = arith.constant 256 : index
    %632 = vector.load %arg28[%c128_603, %c256_604] : memref<144x512xf32, #tpu.memory_space<vmem>>, vector<8x256xf32>
    tpu.vector_store %arg28[%c128_603, %c256_604], %631 {strides = array<i32>} : memref<144x512xf32, #tpu.memory_space<vmem>>, vector<8x256xf32>,
    %c0_605 = arith.constant 0 : index
    %c204_606 = arith.constant 204 : index
    %633 = vector.load %arg27[%c0_605, %c204_606] : memref<8x1056xf32, #tpu.memory_space<vmem>>, vector<8x256xf32>
    %634 = vector.broadcast %624 : vector<1x256xf32> to vector<8x256xf32>
    %635 = arith.mulf %633, %634 : vector<8x256xf32>
    %c136_607 = arith.constant 136 : index
    %c0_608 = arith.constant 0 : index
    %636 = vector.load %arg28[%c136_607, %c0_608] : memref<144x512xf32, #tpu.memory_space<vmem>>, vector<8x256xf32>
    tpu.vector_store %arg28[%c136_607, %c0_608], %635 {strides = array<i32>} : memref<144x512xf32, #tpu.memory_space<vmem>>, vector<8x256xf32>,
    %c0_609 = arith.constant 0 : index
    %c732_610 = arith.constant 732 : index
    %637 = vector.load %arg27[%c0_609, %c732_610] : memref<8x1056xf32, #tpu.memory_space<vmem>>, vector<8x256xf32>
    %638 = vector.broadcast %624 : vector<1x256xf32> to vector<8x256xf32>
    %639 = arith.mulf %637, %638 : vector<8x256xf32>
    %c136_611 = arith.constant 136 : index
    %c256_612 = arith.constant 256 : index
    %640 = vector.load %arg28[%c136_611, %c256_612] : memref<144x512xf32, #tpu.memory_space<vmem>>, vector<8x256xf32>
    tpu.vector_store %arg28[%c136_611, %c256_612], %639 {strides = array<i32>} : memref<144x512xf32, #tpu.memory_space<vmem>>, vector<8x256xf32>,
    %c0_613 = arith.constant 0 : index
    %c0_614 = arith.constant 0 : index
    %641 = vector.load %arg28[%c0_613, %c0_614] : memref<144x512xf32, #tpu.memory_space<vmem>>, vector<144x512xf32>
    %642 = arith.truncf %641 : vector<144x512xf32> to vector<144x512xbf16>
    %c0_615 = arith.constant 0 : index
    %c0_616 = arith.constant 0 : index
    %643 = vector.load %arg15[%c0_615, %c0_616] : memref<8x144xbf16, #tpu.memory_space<vmem>>, vector<8x144xbf16>
    %cst_617 = arith.constant dense<0.000000e+00> : vector<8x512xf32>
    %644 = tpu.matmul %643, %642, %cst_617 {dimension_numbers = #tpu.dot_dimension_numbers<[1], [0], [0], [1], [0, 0, 1, 1], [], []>} : vector<8x144xbf16>, vector<144x512xbf16>, vector<8x512xf32> -> vector<8x512xf32>
    %c0_618 = arith.constant 0 : index
    %c0_619 = arith.constant 0 : index
    %645 = vector.load %arg16[%c0_618, %c0_619] : memref<8x1xf32, #tpu.memory_space<vmem>>, vector<8x1xf32>
    %646 = vector.broadcast %645 : vector<8x1xf32> to vector<8x512xf32>
    %647 = arith.addf %644, %646 : vector<8x512xf32>
    %cst_620 = arith.constant 0.000000e+00 : f32
    %648 = vector.broadcast %cst_620 : f32 to vector<8x512xf32>
    %649 = arith.maximumf %647, %648 : vector<8x512xf32>
    %650 = vector.extract_strided_slice %649 {offsets = [0, 0], sizes = [8, 256], strides = [1, 1]} : vector<8x512xf32> to vector<8x256xf32>
    %c0_621 = arith.constant 0 : index
    %c136_622 = arith.constant 136 : index
    %651 = vector.load %arg27[%c0_621, %c136_622] : memref<8x1056xf32, #tpu.memory_space<vmem>>, vector<8x256xf32>
    tpu.vector_store %arg27[%c0_621, %c136_622], %650 {strides = array<i32>} : memref<8x1056xf32, #tpu.memory_space<vmem>>, vector<8x256xf32>,
    %652 = vector.extract_strided_slice %649 {offsets = [0, 256], sizes = [8, 256], strides = [1, 1]} : vector<8x512xf32> to vector<8x256xf32>
    %c0_623 = arith.constant 0 : index
    %c664_624 = arith.constant 664 : index
    %653 = vector.load %arg27[%c0_623, %c664_624] : memref<8x1056xf32, #tpu.memory_space<vmem>>, vector<8x256xf32>
    tpu.vector_store %arg27[%c0_623, %c664_624], %652 {strides = array<i32>} : memref<8x1056xf32, #tpu.memory_space<vmem>>, vector<8x256xf32>,
    %c0_625 = arith.constant 0 : index
    %c0_626 = arith.constant 0 : index
    %654 = vector.load %arg2[%c0_625, %c0_626] : memref<9x256xf32, #tpu.memory_space<vmem>>, vector<1x256xf32>
    %c0_627 = arith.constant 0 : index
    %c102_628 = arith.constant 102 : index
    %655 = vector.load %arg25[%c0_627, %c102_628] : memref<8x1056xf32, #tpu.memory_space<vmem>>, vector<8x256xf32>
    %656 = vector.broadcast %654 : vector<1x256xf32> to vector<8x256xf32>
    %657 = arith.mulf %655, %656 : vector<8x256xf32>
    %c0_629 = arith.constant 0 : index
    %c0_630 = arith.constant 0 : index
    %658 = vector.load %arg28[%c0_629, %c0_630] : memref<144x512xf32, #tpu.memory_space<vmem>>, vector<8x256xf32>
    tpu.vector_store %arg28[%c0_629, %c0_630], %657 {strides = array<i32>} : memref<144x512xf32, #tpu.memory_space<vmem>>, vector<8x256xf32>,
    %c0_631 = arith.constant 0 : index
    %c630_632 = arith.constant 630 : index
    %659 = vector.load %arg25[%c0_631, %c630_632] : memref<8x1056xf32, #tpu.memory_space<vmem>>, vector<8x256xf32>
    %660 = vector.broadcast %654 : vector<1x256xf32> to vector<8x256xf32>
    %661 = arith.mulf %659, %660 : vector<8x256xf32>
    %c0_633 = arith.constant 0 : index
    %c256_634 = arith.constant 256 : index
    %662 = vector.load %arg28[%c0_633, %c256_634] : memref<144x512xf32, #tpu.memory_space<vmem>>, vector<8x256xf32>
    tpu.vector_store %arg28[%c0_633, %c256_634], %661 {strides = array<i32>} : memref<144x512xf32, #tpu.memory_space<vmem>>, vector<8x256xf32>,
    %c0_635 = arith.constant 0 : index
    %c102_636 = arith.constant 102 : index
    %663 = vector.load %arg27[%c0_635, %c102_636] : memref<8x1056xf32, #tpu.memory_space<vmem>>, vector<8x256xf32>
    %664 = vector.broadcast %654 : vector<1x256xf32> to vector<8x256xf32>
    %665 = arith.mulf %663, %664 : vector<8x256xf32>
    %c8_637 = arith.constant 8 : index
    %c0_638 = arith.constant 0 : index
    %666 = vector.load %arg28[%c8_637, %c0_638] : memref<144x512xf32, #tpu.memory_space<vmem>>, vector<8x256xf32>
    tpu.vector_store %arg28[%c8_637, %c0_638], %665 {strides = array<i32>} : memref<144x512xf32, #tpu.memory_space<vmem>>, vector<8x256xf32>,
    %c0_639 = arith.constant 0 : index
    %c630_640 = arith.constant 630 : index
    %667 = vector.load %arg27[%c0_639, %c630_640] : memref<8x1056xf32, #tpu.memory_space<vmem>>, vector<8x256xf32>
    %668 = vector.broadcast %654 : vector<1x256xf32> to vector<8x256xf32>
    %669 = arith.mulf %667, %668 : vector<8x256xf32>
    %c8_641 = arith.constant 8 : index
    %c256_642 = arith.constant 256 : index
    %670 = vector.load %arg28[%c8_641, %c256_642] : memref<144x512xf32, #tpu.memory_space<vmem>>, vector<8x256xf32>
    tpu.vector_store %arg28[%c8_641, %c256_642], %669 {strides = array<i32>} : memref<144x512xf32, #tpu.memory_space<vmem>>, vector<8x256xf32>,
    %c1_643 = arith.constant 1 : index
    %c0_644 = arith.constant 0 : index
    %671 = vector.load %arg2[%c1_643, %c0_644] : memref<9x256xf32, #tpu.memory_space<vmem>>, vector<1x256xf32>
    %c0_645 = arith.constant 0 : index
    %c104_646 = arith.constant 104 : index
    %672 = vector.load %arg25[%c0_645, %c104_646] : memref<8x1056xf32, #tpu.memory_space<vmem>>, vector<8x256xf32>
    %673 = vector.broadcast %671 : vector<1x256xf32> to vector<8x256xf32>
    %674 = arith.mulf %672, %673 : vector<8x256xf32>
    %c16_647 = arith.constant 16 : index
    %c0_648 = arith.constant 0 : index
    %675 = vector.load %arg28[%c16_647, %c0_648] : memref<144x512xf32, #tpu.memory_space<vmem>>, vector<8x256xf32>
    tpu.vector_store %arg28[%c16_647, %c0_648], %674 {strides = array<i32>} : memref<144x512xf32, #tpu.memory_space<vmem>>, vector<8x256xf32>,
    %c0_649 = arith.constant 0 : index
    %c632_650 = arith.constant 632 : index
    %676 = vector.load %arg25[%c0_649, %c632_650] : memref<8x1056xf32, #tpu.memory_space<vmem>>, vector<8x256xf32>
    %677 = vector.broadcast %671 : vector<1x256xf32> to vector<8x256xf32>
    %678 = arith.mulf %676, %677 : vector<8x256xf32>
    %c16_651 = arith.constant 16 : index
    %c256_652 = arith.constant 256 : index
    %679 = vector.load %arg28[%c16_651, %c256_652] : memref<144x512xf32, #tpu.memory_space<vmem>>, vector<8x256xf32>
    tpu.vector_store %arg28[%c16_651, %c256_652], %678 {strides = array<i32>} : memref<144x512xf32, #tpu.memory_space<vmem>>, vector<8x256xf32>,
    %c0_653 = arith.constant 0 : index
    %c104_654 = arith.constant 104 : index
    %680 = vector.load %arg27[%c0_653, %c104_654] : memref<8x1056xf32, #tpu.memory_space<vmem>>, vector<8x256xf32>
    %681 = vector.broadcast %671 : vector<1x256xf32> to vector<8x256xf32>
    %682 = arith.mulf %680, %681 : vector<8x256xf32>
    %c24_655 = arith.constant 24 : index
    %c0_656 = arith.constant 0 : index
    %683 = vector.load %arg28[%c24_655, %c0_656] : memref<144x512xf32, #tpu.memory_space<vmem>>, vector<8x256xf32>
    tpu.vector_store %arg28[%c24_655, %c0_656], %682 {strides = array<i32>} : memref<144x512xf32, #tpu.memory_space<vmem>>, vector<8x256xf32>,
    %c0_657 = arith.constant 0 : index
    %c632_658 = arith.constant 632 : index
    %684 = vector.load %arg27[%c0_657, %c632_658] : memref<8x1056xf32, #tpu.memory_space<vmem>>, vector<8x256xf32>
    %685 = vector.broadcast %671 : vector<1x256xf32> to vector<8x256xf32>
    %686 = arith.mulf %684, %685 : vector<8x256xf32>
    %c24_659 = arith.constant 24 : index
    %c256_660 = arith.constant 256 : index
    %687 = vector.load %arg28[%c24_659, %c256_660] : memref<144x512xf32, #tpu.memory_space<vmem>>, vector<8x256xf32>
    tpu.vector_store %arg28[%c24_659, %c256_660], %686 {strides = array<i32>} : memref<144x512xf32, #tpu.memory_space<vmem>>, vector<8x256xf32>,
    %c2_661 = arith.constant 2 : index
    %c0_662 = arith.constant 0 : index
    %688 = vector.load %arg2[%c2_661, %c0_662] : memref<9x256xf32, #tpu.memory_space<vmem>>, vector<1x256xf32>
    %c0_663 = arith.constant 0 : index
    %c106_664 = arith.constant 106 : index
    %689 = vector.load %arg25[%c0_663, %c106_664] : memref<8x1056xf32, #tpu.memory_space<vmem>>, vector<8x256xf32>
    %690 = vector.broadcast %688 : vector<1x256xf32> to vector<8x256xf32>
    %691 = arith.mulf %689, %690 : vector<8x256xf32>
    %c32_665 = arith.constant 32 : index
    %c0_666 = arith.constant 0 : index
    %692 = vector.load %arg28[%c32_665, %c0_666] : memref<144x512xf32, #tpu.memory_space<vmem>>, vector<8x256xf32>
    tpu.vector_store %arg28[%c32_665, %c0_666], %691 {strides = array<i32>} : memref<144x512xf32, #tpu.memory_space<vmem>>, vector<8x256xf32>,
    %c0_667 = arith.constant 0 : index
    %c634_668 = arith.constant 634 : index
    %693 = vector.load %arg25[%c0_667, %c634_668] : memref<8x1056xf32, #tpu.memory_space<vmem>>, vector<8x256xf32>
    %694 = vector.broadcast %688 : vector<1x256xf32> to vector<8x256xf32>
    %695 = arith.mulf %693, %694 : vector<8x256xf32>
    %c32_669 = arith.constant 32 : index
    %c256_670 = arith.constant 256 : index
    %696 = vector.load %arg28[%c32_669, %c256_670] : memref<144x512xf32, #tpu.memory_space<vmem>>, vector<8x256xf32>
    tpu.vector_store %arg28[%c32_669, %c256_670], %695 {strides = array<i32>} : memref<144x512xf32, #tpu.memory_space<vmem>>, vector<8x256xf32>,
    %c0_671 = arith.constant 0 : index
    %c106_672 = arith.constant 106 : index
    %697 = vector.load %arg27[%c0_671, %c106_672] : memref<8x1056xf32, #tpu.memory_space<vmem>>, vector<8x256xf32>
    %698 = vector.broadcast %688 : vector<1x256xf32> to vector<8x256xf32>
    %699 = arith.mulf %697, %698 : vector<8x256xf32>
    %c40_673 = arith.constant 40 : index
    %c0_674 = arith.constant 0 : index
    %700 = vector.load %arg28[%c40_673, %c0_674] : memref<144x512xf32, #tpu.memory_space<vmem>>, vector<8x256xf32>
    tpu.vector_store %arg28[%c40_673, %c0_674], %699 {strides = array<i32>} : memref<144x512xf32, #tpu.memory_space<vmem>>, vector<8x256xf32>,
    %c0_675 = arith.constant 0 : index
    %c634_676 = arith.constant 634 : index
    %701 = vector.load %arg27[%c0_675, %c634_676] : memref<8x1056xf32, #tpu.memory_space<vmem>>, vector<8x256xf32>
    %702 = vector.broadcast %688 : vector<1x256xf32> to vector<8x256xf32>
    %703 = arith.mulf %701, %702 : vector<8x256xf32>
    %c40_677 = arith.constant 40 : index
    %c256_678 = arith.constant 256 : index
    %704 = vector.load %arg28[%c40_677, %c256_678] : memref<144x512xf32, #tpu.memory_space<vmem>>, vector<8x256xf32>
    tpu.vector_store %arg28[%c40_677, %c256_678], %703 {strides = array<i32>} : memref<144x512xf32, #tpu.memory_space<vmem>>, vector<8x256xf32>,
    %c3_679 = arith.constant 3 : index
    %c0_680 = arith.constant 0 : index
    %705 = vector.load %arg2[%c3_679, %c0_680] : memref<9x256xf32, #tpu.memory_space<vmem>>, vector<1x256xf32>
    %c0_681 = arith.constant 0 : index
    %c134_682 = arith.constant 134 : index
    %706 = vector.load %arg25[%c0_681, %c134_682] : memref<8x1056xf32, #tpu.memory_space<vmem>>, vector<8x256xf32>
    %707 = vector.broadcast %705 : vector<1x256xf32> to vector<8x256xf32>
    %708 = arith.mulf %706, %707 : vector<8x256xf32>
    %c48_683 = arith.constant 48 : index
    %c0_684 = arith.constant 0 : index
    %709 = vector.load %arg28[%c48_683, %c0_684] : memref<144x512xf32, #tpu.memory_space<vmem>>, vector<8x256xf32>
    tpu.vector_store %arg28[%c48_683, %c0_684], %708 {strides = array<i32>} : memref<144x512xf32, #tpu.memory_space<vmem>>, vector<8x256xf32>,
    %c0_685 = arith.constant 0 : index
    %c662_686 = arith.constant 662 : index
    %710 = vector.load %arg25[%c0_685, %c662_686] : memref<8x1056xf32, #tpu.memory_space<vmem>>, vector<8x256xf32>
    %711 = vector.broadcast %705 : vector<1x256xf32> to vector<8x256xf32>
    %712 = arith.mulf %710, %711 : vector<8x256xf32>
    %c48_687 = arith.constant 48 : index
    %c256_688 = arith.constant 256 : index
    %713 = vector.load %arg28[%c48_687, %c256_688] : memref<144x512xf32, #tpu.memory_space<vmem>>, vector<8x256xf32>
    tpu.vector_store %arg28[%c48_687, %c256_688], %712 {strides = array<i32>} : memref<144x512xf32, #tpu.memory_space<vmem>>, vector<8x256xf32>,
    %c0_689 = arith.constant 0 : index
    %c134_690 = arith.constant 134 : index
    %714 = vector.load %arg27[%c0_689, %c134_690] : memref<8x1056xf32, #tpu.memory_space<vmem>>, vector<8x256xf32>
    %715 = vector.broadcast %705 : vector<1x256xf32> to vector<8x256xf32>
    %716 = arith.mulf %714, %715 : vector<8x256xf32>
    %c56_691 = arith.constant 56 : index
    %c0_692 = arith.constant 0 : index
    %717 = vector.load %arg28[%c56_691, %c0_692] : memref<144x512xf32, #tpu.memory_space<vmem>>, vector<8x256xf32>
    tpu.vector_store %arg28[%c56_691, %c0_692], %716 {strides = array<i32>} : memref<144x512xf32, #tpu.memory_space<vmem>>, vector<8x256xf32>,
    %c0_693 = arith.constant 0 : index
    %c662_694 = arith.constant 662 : index
    %718 = vector.load %arg27[%c0_693, %c662_694] : memref<8x1056xf32, #tpu.memory_space<vmem>>, vector<8x256xf32>
    %719 = vector.broadcast %705 : vector<1x256xf32> to vector<8x256xf32>
    %720 = arith.mulf %718, %719 : vector<8x256xf32>
    %c56_695 = arith.constant 56 : index
    %c256_696 = arith.constant 256 : index
    %721 = vector.load %arg28[%c56_695, %c256_696] : memref<144x512xf32, #tpu.memory_space<vmem>>, vector<8x256xf32>
    tpu.vector_store %arg28[%c56_695, %c256_696], %720 {strides = array<i32>} : memref<144x512xf32, #tpu.memory_space<vmem>>, vector<8x256xf32>,
    %c4_697 = arith.constant 4 : index
    %c0_698 = arith.constant 0 : index
    %722 = vector.load %arg2[%c4_697, %c0_698] : memref<9x256xf32, #tpu.memory_space<vmem>>, vector<1x256xf32>
    %c0_699 = arith.constant 0 : index
    %c136_700 = arith.constant 136 : index
    %723 = vector.load %arg25[%c0_699, %c136_700] : memref<8x1056xf32, #tpu.memory_space<vmem>>, vector<8x256xf32>
    %724 = vector.broadcast %722 : vector<1x256xf32> to vector<8x256xf32>
    %725 = arith.mulf %723, %724 : vector<8x256xf32>
    %c64_701 = arith.constant 64 : index
    %c0_702 = arith.constant 0 : index
    %726 = vector.load %arg28[%c64_701, %c0_702] : memref<144x512xf32, #tpu.memory_space<vmem>>, vector<8x256xf32>
    tpu.vector_store %arg28[%c64_701, %c0_702], %725 {strides = array<i32>} : memref<144x512xf32, #tpu.memory_space<vmem>>, vector<8x256xf32>,
    %c0_703 = arith.constant 0 : index
    %c664_704 = arith.constant 664 : index
    %727 = vector.load %arg25[%c0_703, %c664_704] : memref<8x1056xf32, #tpu.memory_space<vmem>>, vector<8x256xf32>
    %728 = vector.broadcast %722 : vector<1x256xf32> to vector<8x256xf32>
    %729 = arith.mulf %727, %728 : vector<8x256xf32>
    %c64_705 = arith.constant 64 : index
    %c256_706 = arith.constant 256 : index
    %730 = vector.load %arg28[%c64_705, %c256_706] : memref<144x512xf32, #tpu.memory_space<vmem>>, vector<8x256xf32>
    tpu.vector_store %arg28[%c64_705, %c256_706], %729 {strides = array<i32>} : memref<144x512xf32, #tpu.memory_space<vmem>>, vector<8x256xf32>,
    %c0_707 = arith.constant 0 : index
    %c136_708 = arith.constant 136 : index
    %731 = vector.load %arg27[%c0_707, %c136_708] : memref<8x1056xf32, #tpu.memory_space<vmem>>, vector<8x256xf32>
    %732 = vector.broadcast %722 : vector<1x256xf32> to vector<8x256xf32>
    %733 = arith.mulf %731, %732 : vector<8x256xf32>
    %c72_709 = arith.constant 72 : index
    %c0_710 = arith.constant 0 : index
    %734 = vector.load %arg28[%c72_709, %c0_710] : memref<144x512xf32, #tpu.memory_space<vmem>>, vector<8x256xf32>
    tpu.vector_store %arg28[%c72_709, %c0_710], %733 {strides = array<i32>} : memref<144x512xf32, #tpu.memory_space<vmem>>, vector<8x256xf32>,
    %c0_711 = arith.constant 0 : index
    %c664_712 = arith.constant 664 : index
    %735 = vector.load %arg27[%c0_711, %c664_712] : memref<8x1056xf32, #tpu.memory_space<vmem>>, vector<8x256xf32>
    %736 = vector.broadcast %722 : vector<1x256xf32> to vector<8x256xf32>
    %737 = arith.mulf %735, %736 : vector<8x256xf32>
    %c72_713 = arith.constant 72 : index
    %c256_714 = arith.constant 256 : index
    %738 = vector.load %arg28[%c72_713, %c256_714] : memref<144x512xf32, #tpu.memory_space<vmem>>, vector<8x256xf32>
    tpu.vector_store %arg28[%c72_713, %c256_714], %737 {strides = array<i32>} : memref<144x512xf32, #tpu.memory_space<vmem>>, vector<8x256xf32>,
    %c5_715 = arith.constant 5 : index
    %c0_716 = arith.constant 0 : index
    %739 = vector.load %arg2[%c5_715, %c0_716] : memref<9x256xf32, #tpu.memory_space<vmem>>, vector<1x256xf32>
    %c0_717 = arith.constant 0 : index
    %c138_718 = arith.constant 138 : index
    %740 = vector.load %arg25[%c0_717, %c138_718] : memref<8x1056xf32, #tpu.memory_space<vmem>>, vector<8x256xf32>
    %741 = vector.broadcast %739 : vector<1x256xf32> to vector<8x256xf32>
    %742 = arith.mulf %740, %741 : vector<8x256xf32>
    %c80_719 = arith.constant 80 : index
    %c0_720 = arith.constant 0 : index
    %743 = vector.load %arg28[%c80_719, %c0_720] : memref<144x512xf32, #tpu.memory_space<vmem>>, vector<8x256xf32>
    tpu.vector_store %arg28[%c80_719, %c0_720], %742 {strides = array<i32>} : memref<144x512xf32, #tpu.memory_space<vmem>>, vector<8x256xf32>,
    %c0_721 = arith.constant 0 : index
    %c666_722 = arith.constant 666 : index
    %744 = vector.load %arg25[%c0_721, %c666_722] : memref<8x1056xf32, #tpu.memory_space<vmem>>, vector<8x256xf32>
    %745 = vector.broadcast %739 : vector<1x256xf32> to vector<8x256xf32>
    %746 = arith.mulf %744, %745 : vector<8x256xf32>
    %c80_723 = arith.constant 80 : index
    %c256_724 = arith.constant 256 : index
    %747 = vector.load %arg28[%c80_723, %c256_724] : memref<144x512xf32, #tpu.memory_space<vmem>>, vector<8x256xf32>
    tpu.vector_store %arg28[%c80_723, %c256_724], %746 {strides = array<i32>} : memref<144x512xf32, #tpu.memory_space<vmem>>, vector<8x256xf32>,
    %c0_725 = arith.constant 0 : index
    %c138_726 = arith.constant 138 : index
    %748 = vector.load %arg27[%c0_725, %c138_726] : memref<8x1056xf32, #tpu.memory_space<vmem>>, vector<8x256xf32>
    %749 = vector.broadcast %739 : vector<1x256xf32> to vector<8x256xf32>
    %750 = arith.mulf %748, %749 : vector<8x256xf32>
    %c88_727 = arith.constant 88 : index
    %c0_728 = arith.constant 0 : index
    %751 = vector.load %arg28[%c88_727, %c0_728] : memref<144x512xf32, #tpu.memory_space<vmem>>, vector<8x256xf32>
    tpu.vector_store %arg28[%c88_727, %c0_728], %750 {strides = array<i32>} : memref<144x512xf32, #tpu.memory_space<vmem>>, vector<8x256xf32>,
    %c0_729 = arith.constant 0 : index
    %c666_730 = arith.constant 666 : index
    %752 = vector.load %arg27[%c0_729, %c666_730] : memref<8x1056xf32, #tpu.memory_space<vmem>>, vector<8x256xf32>
    %753 = vector.broadcast %739 : vector<1x256xf32> to vector<8x256xf32>
    %754 = arith.mulf %752, %753 : vector<8x256xf32>
    %c88_731 = arith.constant 88 : index
    %c256_732 = arith.constant 256 : index
    %755 = vector.load %arg28[%c88_731, %c256_732] : memref<144x512xf32, #tpu.memory_space<vmem>>, vector<8x256xf32>
    tpu.vector_store %arg28[%c88_731, %c256_732], %754 {strides = array<i32>} : memref<144x512xf32, #tpu.memory_space<vmem>>, vector<8x256xf32>,
    %c6_733 = arith.constant 6 : index
    %c0_734 = arith.constant 0 : index
    %756 = vector.load %arg2[%c6_733, %c0_734] : memref<9x256xf32, #tpu.memory_space<vmem>>, vector<1x256xf32>
    %c0_735 = arith.constant 0 : index
    %c166_736 = arith.constant 166 : index
    %757 = vector.load %arg25[%c0_735, %c166_736] : memref<8x1056xf32, #tpu.memory_space<vmem>>, vector<8x256xf32>
    %758 = vector.broadcast %756 : vector<1x256xf32> to vector<8x256xf32>
    %759 = arith.mulf %757, %758 : vector<8x256xf32>
    %c96_737 = arith.constant 96 : index
    %c0_738 = arith.constant 0 : index
    %760 = vector.load %arg28[%c96_737, %c0_738] : memref<144x512xf32, #tpu.memory_space<vmem>>, vector<8x256xf32>
    tpu.vector_store %arg28[%c96_737, %c0_738], %759 {strides = array<i32>} : memref<144x512xf32, #tpu.memory_space<vmem>>, vector<8x256xf32>,
    %c0_739 = arith.constant 0 : index
    %c694_740 = arith.constant 694 : index
    %761 = vector.load %arg25[%c0_739, %c694_740] : memref<8x1056xf32, #tpu.memory_space<vmem>>, vector<8x256xf32>
    %762 = vector.broadcast %756 : vector<1x256xf32> to vector<8x256xf32>
    %763 = arith.mulf %761, %762 : vector<8x256xf32>
    %c96_741 = arith.constant 96 : index
    %c256_742 = arith.constant 256 : index
    %764 = vector.load %arg28[%c96_741, %c256_742] : memref<144x512xf32, #tpu.memory_space<vmem>>, vector<8x256xf32>
    tpu.vector_store %arg28[%c96_741, %c256_742], %763 {strides = array<i32>} : memref<144x512xf32, #tpu.memory_space<vmem>>, vector<8x256xf32>,
    %c0_743 = arith.constant 0 : index
    %c166_744 = arith.constant 166 : index
    %765 = vector.load %arg27[%c0_743, %c166_744] : memref<8x1056xf32, #tpu.memory_space<vmem>>, vector<8x256xf32>
    %766 = vector.broadcast %756 : vector<1x256xf32> to vector<8x256xf32>
    %767 = arith.mulf %765, %766 : vector<8x256xf32>
    %c104_745 = arith.constant 104 : index
    %c0_746 = arith.constant 0 : index
    %768 = vector.load %arg28[%c104_745, %c0_746] : memref<144x512xf32, #tpu.memory_space<vmem>>, vector<8x256xf32>
    tpu.vector_store %arg28[%c104_745, %c0_746], %767 {strides = array<i32>} : memref<144x512xf32, #tpu.memory_space<vmem>>, vector<8x256xf32>,
    %c0_747 = arith.constant 0 : index
    %c694_748 = arith.constant 694 : index
    %769 = vector.load %arg27[%c0_747, %c694_748] : memref<8x1056xf32, #tpu.memory_space<vmem>>, vector<8x256xf32>
    %770 = vector.broadcast %756 : vector<1x256xf32> to vector<8x256xf32>
    %771 = arith.mulf %769, %770 : vector<8x256xf32>
    %c104_749 = arith.constant 104 : index
    %c256_750 = arith.constant 256 : index
    %772 = vector.load %arg28[%c104_749, %c256_750] : memref<144x512xf32, #tpu.memory_space<vmem>>, vector<8x256xf32>
    tpu.vector_store %arg28[%c104_749, %c256_750], %771 {strides = array<i32>} : memref<144x512xf32, #tpu.memory_space<vmem>>, vector<8x256xf32>,
    %c7_751 = arith.constant 7 : index
    %c0_752 = arith.constant 0 : index
    %773 = vector.load %arg2[%c7_751, %c0_752] : memref<9x256xf32, #tpu.memory_space<vmem>>, vector<1x256xf32>
    %c0_753 = arith.constant 0 : index
    %c168_754 = arith.constant 168 : index
    %774 = vector.load %arg25[%c0_753, %c168_754] : memref<8x1056xf32, #tpu.memory_space<vmem>>, vector<8x256xf32>
    %775 = vector.broadcast %773 : vector<1x256xf32> to vector<8x256xf32>
    %776 = arith.mulf %774, %775 : vector<8x256xf32>
    %c112_755 = arith.constant 112 : index
    %c0_756 = arith.constant 0 : index
    %777 = vector.load %arg28[%c112_755, %c0_756] : memref<144x512xf32, #tpu.memory_space<vmem>>, vector<8x256xf32>
    tpu.vector_store %arg28[%c112_755, %c0_756], %776 {strides = array<i32>} : memref<144x512xf32, #tpu.memory_space<vmem>>, vector<8x256xf32>,
    %c0_757 = arith.constant 0 : index
    %c696_758 = arith.constant 696 : index
    %778 = vector.load %arg25[%c0_757, %c696_758] : memref<8x1056xf32, #tpu.memory_space<vmem>>, vector<8x256xf32>
    %779 = vector.broadcast %773 : vector<1x256xf32> to vector<8x256xf32>
    %780 = arith.mulf %778, %779 : vector<8x256xf32>
    %c112_759 = arith.constant 112 : index
    %c256_760 = arith.constant 256 : index
    %781 = vector.load %arg28[%c112_759, %c256_760] : memref<144x512xf32, #tpu.memory_space<vmem>>, vector<8x256xf32>
    tpu.vector_store %arg28[%c112_759, %c256_760], %780 {strides = array<i32>} : memref<144x512xf32, #tpu.memory_space<vmem>>, vector<8x256xf32>,
    %c0_761 = arith.constant 0 : index
    %c168_762 = arith.constant 168 : index
    %782 = vector.load %arg27[%c0_761, %c168_762] : memref<8x1056xf32, #tpu.memory_space<vmem>>, vector<8x256xf32>
    %783 = vector.broadcast %773 : vector<1x256xf32> to vector<8x256xf32>
    %784 = arith.mulf %782, %783 : vector<8x256xf32>
    %c120_763 = arith.constant 120 : index
    %c0_764 = arith.constant 0 : index
    %785 = vector.load %arg28[%c120_763, %c0_764] : memref<144x512xf32, #tpu.memory_space<vmem>>, vector<8x256xf32>
    tpu.vector_store %arg28[%c120_763, %c0_764], %784 {strides = array<i32>} : memref<144x512xf32, #tpu.memory_space<vmem>>, vector<8x256xf32>,
    %c0_765 = arith.constant 0 : index
    %c696_766 = arith.constant 696 : index
    %786 = vector.load %arg27[%c0_765, %c696_766] : memref<8x1056xf32, #tpu.memory_space<vmem>>, vector<8x256xf32>
    %787 = vector.broadcast %773 : vector<1x256xf32> to vector<8x256xf32>
    %788 = arith.mulf %786, %787 : vector<8x256xf32>
    %c120_767 = arith.constant 120 : index
    %c256_768 = arith.constant 256 : index
    %789 = vector.load %arg28[%c120_767, %c256_768] : memref<144x512xf32, #tpu.memory_space<vmem>>, vector<8x256xf32>
    tpu.vector_store %arg28[%c120_767, %c256_768], %788 {strides = array<i32>} : memref<144x512xf32, #tpu.memory_space<vmem>>, vector<8x256xf32>,
    %c8_769 = arith.constant 8 : index
    %c0_770 = arith.constant 0 : index
    %790 = vector.load %arg2[%c8_769, %c0_770] : memref<9x256xf32, #tpu.memory_space<vmem>>, vector<1x256xf32>
    %c0_771 = arith.constant 0 : index
    %c170_772 = arith.constant 170 : index
    %791 = vector.load %arg25[%c0_771, %c170_772] : memref<8x1056xf32, #tpu.memory_space<vmem>>, vector<8x256xf32>
    %792 = vector.broadcast %790 : vector<1x256xf32> to vector<8x256xf32>
    %793 = arith.mulf %791, %792 : vector<8x256xf32>
    %c128_773 = arith.constant 128 : index
    %c0_774 = arith.constant 0 : index
    %794 = vector.load %arg28[%c128_773, %c0_774] : memref<144x512xf32, #tpu.memory_space<vmem>>, vector<8x256xf32>
    tpu.vector_store %arg28[%c128_773, %c0_774], %793 {strides = array<i32>} : memref<144x512xf32, #tpu.memory_space<vmem>>, vector<8x256xf32>,
    %c0_775 = arith.constant 0 : index
    %c698_776 = arith.constant 698 : index
    %795 = vector.load %arg25[%c0_775, %c698_776] : memref<8x1056xf32, #tpu.memory_space<vmem>>, vector<8x256xf32>
    %796 = vector.broadcast %790 : vector<1x256xf32> to vector<8x256xf32>
    %797 = arith.mulf %795, %796 : vector<8x256xf32>
    %c128_777 = arith.constant 128 : index
    %c256_778 = arith.constant 256 : index
    %798 = vector.load %arg28[%c128_777, %c256_778] : memref<144x512xf32, #tpu.memory_space<vmem>>, vector<8x256xf32>
    tpu.vector_store %arg28[%c128_777, %c256_778], %797 {strides = array<i32>} : memref<144x512xf32, #tpu.memory_space<vmem>>, vector<8x256xf32>,
    %c0_779 = arith.constant 0 : index
    %c170_780 = arith.constant 170 : index
    %799 = vector.load %arg27[%c0_779, %c170_780] : memref<8x1056xf32, #tpu.memory_space<vmem>>, vector<8x256xf32>
    %800 = vector.broadcast %790 : vector<1x256xf32> to vector<8x256xf32>
    %801 = arith.mulf %799, %800 : vector<8x256xf32>
    %c136_781 = arith.constant 136 : index
    %c0_782 = arith.constant 0 : index
    %802 = vector.load %arg28[%c136_781, %c0_782] : memref<144x512xf32, #tpu.memory_space<vmem>>, vector<8x256xf32>
    tpu.vector_store %arg28[%c136_781, %c0_782], %801 {strides = array<i32>} : memref<144x512xf32, #tpu.memory_space<vmem>>, vector<8x256xf32>,
    %c0_783 = arith.constant 0 : index
    %c698_784 = arith.constant 698 : index
    %803 = vector.load %arg27[%c0_783, %c698_784] : memref<8x1056xf32, #tpu.memory_space<vmem>>, vector<8x256xf32>
    %804 = vector.broadcast %790 : vector<1x256xf32> to vector<8x256xf32>
    %805 = arith.mulf %803, %804 : vector<8x256xf32>
    %c136_785 = arith.constant 136 : index
    %c256_786 = arith.constant 256 : index
    %806 = vector.load %arg28[%c136_785, %c256_786] : memref<144x512xf32, #tpu.memory_space<vmem>>, vector<8x256xf32>
    tpu.vector_store %arg28[%c136_785, %c256_786], %805 {strides = array<i32>} : memref<144x512xf32, #tpu.memory_space<vmem>>, vector<8x256xf32>,
    %c0_787 = arith.constant 0 : index
    %c0_788 = arith.constant 0 : index
    %807 = vector.load %arg28[%c0_787, %c0_788] : memref<144x512xf32, #tpu.memory_space<vmem>>, vector<144x512xf32>
    %808 = arith.truncf %807 : vector<144x512xf32> to vector<144x512xbf16>
    %c0_789 = arith.constant 0 : index
    %c0_790 = arith.constant 0 : index
    %809 = vector.load %arg17[%c0_789, %c0_790] : memref<8x144xbf16, #tpu.memory_space<vmem>>, vector<8x144xbf16>
    %cst_791 = arith.constant dense<0.000000e+00> : vector<8x512xf32>
    %810 = tpu.matmul %809, %808, %cst_791 {dimension_numbers = #tpu.dot_dimension_numbers<[1], [0], [0], [1], [0, 0, 1, 1], [], []>} : vector<8x144xbf16>, vector<144x512xbf16>, vector<8x512xf32> -> vector<8x512xf32>
    %c0_792 = arith.constant 0 : index
    %c0_793 = arith.constant 0 : index
    %811 = vector.load %arg18[%c0_792, %c0_793] : memref<8x1xf32, #tpu.memory_space<vmem>>, vector<8x1xf32>
    %812 = vector.broadcast %811 : vector<8x1xf32> to vector<8x512xf32>
    %813 = arith.addf %810, %812 : vector<8x512xf32>
    %cst_794 = arith.constant 0.000000e+00 : f32
    %814 = vector.broadcast %cst_794 : f32 to vector<8x512xf32>
    %815 = arith.maximumf %813, %814 : vector<8x512xf32>
    %816 = vector.extract_strided_slice %815 {offsets = [0, 0], sizes = [8, 256], strides = [1, 1]} : vector<8x512xf32> to vector<8x256xf32>
    %c0_795 = arith.constant 0 : index
    %c136_796 = arith.constant 136 : index
    %817 = vector.load %arg27[%c0_795, %c136_796] : memref<8x1056xf32, #tpu.memory_space<vmem>>, vector<8x256xf32>
    tpu.vector_store %arg27[%c0_795, %c136_796], %816 {strides = array<i32>} : memref<8x1056xf32, #tpu.memory_space<vmem>>, vector<8x256xf32>,
    %818 = vector.extract_strided_slice %815 {offsets = [0, 256], sizes = [8, 256], strides = [1, 1]} : vector<8x512xf32> to vector<8x256xf32>
    %c0_797 = arith.constant 0 : index
    %c664_798 = arith.constant 664 : index
    %819 = vector.load %arg27[%c0_797, %c664_798] : memref<8x1056xf32, #tpu.memory_space<vmem>>, vector<8x256xf32>
    tpu.vector_store %arg27[%c0_797, %c664_798], %818 {strides = array<i32>} : memref<8x1056xf32, #tpu.memory_space<vmem>>, vector<8x256xf32>,
    %c0_799 = arith.constant 0 : index
    %c0_800 = arith.constant 0 : index
    %820 = vector.load %arg1[%c0_799, %c0_800] : memref<9x256xf32, #tpu.memory_space<vmem>>, vector<1x256xf32>
    %c0_801 = arith.constant 0 : index
    %c119_802 = arith.constant 119 : index
    %821 = vector.load %arg24[%c0_801, %c119_802] : memref<8x1056xf32, #tpu.memory_space<vmem>>, vector<8x256xf32>
    %822 = vector.broadcast %820 : vector<1x256xf32> to vector<8x256xf32>
    %823 = arith.mulf %821, %822 : vector<8x256xf32>
    %c0_803 = arith.constant 0 : index
    %c0_804 = arith.constant 0 : index
    %824 = vector.load %arg28[%c0_803, %c0_804] : memref<144x512xf32, #tpu.memory_space<vmem>>, vector<8x256xf32>
    tpu.vector_store %arg28[%c0_803, %c0_804], %823 {strides = array<i32>} : memref<144x512xf32, #tpu.memory_space<vmem>>, vector<8x256xf32>,
    %c0_805 = arith.constant 0 : index
    %c647_806 = arith.constant 647 : index
    %825 = vector.load %arg24[%c0_805, %c647_806] : memref<8x1056xf32, #tpu.memory_space<vmem>>, vector<8x256xf32>
    %826 = vector.broadcast %820 : vector<1x256xf32> to vector<8x256xf32>
    %827 = arith.mulf %825, %826 : vector<8x256xf32>
    %c0_807 = arith.constant 0 : index
    %c256_808 = arith.constant 256 : index
    %828 = vector.load %arg28[%c0_807, %c256_808] : memref<144x512xf32, #tpu.memory_space<vmem>>, vector<8x256xf32>
    tpu.vector_store %arg28[%c0_807, %c256_808], %827 {strides = array<i32>} : memref<144x512xf32, #tpu.memory_space<vmem>>, vector<8x256xf32>,
    %c0_809 = arith.constant 0 : index
    %c119_810 = arith.constant 119 : index
    %829 = vector.load %arg27[%c0_809, %c119_810] : memref<8x1056xf32, #tpu.memory_space<vmem>>, vector<8x256xf32>
    %830 = vector.broadcast %820 : vector<1x256xf32> to vector<8x256xf32>
    %831 = arith.mulf %829, %830 : vector<8x256xf32>
    %c8_811 = arith.constant 8 : index
    %c0_812 = arith.constant 0 : index
    %832 = vector.load %arg28[%c8_811, %c0_812] : memref<144x512xf32, #tpu.memory_space<vmem>>, vector<8x256xf32>
    tpu.vector_store %arg28[%c8_811, %c0_812], %831 {strides = array<i32>} : memref<144x512xf32, #tpu.memory_space<vmem>>, vector<8x256xf32>,
    %c0_813 = arith.constant 0 : index
    %c647_814 = arith.constant 647 : index
    %833 = vector.load %arg27[%c0_813, %c647_814] : memref<8x1056xf32, #tpu.memory_space<vmem>>, vector<8x256xf32>
    %834 = vector.broadcast %820 : vector<1x256xf32> to vector<8x256xf32>
    %835 = arith.mulf %833, %834 : vector<8x256xf32>
    %c8_815 = arith.constant 8 : index
    %c256_816 = arith.constant 256 : index
    %836 = vector.load %arg28[%c8_815, %c256_816] : memref<144x512xf32, #tpu.memory_space<vmem>>, vector<8x256xf32>
    tpu.vector_store %arg28[%c8_815, %c256_816], %835 {strides = array<i32>} : memref<144x512xf32, #tpu.memory_space<vmem>>, vector<8x256xf32>,
    %c1_817 = arith.constant 1 : index
    %c0_818 = arith.constant 0 : index
    %837 = vector.load %arg1[%c1_817, %c0_818] : memref<9x256xf32, #tpu.memory_space<vmem>>, vector<1x256xf32>
    %c0_819 = arith.constant 0 : index
    %c120_820 = arith.constant 120 : index
    %838 = vector.load %arg24[%c0_819, %c120_820] : memref<8x1056xf32, #tpu.memory_space<vmem>>, vector<8x256xf32>
    %839 = vector.broadcast %837 : vector<1x256xf32> to vector<8x256xf32>
    %840 = arith.mulf %838, %839 : vector<8x256xf32>
    %c16_821 = arith.constant 16 : index
    %c0_822 = arith.constant 0 : index
    %841 = vector.load %arg28[%c16_821, %c0_822] : memref<144x512xf32, #tpu.memory_space<vmem>>, vector<8x256xf32>
    tpu.vector_store %arg28[%c16_821, %c0_822], %840 {strides = array<i32>} : memref<144x512xf32, #tpu.memory_space<vmem>>, vector<8x256xf32>,
    %c0_823 = arith.constant 0 : index
    %c648_824 = arith.constant 648 : index
    %842 = vector.load %arg24[%c0_823, %c648_824] : memref<8x1056xf32, #tpu.memory_space<vmem>>, vector<8x256xf32>
    %843 = vector.broadcast %837 : vector<1x256xf32> to vector<8x256xf32>
    %844 = arith.mulf %842, %843 : vector<8x256xf32>
    %c16_825 = arith.constant 16 : index
    %c256_826 = arith.constant 256 : index
    %845 = vector.load %arg28[%c16_825, %c256_826] : memref<144x512xf32, #tpu.memory_space<vmem>>, vector<8x256xf32>
    tpu.vector_store %arg28[%c16_825, %c256_826], %844 {strides = array<i32>} : memref<144x512xf32, #tpu.memory_space<vmem>>, vector<8x256xf32>,
    %c0_827 = arith.constant 0 : index
    %c120_828 = arith.constant 120 : index
    %846 = vector.load %arg27[%c0_827, %c120_828] : memref<8x1056xf32, #tpu.memory_space<vmem>>, vector<8x256xf32>
    %847 = vector.broadcast %837 : vector<1x256xf32> to vector<8x256xf32>
    %848 = arith.mulf %846, %847 : vector<8x256xf32>
    %c24_829 = arith.constant 24 : index
    %c0_830 = arith.constant 0 : index
    %849 = vector.load %arg28[%c24_829, %c0_830] : memref<144x512xf32, #tpu.memory_space<vmem>>, vector<8x256xf32>
    tpu.vector_store %arg28[%c24_829, %c0_830], %848 {strides = array<i32>} : memref<144x512xf32, #tpu.memory_space<vmem>>, vector<8x256xf32>,
    %c0_831 = arith.constant 0 : index
    %c648_832 = arith.constant 648 : index
    %850 = vector.load %arg27[%c0_831, %c648_832] : memref<8x1056xf32, #tpu.memory_space<vmem>>, vector<8x256xf32>
    %851 = vector.broadcast %837 : vector<1x256xf32> to vector<8x256xf32>
    %852 = arith.mulf %850, %851 : vector<8x256xf32>
    %c24_833 = arith.constant 24 : index
    %c256_834 = arith.constant 256 : index
    %853 = vector.load %arg28[%c24_833, %c256_834] : memref<144x512xf32, #tpu.memory_space<vmem>>, vector<8x256xf32>
    tpu.vector_store %arg28[%c24_833, %c256_834], %852 {strides = array<i32>} : memref<144x512xf32, #tpu.memory_space<vmem>>, vector<8x256xf32>,
    %c2_835 = arith.constant 2 : index
    %c0_836 = arith.constant 0 : index
    %854 = vector.load %arg1[%c2_835, %c0_836] : memref<9x256xf32, #tpu.memory_space<vmem>>, vector<1x256xf32>
    %c0_837 = arith.constant 0 : index
    %c121_838 = arith.constant 121 : index
    %855 = vector.load %arg24[%c0_837, %c121_838] : memref<8x1056xf32, #tpu.memory_space<vmem>>, vector<8x256xf32>
    %856 = vector.broadcast %854 : vector<1x256xf32> to vector<8x256xf32>
    %857 = arith.mulf %855, %856 : vector<8x256xf32>
    %c32_839 = arith.constant 32 : index
    %c0_840 = arith.constant 0 : index
    %858 = vector.load %arg28[%c32_839, %c0_840] : memref<144x512xf32, #tpu.memory_space<vmem>>, vector<8x256xf32>
    tpu.vector_store %arg28[%c32_839, %c0_840], %857 {strides = array<i32>} : memref<144x512xf32, #tpu.memory_space<vmem>>, vector<8x256xf32>,
    %c0_841 = arith.constant 0 : index
    %c649_842 = arith.constant 649 : index
    %859 = vector.load %arg24[%c0_841, %c649_842] : memref<8x1056xf32, #tpu.memory_space<vmem>>, vector<8x256xf32>
    %860 = vector.broadcast %854 : vector<1x256xf32> to vector<8x256xf32>
    %861 = arith.mulf %859, %860 : vector<8x256xf32>
    %c32_843 = arith.constant 32 : index
    %c256_844 = arith.constant 256 : index
    %862 = vector.load %arg28[%c32_843, %c256_844] : memref<144x512xf32, #tpu.memory_space<vmem>>, vector<8x256xf32>
    tpu.vector_store %arg28[%c32_843, %c256_844], %861 {strides = array<i32>} : memref<144x512xf32, #tpu.memory_space<vmem>>, vector<8x256xf32>,
    %c0_845 = arith.constant 0 : index
    %c121_846 = arith.constant 121 : index
    %863 = vector.load %arg27[%c0_845, %c121_846] : memref<8x1056xf32, #tpu.memory_space<vmem>>, vector<8x256xf32>
    %864 = vector.broadcast %854 : vector<1x256xf32> to vector<8x256xf32>
    %865 = arith.mulf %863, %864 : vector<8x256xf32>
    %c40_847 = arith.constant 40 : index
    %c0_848 = arith.constant 0 : index
    %866 = vector.load %arg28[%c40_847, %c0_848] : memref<144x512xf32, #tpu.memory_space<vmem>>, vector<8x256xf32>
    tpu.vector_store %arg28[%c40_847, %c0_848], %865 {strides = array<i32>} : memref<144x512xf32, #tpu.memory_space<vmem>>, vector<8x256xf32>,
    %c0_849 = arith.constant 0 : index
    %c649_850 = arith.constant 649 : index
    %867 = vector.load %arg27[%c0_849, %c649_850] : memref<8x1056xf32, #tpu.memory_space<vmem>>, vector<8x256xf32>
    %868 = vector.broadcast %854 : vector<1x256xf32> to vector<8x256xf32>
    %869 = arith.mulf %867, %868 : vector<8x256xf32>
    %c40_851 = arith.constant 40 : index
    %c256_852 = arith.constant 256 : index
    %870 = vector.load %arg28[%c40_851, %c256_852] : memref<144x512xf32, #tpu.memory_space<vmem>>, vector<8x256xf32>
    tpu.vector_store %arg28[%c40_851, %c256_852], %869 {strides = array<i32>} : memref<144x512xf32, #tpu.memory_space<vmem>>, vector<8x256xf32>,
    %c3_853 = arith.constant 3 : index
    %c0_854 = arith.constant 0 : index
    %871 = vector.load %arg1[%c3_853, %c0_854] : memref<9x256xf32, #tpu.memory_space<vmem>>, vector<1x256xf32>
    %c0_855 = arith.constant 0 : index
    %c135_856 = arith.constant 135 : index
    %872 = vector.load %arg24[%c0_855, %c135_856] : memref<8x1056xf32, #tpu.memory_space<vmem>>, vector<8x256xf32>
    %873 = vector.broadcast %871 : vector<1x256xf32> to vector<8x256xf32>
    %874 = arith.mulf %872, %873 : vector<8x256xf32>
    %c48_857 = arith.constant 48 : index
    %c0_858 = arith.constant 0 : index
    %875 = vector.load %arg28[%c48_857, %c0_858] : memref<144x512xf32, #tpu.memory_space<vmem>>, vector<8x256xf32>
    tpu.vector_store %arg28[%c48_857, %c0_858], %874 {strides = array<i32>} : memref<144x512xf32, #tpu.memory_space<vmem>>, vector<8x256xf32>,
    %c0_859 = arith.constant 0 : index
    %c663_860 = arith.constant 663 : index
    %876 = vector.load %arg24[%c0_859, %c663_860] : memref<8x1056xf32, #tpu.memory_space<vmem>>, vector<8x256xf32>
    %877 = vector.broadcast %871 : vector<1x256xf32> to vector<8x256xf32>
    %878 = arith.mulf %876, %877 : vector<8x256xf32>
    %c48_861 = arith.constant 48 : index
    %c256_862 = arith.constant 256 : index
    %879 = vector.load %arg28[%c48_861, %c256_862] : memref<144x512xf32, #tpu.memory_space<vmem>>, vector<8x256xf32>
    tpu.vector_store %arg28[%c48_861, %c256_862], %878 {strides = array<i32>} : memref<144x512xf32, #tpu.memory_space<vmem>>, vector<8x256xf32>,
    %c0_863 = arith.constant 0 : index
    %c135_864 = arith.constant 135 : index
    %880 = vector.load %arg27[%c0_863, %c135_864] : memref<8x1056xf32, #tpu.memory_space<vmem>>, vector<8x256xf32>
    %881 = vector.broadcast %871 : vector<1x256xf32> to vector<8x256xf32>
    %882 = arith.mulf %880, %881 : vector<8x256xf32>
    %c56_865 = arith.constant 56 : index
    %c0_866 = arith.constant 0 : index
    %883 = vector.load %arg28[%c56_865, %c0_866] : memref<144x512xf32, #tpu.memory_space<vmem>>, vector<8x256xf32>
    tpu.vector_store %arg28[%c56_865, %c0_866], %882 {strides = array<i32>} : memref<144x512xf32, #tpu.memory_space<vmem>>, vector<8x256xf32>,
    %c0_867 = arith.constant 0 : index
    %c663_868 = arith.constant 663 : index
    %884 = vector.load %arg27[%c0_867, %c663_868] : memref<8x1056xf32, #tpu.memory_space<vmem>>, vector<8x256xf32>
    %885 = vector.broadcast %871 : vector<1x256xf32> to vector<8x256xf32>
    %886 = arith.mulf %884, %885 : vector<8x256xf32>
    %c56_869 = arith.constant 56 : index
    %c256_870 = arith.constant 256 : index
    %887 = vector.load %arg28[%c56_869, %c256_870] : memref<144x512xf32, #tpu.memory_space<vmem>>, vector<8x256xf32>
    tpu.vector_store %arg28[%c56_869, %c256_870], %886 {strides = array<i32>} : memref<144x512xf32, #tpu.memory_space<vmem>>, vector<8x256xf32>,
    %c4_871 = arith.constant 4 : index
    %c0_872 = arith.constant 0 : index
    %888 = vector.load %arg1[%c4_871, %c0_872] : memref<9x256xf32, #tpu.memory_space<vmem>>, vector<1x256xf32>
    %c0_873 = arith.constant 0 : index
    %c136_874 = arith.constant 136 : index
    %889 = vector.load %arg24[%c0_873, %c136_874] : memref<8x1056xf32, #tpu.memory_space<vmem>>, vector<8x256xf32>
    %890 = vector.broadcast %888 : vector<1x256xf32> to vector<8x256xf32>
    %891 = arith.mulf %889, %890 : vector<8x256xf32>
    %c64_875 = arith.constant 64 : index
    %c0_876 = arith.constant 0 : index
    %892 = vector.load %arg28[%c64_875, %c0_876] : memref<144x512xf32, #tpu.memory_space<vmem>>, vector<8x256xf32>
    tpu.vector_store %arg28[%c64_875, %c0_876], %891 {strides = array<i32>} : memref<144x512xf32, #tpu.memory_space<vmem>>, vector<8x256xf32>,
    %c0_877 = arith.constant 0 : index
    %c664_878 = arith.constant 664 : index
    %893 = vector.load %arg24[%c0_877, %c664_878] : memref<8x1056xf32, #tpu.memory_space<vmem>>, vector<8x256xf32>
    %894 = vector.broadcast %888 : vector<1x256xf32> to vector<8x256xf32>
    %895 = arith.mulf %893, %894 : vector<8x256xf32>
    %c64_879 = arith.constant 64 : index
    %c256_880 = arith.constant 256 : index
    %896 = vector.load %arg28[%c64_879, %c256_880] : memref<144x512xf32, #tpu.memory_space<vmem>>, vector<8x256xf32>
    tpu.vector_store %arg28[%c64_879, %c256_880], %895 {strides = array<i32>} : memref<144x512xf32, #tpu.memory_space<vmem>>, vector<8x256xf32>,
    %c0_881 = arith.constant 0 : index
    %c136_882 = arith.constant 136 : index
    %897 = vector.load %arg27[%c0_881, %c136_882] : memref<8x1056xf32, #tpu.memory_space<vmem>>, vector<8x256xf32>
    %898 = vector.broadcast %888 : vector<1x256xf32> to vector<8x256xf32>
    %899 = arith.mulf %897, %898 : vector<8x256xf32>
    %c72_883 = arith.constant 72 : index
    %c0_884 = arith.constant 0 : index
    %900 = vector.load %arg28[%c72_883, %c0_884] : memref<144x512xf32, #tpu.memory_space<vmem>>, vector<8x256xf32>
    tpu.vector_store %arg28[%c72_883, %c0_884], %899 {strides = array<i32>} : memref<144x512xf32, #tpu.memory_space<vmem>>, vector<8x256xf32>,
    %c0_885 = arith.constant 0 : index
    %c664_886 = arith.constant 664 : index
    %901 = vector.load %arg27[%c0_885, %c664_886] : memref<8x1056xf32, #tpu.memory_space<vmem>>, vector<8x256xf32>
    %902 = vector.broadcast %888 : vector<1x256xf32> to vector<8x256xf32>
    %903 = arith.mulf %901, %902 : vector<8x256xf32>
    %c72_887 = arith.constant 72 : index
    %c256_888 = arith.constant 256 : index
    %904 = vector.load %arg28[%c72_887, %c256_888] : memref<144x512xf32, #tpu.memory_space<vmem>>, vector<8x256xf32>
    tpu.vector_store %arg28[%c72_887, %c256_888], %903 {strides = array<i32>} : memref<144x512xf32, #tpu.memory_space<vmem>>, vector<8x256xf32>,
    %c5_889 = arith.constant 5 : index
    %c0_890 = arith.constant 0 : index
    %905 = vector.load %arg1[%c5_889, %c0_890] : memref<9x256xf32, #tpu.memory_space<vmem>>, vector<1x256xf32>
    %c0_891 = arith.constant 0 : index
    %c137_892 = arith.constant 137 : index
    %906 = vector.load %arg24[%c0_891, %c137_892] : memref<8x1056xf32, #tpu.memory_space<vmem>>, vector<8x256xf32>
    %907 = vector.broadcast %905 : vector<1x256xf32> to vector<8x256xf32>
    %908 = arith.mulf %906, %907 : vector<8x256xf32>
    %c80_893 = arith.constant 80 : index
    %c0_894 = arith.constant 0 : index
    %909 = vector.load %arg28[%c80_893, %c0_894] : memref<144x512xf32, #tpu.memory_space<vmem>>, vector<8x256xf32>
    tpu.vector_store %arg28[%c80_893, %c0_894], %908 {strides = array<i32>} : memref<144x512xf32, #tpu.memory_space<vmem>>, vector<8x256xf32>,
    %c0_895 = arith.constant 0 : index
    %c665_896 = arith.constant 665 : index
    %910 = vector.load %arg24[%c0_895, %c665_896] : memref<8x1056xf32, #tpu.memory_space<vmem>>, vector<8x256xf32>
    %911 = vector.broadcast %905 : vector<1x256xf32> to vector<8x256xf32>
    %912 = arith.mulf %910, %911 : vector<8x256xf32>
    %c80_897 = arith.constant 80 : index
    %c256_898 = arith.constant 256 : index
    %913 = vector.load %arg28[%c80_897, %c256_898] : memref<144x512xf32, #tpu.memory_space<vmem>>, vector<8x256xf32>
    tpu.vector_store %arg28[%c80_897, %c256_898], %912 {strides = array<i32>} : memref<144x512xf32, #tpu.memory_space<vmem>>, vector<8x256xf32>,
    %c0_899 = arith.constant 0 : index
    %c137_900 = arith.constant 137 : index
    %914 = vector.load %arg27[%c0_899, %c137_900] : memref<8x1056xf32, #tpu.memory_space<vmem>>, vector<8x256xf32>
    %915 = vector.broadcast %905 : vector<1x256xf32> to vector<8x256xf32>
    %916 = arith.mulf %914, %915 : vector<8x256xf32>
    %c88_901 = arith.constant 88 : index
    %c0_902 = arith.constant 0 : index
    %917 = vector.load %arg28[%c88_901, %c0_902] : memref<144x512xf32, #tpu.memory_space<vmem>>, vector<8x256xf32>
    tpu.vector_store %arg28[%c88_901, %c0_902], %916 {strides = array<i32>} : memref<144x512xf32, #tpu.memory_space<vmem>>, vector<8x256xf32>,
    %c0_903 = arith.constant 0 : index
    %c665_904 = arith.constant 665 : index
    %918 = vector.load %arg27[%c0_903, %c665_904] : memref<8x1056xf32, #tpu.memory_space<vmem>>, vector<8x256xf32>
    %919 = vector.broadcast %905 : vector<1x256xf32> to vector<8x256xf32>
    %920 = arith.mulf %918, %919 : vector<8x256xf32>
    %c88_905 = arith.constant 88 : index
    %c256_906 = arith.constant 256 : index
    %921 = vector.load %arg28[%c88_905, %c256_906] : memref<144x512xf32, #tpu.memory_space<vmem>>, vector<8x256xf32>
    tpu.vector_store %arg28[%c88_905, %c256_906], %920 {strides = array<i32>} : memref<144x512xf32, #tpu.memory_space<vmem>>, vector<8x256xf32>,
    %c6_907 = arith.constant 6 : index
    %c0_908 = arith.constant 0 : index
    %922 = vector.load %arg1[%c6_907, %c0_908] : memref<9x256xf32, #tpu.memory_space<vmem>>, vector<1x256xf32>
    %c0_909 = arith.constant 0 : index
    %c151_910 = arith.constant 151 : index
    %923 = vector.load %arg24[%c0_909, %c151_910] : memref<8x1056xf32, #tpu.memory_space<vmem>>, vector<8x256xf32>
    %924 = vector.broadcast %922 : vector<1x256xf32> to vector<8x256xf32>
    %925 = arith.mulf %923, %924 : vector<8x256xf32>
    %c96_911 = arith.constant 96 : index
    %c0_912 = arith.constant 0 : index
    %926 = vector.load %arg28[%c96_911, %c0_912] : memref<144x512xf32, #tpu.memory_space<vmem>>, vector<8x256xf32>
    tpu.vector_store %arg28[%c96_911, %c0_912], %925 {strides = array<i32>} : memref<144x512xf32, #tpu.memory_space<vmem>>, vector<8x256xf32>,
    %c0_913 = arith.constant 0 : index
    %c679_914 = arith.constant 679 : index
    %927 = vector.load %arg24[%c0_913, %c679_914] : memref<8x1056xf32, #tpu.memory_space<vmem>>, vector<8x256xf32>
    %928 = vector.broadcast %922 : vector<1x256xf32> to vector<8x256xf32>
    %929 = arith.mulf %927, %928 : vector<8x256xf32>
    %c96_915 = arith.constant 96 : index
    %c256_916 = arith.constant 256 : index
    %930 = vector.load %arg28[%c96_915, %c256_916] : memref<144x512xf32, #tpu.memory_space<vmem>>, vector<8x256xf32>
    tpu.vector_store %arg28[%c96_915, %c256_916], %929 {strides = array<i32>} : memref<144x512xf32, #tpu.memory_space<vmem>>, vector<8x256xf32>,
    %c0_917 = arith.constant 0 : index
    %c151_918 = arith.constant 151 : index
    %931 = vector.load %arg27[%c0_917, %c151_918] : memref<8x1056xf32, #tpu.memory_space<vmem>>, vector<8x256xf32>
    %932 = vector.broadcast %922 : vector<1x256xf32> to vector<8x256xf32>
    %933 = arith.mulf %931, %932 : vector<8x256xf32>
    %c104_919 = arith.constant 104 : index
    %c0_920 = arith.constant 0 : index
    %934 = vector.load %arg28[%c104_919, %c0_920] : memref<144x512xf32, #tpu.memory_space<vmem>>, vector<8x256xf32>
    tpu.vector_store %arg28[%c104_919, %c0_920], %933 {strides = array<i32>} : memref<144x512xf32, #tpu.memory_space<vmem>>, vector<8x256xf32>,
    %c0_921 = arith.constant 0 : index
    %c679_922 = arith.constant 679 : index
    %935 = vector.load %arg27[%c0_921, %c679_922] : memref<8x1056xf32, #tpu.memory_space<vmem>>, vector<8x256xf32>
    %936 = vector.broadcast %922 : vector<1x256xf32> to vector<8x256xf32>
    %937 = arith.mulf %935, %936 : vector<8x256xf32>
    %c104_923 = arith.constant 104 : index
    %c256_924 = arith.constant 256 : index
    %938 = vector.load %arg28[%c104_923, %c256_924] : memref<144x512xf32, #tpu.memory_space<vmem>>, vector<8x256xf32>
    tpu.vector_store %arg28[%c104_923, %c256_924], %937 {strides = array<i32>} : memref<144x512xf32, #tpu.memory_space<vmem>>, vector<8x256xf32>,
    %c7_925 = arith.constant 7 : index
    %c0_926 = arith.constant 0 : index
    %939 = vector.load %arg1[%c7_925, %c0_926] : memref<9x256xf32, #tpu.memory_space<vmem>>, vector<1x256xf32>
    %c0_927 = arith.constant 0 : index
    %c152_928 = arith.constant 152 : index
    %940 = vector.load %arg24[%c0_927, %c152_928] : memref<8x1056xf32, #tpu.memory_space<vmem>>, vector<8x256xf32>
    %941 = vector.broadcast %939 : vector<1x256xf32> to vector<8x256xf32>
    %942 = arith.mulf %940, %941 : vector<8x256xf32>
    %c112_929 = arith.constant 112 : index
    %c0_930 = arith.constant 0 : index
    %943 = vector.load %arg28[%c112_929, %c0_930] : memref<144x512xf32, #tpu.memory_space<vmem>>, vector<8x256xf32>
    tpu.vector_store %arg28[%c112_929, %c0_930], %942 {strides = array<i32>} : memref<144x512xf32, #tpu.memory_space<vmem>>, vector<8x256xf32>,
    %c0_931 = arith.constant 0 : index
    %c680_932 = arith.constant 680 : index
    %944 = vector.load %arg24[%c0_931, %c680_932] : memref<8x1056xf32, #tpu.memory_space<vmem>>, vector<8x256xf32>
    %945 = vector.broadcast %939 : vector<1x256xf32> to vector<8x256xf32>
    %946 = arith.mulf %944, %945 : vector<8x256xf32>
    %c112_933 = arith.constant 112 : index
    %c256_934 = arith.constant 256 : index
    %947 = vector.load %arg28[%c112_933, %c256_934] : memref<144x512xf32, #tpu.memory_space<vmem>>, vector<8x256xf32>
    tpu.vector_store %arg28[%c112_933, %c256_934], %946 {strides = array<i32>} : memref<144x512xf32, #tpu.memory_space<vmem>>, vector<8x256xf32>,
    %c0_935 = arith.constant 0 : index
    %c152_936 = arith.constant 152 : index
    %948 = vector.load %arg27[%c0_935, %c152_936] : memref<8x1056xf32, #tpu.memory_space<vmem>>, vector<8x256xf32>
    %949 = vector.broadcast %939 : vector<1x256xf32> to vector<8x256xf32>
    %950 = arith.mulf %948, %949 : vector<8x256xf32>
    %c120_937 = arith.constant 120 : index
    %c0_938 = arith.constant 0 : index
    %951 = vector.load %arg28[%c120_937, %c0_938] : memref<144x512xf32, #tpu.memory_space<vmem>>, vector<8x256xf32>
    tpu.vector_store %arg28[%c120_937, %c0_938], %950 {strides = array<i32>} : memref<144x512xf32, #tpu.memory_space<vmem>>, vector<8x256xf32>,
    %c0_939 = arith.constant 0 : index
    %c680_940 = arith.constant 680 : index
    %952 = vector.load %arg27[%c0_939, %c680_940] : memref<8x1056xf32, #tpu.memory_space<vmem>>, vector<8x256xf32>
    %953 = vector.broadcast %939 : vector<1x256xf32> to vector<8x256xf32>
    %954 = arith.mulf %952, %953 : vector<8x256xf32>
    %c120_941 = arith.constant 120 : index
    %c256_942 = arith.constant 256 : index
    %955 = vector.load %arg28[%c120_941, %c256_942] : memref<144x512xf32, #tpu.memory_space<vmem>>, vector<8x256xf32>
    tpu.vector_store %arg28[%c120_941, %c256_942], %954 {strides = array<i32>} : memref<144x512xf32, #tpu.memory_space<vmem>>, vector<8x256xf32>,
    %c8_943 = arith.constant 8 : index
    %c0_944 = arith.constant 0 : index
    %956 = vector.load %arg1[%c8_943, %c0_944] : memref<9x256xf32, #tpu.memory_space<vmem>>, vector<1x256xf32>
    %c0_945 = arith.constant 0 : index
    %c153_946 = arith.constant 153 : index
    %957 = vector.load %arg24[%c0_945, %c153_946] : memref<8x1056xf32, #tpu.memory_space<vmem>>, vector<8x256xf32>
    %958 = vector.broadcast %956 : vector<1x256xf32> to vector<8x256xf32>
    %959 = arith.mulf %957, %958 : vector<8x256xf32>
    %c128_947 = arith.constant 128 : index
    %c0_948 = arith.constant 0 : index
    %960 = vector.load %arg28[%c128_947, %c0_948] : memref<144x512xf32, #tpu.memory_space<vmem>>, vector<8x256xf32>
    tpu.vector_store %arg28[%c128_947, %c0_948], %959 {strides = array<i32>} : memref<144x512xf32, #tpu.memory_space<vmem>>, vector<8x256xf32>,
    %c0_949 = arith.constant 0 : index
    %c681_950 = arith.constant 681 : index
    %961 = vector.load %arg24[%c0_949, %c681_950] : memref<8x1056xf32, #tpu.memory_space<vmem>>, vector<8x256xf32>
    %962 = vector.broadcast %956 : vector<1x256xf32> to vector<8x256xf32>
    %963 = arith.mulf %961, %962 : vector<8x256xf32>
    %c128_951 = arith.constant 128 : index
    %c256_952 = arith.constant 256 : index
    %964 = vector.load %arg28[%c128_951, %c256_952] : memref<144x512xf32, #tpu.memory_space<vmem>>, vector<8x256xf32>
    tpu.vector_store %arg28[%c128_951, %c256_952], %963 {strides = array<i32>} : memref<144x512xf32, #tpu.memory_space<vmem>>, vector<8x256xf32>,
    %c0_953 = arith.constant 0 : index
    %c153_954 = arith.constant 153 : index
    %965 = vector.load %arg27[%c0_953, %c153_954] : memref<8x1056xf32, #tpu.memory_space<vmem>>, vector<8x256xf32>
    %966 = vector.broadcast %956 : vector<1x256xf32> to vector<8x256xf32>
    %967 = arith.mulf %965, %966 : vector<8x256xf32>
    %c136_955 = arith.constant 136 : index
    %c0_956 = arith.constant 0 : index
    %968 = vector.load %arg28[%c136_955, %c0_956] : memref<144x512xf32, #tpu.memory_space<vmem>>, vector<8x256xf32>
    tpu.vector_store %arg28[%c136_955, %c0_956], %967 {strides = array<i32>} : memref<144x512xf32, #tpu.memory_space<vmem>>, vector<8x256xf32>,
    %c0_957 = arith.constant 0 : index
    %c681_958 = arith.constant 681 : index
    %969 = vector.load %arg27[%c0_957, %c681_958] : memref<8x1056xf32, #tpu.memory_space<vmem>>, vector<8x256xf32>
    %970 = vector.broadcast %956 : vector<1x256xf32> to vector<8x256xf32>
    %971 = arith.mulf %969, %970 : vector<8x256xf32>
    %c136_959 = arith.constant 136 : index
    %c256_960 = arith.constant 256 : index
    %972 = vector.load %arg28[%c136_959, %c256_960] : memref<144x512xf32, #tpu.memory_space<vmem>>, vector<8x256xf32>
    tpu.vector_store %arg28[%c136_959, %c256_960], %971 {strides = array<i32>} : memref<144x512xf32, #tpu.memory_space<vmem>>, vector<8x256xf32>,
    %c0_961 = arith.constant 0 : index
    %c0_962 = arith.constant 0 : index
    %973 = vector.load %arg28[%c0_961, %c0_962] : memref<144x512xf32, #tpu.memory_space<vmem>>, vector<144x512xf32>
    %974 = arith.truncf %973 : vector<144x512xf32> to vector<144x512xbf16>
    %c0_963 = arith.constant 0 : index
    %c0_964 = arith.constant 0 : index
    %975 = vector.load %arg19[%c0_963, %c0_964] : memref<4x144xbf16, #tpu.memory_space<vmem>>, vector<4x144xbf16>
    %cst_965 = arith.constant dense<0.000000e+00> : vector<4x512xf32>
    %976 = tpu.matmul %975, %974, %cst_965 {dimension_numbers = #tpu.dot_dimension_numbers<[1], [0], [0], [1], [0, 0, 1, 1], [], []>} : vector<4x144xbf16>, vector<144x512xbf16>, vector<4x512xf32> -> vector<4x512xf32>
    %c0_966 = arith.constant 0 : index
    %c0_967 = arith.constant 0 : index
    %977 = vector.load %arg20[%c0_966, %c0_967] : memref<4x1xf32, #tpu.memory_space<vmem>>, vector<4x1xf32>
    %978 = vector.broadcast %977 : vector<4x1xf32> to vector<4x512xf32>
    %979 = arith.addf %976, %978 : vector<4x512xf32>
    %cst_968 = arith.constant 0.000000e+00 : f32
    %980 = vector.broadcast %cst_968 : f32 to vector<4x512xf32>
    %981 = arith.maximumf %979, %980 : vector<4x512xf32>
    %c0_969 = arith.constant 0 : index
    %c136_970 = arith.constant 136 : index
    %982 = vector.load %arg23[%c0_969, %c136_970] : memref<4x1056xf32, #tpu.memory_space<vmem>>, vector<4x256xf32>
    %983 = vector.extract_strided_slice %981 {offsets = [0, 0], sizes = [4, 256], strides = [1, 1]} : vector<4x512xf32> to vector<4x256xf32>
    %984 = arith.addf %983, %982 : vector<4x256xf32>
    %c0_971 = arith.constant 0 : index
    %c0_972 = arith.constant 0 : index
    %c0_973 = arith.constant 0 : index
    %985 = vector.load %arg21[%c0_971, %c0_972, %c0_973] : memref<2x4x256xf32, #tpu.memory_space<vmem>>, vector<1x4x256xf32>
    %986 = vector.shape_cast %985 : vector<1x4x256xf32> to vector<4x256xf32>
    %987 = vector.shape_cast %984 : vector<4x256xf32> to vector<1x4x256xf32>
    tpu.vector_store %arg21[%c0_971, %c0_972, %c0_973], %987 {strides = array<i32>} : memref<2x4x256xf32, #tpu.memory_space<vmem>>, vector<1x4x256xf32>,
    %c0_974 = arith.constant 0 : index
    %c664_975 = arith.constant 664 : index
    %988 = vector.load %arg23[%c0_974, %c664_975] : memref<4x1056xf32, #tpu.memory_space<vmem>>, vector<4x256xf32>
    %989 = vector.extract_strided_slice %981 {offsets = [0, 256], sizes = [4, 256], strides = [1, 1]} : vector<4x512xf32> to vector<4x256xf32>
    %990 = arith.addf %989, %988 : vector<4x256xf32>
    %c1_976 = arith.constant 1 : index
    %c0_977 = arith.constant 0 : index
    %c0_978 = arith.constant 0 : index
    %991 = vector.load %arg21[%c1_976, %c0_977, %c0_978] : memref<2x4x256xf32, #tpu.memory_space<vmem>>, vector<1x4x256xf32>
    %992 = vector.shape_cast %991 : vector<1x4x256xf32> to vector<4x256xf32>
    %993 = vector.shape_cast %990 : vector<4x256xf32> to vector<1x4x256xf32>
    tpu.vector_store %arg21[%c1_976, %c0_977, %c0_978], %993 {strides = array<i32>} : memref<2x4x256xf32, #tpu.memory_space<vmem>>, vector<1x4x256xf32>,
    return
  }
}

</mosaic_0001>

<llo_original>
// kernel: _lambda_.1
$region0: #{_lambda_.1}
  #allocation0 [shape = 'u32[]', space=smem, size = 0x4, offset = 0x4, fixed_abs, tag = 'smem constant byte address 0x4 - core index']
  #allocation1 [shape = 'u32[144,128]{1,0:T(1,128)}', space=vmem, size = 0x12000, scoped, tag = 'internal scratch']
  #allocation2 [shape = 'f32[4,1056]{1,0:T(4,128)}', space=vmem, size = 0x4800, scoped, tag = 'scratch operand']
  #allocation3 [shape = 'f32[4,1056]{1,0:T(4,128)}', space=vmem, size = 0x4800, scoped, tag = 'scratch operand']
  #allocation4 [shape = 'f32[8,1056]{1,0:T(8,128)}', space=vmem, size = 0x9000, scoped, tag = 'scratch operand']
  #allocation5 [shape = 'f32[8,1056]{1,0:T(8,128)}', space=vmem, size = 0x9000, scoped, tag = 'scratch operand']
  #allocation6 [shape = 'f32[8,1056]{1,0:T(8,128)}', space=vmem, size = 0x9000, scoped, tag = 'scratch operand']
  #allocation7 [shape = 'f32[8,1056]{1,0:T(8,128)}', space=vmem, size = 0x9000, scoped, tag = 'scratch operand']
  #allocation8 [shape = 'f32[144,512]{1,0:T(8,128)}', space=vmem, size = 0x48000, scoped, tag = 'scratch operand']
  %s0 = inlined_call_operand.vmem [shape: f32[2,4,256], index: 0, kind: input, shape index: {}]
  %s1 = inlined_call_operand.vmem [shape: f32[9,256], index: 1, kind: input, shape index: {}]
  %s2 = inlined_call_operand.vmem [shape: f32[9,256], index: 2, kind: input, shape index: {}]
  %s3 = inlined_call_operand.vmem [shape: f32[9,256], index: 3, kind: input, shape index: {}]
  %s4 = inlined_call_operand.vmem [shape: f32[9,256], index: 4, kind: input, shape index: {}]
  %s5 = inlined_call_operand.hbm [shape: bf16[4,36], index: 5, kind: input, shape index: {}]
  %s6 = inlined_call_operand.hbm [shape: f32[4,1], index: 6, kind: input, shape index: {}]
  %s7 = inlined_call_operand.hbm [shape: bf16[8,36], index: 7, kind: input, shape index: {}]
  %s8 = inlined_call_operand.hbm [shape: f32[8,1], index: 8, kind: input, shape index: {}]
  %s9 = inlined_call_operand.hbm [shape: bf16[8,72], index: 9, kind: input, shape index: {}]
  %s10 = inlined_call_operand.hbm [shape: f32[8,1], index: 10, kind: input, shape index: {}]
  %s11 = inlined_call_operand.hbm [shape: bf16[8,72], index: 11, kind: input, shape index: {}]
  %s12 = inlined_call_operand.vmem [shape: f32[8,1], index: 12, kind: input, shape index: {}]
  %s13 = inlined_call_operand.vmem [shape: bf16[8,72], index: 13, kind: input, shape index: {}]
  %s14 = inlined_call_operand.vmem [shape: f32[8,1], index: 14, kind: input, shape index: {}]
  %s15 = inlined_call_operand.vmem [shape: bf16[8,144], index: 15, kind: input, shape index: {}]
  %s16 = inlined_call_operand.vmem [shape: f32[8,1], index: 16, kind: input, shape index: {}]
  %s17 = inlined_call_operand.vmem [shape: bf16[8,144], index: 17, kind: input, shape index: {}]
  %s18 = inlined_call_operand.vmem [shape: f32[8,1], index: 18, kind: input, shape index: {}]
  %s19 = inlined_call_operand.vmem [shape: bf16[4,144], index: 19, kind: input, shape index: {}]
  %s20 = inlined_call_operand.vmem [shape: f32[4,1], index: 20, kind: input, shape index: {}]
  %s21 = inlined_call_operand.vmem [shape: f32[2,4,256], index: 21, kind: output, shape index: {}]
  %s22 = sld [smem:[#allocation0]]
  $region122: #{_lambda_.1} parent=0
    _
  %s24 = ssub.s32 1, %s22
  %s25 = scalar_select 0, %s24, %s22
  $region1: #{_lambda_.1} parent=0
    #allocation9 [shape = 'u8[1024]{0}', space=vmem, size = 0x400, scoped, tag = 'input window, operand 5, single buffered']
    #allocation10 [shape = 's32[1]{0}', space=sflag, size = 0x4, scoped, tag = 'scoped memory for _lambda_.1']
    #allocation11 [shape = 'u8[2048]{0}', space=vmem, size = 0x800, scoped, tag = 'input window, operand 6, single buffered']
    #allocation12 [shape = 's32[1]{0}', space=sflag, size = 0x4, scoped, tag = 'scoped memory for _lambda_.1']
    #allocation13 [shape = 'u8[2048]{0}', space=vmem, size = 0x800, scoped, tag = 'input window, operand 7, single buffered']
    #allocation14 [shape = 'u8[4096]{0}', space=vmem, size = 0x1000, scoped, tag = 'input window, operand 8, single buffered']
    #allocation15 [shape = 's32[1]{0}', space=sflag, size = 0x4, scoped, tag = 'scoped memory for _lambda_.1']
    #allocation16 [shape = 'u8[2048]{0}', space=vmem, size = 0x800, scoped, tag = 'input window, operand 9, single buffered']
    #allocation17 [shape = 'u8[4096]{0}', space=vmem, size = 0x1000, scoped, tag = 'input window, operand 10, single buffered']
    #allocation18 [shape = 's32[1]{0}', space=sflag, size = 0x4, scoped, tag = 'scoped memory for _lambda_.1']
    #allocation19 [shape = 'u8[2048]{0}', space=vmem, size = 0x800, scoped, tag = 'input window, operand 11, single buffered']
    %26 = vsyncpa [#allocation10], 0
    %27 = vsyncpa [#allocation12], 0
    %28 = vsyncpa [#allocation15], 0
    %29 = vsyncpa [#allocation18], 0
    // Predicated region
    $region2: #{_lambda_.1} parent=1 // pred_check
      _
    $region3: #{_lambda_.1} parent=1 // pred_check_branch
      %31 = sbr.rel (0) target = $region5
    $region4: #{_lambda_.1} parent=1 // pred_region
      _
    $region5: #{_lambda_.1} parent=1 // pred_fallthru
      _
    // Predicated region
    $region6: #{_lambda_.1} parent=1 // pred_check
      _
    $region7: #{_lambda_.1} parent=1 // pred_check_branch
      %33 = sbr.rel (0) target = $region9
    $region8: #{_lambda_.1} parent=1 // pred_region
      _
    $region9: #{_lambda_.1} parent=1 // pred_fallthru
      _
    // Predicated region
    $region10: #{_lambda_.1} parent=1 // pred_check
      _
    $region11: #{_lambda_.1} parent=1 // pred_check_branch
      %35 = sbr.rel (0) target = $region13
    $region12: #{_lambda_.1} parent=1 // pred_region
      _
    $region13: #{_lambda_.1} parent=1 // pred_fallthru
      _
    // Predicated region
    $region14: #{_lambda_.1} parent=1 // pred_check
      _
    $region15: #{_lambda_.1} parent=1 // pred_check_branch
      %37 = sbr.rel (0) target = $region17
    $region16: #{_lambda_.1} parent=1 // pred_region
      _
    $region17: #{_lambda_.1} parent=1 // pred_fallthru
      _
    // Predicated region
    $region18: #{_lambda_.1} parent=1 // pred_check
      _
    $region19: #{_lambda_.1} parent=1 // pred_check_branch
      %39 = sbr.rel (0) target = $region21
    $region20: #{_lambda_.1} parent=1 // pred_region
      _
    $region21: #{_lambda_.1} parent=1 // pred_fallthru
      _
    // Predicated region
    $region22: #{_lambda_.1} parent=1 // pred_check
      _
    $region23: #{_lambda_.1} parent=1 // pred_check_branch
      %41 = sbr.rel (0) target = $region25
    $region24: #{_lambda_.1} parent=1 // pred_region
      %s43 = ssub.s32 32, 32
      %44 = vsyncadd [#allocation10], %s43
      %s46 = sshll.u32 [#allocation9], 4
      %s47 = int_to_ptr.vmem [resolvable:$true] %s46
      %49 = dma.hbm_to_vmem [thread:$0]  %s5, 32, %s47, [#allocation10]
    $region25: #{_lambda_.1} parent=1 // pred_fallthru
      _
    // Predicated region
    $region26: #{_lambda_.1} parent=1 // pred_check
      _
    $region27: #{_lambda_.1} parent=1 // pred_check_branch
      %51 = sbr.rel (0) target = $region29
    $region28: #{_lambda_.1} parent=1 // pred_region
      %s53 = ssub.s32 64, 64
      %54 = vsyncadd [#allocation12], %s53
      %s56 = sshll.u32 [#allocation11], 4
      %s57 = int_to_ptr.vmem [resolvable:$true] %s56
      %59 = dma.hbm_to_vmem [thread:$0]  %s6, 64, %s57, [#allocation12]
    $region29: #{_lambda_.1} parent=1 // pred_fallthru
      _
    // Predicated region
    $region30: #{_lambda_.1} parent=1 // pred_check
      _
    $region31: #{_lambda_.1} parent=1 // pred_check_branch
      %61 = sbr.rel (0) target = $region33
    $region32: #{_lambda_.1} parent=1 // pred_region
      %s63 = ssub.s32 64, 64
      %64 = vsyncadd [#allocation12], %s63
      %s66 = sshll.u32 [#allocation13], 4
      %s67 = int_to_ptr.vmem [resolvable:$true] %s66
      %69 = dma.hbm_to_vmem [thread:$0]  %s7, 64, %s67, [#allocation12]
    $region33: #{_lambda_.1} parent=1 // pred_fallthru
      _
    // Predicated region
    $region34: #{_lambda_.1} parent=1 // pred_check
      _
    $region35: #{_lambda_.1} parent=1 // pred_check_branch
      %71 = sbr.rel (0) target = $region37
    $region36: #{_lambda_.1} parent=1 // pred_region
      %s73 = ssub.s32 128, 128
      %74 = vsyncadd [#allocation15], %s73
      %s76 = sshll.u32 [#allocation14], 4
      %s77 = int_to_ptr.vmem [resolvable:$true] %s76
      %79 = dma.hbm_to_vmem [thread:$0]  %s8, 128, %s77, [#allocation15]
    $region37: #{_lambda_.1} parent=1 // pred_fallthru
      _
    // Predicated region
    $region38: #{_lambda_.1} parent=1 // pred_check
      _
    $region39: #{_lambda_.1} parent=1 // pred_check_branch
      %81 = sbr.rel (0) target = $region41
    $region40: #{_lambda_.1} parent=1 // pred_region
      %s83 = ssub.s32 64, 64
      %84 = vsyncadd [#allocation15], %s83
      %s86 = sshll.u32 [#allocation16], 4
      %s87 = int_to_ptr.vmem [resolvable:$true] %s86
      %89 = dma.hbm_to_vmem [thread:$0]  %s9, 64, %s87, [#allocation15]
    $region41: #{_lambda_.1} parent=1 // pred_fallthru
      _
    // Predicated region
    $region42: #{_lambda_.1} parent=1 // pred_check
      _
    $region43: #{_lambda_.1} parent=1 // pred_check_branch
      %91 = sbr.rel (0) target = $region45
    $region44: #{_lambda_.1} parent=1 // pred_region
      %s93 = ssub.s32 128, 128
      %94 = vsyncadd [#allocation18], %s93
      %s96 = sshll.u32 [#allocation17], 4
      %s97 = int_to_ptr.vmem [resolvable:$true] %s96
      %99 = dma.hbm_to_vmem [thread:$0]  %s10, 128, %s97, [#allocation18]
    $region45: #{_lambda_.1} parent=1 // pred_fallthru
      _
    // Predicated region
    $region46: #{_lambda_.1} parent=1 // pred_check
      _
    $region47: #{_lambda_.1} parent=1 // pred_check_branch
      %101 = sbr.rel (0) target = $region49
    $region48: #{_lambda_.1} parent=1 // pred_region
      %s103 = ssub.s32 64, 64
      %104 = vsyncadd [#allocation18], %s103
      %s106 = sshll.u32 [#allocation19], 4
      %s107 = int_to_ptr.vmem [resolvable:$true] %s106
      %109 = dma.hbm_to_vmem [thread:$0]  %s11, 64, %s107, [#allocation18]
    $region49: #{_lambda_.1} parent=1 // pred_fallthru
      _
    // Predicated region
    $region50: #{_lambda_.1} parent=1 // pred_check
      _
    $region51: #{_lambda_.1} parent=1 // pred_check_branch
      %111 = sbr.rel (0) target = $region53
    $region52: #{_lambda_.1} parent=1 // pred_region
      _
    $region53: #{_lambda_.1} parent=1 // pred_fallthru
      _
    // Predicated region
    $region54: #{_lambda_.1} parent=1 // pred_check
      _
    $region55: #{_lambda_.1} parent=1 // pred_check_branch
      %113 = sbr.rel (0) target = $region57
    $region56: #{_lambda_.1} parent=1 // pred_region
      _
    $region57: #{_lambda_.1} parent=1 // pred_fallthru
      _
    // Predicated region
    $region58: #{_lambda_.1} parent=1 // pred_check
      _
    $region59: #{_lambda_.1} parent=1 // pred_check_branch
      %115 = sbr.rel (0) target = $region61
    $region60: #{_lambda_.1} parent=1 // pred_region
      _
    $region61: #{_lambda_.1} parent=1 // pred_fallthru
      _
    // Predicated region
    $region62: #{_lambda_.1} parent=1 // pred_check
      _
    $region63: #{_lambda_.1} parent=1 // pred_check_branch
      %117 = sbr.rel (0) target = $region65
    $region64: #{_lambda_.1} parent=1 // pred_region
      _
    $region65: #{_lambda_.1} parent=1 // pred_fallthru
      _
    // Predicated region
    $region66: #{_lambda_.1} parent=1 // pred_check
      _
    $region67: #{_lambda_.1} parent=1 // pred_check_branch
      %119 = sbr.rel (0) target = $region69
    $region68: #{_lambda_.1} parent=1 // pred_region
      _
    $region69: #{_lambda_.1} parent=1 // pred_fallthru
      _
    // Predicated region
    $region70: #{_lambda_.1} parent=1 // pred_check
      _
    $region71: #{_lambda_.1} parent=1 // pred_check_branch
      %121 = sbr.rel (0) target = $region73
    $region72: #{_lambda_.1} parent=1 // pred_region
      _
    $region73: #{_lambda_.1} parent=1 // pred_fallthru
      _
    // Predicated region
    $region74: #{_lambda_.1} parent=1 // pred_check
      _
    $region75: #{_lambda_.1} parent=1 // pred_check_branch
      %123 = sbr.rel (0) target = $region77
    $region76: #{_lambda_.1} parent=1 // pred_region
      _
    $region77: #{_lambda_.1} parent=1 // pred_fallthru
      _
    // Predicated region
    $region78: #{_lambda_.1} parent=1 // pred_check
      _
    $region79: #{_lambda_.1} parent=1 // pred_check_branch
      %125 = sbr.rel (0) target = $region81
    $region80: #{_lambda_.1} parent=1 // pred_region
      _
    $region81: #{_lambda_.1} parent=1 // pred_fallthru
      _
    // Predicated region
    $region82: #{_lambda_.1} parent=1 // pred_check
      _
    $region83: #{_lambda_.1} parent=1 // pred_check_branch
      %127 = sbr.rel (0) target = $region85
    $region84: #{_lambda_.1} parent=1 // pred_region
      _
    $region85: #{_lambda_.1} parent=1 // pred_fallthru
      _
    // Predicated region
    $region86: #{_lambda_.1} parent=1 // pred_check
      _
    $region87: #{_lambda_.1} parent=1 // pred_check_branch
      %129 = sbr.rel (0) target = $region89
    $region88: #{_lambda_.1} parent=1 // pred_region
      %130 = dma.done [#allocation10], 32
    $region89: #{_lambda_.1} parent=1 // pred_fallthru
      _
    // Predicated region
    $region90: #{_lambda_.1} parent=1 // pred_check
      _
    $region91: #{_lambda_.1} parent=1 // pred_check_branch
      %132 = sbr.rel (0) target = $region93
    $region92: #{_lambda_.1} parent=1 // pred_region
      %133 = dma.done [#allocation12], 64
    $region93: #{_lambda_.1} parent=1 // pred_fallthru
      _
    // Predicated region
    $region94: #{_lambda_.1} parent=1 // pred_check
      _
    $region95: #{_lambda_.1} parent=1 // pred_check_branch
      %135 = sbr.rel (0) target = $region97
    $region96: #{_lambda_.1} parent=1 // pred_region
      %136 = dma.done [#allocation12], 64
    $region97: #{_lambda_.1} parent=1 // pred_fallthru
      _
    // Predicated region
    $region98: #{_lambda_.1} parent=1 // pred_check
      _
    $region99: #{_lambda_.1} parent=1 // pred_check_branch
      %138 = sbr.rel (0) target = $region101
    $region100: #{_lambda_.1} parent=1 // pred_region
      %139 = dma.done [#allocation15], 128
    $region101: #{_lambda_.1} parent=1 // pred_fallthru
      _
    // Predicated region
    $region102: #{_lambda_.1} parent=1 // pred_check
      _
    $region103: #{_lambda_.1} parent=1 // pred_check_branch
      %141 = sbr.rel (0) target = $region105
    $region104: #{_lambda_.1} parent=1 // pred_region
      %142 = dma.done [#allocation15], 64
    $region105: #{_lambda_.1} parent=1 // pred_fallthru
      _
    // Predicated region
    $region106: #{_lambda_.1} parent=1 // pred_check
      _
    $region107: #{_lambda_.1} parent=1 // pred_check_branch
      %144 = sbr.rel (0) target = $region109
    $region108: #{_lambda_.1} parent=1 // pred_region
      %145 = dma.done [#allocation18], 128
    $region109: #{_lambda_.1} parent=1 // pred_fallthru
      _
    // Predicated region
    $region110: #{_lambda_.1} parent=1 // pred_check
      _
    $region111: #{_lambda_.1} parent=1 // pred_check_branch
      %147 = sbr.rel (0) target = $region113
    $region112: #{_lambda_.1} parent=1 // pred_region
      %148 = dma.done [#allocation18], 64
    $region113: #{_lambda_.1} parent=1 // pred_fallthru
      _
    %150 = vst [vmem:[#allocation2] sm:$0xff] 0.0
    %151 = vst [vmem:[#allocation2 + $0x8] sm:$0xff] 0.0
    %152 = vst [vmem:[#allocation2 + $0x10] sm:$0xff] 0.0
    %153 = vst [vmem:[#allocation2 + $0x18] sm:$0xff] 0.0
    %vm154 = vcmask 257024
    %155 = vst.msk [vmem:[#allocation2 + $0x20] sm:$0xf] %vm154, 0.0
    %156 = vst [vmem:[#allocation3] sm:$0xff] 0.0
    %157 = vst [vmem:[#allocation3 + $0x8] sm:$0xff] 0.0
    %158 = vst [vmem:[#allocation3 + $0x10] sm:$0xff] 0.0
    %159 = vst [vmem:[#allocation3 + $0x18] sm:$0xff] 0.0
    %160 = vst.msk [vmem:[#allocation3 + $0x20] sm:$0xf] %vm154, 0.0
    %161 = vst [vmem:[#allocation4] sm:$0xff] 0.0
    %162 = vst [vmem:[#allocation4 + $0x8] sm:$0xff] 0.0
    %163 = vst [vmem:[#allocation4 + $0x10] sm:$0xff] 0.0
    %164 = vst [vmem:[#allocation4 + $0x18] sm:$0xff] 0.0
    %165 = vst [vmem:[#allocation4 + $0x20] sm:$0xff] 0.0
    %166 = vst [vmem:[#allocation4 + $0x28] sm:$0xff] 0.0
    %167 = vst [vmem:[#allocation4 + $0x30] sm:$0xff] 0.0
    %168 = vst [vmem:[#allocation4 + $0x38] sm:$0xff] 0.0
    %vm169 = vcmask 261120
    %170 = vst.msk [vmem:[#allocation4 + $0x40] sm:$0xff] %vm169, 0.0
    %171 = vst [vmem:[#allocation5] sm:$0xff] 0.0
    %172 = vst [vmem:[#allocation5 + $0x8] sm:$0xff] 0.0
    %173 = vst [vmem:[#allocation5 + $0x10] sm:$0xff] 0.0
    %174 = vst [vmem:[#allocation5 + $0x18] sm:$0xff] 0.0
    %175 = vst [vmem:[#allocation5 + $0x20] sm:$0xff] 0.0
    %176 = vst [vmem:[#allocation5 + $0x28] sm:$0xff] 0.0
    %177 = vst [vmem:[#allocation5 + $0x30] sm:$0xff] 0.0
    %178 = vst [vmem:[#allocation5 + $0x38] sm:$0xff] 0.0
    %179 = vst.msk [vmem:[#allocation5 + $0x40] sm:$0xff] %vm169, 0.0
    %180 = vst [vmem:[#allocation6] sm:$0xff] 0.0
    %181 = vst [vmem:[#allocation6 + $0x8] sm:$0xff] 0.0
    %182 = vst [vmem:[#allocation6 + $0x10] sm:$0xff] 0.0
    %183 = vst [vmem:[#allocation6 + $0x18] sm:$0xff] 0.0
    %184 = vst [vmem:[#allocation6 + $0x20] sm:$0xff] 0.0
    %185 = vst [vmem:[#allocation6 + $0x28] sm:$0xff] 0.0
    %186 = vst [vmem:[#allocation6 + $0x30] sm:$0xff] 0.0
    %187 = vst [vmem:[#allocation6 + $0x38] sm:$0xff] 0.0
    %188 = vst.msk [vmem:[#allocation6 + $0x40] sm:$0xff] %vm169, 0.0
    %189 = vst [vmem:[#allocation7] sm:$0xff] 0.0
    %190 = vst [vmem:[#allocation7 + $0x8] sm:$0xff] 0.0
    %191 = vst [vmem:[#allocation7 + $0x10] sm:$0xff] 0.0
    %192 = vst [vmem:[#allocation7 + $0x18] sm:$0xff] 0.0
    %193 = vst [vmem:[#allocation7 + $0x20] sm:$0xff] 0.0
    %194 = vst [vmem:[#allocation7 + $0x28] sm:$0xff] 0.0
    %195 = vst [vmem:[#allocation7 + $0x30] sm:$0xff] 0.0
    %196 = vst [vmem:[#allocation7 + $0x38] sm:$0xff] 0.0
    %197 = vst.msk [vmem:[#allocation7 + $0x40] sm:$0xff] %vm169, 0.0
    %v198 = vld [vmem:[%s0] sm:$0xff]
    %200 = vrot.lane.b32.xlu0 %v198, 8
    %v201 = vpop.permute.xlu0 %200
    %v202 = vrot.slane %v201, 4
    %vm203 = vcmask 64512
    %v204 = vsel %vm203, %v202, %v201
    %vm207 = vcmask 1043520
    %vm208 = vcmask 1047556
    %vm209 = vmor %vm208, %vm207
    %210 = vst.msk [vmem:[#allocation2 + $0x4] sm:$0xff] %vm209, %v204
    %vm211 = vcmask 60416
    %212 = vst.msk [vmem:[#allocation2 + $0xc] sm:$0xf] %vm211, %v202
    %s213 = scalar_lea.vmem %s0, 8
    %v214 = vld [vmem:[%s213] sm:$0xff]
    %216 = vrot.lane.b32.xlu0 %v214, 24
    %v217 = vpop.permute.xlu0 %216
    %v218 = vrot.slane %v217, 4
    %vm219 = vcmask 195584
    %v220 = vsel %vm219, %v218, %v217
    %vm223 = vcmask 1043648
    %vm224 = vmor %vm208, %vm223
    %225 = vst.msk [vmem:[#allocation2 + $0x14] sm:$0xff] %vm224, %v220
    %vm226 = vcmask 191488
    %227 = vst.msk [vmem:[#allocation2 + $0x1c] sm:$0xf] %vm226, %v218
    %v228 = vld [vmem:[%s1] ss:$8 sm:$0x3]
    %v229 = vld [vmem:[#allocation2] sm:$0xff]
    %v230 = vld [vmem:[#allocation2 + $0x8] sm:$0xf]
    %v232 = vlaneseq
    %v233 = vshrl.u32 %v232, 7
    %v234 = vsub.s32 0, %v233
    %v235 = vrot.slane %v228, %v234
    %v236 = vlaneseq
    %v237 = vshrl.u32 %v236, 7
    %v238 = vsub.s32 1, %v237
    %v239 = vrot.slane %v228, %v238
    %v240 = vcombine.low %v235, %v239
    %241 = vrot.lane.b32.xlu0 %v240, 119
    %v242 = vpop.permute.xlu0 %241
    %v243 = vrot.slane %v242, 4
    %vm244 = vcmask 973824
    %v245 = vsel %vm244, %v243, %v242
    %v248 = vmul.f32 %v229, %v245
    %v249 = vmul.f32 %v230, %v243
    %v252 = vcombine.high %v248, %v248
    %253 = vrot.lane.b32.xlu0 %v248, 9
    %v254 = vpop.permute.xlu0 %253
    %255 = vrot.lane.b32.xlu0 %v252, 9
    %v256 = vpop.permute.xlu0 %255
    %257 = vrot.lane.b32.xlu0 %v249, 9
    %v258 = vpop.permute.xlu0 %257
    %vm259 = vcmask 72704
    %v260 = vsel %vm259, %v254, %v256
    %v261 = vsel %vm259, %v256, %v258
    %264 = vst [vmem:[#allocation8] sm:$0xf] %v260
    %265 = vst [vmem:[#allocation8 + $0x8] sm:$0xf] %v261
    %v266 = vld [vmem:[#allocation2 + $0x14] sm:$0xff]
    %v267 = vld [vmem:[#allocation2 + $0x1c] sm:$0xf]
    %268 = vrot.lane.b32.xlu0 %v240, 7
    %v269 = vpop.permute.xlu0 %268
    %v270 = vrot.slane %v269, 4
    %vm271 = vcmask 56320
    %v272 = vsel %vm271, %v270, %v269
    %v275 = vmul.f32 %v266, %v272
    %v276 = vmul.f32 %v267, %v270
    %v279 = vcombine.high %v275, %v275
    %280 = vrot.lane.b32.xlu0 %v275, 121
    %v281 = vpop.permute.xlu0 %280
    %282 = vrot.lane.b32.xlu0 %v279, 121
    %v283 = vpop.permute.xlu0 %282
    %284 = vrot.lane.b32.xlu0 %v276, 121
    %v285 = vpop.permute.xlu0 %284
    %vm286 = vcmask 990208
    %v287 = vsel %vm286, %v281, %v283
    %v288 = vsel %vm286, %v283, %v285
    %291 = vst [vmem:[#allocation8 + $0x10] sm:$0xf] %v287
    %292 = vst [vmem:[#allocation8 + $0x18] sm:$0xf] %v288
    %s293 = scalar_lea.vmem %s1, 1
    %v294 = vld [vmem:[%s293] ss:$8 sm:$0x3]
    %v295 = vld [vmem:[#allocation2] sm:$0xff]
    %v296 = vld [vmem:[#allocation2 + $0x8] sm:$0xf]
    %v298 = vlaneseq
    %v299 = vshrl.u32 %v298, 7
    %v300 = vsub.s32 0, %v299
    %v301 = vrot.slane %v294, %v300
    %v302 = vlaneseq
    %v303 = vshrl.u32 %v302, 7
    %v304 = vsub.s32 1, %v303
    %v305 = vrot.slane %v294, %v304
    %v306 = vcombine.low %v301, %v305
    %307 = vrot.lane.b32.xlu0 %v306, 120
    %v308 = vpop.permute.xlu0 %307
    %v309 = vrot.slane %v308, 4
    %vm310 = vcmask 982016
    %v311 = vsel %vm310, %v309, %v308
    %v314 = vmul.f32 %v295, %v311
    %v315 = vmul.f32 %v296, %v309
    %v318 = vcombine.low %v314, %v314
    %v319 = vcombine.low %v315, %v315
    %320 = vrot.lane.b32.xlu0 %v318, 8
    %v321 = vpop.permute.xlu0 %320
    %322 = vrot.lane.b32.xlu0 %v314, 8
    %v323 = vpop.permute.xlu0 %322
    %324 = vrot.lane.b32.xlu0 %v319, 8
    %v325 = vpop.permute.xlu0 %324
    %v326 = vsel %vm203, %v321, %v323
    %v327 = vsel %vm203, %v323, %v325
    %330 = vst [vmem:[#allocation8] sm:$0xf0] %v326
    %331 = vst [vmem:[#allocation8 + $0x8] sm:$0xf0] %v327
    %v332 = vld [vmem:[#allocation2 + $0x14] sm:$0xff]
    %v333 = vld [vmem:[#allocation2 + $0x1c] sm:$0xf]
    %334 = vrot.lane.b32.xlu0 %v306, 8
    %v335 = vpop.permute.xlu0 %334
    %v336 = vrot.slane %v335, 4
    %v337 = vsel %vm203, %v336, %v335
    %v340 = vmul.f32 %v332, %v337
    %v341 = vmul.f32 %v333, %v336
    %v344 = vcombine.low %v340, %v340
    %v345 = vcombine.low %v341, %v341
    %346 = vrot.lane.b32.xlu0 %v344, 120
    %v347 = vpop.permute.xlu0 %346
    %348 = vrot.lane.b32.xlu0 %v340, 120
    %v349 = vpop.permute.xlu0 %348
    %350 = vrot.lane.b32.xlu0 %v345, 120
    %v351 = vpop.permute.xlu0 %350
    %v352 = vsel %vm310, %v347, %v349
    %v353 = vsel %vm310, %v349, %v351
    %356 = vst [vmem:[#allocation8 + $0x10] sm:$0xf0] %v352
    %357 = vst [vmem:[#allocation8 + $0x18] sm:$0xf0] %v353
    %s358 = scalar_lea.vmem %s1, 2
    %v359 = vld [vmem:[%s358] ss:$8 sm:$0x3]
    %v360 = vld [vmem:[#allocation2] sm:$0xff]
    %v361 = vld [vmem:[#allocation2 + $0x8] sm:$0xf]
    %v363 = vlaneseq
    %v364 = vshrl.u32 %v363, 7
    %v365 = vsub.s32 0, %v364
    %v366 = vrot.slane %v359, %v365
    %v367 = vlaneseq
    %v368 = vshrl.u32 %v367, 7
    %v369 = vsub.s32 1, %v368
    %v370 = vrot.slane %v359, %v369
    %v371 = vcombine.low %v366, %v370
    %372 = vrot.lane.b32.xlu0 %v371, 121
    %v373 = vpop.permute.xlu0 %372
    %v374 = vrot.slane %v373, 4
    %v375 = vsel %vm286, %v374, %v373
    %v378 = vmul.f32 %v360, %v375
    %v379 = vmul.f32 %v361, %v374
    %v382 = vcombine.high %v378, %v378
    %383 = vrot.lane.b32.xlu0 %v378, 7
    %v384 = vpop.permute.xlu0 %383
    %385 = vrot.lane.b32.xlu0 %v382, 7
    %v386 = vpop.permute.xlu0 %385
    %387 = vrot.lane.b32.xlu0 %v379, 7
    %v388 = vpop.permute.xlu0 %387
    %v389 = vsel %vm271, %v384, %v386
    %v390 = vsel %vm271, %v386, %v388
    %393 = vst [vmem:[#allocation8 + $0x20] sm:$0xf] %v389
    %394 = vst [vmem:[#allocation8 + $0x28] sm:$0xf] %v390
    %v395 = vld [vmem:[#allocation2 + $0x14] sm:$0xff]
    %v396 = vld [vmem:[#allocation2 + $0x1c] sm:$0xf]
    %397 = vrot.lane.b32.xlu0 %v371, 9
    %v398 = vpop.permute.xlu0 %397
    %v399 = vrot.slane %v398, 4
    %v400 = vsel %vm259, %v399, %v398
    %v403 = vmul.f32 %v395, %v400
    %v404 = vmul.f32 %v396, %v399
    %v407 = vcombine.high %v403, %v403
    %408 = vrot.lane.b32.xlu0 %v403, 119
    %v409 = vpop.permute.xlu0 %408
    %410 = vrot.lane.b32.xlu0 %v407, 119
    %v411 = vpop.permute.xlu0 %410
    %412 = vrot.lane.b32.xlu0 %v404, 119
    %v413 = vpop.permute.xlu0 %412
    %v414 = vsel %vm244, %v409, %v411
    %v415 = vsel %vm244, %v411, %v413
    %418 = vst [vmem:[#allocation8 + $0x30] sm:$0xf] %v414
    %419 = vst [vmem:[#allocation8 + $0x38] sm:$0xf] %v415
    %s420 = scalar_lea.vmem %s1, 3
    %v421 = vld [vmem:[%s420] ss:$8 sm:$0x3]
    %v422 = vld [vmem:[#allocation2 + $0x4] sm:$0xff]
    %v423 = vld [vmem:[#allocation2 + $0xc] sm:$0xf]
    %v425 = vlaneseq
    %v426 = vshrl.u32 %v425, 7
    %v427 = vsub.s32 0, %v426
    %v428 = vrot.slane %v421, %v427
    %v429 = vlaneseq
    %v430 = vshrl.u32 %v429, 7
    %v431 = vsub.s32 1, %v430
    %v432 = vrot.slane %v421, %v431
    %v433 = vcombine.low %v428, %v432
    %434 = vrot.lane.b32.xlu0 %v433, 7
    %v435 = vpop.permute.xlu0 %434
    %v436 = vrot.slane %v435, 4
    %v437 = vsel %vm271, %v436, %v435
    %v440 = vmul.f32 %v422, %v437
    %v441 = vmul.f32 %v423, %v436
    %v444 = vcombine.low %v440, %v440
    %v445 = vcombine.low %v441, %v441
    %446 = vrot.lane.b32.xlu0 %v444, 121
    %v447 = vpop.permute.xlu0 %446
    %448 = vrot.lane.b32.xlu0 %v440, 121
    %v449 = vpop.permute.xlu0 %448
    %450 = vrot.lane.b32.xlu0 %v445, 121
    %v451 = vpop.permute.xlu0 %450
    %v452 = vsel %vm286, %v447, %v449
    %v453 = vsel %vm286, %v449, %v451
    %456 = vst [vmem:[#allocation8 + $0x20] sm:$0xf0] %v452
    %457 = vst [vmem:[#allocation8 + $0x28] sm:$0xf0] %v453
    %v458 = vld [vmem:[#allocation2 + $0x14] sm:$0xff]
    %v459 = vld [vmem:[#allocation2 + $0x1c] sm:$0xf]
    %460 = vrot.lane.b32.xlu0 %v433, 23
    %v461 = vpop.permute.xlu0 %460
    %v462 = vrot.slane %v461, 4
    %vm463 = vcmask 187392
    %v464 = vsel %vm463, %v462, %v461
    %v467 = vmul.f32 %v458, %v464
    %v468 = vmul.f32 %v459, %v462
    %v471 = vcombine.low %v467, %v467
    %v472 = vcombine.low %v468, %v468
    %473 = vrot.lane.b32.xlu0 %v471, 105
    %v474 = vpop.permute.xlu0 %473
    %475 = vrot.lane.b32.xlu0 %v467, 105
    %v476 = vpop.permute.xlu0 %475
    %477 = vrot.lane.b32.xlu0 %v472, 105
    %v478 = vpop.permute.xlu0 %477
    %vm479 = vcmask 859136
    %v480 = vsel %vm479, %v474, %v476
    %v481 = vsel %vm479, %v476, %v478
    %484 = vst [vmem:[#allocation8 + $0x30] sm:$0xf0] %v480
    %485 = vst [vmem:[#allocation8 + $0x38] sm:$0xf0] %v481
    %s486 = scalar_lea.vmem %s1, 4
    %v487 = vld [vmem:[%s486] ss:$8 sm:$0x3]
    %v488 = vld [vmem:[#allocation2 + $0x4] sm:$0xff]
    %v489 = vld [vmem:[#allocation2 + $0xc] sm:$0xf]
    %v491 = vlaneseq
    %v492 = vshrl.u32 %v491, 7
    %v493 = vsub.s32 0, %v492
    %v494 = vrot.slane %v487, %v493
    %v495 = vlaneseq
    %v496 = vshrl.u32 %v495, 7
    %v497 = vsub.s32 1, %v496
    %v498 = vrot.slane %v487, %v497
    %v499 = vcombine.low %v494, %v498
    %500 = vrot.lane.b32.xlu0 %v499, 8
    %v501 = vpop.permute.xlu0 %500
    %v502 = vrot.slane %v501, 4
    %v503 = vsel %vm203, %v502, %v501
    %v506 = vmul.f32 %v488, %v503
    %v507 = vmul.f32 %v489, %v502
    %v510 = vcombine.high %v506, %v506
    %511 = vrot.lane.b32.xlu0 %v506, 120
    %v512 = vpop.permute.xlu0 %511
    %513 = vrot.lane.b32.xlu0 %v510, 120
    %v514 = vpop.permute.xlu0 %513
    %515 = vrot.lane.b32.xlu0 %v507, 120
    %v516 = vpop.permute.xlu0 %515
    %v517 = vsel %vm310, %v512, %v514
    %v518 = vsel %vm310, %v514, %v516
    %521 = vst [vmem:[#allocation8 + $0x40] sm:$0xf] %v517
    %522 = vst [vmem:[#allocation8 + $0x48] sm:$0xf] %v518
    %v523 = vld [vmem:[#allocation2 + $0x14] sm:$0xff]
    %v524 = vld [vmem:[#allocation2 + $0x1c] sm:$0xf]
    %525 = vrot.lane.b32.xlu0 %v499, 24
    %v526 = vpop.permute.xlu0 %525
    %v527 = vrot.slane %v526, 4
    %v528 = vsel %vm219, %v527, %v526
    %v531 = vmul.f32 %v523, %v528
    %v532 = vmul.f32 %v524, %v527
    %v535 = vcombine.high %v531, %v531
    %536 = vrot.lane.b32.xlu0 %v531, 104
    %v537 = vpop.permute.xlu0 %536
    %538 = vrot.lane.b32.xlu0 %v535, 104
    %v539 = vpop.permute.xlu0 %538
    %540 = vrot.lane.b32.xlu0 %v532, 104
    %v541 = vpop.permute.xlu0 %540
    %vm542 = vcmask 850944
    %v543 = vsel %vm542, %v537, %v539
    %v544 = vsel %vm542, %v539, %v541
    %547 = vst [vmem:[#allocation8 + $0x50] sm:$0xf] %v543
    %548 = vst [vmem:[#allocation8 + $0x58] sm:$0xf] %v544
    %s549 = scalar_lea.vmem %s1, 5
    %v550 = vld [vmem:[%s549] ss:$8 sm:$0x3]
    %v551 = vld [vmem:[#allocation2 + $0x4] sm:$0xff]
    %v552 = vld [vmem:[#allocation2 + $0xc] sm:$0xf]
    %v554 = vlaneseq
    %v555 = vshrl.u32 %v554, 7
    %v556 = vsub.s32 0, %v555
    %v557 = vrot.slane %v550, %v556
    %v558 = vlaneseq
    %v559 = vshrl.u32 %v558, 7
    %v560 = vsub.s32 1, %v559
    %v561 = vrot.slane %v550, %v560
    %v562 = vcombine.low %v557, %v561
    %563 = vrot.lane.b32.xlu0 %v562, 9
    %v564 = vpop.permute.xlu0 %563
    %v565 = vrot.slane %v564, 4
    %v566 = vsel %vm259, %v565, %v564
    %v569 = vmul.f32 %v551, %v566
    %v570 = vmul.f32 %v552, %v565
    %v573 = vcombine.low %v569, %v569
    %v574 = vcombine.low %v570, %v570
    %575 = vrot.lane.b32.xlu0 %v573, 119
    %v576 = vpop.permute.xlu0 %575
    %577 = vrot.lane.b32.xlu0 %v569, 119
    %v578 = vpop.permute.xlu0 %577
    %579 = vrot.lane.b32.xlu0 %v574, 119
    %v580 = vpop.permute.xlu0 %579
    %v581 = vsel %vm244, %v576, %v578
    %v582 = vsel %vm244, %v578, %v580
    %585 = vst [vmem:[#allocation8 + $0x40] sm:$0xf0] %v581
    %586 = vst [vmem:[#allocation8 + $0x48] sm:$0xf0] %v582
    %v587 = vld [vmem:[#allocation2 + $0x14] sm:$0xff]
    %v588 = vld [vmem:[#allocation2 + $0x1c] sm:$0xf]
    %589 = vrot.lane.b32.xlu0 %v562, 25
    %v590 = vpop.permute.xlu0 %589
    %v591 = vrot.slane %v590, 4
    %vm592 = vcmask 203776
    %v593 = vsel %vm592, %v591, %v590
    %v596 = vmul.f32 %v587, %v593
    %v597 = vmul.f32 %v588, %v591
    %v600 = vcombine.low %v596, %v596
    %v601 = vcombine.low %v597, %v597
    %602 = vrot.lane.b32.xlu0 %v600, 103
    %v603 = vpop.permute.xlu0 %602
    %604 = vrot.lane.b32.xlu0 %v596, 103
    %v605 = vpop.permute.xlu0 %604
    %606 = vrot.lane.b32.xlu0 %v601, 103
    %v607 = vpop.permute.xlu0 %606
    %vm608 = vcmask 842752
    %v609 = vsel %vm608, %v603, %v605
    %v610 = vsel %vm608, %v605, %v607
    %613 = vst [vmem:[#allocation8 + $0x50] sm:$0xf0] %v609
    %614 = vst [vmem:[#allocation8 + $0x58] sm:$0xf0] %v610
    %s615 = scalar_lea.vmem %s1, 6
    %v616 = vld [vmem:[%s615] ss:$8 sm:$0x3]
    %v617 = vld [vmem:[#allocation2 + $0x4] sm:$0xff]
    %v618 = vld [vmem:[#allocation2 + $0xc] sm:$0xf]
    %v620 = vlaneseq
    %v621 = vshrl.u32 %v620, 7
    %v622 = vsub.s32 0, %v621
    %v623 = vrot.slane %v616, %v622
    %v624 = vlaneseq
    %v625 = vshrl.u32 %v624, 7
    %v626 = vsub.s32 1, %v625
    %v627 = vrot.slane %v616, %v626
    %v628 = vcombine.low %v623, %v627
    %629 = vrot.lane.b32.xlu0 %v628, 23
    %v630 = vpop.permute.xlu0 %629
    %v631 = vrot.slane %v630, 4
    %v632 = vsel %vm463, %v631, %v630
    %v635 = vmul.f32 %v617, %v632
    %v636 = vmul.f32 %v618, %v631
    %v639 = vcombine.high %v635, %v635
    %640 = vrot.lane.b32.xlu0 %v635, 105
    %v641 = vpop.permute.xlu0 %640
    %642 = vrot.lane.b32.xlu0 %v639, 105
    %v643 = vpop.permute.xlu0 %642
    %644 = vrot.lane.b32.xlu0 %v636, 105
    %v645 = vpop.permute.xlu0 %644
    %v646 = vsel %vm479, %v641, %v643
    %v647 = vsel %vm479, %v643, %v645
    %650 = vst [vmem:[#allocation8 + $0x60] sm:$0xf] %v646
    %651 = vst [vmem:[#allocation8 + $0x68] sm:$0xf] %v647
    %v652 = vld [vmem:[#allocation2 + $0x14] sm:$0xff]
    %v653 = vld [vmem:[#allocation2 + $0x1c] sm:$0xf]
    %654 = vrot.lane.b32.xlu0 %v628, 39
    %v655 = vpop.permute.xlu0 %654
    %v656 = vrot.slane %v655, 4
    %vm657 = vcmask 318464
    %v658 = vsel %vm657, %v656, %v655
    %v661 = vmul.f32 %v652, %v658
    %v662 = vmul.f32 %v653, %v656
    %v665 = vcombine.high %v661, %v661
    %666 = vrot.lane.b32.xlu0 %v661, 89
    %v667 = vpop.permute.xlu0 %666
    %668 = vrot.lane.b32.xlu0 %v665, 89
    %v669 = vpop.permute.xlu0 %668
    %670 = vrot.lane.b32.xlu0 %v662, 89
    %v671 = vpop.permute.xlu0 %670
    %vm672 = vcmask 728064
    %v673 = vsel %vm672, %v667, %v669
    %v674 = vsel %vm672, %v669, %v671
    %677 = vst [vmem:[#allocation8 + $0x70] sm:$0xf] %v673
    %678 = vst [vmem:[#allocation8 + $0x78] sm:$0xf] %v674
    %s679 = scalar_lea.vmem %s1, 7
    %v680 = vld [vmem:[%s679] ss:$8 sm:$0x3]
    %v681 = vld [vmem:[#allocation2 + $0x4] sm:$0xff]
    %v682 = vld [vmem:[#allocation2 + $0xc] sm:$0xf]
    %v684 = vlaneseq
    %v685 = vshrl.u32 %v684, 7
    %v686 = vsub.s32 0, %v685
    %v687 = vrot.slane %v680, %v686
    %v688 = vlaneseq
    %v689 = vshrl.u32 %v688, 7
    %v690 = vsub.s32 1, %v689
    %v691 = vrot.slane %v680, %v690
    %v692 = vcombine.low %v687, %v691
    %693 = vrot.lane.b32.xlu0 %v692, 24
    %v694 = vpop.permute.xlu0 %693
    %v695 = vrot.slane %v694, 4
    %v696 = vsel %vm219, %v695, %v694
    %v699 = vmul.f32 %v681, %v696
    %v700 = vmul.f32 %v682, %v695
    %v703 = vcombine.low %v699, %v699
    %v704 = vcombine.low %v700, %v700
    %705 = vrot.lane.b32.xlu0 %v703, 104
    %v706 = vpop.permute.xlu0 %705
    %707 = vrot.lane.b32.xlu0 %v699, 104
    %v708 = vpop.permute.xlu0 %707
    %709 = vrot.lane.b32.xlu0 %v704, 104
    %v710 = vpop.permute.xlu0 %709
    %v711 = vsel %vm542, %v706, %v708
    %v712 = vsel %vm542, %v708, %v710
    %715 = vst [vmem:[#allocation8 + $0x60] sm:$0xf0] %v711
    %716 = vst [vmem:[#allocation8 + $0x68] sm:$0xf0] %v712
    %v717 = vld [vmem:[#allocation2 + $0x14] sm:$0xff]
    %v718 = vld [vmem:[#allocation2 + $0x1c] sm:$0xf]
    %719 = vrot.lane.b32.xlu0 %v692, 40
    %v720 = vpop.permute.xlu0 %719
    %v721 = vrot.slane %v720, 4
    %vm722 = vcmask 326656
    %v723 = vsel %vm722, %v721, %v720
    %v726 = vmul.f32 %v717, %v723
    %v727 = vmul.f32 %v718, %v721
    %v730 = vcombine.low %v726, %v726
    %v731 = vcombine.low %v727, %v727
    %732 = vrot.lane.b32.xlu0 %v730, 88
    %v733 = vpop.permute.xlu0 %732
    %734 = vrot.lane.b32.xlu0 %v726, 88
    %v735 = vpop.permute.xlu0 %734
    %736 = vrot.lane.b32.xlu0 %v731, 88
    %v737 = vpop.permute.xlu0 %736
    %vm738 = vcmask 719872
    %v739 = vsel %vm738, %v733, %v735
    %v740 = vsel %vm738, %v735, %v737
    %743 = vst [vmem:[#allocation8 + $0x70] sm:$0xf0] %v739
    %744 = vst [vmem:[#allocation8 + $0x78] sm:$0xf0] %v740
    %s745 = scalar_lea.vmem %s1, 16
    %v746 = vld [vmem:[%s745] ss:$8 sm:$0x3]
    %v747 = vld [vmem:[#allocation2 + $0x4] sm:$0xff]
    %v748 = vld [vmem:[#allocation2 + $0xc] sm:$0xf]
    %v750 = vlaneseq
    %v751 = vshrl.u32 %v750, 7
    %v752 = vsub.s32 0, %v751
    %v753 = vrot.slane %v746, %v752
    %v754 = vlaneseq
    %v755 = vshrl.u32 %v754, 7
    %v756 = vsub.s32 1, %v755
    %v757 = vrot.slane %v746, %v756
    %v758 = vcombine.low %v753, %v757
    %759 = vrot.lane.b32.xlu0 %v758, 25
    %v760 = vpop.permute.xlu0 %759
    %v761 = vrot.slane %v760, 4
    %v762 = vsel %vm592, %v761, %v760
    %v765 = vmul.f32 %v747, %v762
    %v766 = vmul.f32 %v748, %v761
    %v769 = vcombine.high %v765, %v765
    %770 = vrot.lane.b32.xlu0 %v765, 103
    %v771 = vpop.permute.xlu0 %770
    %772 = vrot.lane.b32.xlu0 %v769, 103
    %v773 = vpop.permute.xlu0 %772
    %774 = vrot.lane.b32.xlu0 %v766, 103
    %v775 = vpop.permute.xlu0 %774
    %v776 = vsel %vm608, %v771, %v773
    %v777 = vsel %vm608, %v773, %v775
    %780 = vst [vmem:[#allocation8 + $0x80] sm:$0xf] %v776
    %781 = vst [vmem:[#allocation8 + $0x88] sm:$0xf] %v777
    %v782 = vld [vmem:[#allocation2 + $0x14] sm:$0xff]
    %v783 = vld [vmem:[#allocation2 + $0x1c] sm:$0xf]
    %784 = vrot.lane.b32.xlu0 %v758, 41
    %v785 = vpop.permute.xlu0 %784
    %v786 = vrot.slane %v785, 4
    %vm787 = vcmask 334848
    %v788 = vsel %vm787, %v786, %v785
    %v791 = vmul.f32 %v782, %v788
    %v792 = vmul.f32 %v783, %v786
    %v795 = vcombine.high %v791, %v791
    %796 = vrot.lane.b32.xlu0 %v791, 87
    %v797 = vpop.permute.xlu0 %796
    %798 = vrot.lane.b32.xlu0 %v795, 87
    %v799 = vpop.permute.xlu0 %798
    %800 = vrot.lane.b32.xlu0 %v792, 87
    %v801 = vpop.permute.xlu0 %800
    %vm802 = vcmask 711680
    %v803 = vsel %vm802, %v797, %v799
    %v804 = vsel %vm802, %v799, %v801
    %807 = vst [vmem:[#allocation8 + $0x90] sm:$0xf] %v803
    %808 = vst [vmem:[#allocation8 + $0x98] sm:$0xf] %v804
    %v809 = vld [vmem:[#allocation8] sm:$0xff]
    %v810 = vld [vmem:[#allocation8 + $0x8] sm:$0xff]
    %v811 = vld [vmem:[#allocation8 + $0x10] sm:$0xff]
    %v812 = vld [vmem:[#allocation8 + $0x18] sm:$0xff]
    %v813 = vld [vmem:[#allocation8 + $0x20] sm:$0xff]
    %v814 = vld [vmem:[#allocation8 + $0x28] sm:$0xff]
    %v815 = vld [vmem:[#allocation8 + $0x30] sm:$0xff]
    %v816 = vld [vmem:[#allocation8 + $0x38] sm:$0xff]
    %v817 = vld [vmem:[#allocation8 + $0x40] sm:$0xff]
    %v818 = vld [vmem:[#allocation8 + $0x48] sm:$0xff]
    %v819 = vld [vmem:[#allocation8 + $0x50] sm:$0xff]
    %v820 = vld [vmem:[#allocation8 + $0x58] sm:$0xff]
    %v821 = vld [vmem:[#allocation8 + $0x60] sm:$0xff]
    %v822 = vld [vmem:[#allocation8 + $0x68] sm:$0xff]
    %v823 = vld [vmem:[#allocation8 + $0x70] sm:$0xff]
    %v824 = vld [vmem:[#allocation8 + $0x78] sm:$0xff]
    %v825 = vld [vmem:[#allocation8 + $0x80] sm:$0xf]
    %v826 = vld [vmem:[#allocation8 + $0x88] sm:$0xf]
    %v827 = vld [vmem:[#allocation8 + $0x90] sm:$0xf]
    %v828 = vld [vmem:[#allocation8 + $0x98] sm:$0xf]
    %v829 = vpack.c.bf16 %v813, %v809
    %v830 = vpack.c.bf16 %v814, %v810
    %v831 = vpack.c.bf16 %v815, %v811
    %v832 = vpack.c.bf16 %v816, %v812
    %v833 = vpack.c.bf16 %v821, %v817
    %v834 = vpack.c.bf16 %v822, %v818
    %v835 = vpack.c.bf16 %v823, %v819
    %v836 = vpack.c.bf16 %v824, %v820
    %v837 = vpack.c.bf16 %v825, %v825
    %v838 = vpack.c.bf16 %v826, %v826
    %v839 = vpack.c.bf16 %v827, %v827
    %v840 = vpack.c.bf16 %v828, %v828
    %v841 = vld [vmem:[#allocation9] sm:$0x3]
    %v842 = vld [vmem:[#allocation11] sm:$0xf]
    %844 = vset.pattern.permute.xlu0 0
    %845 = vperm.xlu0 %844, %v842
    %v846 = vpop.permute.xlu0 %845
    %vm848 = vcmask 293888
    %v850 = vsel %vm848, %v841, 0
    %vm852 = vcmask 1041408
    %v854 = vsel %vm852, %v837, 0
    %v857 = vsel %vm852, %v838, 0
    %v860 = vsel %vm852, %v839, 0
    %v863 = vsel %vm852, %v840, 0
    %865 = vmatprep.subr.bf16.mxu0 %v830
    %866 = vmatpush1.bf16.msra.mxu0 %v829
    %867 = vmatprep.subr.bf16.mxu0 %v834
    %868 = vmatpush1.bf16.msra.mxu0 %v833
    %869 = vmatprep.subr.bf16.mxu0 %v857
    %870 = vmatpush1.bf16.msra.mxu0 %v854
    %871 = vmatprep.subr.bf16.mxu0 0
    %872 = vmatpush1.bf16.msra.mxu0 0
    %873 = vmatprep.subr.bf16.mxu0 0
    %874 = vmatpush1.bf16.msra.mxu0 0
    %875 = vmatprep.subr.bf16.mxu0 0
    %876 = vmatpush1.bf16.msra.mxu0 0
    %877 = vmatprep.subr.bf16.mxu0 0
    %878 = vmatpush1.bf16.msra.mxu0 0
    %879 = vmatprep.subr.bf16.mxu0 0
    %880 = vmatpush1.bf16.msra.mxu0 0
    %881 = vmatprep.subr.bf16.mxu0 0
    %882 = vmatpush1.bf16.msra.mxu0 0
    %883 = vmatprep.subr.bf16.mxu0 0
    %884 = vmatpush1.bf16.msra.mxu0 0
    %885 = vmatprep.subr.bf16.mxu0 0
    %886 = vmatpush1.bf16.msra.mxu0 0
    %887 = vmatprep.subr.bf16.mxu0 0
    %888 = vmatpush1.bf16.msra.mxu0 0
    %889 = vmatprep.subr.bf16.mxu0 0
    %890 = vmatpush1.bf16.msra.mxu0 0
    %891 = vmatprep.subr.bf16.mxu0 0
    %892 = vmatpush1.bf16.msra.mxu0 0
    %893 = vmatprep.subr.bf16.mxu0 0
    %894 = vmatpush1.bf16.msra.mxu0 0
    %895 = vmatprep.subr.bf16.mxu0 0
    %896 = vmatpush1.bf16.msra.mxu0 0
    %897 = vmatprep.mubr.bf16.mxu0 0
    %898 = vmatmul.mubr.bf16.gmra.mrb[0].mxu0 %v850
    %v899 = vpop.f32.mrb[0].mxu0
    %v900 = vadd.f32 %v846, %v899
    %v901 = vpop.f32.mrb[0].mxu0
    %v902 = vadd.f32 %v846, %v901
    %v903 = vpop.f32.mrb[0].mxu0
    %v904 = vpop.f32.mrb[0].mxu0
    %905 = vdwg.mxu0
    %906 = vmatprep.subr.bf16.mxu0 %v832
    %907 = vmatpush1.bf16.msra.mxu0 %v831
    %908 = vmatprep.subr.bf16.mxu0 %v836
    %909 = vmatpush1.bf16.msra.mxu0 %v835
    %910 = vmatprep.subr.bf16.mxu0 %v863
    %911 = vmatpush1.bf16.msra.mxu0 %v860
    %912 = vmatprep.subr.bf16.mxu0 0
    %913 = vmatpush1.bf16.msra.mxu0 0
    %914 = vmatprep.subr.bf16.mxu0 0
    %915 = vmatpush1.bf16.msra.mxu0 0
    %916 = vmatprep.subr.bf16.mxu0 0
    %917 = vmatpush1.bf16.msra.mxu0 0
    %918 = vmatprep.subr.bf16.mxu0 0
    %919 = vmatpush1.bf16.msra.mxu0 0
    %920 = vmatprep.subr.bf16.mxu0 0
    %921 = vmatpush1.bf16.msra.mxu0 0
    %922 = vmatprep.subr.bf16.mxu0 0
    %923 = vmatpush1.bf16.msra.mxu0 0
    %924 = vmatprep.subr.bf16.mxu0 0
    %925 = vmatpush1.bf16.msra.mxu0 0
    %926 = vmatprep.subr.bf16.mxu0 0
    %927 = vmatpush1.bf16.msra.mxu0 0
    %928 = vmatprep.subr.bf16.mxu0 0
    %929 = vmatpush1.bf16.msra.mxu0 0
    %930 = vmatprep.subr.bf16.mxu0 0
    %931 = vmatpush1.bf16.msra.mxu0 0
    %932 = vmatprep.subr.bf16.mxu0 0
    %933 = vmatpush1.bf16.msra.mxu0 0
    %934 = vmatprep.subr.bf16.mxu0 0
    %935 = vmatpush1.bf16.msra.mxu0 0
    %936 = vmatprep.subr.bf16.mxu0 0
    %937 = vmatpush1.bf16.msra.mxu0 0
    %938 = vmatprep.mubr.bf16.mxu0 0
    %939 = vmatmul.mubr.bf16.gmra.mrb[0].mxu0 %v850
    %v940 = vpop.f32.mrb[0].mxu0
    %v941 = vadd.f32 %v846, %v940
    %v942 = vpop.f32.mrb[0].mxu0
    %v943 = vadd.f32 %v846, %v942
    %v944 = vpop.f32.mrb[0].mxu0
    %v945 = vpop.f32.mrb[0].mxu0
    %946 = vdwg.mxu0
    %v947 = vmax.f32 %v900, 0.0
    %v948 = vmax.f32 %v902, 0.0
    %v949 = vmax.f32 %v941, 0.0
    %v950 = vmax.f32 %v943, 0.0
    %v953 = vcombine.low %v947, %v948
    %954 = vrot.lane.b32.xlu0 %v953, 8
    %v955 = vpop.permute.xlu0 %954
    %v956 = vrot.slane %v955, 4
    %v957 = vsel %vm203, %v956, %v955
    %960 = vst.msk [vmem:[#allocation3 + $0x4] sm:$0xff] %vm209, %v957
    %961 = vst.msk [vmem:[#allocation3 + $0xc] sm:$0xf] %vm211, %v956
    %v964 = vcombine.low %v949, %v950
    %965 = vrot.lane.b32.xlu0 %v964, 24
    %v966 = vpop.permute.xlu0 %965
    %v967 = vrot.slane %v966, 4
    %v968 = vsel %vm219, %v967, %v966
    %971 = vst.msk [vmem:[#allocation3 + $0x14] sm:$0xff] %vm224, %v968
    %972 = vst.msk [vmem:[#allocation3 + $0x1c] sm:$0xf] %vm226, %v967
    %v973 = vld [vmem:[%s1] ss:$8 sm:$0x3]
    %v974 = vld [vmem:[#allocation3] sm:$0xff]
    %v975 = vld [vmem:[#allocation3 + $0x8] sm:$0xf]
    %v977 = vlaneseq
    %v978 = vshrl.u32 %v977, 7
    %v979 = vsub.s32 0, %v978
    %v980 = vrot.slane %v973, %v979
    %v981 = vlaneseq
    %v982 = vshrl.u32 %v981, 7
    %v983 = vsub.s32 1, %v982
    %v984 = vrot.slane %v973, %v983
    %v985 = vcombine.low %v980, %v984
    %986 = vrot.lane.b32.xlu0 %v985, 119
    %v987 = vpop.permute.xlu0 %986
    %v988 = vrot.slane %v987, 4
    %v989 = vsel %vm244, %v988, %v987
    %v992 = vmul.f32 %v974, %v989
    %v993 = vmul.f32 %v975, %v988
    %v996 = vcombine.high %v992, %v992
    %997 = vrot.lane.b32.xlu0 %v992, 9
    %v998 = vpop.permute.xlu0 %997
    %999 = vrot.lane.b32.xlu0 %v996, 9
    %v1000 = vpop.permute.xlu0 %999
    %1001 = vrot.lane.b32.xlu0 %v993, 9
    %v1002 = vpop.permute.xlu0 %1001
    %v1003 = vsel %vm259, %v998, %v1000
    %v1004 = vsel %vm259, %v1000, %v1002
    %1007 = vst [vmem:[#allocation8] sm:$0xf] %v1003
    %1008 = vst [vmem:[#allocation8 + $0x8] sm:$0xf] %v1004
    %v1009 = vld [vmem:[#allocation3 + $0x14] sm:$0xff]
    %v1010 = vld [vmem:[#allocation3 + $0x1c] sm:$0xf]
    %1011 = vrot.lane.b32.xlu0 %v985, 7
    %v1012 = vpop.permute.xlu0 %1011
    %v1013 = vrot.slane %v1012, 4
    %v1014 = vsel %vm271, %v1013, %v1012
    %v1017 = vmul.f32 %v1009, %v1014
    %v1018 = vmul.f32 %v1010, %v1013
    %v1021 = vcombine.high %v1017, %v1017
    %1022 = vrot.lane.b32.xlu0 %v1017, 121
    %v1023 = vpop.permute.xlu0 %1022
    %1024 = vrot.lane.b32.xlu0 %v1021, 121
    %v1025 = vpop.permute.xlu0 %1024
    %1026 = vrot.lane.b32.xlu0 %v1018, 121
    %v1027 = vpop.permute.xlu0 %1026
    %v1028 = vsel %vm286, %v1023, %v1025
    %v1029 = vsel %vm286, %v1025, %v1027
    %1032 = vst [vmem:[#allocation8 + $0x10] sm:$0xf] %v1028
    %1033 = vst [vmem:[#allocation8 + $0x18] sm:$0xf] %v1029
    %v1034 = vld [vmem:[%s293] ss:$8 sm:$0x3]
    %v1035 = vld [vmem:[#allocation3] sm:$0xff]
    %v1036 = vld [vmem:[#allocation3 + $0x8] sm:$0xf]
    %v1038 = vlaneseq
    %v1039 = vshrl.u32 %v1038, 7
    %v1040 = vsub.s32 0, %v1039
    %v1041 = vrot.slane %v1034, %v1040
    %v1042 = vlaneseq
    %v1043 = vshrl.u32 %v1042, 7
    %v1044 = vsub.s32 1, %v1043
    %v1045 = vrot.slane %v1034, %v1044
    %v1046 = vcombine.low %v1041, %v1045
    %1047 = vrot.lane.b32.xlu0 %v1046, 120
    %v1048 = vpop.permute.xlu0 %1047
    %v1049 = vrot.slane %v1048, 4
    %v1050 = vsel %vm310, %v1049, %v1048
    %v1053 = vmul.f32 %v1035, %v1050
    %v1054 = vmul.f32 %v1036, %v1049
    %v1057 = vcombine.low %v1053, %v1053
    %v1058 = vcombine.low %v1054, %v1054
    %1059 = vrot.lane.b32.xlu0 %v1057, 8
    %v1060 = vpop.permute.xlu0 %1059
    %1061 = vrot.lane.b32.xlu0 %v1053, 8
    %v1062 = vpop.permute.xlu0 %1061
    %1063 = vrot.lane.b32.xlu0 %v1058, 8
    %v1064 = vpop.permute.xlu0 %1063
    %v1065 = vsel %vm203, %v1060, %v1062
    %v1066 = vsel %vm203, %v1062, %v1064
    %1069 = vst [vmem:[#allocation8] sm:$0xf0] %v1065
    %1070 = vst [vmem:[#allocation8 + $0x8] sm:$0xf0] %v1066
    %v1071 = vld [vmem:[#allocation3 + $0x14] sm:$0xff]
    %v1072 = vld [vmem:[#allocation3 + $0x1c] sm:$0xf]
    %1073 = vrot.lane.b32.xlu0 %v1046, 8
    %v1074 = vpop.permute.xlu0 %1073
    %v1075 = vrot.slane %v1074, 4
    %v1076 = vsel %vm203, %v1075, %v1074
    %v1079 = vmul.f32 %v1071, %v1076
    %v1080 = vmul.f32 %v1072, %v1075
    %v1083 = vcombine.low %v1079, %v1079
    %v1084 = vcombine.low %v1080, %v1080
    %1085 = vrot.lane.b32.xlu0 %v1083, 120
    %v1086 = vpop.permute.xlu0 %1085
    %1087 = vrot.lane.b32.xlu0 %v1079, 120
    %v1088 = vpop.permute.xlu0 %1087
    %1089 = vrot.lane.b32.xlu0 %v1084, 120
    %v1090 = vpop.permute.xlu0 %1089
    %v1091 = vsel %vm310, %v1086, %v1088
    %v1092 = vsel %vm310, %v1088, %v1090
    %1095 = vst [vmem:[#allocation8 + $0x10] sm:$0xf0] %v1091
    %1096 = vst [vmem:[#allocation8 + $0x18] sm:$0xf0] %v1092
    %v1097 = vld [vmem:[%s358] ss:$8 sm:$0x3]
    %v1098 = vld [vmem:[#allocation3] sm:$0xff]
    %v1099 = vld [vmem:[#allocation3 + $0x8] sm:$0xf]
    %v1101 = vlaneseq
    %v1102 = vshrl.u32 %v1101, 7
    %v1103 = vsub.s32 0, %v1102
    %v1104 = vrot.slane %v1097, %v1103
    %v1105 = vlaneseq
    %v1106 = vshrl.u32 %v1105, 7
    %v1107 = vsub.s32 1, %v1106
    %v1108 = vrot.slane %v1097, %v1107
    %v1109 = vcombine.low %v1104, %v1108
    %1110 = vrot.lane.b32.xlu0 %v1109, 121
    %v1111 = vpop.permute.xlu0 %1110
    %v1112 = vrot.slane %v1111, 4
    %v1113 = vsel %vm286, %v1112, %v1111
    %v1116 = vmul.f32 %v1098, %v1113
    %v1117 = vmul.f32 %v1099, %v1112
    %v1120 = vcombine.high %v1116, %v1116
    %1121 = vrot.lane.b32.xlu0 %v1116, 7
    %v1122 = vpop.permute.xlu0 %1121
    %1123 = vrot.lane.b32.xlu0 %v1120, 7
    %v1124 = vpop.permute.xlu0 %1123
    %1125 = vrot.lane.b32.xlu0 %v1117, 7
    %v1126 = vpop.permute.xlu0 %1125
    %v1127 = vsel %vm271, %v1122, %v1124
    %v1128 = vsel %vm271, %v1124, %v1126
    %1131 = vst [vmem:[#allocation8 + $0x20] sm:$0xf] %v1127
    %1132 = vst [vmem:[#allocation8 + $0x28] sm:$0xf] %v1128
    %v1133 = vld [vmem:[#allocation3 + $0x14] sm:$0xff]
    %v1134 = vld [vmem:[#allocation3 + $0x1c] sm:$0xf]
    %1135 = vrot.lane.b32.xlu0 %v1109, 9
    %v1136 = vpop.permute.xlu0 %1135
    %v1137 = vrot.slane %v1136, 4
    %v1138 = vsel %vm259, %v1137, %v1136
    %v1141 = vmul.f32 %v1133, %v1138
    %v1142 = vmul.f32 %v1134, %v1137
    %v1145 = vcombine.high %v1141, %v1141
    %1146 = vrot.lane.b32.xlu0 %v1141, 119
    %v1147 = vpop.permute.xlu0 %1146
    %1148 = vrot.lane.b32.xlu0 %v1145, 119
    %v1149 = vpop.permute.xlu0 %1148
    %1150 = vrot.lane.b32.xlu0 %v1142, 119
    %v1151 = vpop.permute.xlu0 %1150
    %v1152 = vsel %vm244, %v1147, %v1149
    %v1153 = vsel %vm244, %v1149, %v1151
    %1156 = vst [vmem:[#allocation8 + $0x30] sm:$0xf] %v1152
    %1157 = vst [vmem:[#allocation8 + $0x38] sm:$0xf] %v1153
    %v1158 = vld [vmem:[%s420] ss:$8 sm:$0x3]
    %v1159 = vld [vmem:[#allocation3 + $0x4] sm:$0xff]
    %v1160 = vld [vmem:[#allocation3 + $0xc] sm:$0xf]
    %v1162 = vlaneseq
    %v1163 = vshrl.u32 %v1162, 7
    %v1164 = vsub.s32 0, %v1163
    %v1165 = vrot.slane %v1158, %v1164
    %v1166 = vlaneseq
    %v1167 = vshrl.u32 %v1166, 7
    %v1168 = vsub.s32 1, %v1167
    %v1169 = vrot.slane %v1158, %v1168
    %v1170 = vcombine.low %v1165, %v1169
    %1171 = vrot.lane.b32.xlu0 %v1170, 7
    %v1172 = vpop.permute.xlu0 %1171
    %v1173 = vrot.slane %v1172, 4
    %v1174 = vsel %vm271, %v1173, %v1172
    %v1177 = vmul.f32 %v1159, %v1174
    %v1178 = vmul.f32 %v1160, %v1173
    %v1181 = vcombine.low %v1177, %v1177
    %v1182 = vcombine.low %v1178, %v1178
    %1183 = vrot.lane.b32.xlu0 %v1181, 121
    %v1184 = vpop.permute.xlu0 %1183
    %1185 = vrot.lane.b32.xlu0 %v1177, 121
    %v1186 = vpop.permute.xlu0 %1185
    %1187 = vrot.lane.b32.xlu0 %v1182, 121
    %v1188 = vpop.permute.xlu0 %1187
    %v1189 = vsel %vm286, %v1184, %v1186
    %v1190 = vsel %vm286, %v1186, %v1188
    %1193 = vst [vmem:[#allocation8 + $0x20] sm:$0xf0] %v1189
    %1194 = vst [vmem:[#allocation8 + $0x28] sm:$0xf0] %v1190
    %v1195 = vld [vmem:[#allocation3 + $0x14] sm:$0xff]
    %v1196 = vld [vmem:[#allocation3 + $0x1c] sm:$0xf]
    %1197 = vrot.lane.b32.xlu0 %v1170, 23
    %v1198 = vpop.permute.xlu0 %1197
    %v1199 = vrot.slane %v1198, 4
    %v1200 = vsel %vm463, %v1199, %v1198
    %v1203 = vmul.f32 %v1195, %v1200
    %v1204 = vmul.f32 %v1196, %v1199
    %v1207 = vcombine.low %v1203, %v1203
    %v1208 = vcombine.low %v1204, %v1204
    %1209 = vrot.lane.b32.xlu0 %v1207, 105
    %v1210 = vpop.permute.xlu0 %1209
    %1211 = vrot.lane.b32.xlu0 %v1203, 105
    %v1212 = vpop.permute.xlu0 %1211
    %1213 = vrot.lane.b32.xlu0 %v1208, 105
    %v1214 = vpop.permute.xlu0 %1213
    %v1215 = vsel %vm479, %v1210, %v1212
    %v1216 = vsel %vm479, %v1212, %v1214
    %1219 = vst [vmem:[#allocation8 + $0x30] sm:$0xf0] %v1215
    %1220 = vst [vmem:[#allocation8 + $0x38] sm:$0xf0] %v1216
    %v1221 = vld [vmem:[%s486] ss:$8 sm:$0x3]
    %v1222 = vld [vmem:[#allocation3 + $0x4] sm:$0xff]
    %v1223 = vld [vmem:[#allocation3 + $0xc] sm:$0xf]
    %v1225 = vlaneseq
    %v1226 = vshrl.u32 %v1225, 7
    %v1227 = vsub.s32 0, %v1226
    %v1228 = vrot.slane %v1221, %v1227
    %v1229 = vlaneseq
    %v1230 = vshrl.u32 %v1229, 7
    %v1231 = vsub.s32 1, %v1230
    %v1232 = vrot.slane %v1221, %v1231
    %v1233 = vcombine.low %v1228, %v1232
    %1234 = vrot.lane.b32.xlu0 %v1233, 8
    %v1235 = vpop.permute.xlu0 %1234
    %v1236 = vrot.slane %v1235, 4
    %v1237 = vsel %vm203, %v1236, %v1235
    %v1240 = vmul.f32 %v1222, %v1237
    %v1241 = vmul.f32 %v1223, %v1236
    %v1244 = vcombine.high %v1240, %v1240
    %1245 = vrot.lane.b32.xlu0 %v1240, 120
    %v1246 = vpop.permute.xlu0 %1245
    %1247 = vrot.lane.b32.xlu0 %v1244, 120
    %v1248 = vpop.permute.xlu0 %1247
    %1249 = vrot.lane.b32.xlu0 %v1241, 120
    %v1250 = vpop.permute.xlu0 %1249
    %v1251 = vsel %vm310, %v1246, %v1248
    %v1252 = vsel %vm310, %v1248, %v1250
    %1255 = vst [vmem:[#allocation8 + $0x40] sm:$0xf] %v1251
    %1256 = vst [vmem:[#allocation8 + $0x48] sm:$0xf] %v1252
    %v1257 = vld [vmem:[#allocation3 + $0x14] sm:$0xff]
    %v1258 = vld [vmem:[#allocation3 + $0x1c] sm:$0xf]
    %1259 = vrot.lane.b32.xlu0 %v1233, 24
    %v1260 = vpop.permute.xlu0 %1259
    %v1261 = vrot.slane %v1260, 4
    %v1262 = vsel %vm219, %v1261, %v1260
    %v1265 = vmul.f32 %v1257, %v1262
    %v1266 = vmul.f32 %v1258, %v1261
    %v1269 = vcombine.high %v1265, %v1265
    %1270 = vrot.lane.b32.xlu0 %v1265, 104
    %v1271 = vpop.permute.xlu0 %1270
    %1272 = vrot.lane.b32.xlu0 %v1269, 104
    %v1273 = vpop.permute.xlu0 %1272
    %1274 = vrot.lane.b32.xlu0 %v1266, 104
    %v1275 = vpop.permute.xlu0 %1274
    %v1276 = vsel %vm542, %v1271, %v1273
    %v1277 = vsel %vm542, %v1273, %v1275
    %1280 = vst [vmem:[#allocation8 + $0x50] sm:$0xf] %v1276
    %1281 = vst [vmem:[#allocation8 + $0x58] sm:$0xf] %v1277
    %v1282 = vld [vmem:[%s549] ss:$8 sm:$0x3]
    %v1283 = vld [vmem:[#allocation3 + $0x4] sm:$0xff]
    %v1284 = vld [vmem:[#allocation3 + $0xc] sm:$0xf]
    %v1286 = vlaneseq
    %v1287 = vshrl.u32 %v1286, 7
    %v1288 = vsub.s32 0, %v1287
    %v1289 = vrot.slane %v1282, %v1288
    %v1290 = vlaneseq
    %v1291 = vshrl.u32 %v1290, 7
    %v1292 = vsub.s32 1, %v1291
    %v1293 = vrot.slane %v1282, %v1292
    %v1294 = vcombine.low %v1289, %v1293
    %1295 = vrot.lane.b32.xlu0 %v1294, 9
    %v1296 = vpop.permute.xlu0 %1295
    %v1297 = vrot.slane %v1296, 4
    %v1298 = vsel %vm259, %v1297, %v1296
    %v1301 = vmul.f32 %v1283, %v1298
    %v1302 = vmul.f32 %v1284, %v1297
    %v1305 = vcombine.low %v1301, %v1301
    %v1306 = vcombine.low %v1302, %v1302
    %1307 = vrot.lane.b32.xlu0 %v1305, 119
    %v1308 = vpop.permute.xlu0 %1307
    %1309 = vrot.lane.b32.xlu0 %v1301, 119
    %v1310 = vpop.permute.xlu0 %1309
    %1311 = vrot.lane.b32.xlu0 %v1306, 119
    %v1312 = vpop.permute.xlu0 %1311
    %v1313 = vsel %vm244, %v1308, %v1310
    %v1314 = vsel %vm244, %v1310, %v1312
    %1317 = vst [vmem:[#allocation8 + $0x40] sm:$0xf0] %v1313
    %1318 = vst [vmem:[#allocation8 + $0x48] sm:$0xf0] %v1314
    %v1319 = vld [vmem:[#allocation3 + $0x14] sm:$0xff]
    %v1320 = vld [vmem:[#allocation3 + $0x1c] sm:$0xf]
    %1321 = vrot.lane.b32.xlu0 %v1294, 25
    %v1322 = vpop.permute.xlu0 %1321
    %v1323 = vrot.slane %v1322, 4
    %v1324 = vsel %vm592, %v1323, %v1322
    %v1327 = vmul.f32 %v1319, %v1324
    %v1328 = vmul.f32 %v1320, %v1323
    %v1331 = vcombine.low %v1327, %v1327
    %v1332 = vcombine.low %v1328, %v1328
    %1333 = vrot.lane.b32.xlu0 %v1331, 103
    %v1334 = vpop.permute.xlu0 %1333
    %1335 = vrot.lane.b32.xlu0 %v1327, 103
    %v1336 = vpop.permute.xlu0 %1335
    %1337 = vrot.lane.b32.xlu0 %v1332, 103
    %v1338 = vpop.permute.xlu0 %1337
    %v1339 = vsel %vm608, %v1334, %v1336
    %v1340 = vsel %vm608, %v1336, %v1338
    %1343 = vst [vmem:[#allocation8 + $0x50] sm:$0xf0] %v1339
    %1344 = vst [vmem:[#allocation8 + $0x58] sm:$0xf0] %v1340
    %v1345 = vld [vmem:[%s615] ss:$8 sm:$0x3]
    %v1346 = vld [vmem:[#allocation3 + $0x4] sm:$0xff]
    %v1347 = vld [vmem:[#allocation3 + $0xc] sm:$0xf]
    %v1349 = vlaneseq
    %v1350 = vshrl.u32 %v1349, 7
    %v1351 = vsub.s32 0, %v1350
    %v1352 = vrot.slane %v1345, %v1351
    %v1353 = vlaneseq
    %v1354 = vshrl.u32 %v1353, 7
    %v1355 = vsub.s32 1, %v1354
    %v1356 = vrot.slane %v1345, %v1355
    %v1357 = vcombine.low %v1352, %v1356
    %1358 = vrot.lane.b32.xlu0 %v1357, 23
    %v1359 = vpop.permute.xlu0 %1358
    %v1360 = vrot.slane %v1359, 4
    %v1361 = vsel %vm463, %v1360, %v1359
    %v1364 = vmul.f32 %v1346, %v1361
    %v1365 = vmul.f32 %v1347, %v1360
    %v1368 = vcombine.high %v1364, %v1364
    %1369 = vrot.lane.b32.xlu0 %v1364, 105
    %v1370 = vpop.permute.xlu0 %1369
    %1371 = vrot.lane.b32.xlu0 %v1368, 105
    %v1372 = vpop.permute.xlu0 %1371
    %1373 = vrot.lane.b32.xlu0 %v1365, 105
    %v1374 = vpop.permute.xlu0 %1373
    %v1375 = vsel %vm479, %v1370, %v1372
    %v1376 = vsel %vm479, %v1372, %v1374
    %1379 = vst [vmem:[#allocation8 + $0x60] sm:$0xf] %v1375
    %1380 = vst [vmem:[#allocation8 + $0x68] sm:$0xf] %v1376
    %v1381 = vld [vmem:[#allocation3 + $0x14] sm:$0xff]
    %v1382 = vld [vmem:[#allocation3 + $0x1c] sm:$0xf]
    %1383 = vrot.lane.b32.xlu0 %v1357, 39
    %v1384 = vpop.permute.xlu0 %1383
    %v1385 = vrot.slane %v1384, 4
    %v1386 = vsel %vm657, %v1385, %v1384
    %v1389 = vmul.f32 %v1381, %v1386
    %v1390 = vmul.f32 %v1382, %v1385
    %v1393 = vcombine.high %v1389, %v1389
    %1394 = vrot.lane.b32.xlu0 %v1389, 89
    %v1395 = vpop.permute.xlu0 %1394
    %1396 = vrot.lane.b32.xlu0 %v1393, 89
    %v1397 = vpop.permute.xlu0 %1396
    %1398 = vrot.lane.b32.xlu0 %v1390, 89
    %v1399 = vpop.permute.xlu0 %1398
    %v1400 = vsel %vm672, %v1395, %v1397
    %v1401 = vsel %vm672, %v1397, %v1399
    %1404 = vst [vmem:[#allocation8 + $0x70] sm:$0xf] %v1400
    %1405 = vst [vmem:[#allocation8 + $0x78] sm:$0xf] %v1401
    %v1406 = vld [vmem:[%s679] ss:$8 sm:$0x3]
    %v1407 = vld [vmem:[#allocation3 + $0x4] sm:$0xff]
    %v1408 = vld [vmem:[#allocation3 + $0xc] sm:$0xf]
    %v1410 = vlaneseq
    %v1411 = vshrl.u32 %v1410, 7
    %v1412 = vsub.s32 0, %v1411
    %v1413 = vrot.slane %v1406, %v1412
    %v1414 = vlaneseq
    %v1415 = vshrl.u32 %v1414, 7
    %v1416 = vsub.s32 1, %v1415
    %v1417 = vrot.slane %v1406, %v1416
    %v1418 = vcombine.low %v1413, %v1417
    %1419 = vrot.lane.b32.xlu0 %v1418, 24
    %v1420 = vpop.permute.xlu0 %1419
    %v1421 = vrot.slane %v1420, 4
    %v1422 = vsel %vm219, %v1421, %v1420
    %v1425 = vmul.f32 %v1407, %v1422
    %v1426 = vmul.f32 %v1408, %v1421
    %v1429 = vcombine.low %v1425, %v1425
    %v1430 = vcombine.low %v1426, %v1426
    %1431 = vrot.lane.b32.xlu0 %v1429, 104
    %v1432 = vpop.permute.xlu0 %1431
    %1433 = vrot.lane.b32.xlu0 %v1425, 104
    %v1434 = vpop.permute.xlu0 %1433
    %1435 = vrot.lane.b32.xlu0 %v1430, 104
    %v1436 = vpop.permute.xlu0 %1435
    %v1437 = vsel %vm542, %v1432, %v1434
    %v1438 = vsel %vm542, %v1434, %v1436
    %1441 = vst [vmem:[#allocation8 + $0x60] sm:$0xf0] %v1437
    %1442 = vst [vmem:[#allocation8 + $0x68] sm:$0xf0] %v1438
    %v1443 = vld [vmem:[#allocation3 + $0x14] sm:$0xff]
    %v1444 = vld [vmem:[#allocation3 + $0x1c] sm:$0xf]
    %1445 = vrot.lane.b32.xlu0 %v1418, 40
    %v1446 = vpop.permute.xlu0 %1445
    %v1447 = vrot.slane %v1446, 4
    %v1448 = vsel %vm722, %v1447, %v1446
    %v1451 = vmul.f32 %v1443, %v1448
    %v1452 = vmul.f32 %v1444, %v1447
    %v1455 = vcombine.low %v1451, %v1451
    %v1456 = vcombine.low %v1452, %v1452
    %1457 = vrot.lane.b32.xlu0 %v1455, 88
    %v1458 = vpop.permute.xlu0 %1457
    %1459 = vrot.lane.b32.xlu0 %v1451, 88
    %v1460 = vpop.permute.xlu0 %1459
    %1461 = vrot.lane.b32.xlu0 %v1456, 88
    %v1462 = vpop.permute.xlu0 %1461
    %v1463 = vsel %vm738, %v1458, %v1460
    %v1464 = vsel %vm738, %v1460, %v1462
    %1467 = vst [vmem:[#allocation8 + $0x70] sm:$0xf0] %v1463
    %1468 = vst [vmem:[#allocation8 + $0x78] sm:$0xf0] %v1464
    %v1469 = vld [vmem:[%s745] ss:$8 sm:$0x3]
    %v1470 = vld [vmem:[#allocation3 + $0x4] sm:$0xff]
    %v1471 = vld [vmem:[#allocation3 + $0xc] sm:$0xf]
    %v1473 = vlaneseq
    %v1474 = vshrl.u32 %v1473, 7
    %v1475 = vsub.s32 0, %v1474
    %v1476 = vrot.slane %v1469, %v1475
    %v1477 = vlaneseq
    %v1478 = vshrl.u32 %v1477, 7
    %v1479 = vsub.s32 1, %v1478
    %v1480 = vrot.slane %v1469, %v1479
    %v1481 = vcombine.low %v1476, %v1480
    %1482 = vrot.lane.b32.xlu0 %v1481, 25
    %v1483 = vpop.permute.xlu0 %1482
    %v1484 = vrot.slane %v1483, 4
    %v1485 = vsel %vm592, %v1484, %v1483
    %v1488 = vmul.f32 %v1470, %v1485
    %v1489 = vmul.f32 %v1471, %v1484
    %v1492 = vcombine.high %v1488, %v1488
    %1493 = vrot.lane.b32.xlu0 %v1488, 103
    %v1494 = vpop.permute.xlu0 %1493
    %1495 = vrot.lane.b32.xlu0 %v1492, 103
    %v1496 = vpop.permute.xlu0 %1495
    %1497 = vrot.lane.b32.xlu0 %v1489, 103
    %v1498 = vpop.permute.xlu0 %1497
    %v1499 = vsel %vm608, %v1494, %v1496
    %v1500 = vsel %vm608, %v1496, %v1498
    %1503 = vst [vmem:[#allocation8 + $0x80] sm:$0xf] %v1499
    %1504 = vst [vmem:[#allocation8 + $0x88] sm:$0xf] %v1500
    %v1505 = vld [vmem:[#allocation3 + $0x14] sm:$0xff]
    %v1506 = vld [vmem:[#allocation3 + $0x1c] sm:$0xf]
    %1507 = vrot.lane.b32.xlu0 %v1481, 41
    %v1508 = vpop.permute.xlu0 %1507
    %v1509 = vrot.slane %v1508, 4
    %v1510 = vsel %vm787, %v1509, %v1508
    %v1513 = vmul.f32 %v1505, %v1510
    %v1514 = vmul.f32 %v1506, %v1509
    %v1517 = vcombine.high %v1513, %v1513
    %1518 = vrot.lane.b32.xlu0 %v1513, 87
    %v1519 = vpop.permute.xlu0 %1518
    %1520 = vrot.lane.b32.xlu0 %v1517, 87
    %v1521 = vpop.permute.xlu0 %1520
    %1522 = vrot.lane.b32.xlu0 %v1514, 87
    %v1523 = vpop.permute.xlu0 %1522
    %v1524 = vsel %vm802, %v1519, %v1521
    %v1525 = vsel %vm802, %v1521, %v1523
    %1528 = vst [vmem:[#allocation8 + $0x90] sm:$0xf] %v1524
    %1529 = vst [vmem:[#allocation8 + $0x98] sm:$0xf] %v1525
    %v1530 = vld [vmem:[#allocation8] sm:$0xff]
    %v1531 = vld [vmem:[#allocation8 + $0x8] sm:$0xff]
    %v1532 = vld [vmem:[#allocation8 + $0x10] sm:$0xff]
    %v1533 = vld [vmem:[#allocation8 + $0x18] sm:$0xff]
    %v1534 = vld [vmem:[#allocation8 + $0x20] sm:$0xff]
    %v1535 = vld [vmem:[#allocation8 + $0x28] sm:$0xff]
    %v1536 = vld [vmem:[#allocation8 + $0x30] sm:$0xff]
    %v1537 = vld [vmem:[#allocation8 + $0x38] sm:$0xff]
    %v1538 = vld [vmem:[#allocation8 + $0x40] sm:$0xff]
    %v1539 = vld [vmem:[#allocation8 + $0x48] sm:$0xff]
    %v1540 = vld [vmem:[#allocation8 + $0x50] sm:$0xff]
    %v1541 = vld [vmem:[#allocation8 + $0x58] sm:$0xff]
    %v1542 = vld [vmem:[#allocation8 + $0x60] sm:$0xff]
    %v1543 = vld [vmem:[#allocation8 + $0x68] sm:$0xff]
    %v1544 = vld [vmem:[#allocation8 + $0x70] sm:$0xff]
    %v1545 = vld [vmem:[#allocation8 + $0x78] sm:$0xff]
    %v1546 = vld [vmem:[#allocation8 + $0x80] sm:$0xf]
    %v1547 = vld [vmem:[#allocation8 + $0x88] sm:$0xf]
    %v1548 = vld [vmem:[#allocation8 + $0x90] sm:$0xf]
    %v1549 = vld [vmem:[#allocation8 + $0x98] sm:$0xf]
    %v1550 = vpack.c.bf16 %v1534, %v1530
    %v1551 = vpack.c.bf16 %v1535, %v1531
    %v1552 = vpack.c.bf16 %v1536, %v1532
    %v1553 = vpack.c.bf16 %v1537, %v1533
    %v1554 = vpack.c.bf16 %v1542, %v1538
    %v1555 = vpack.c.bf16 %v1543, %v1539
    %v1556 = vpack.c.bf16 %v1544, %v1540
    %v1557 = vpack.c.bf16 %v1545, %v1541
    %v1558 = vpack.c.bf16 %v1546, %v1546
    %v1559 = vpack.c.bf16 %v1547, %v1547
    %v1560 = vpack.c.bf16 %v1548, %v1548
    %v1561 = vpack.c.bf16 %v1549, %v1549
    %v1562 = vld [vmem:[#allocation13] sm:$0xf]
    %v1563 = vld [vmem:[#allocation14] sm:$0xff]
    %1565 = vset.pattern.permute.xlu0 0
    %1566 = vperm.xlu0 %1565, %v1563
    %v1567 = vpop.permute.xlu0 %1566
    %v1570 = vsel %vm848, %v1562, 0
    %v1573 = vsel %vm852, %v1558, 0
    %v1576 = vsel %vm852, %v1559, 0
    %v1579 = vsel %vm852, %v1560, 0
    %v1582 = vsel %vm852, %v1561, 0
    %1584 = vmatprep.subr.bf16.mxu0 %v1551
    %1585 = vmatpush1.bf16.msra.mxu0 %v1550
    %1586 = vmatprep.subr.bf16.mxu0 %v1555
    %1587 = vmatpush1.bf16.msra.mxu0 %v1554
    %1588 = vmatprep.subr.bf16.mxu0 %v1576
    %1589 = vmatpush1.bf16.msra.mxu0 %v1573
    %1590 = vmatprep.subr.bf16.mxu0 0
    %1591 = vmatpush1.bf16.msra.mxu0 0
    %1592 = vmatprep.subr.bf16.mxu0 0
    %1593 = vmatpush1.bf16.msra.mxu0 0
    %1594 = vmatprep.subr.bf16.mxu0 0
    %1595 = vmatpush1.bf16.msra.mxu0 0
    %1596 = vmatprep.subr.bf16.mxu0 0
    %1597 = vmatpush1.bf16.msra.mxu0 0
    %1598 = vmatprep.subr.bf16.mxu0 0
    %1599 = vmatpush1.bf16.msra.mxu0 0
    %1600 = vmatprep.subr.bf16.mxu0 0
    %1601 = vmatpush1.bf16.msra.mxu0 0
    %1602 = vmatprep.subr.bf16.mxu0 0
    %1603 = vmatpush1.bf16.msra.mxu0 0
    %1604 = vmatprep.subr.bf16.mxu0 0
    %1605 = vmatpush1.bf16.msra.mxu0 0
    %1606 = vmatprep.subr.bf16.mxu0 0
    %1607 = vmatpush1.bf16.msra.mxu0 0
    %1608 = vmatprep.subr.bf16.mxu0 0
    %1609 = vmatpush1.bf16.msra.mxu0 0
    %1610 = vmatprep.subr.bf16.mxu0 0
    %1611 = vmatpush1.bf16.msra.mxu0 0
    %1612 = vmatprep.subr.bf16.mxu0 0
    %1613 = vmatpush1.bf16.msra.mxu0 0
    %1614 = vmatprep.subr.bf16.mxu0 0
    %1615 = vmatpush1.bf16.msra.mxu0 0
    %1616 = vmatprep.mubr.bf16.mxu0 0
    %1617 = vmatmul.mubr.bf16.gmra.mrb[0].mxu0 %v1570
    %v1618 = vpop.f32.mrb[0].mxu0
    %v1619 = vadd.f32 %v1567, %v1618
    %v1620 = vpop.f32.mrb[0].mxu0
    %v1621 = vadd.f32 %v1567, %v1620
    %v1622 = vpop.f32.mrb[0].mxu0
    %v1623 = vpop.f32.mrb[0].mxu0
    %1624 = vdwg.mxu0
    %1625 = vmatprep.subr.bf16.mxu0 %v1553
    %1626 = vmatpush1.bf16.msra.mxu0 %v1552
    %1627 = vmatprep.subr.bf16.mxu0 %v1557
    %1628 = vmatpush1.bf16.msra.mxu0 %v1556
    %1629 = vmatprep.subr.bf16.mxu0 %v1582
    %1630 = vmatpush1.bf16.msra.mxu0 %v1579
    %1631 = vmatprep.subr.bf16.mxu0 0
    %1632 = vmatpush1.bf16.msra.mxu0 0
    %1633 = vmatprep.subr.bf16.mxu0 0
    %1634 = vmatpush1.bf16.msra.mxu0 0
    %1635 = vmatprep.subr.bf16.mxu0 0
    %1636 = vmatpush1.bf16.msra.mxu0 0
    %1637 = vmatprep.subr.bf16.mxu0 0
    %1638 = vmatpush1.bf16.msra.mxu0 0
    %1639 = vmatprep.subr.bf16.mxu0 0
    %1640 = vmatpush1.bf16.msra.mxu0 0
    %1641 = vmatprep.subr.bf16.mxu0 0
    %1642 = vmatpush1.bf16.msra.mxu0 0
    %1643 = vmatprep.subr.bf16.mxu0 0
    %1644 = vmatpush1.bf16.msra.mxu0 0
    %1645 = vmatprep.subr.bf16.mxu0 0
    %1646 = vmatpush1.bf16.msra.mxu0 0
    %1647 = vmatprep.subr.bf16.mxu0 0
    %1648 = vmatpush1.bf16.msra.mxu0 0
    %1649 = vmatprep.subr.bf16.mxu0 0
    %1650 = vmatpush1.bf16.msra.mxu0 0
    %1651 = vmatprep.subr.bf16.mxu0 0
    %1652 = vmatpush1.bf16.msra.mxu0 0
    %1653 = vmatprep.subr.bf16.mxu0 0
    %1654 = vmatpush1.bf16.msra.mxu0 0
    %1655 = vmatprep.subr.bf16.mxu0 0
    %1656 = vmatpush1.bf16.msra.mxu0 0
    %1657 = vmatprep.mubr.bf16.mxu0 0
    %1658 = vmatmul.mubr.bf16.gmra.mrb[0].mxu0 %v1570
    %v1659 = vpop.f32.mrb[0].mxu0
    %v1660 = vadd.f32 %v1567, %v1659
    %v1661 = vpop.f32.mrb[0].mxu0
    %v1662 = vadd.f32 %v1567, %v1661
    %v1663 = vpop.f32.mrb[0].mxu0
    %v1664 = vpop.f32.mrb[0].mxu0
    %1665 = vdwg.mxu0
    %v1666 = vmax.f32 %v1619, 0.0
    %v1667 = vmax.f32 %v1621, 0.0
    %v1668 = vmax.f32 %v1660, 0.0
    %v1669 = vmax.f32 %v1662, 0.0
    %1672 = vrot.lane.b32.xlu0 %v1666, 8
    %v1673 = vpop.permute.xlu0 %1672
    %1674 = vrot.lane.b32.xlu0 %v1667, 8
    %v1675 = vpop.permute.xlu0 %1674
    %v1676 = vsel %vm203, %v1673, %v1675
    %vm1680 = vcmask 1047616
    %1681 = vst.msk [vmem:[#allocation4 + $0x8] sm:$0xff] %vm1680, %v1673
    %1682 = vst [vmem:[#allocation4 + $0x10] sm:$0xff] %v1676
    %1683 = vst.msk [vmem:[#allocation4 + $0x18] sm:$0xff] %vm203, %v1675
    %1686 = vrot.lane.b32.xlu0 %v1668, 24
    %v1687 = vpop.permute.xlu0 %1686
    %1688 = vrot.lane.b32.xlu0 %v1669, 24
    %v1689 = vpop.permute.xlu0 %1688
    %v1690 = vsel %vm219, %v1687, %v1689
    %vm1694 = vcmask 1047744
    %1695 = vst.msk [vmem:[#allocation4 + $0x28] sm:$0xff] %vm1694, %v1687
    %1696 = vst [vmem:[#allocation4 + $0x30] sm:$0xff] %v1690
    %1697 = vst.msk [vmem:[#allocation4 + $0x38] sm:$0xff] %vm219, %v1689
    %v1698 = vld [vmem:[%s2] ss:$8 sm:$0x3]
    %v1699 = vld [vmem:[#allocation4] sm:$0xff]
    %v1700 = vld [vmem:[#allocation4 + $0x8] sm:$0xff]
    %v1701 = vld [vmem:[#allocation4 + $0x10] sm:$0xff]
    %v1703 = vlaneseq
    %v1704 = vshrl.u32 %v1703, 7
    %v1705 = vsub.s32 0, %v1704
    %v1706 = vrot.slane %v1698, %v1705
    %v1707 = vlaneseq
    %v1708 = vshrl.u32 %v1707, 7
    %v1709 = vsub.s32 1, %v1708
    %v1710 = vrot.slane %v1698, %v1709
    %1711 = vrot.lane.b32.xlu0 %v1706, 102
    %v1712 = vpop.permute.xlu0 %1711
    %1713 = vrot.lane.b32.xlu0 %v1710, 102
    %v1714 = vpop.permute.xlu0 %1713
    %vm1715 = vcmask 834560
    %v1716 = vsel %vm1715, %v1712, %v1714
    %v1720 = vmul.f32 %v1699, %v1712
    %v1721 = vmul.f32 %v1700, %v1716
    %v1722 = vmul.f32 %v1701, %v1714
    %1726 = vrot.lane.b32.xlu0 %v1720, 26
    %v1727 = vpop.permute.xlu0 %1726
    %1728 = vrot.lane.b32.xlu0 %v1721, 26
    %v1729 = vpop.permute.xlu0 %1728
    %1730 = vrot.lane.b32.xlu0 %v1722, 26
    %v1731 = vpop.permute.xlu0 %1730
    %vm1732 = vcmask 211968
    %v1733 = vsel %vm1732, %v1727, %v1729
    %v1734 = vsel %vm1732, %v1729, %v1731
    %1737 = vst [vmem:[#allocation8] sm:$0xff] %v1733
    %1738 = vst [vmem:[#allocation8 + $0x8] sm:$0xff] %v1734
    %v1739 = vld [vmem:[#allocation4 + $0x20] sm:$0xff]
    %v1740 = vld [vmem:[#allocation4 + $0x28] sm:$0xff]
    %v1741 = vld [vmem:[#allocation4 + $0x30] sm:$0xff]
    %1742 = vrot.lane.b32.xlu0 %v1706, 118
    %v1743 = vpop.permute.xlu0 %1742
    %1744 = vrot.lane.b32.xlu0 %v1710, 118
    %v1745 = vpop.permute.xlu0 %1744
    %vm1746 = vcmask 965632
    %v1747 = vsel %vm1746, %v1743, %v1745
    %v1751 = vmul.f32 %v1739, %v1743
    %v1752 = vmul.f32 %v1740, %v1747
    %v1753 = vmul.f32 %v1741, %v1745
    %1757 = vrot.lane.b32.xlu0 %v1751, 10
    %v1758 = vpop.permute.xlu0 %1757
    %1759 = vrot.lane.b32.xlu0 %v1752, 10
    %v1760 = vpop.permute.xlu0 %1759
    %1761 = vrot.lane.b32.xlu0 %v1753, 10
    %v1762 = vpop.permute.xlu0 %1761
    %vm1763 = vcmask 80896
    %v1764 = vsel %vm1763, %v1758, %v1760
    %v1765 = vsel %vm1763, %v1760, %v1762
    %1768 = vst [vmem:[#allocation8 + $0x10] sm:$0xff] %v1764
    %1769 = vst [vmem:[#allocation8 + $0x18] sm:$0xff] %v1765
    %s1770 = scalar_lea.vmem %s2, 1
    %v1771 = vld [vmem:[%s1770] ss:$8 sm:$0x3]
    %v1772 = vld [vmem:[#allocation4] sm:$0xff]
    %v1773 = vld [vmem:[#allocation4 + $0x8] sm:$0xff]
    %v1774 = vld [vmem:[#allocation4 + $0x10] sm:$0xff]
    %v1776 = vlaneseq
    %v1777 = vshrl.u32 %v1776, 7
    %v1778 = vsub.s32 0, %v1777
    %v1779 = vrot.slane %v1771, %v1778
    %v1780 = vlaneseq
    %v1781 = vshrl.u32 %v1780, 7
    %v1782 = vsub.s32 1, %v1781
    %v1783 = vrot.slane %v1771, %v1782
    %1784 = vrot.lane.b32.xlu0 %v1779, 104
    %v1785 = vpop.permute.xlu0 %1784
    %1786 = vrot.lane.b32.xlu0 %v1783, 104
    %v1787 = vpop.permute.xlu0 %1786
    %v1788 = vsel %vm542, %v1785, %v1787
    %v1792 = vmul.f32 %v1772, %v1785
    %v1793 = vmul.f32 %v1773, %v1788
    %v1794 = vmul.f32 %v1774, %v1787
    %1798 = vrot.lane.b32.xlu0 %v1792, 24
    %v1799 = vpop.permute.xlu0 %1798
    %1800 = vrot.lane.b32.xlu0 %v1793, 24
    %v1801 = vpop.permute.xlu0 %1800
    %1802 = vrot.lane.b32.xlu0 %v1794, 24
    %v1803 = vpop.permute.xlu0 %1802
    %v1804 = vsel %vm219, %v1799, %v1801
    %v1805 = vsel %vm219, %v1801, %v1803
    %1808 = vst [vmem:[#allocation8 + $0x20] sm:$0xff] %v1804
    %1809 = vst [vmem:[#allocation8 + $0x28] sm:$0xff] %v1805
    %v1810 = vld [vmem:[#allocation4 + $0x20] sm:$0xff]
    %v1811 = vld [vmem:[#allocation4 + $0x28] sm:$0xff]
    %v1812 = vld [vmem:[#allocation4 + $0x30] sm:$0xff]
    %1813 = vrot.lane.b32.xlu0 %v1779, 120
    %v1814 = vpop.permute.xlu0 %1813
    %1815 = vrot.lane.b32.xlu0 %v1783, 120
    %v1816 = vpop.permute.xlu0 %1815
    %v1817 = vsel %vm310, %v1814, %v1816
    %v1821 = vmul.f32 %v1810, %v1814
    %v1822 = vmul.f32 %v1811, %v1817
    %v1823 = vmul.f32 %v1812, %v1816
    %1827 = vrot.lane.b32.xlu0 %v1821, 8
    %v1828 = vpop.permute.xlu0 %1827
    %1829 = vrot.lane.b32.xlu0 %v1822, 8
    %v1830 = vpop.permute.xlu0 %1829
    %1831 = vrot.lane.b32.xlu0 %v1823, 8
    %v1832 = vpop.permute.xlu0 %1831
    %v1833 = vsel %vm203, %v1828, %v1830
    %v1834 = vsel %vm203, %v1830, %v1832
    %1837 = vst [vmem:[#allocation8 + $0x30] sm:$0xff] %v1833
    %1838 = vst [vmem:[#allocation8 + $0x38] sm:$0xff] %v1834
    %s1839 = scalar_lea.vmem %s2, 2
    %v1840 = vld [vmem:[%s1839] ss:$8 sm:$0x3]
    %v1841 = vld [vmem:[#allocation4] sm:$0xff]
    %v1842 = vld [vmem:[#allocation4 + $0x8] sm:$0xff]
    %v1843 = vld [vmem:[#allocation4 + $0x10] sm:$0xff]
    %v1845 = vlaneseq
    %v1846 = vshrl.u32 %v1845, 7
    %v1847 = vsub.s32 0, %v1846
    %v1848 = vrot.slane %v1840, %v1847
    %v1849 = vlaneseq
    %v1850 = vshrl.u32 %v1849, 7
    %v1851 = vsub.s32 1, %v1850
    %v1852 = vrot.slane %v1840, %v1851
    %1853 = vrot.lane.b32.xlu0 %v1848, 106
    %v1854 = vpop.permute.xlu0 %1853
    %1855 = vrot.lane.b32.xlu0 %v1852, 106
    %v1856 = vpop.permute.xlu0 %1855
    %vm1857 = vcmask 867328
    %v1858 = vsel %vm1857, %v1854, %v1856
    %v1862 = vmul.f32 %v1841, %v1854
    %v1863 = vmul.f32 %v1842, %v1858
    %v1864 = vmul.f32 %v1843, %v1856
    %1868 = vrot.lane.b32.xlu0 %v1862, 22
    %v1869 = vpop.permute.xlu0 %1868
    %1870 = vrot.lane.b32.xlu0 %v1863, 22
    %v1871 = vpop.permute.xlu0 %1870
    %1872 = vrot.lane.b32.xlu0 %v1864, 22
    %v1873 = vpop.permute.xlu0 %1872
    %vm1874 = vcmask 179200
    %v1875 = vsel %vm1874, %v1869, %v1871
    %v1876 = vsel %vm1874, %v1871, %v1873
    %1879 = vst [vmem:[#allocation8 + $0x40] sm:$0xff] %v1875
    %1880 = vst [vmem:[#allocation8 + $0x48] sm:$0xff] %v1876
    %v1881 = vld [vmem:[#allocation4 + $0x20] sm:$0xff]
    %v1882 = vld [vmem:[#allocation4 + $0x28] sm:$0xff]
    %v1883 = vld [vmem:[#allocation4 + $0x30] sm:$0xff]
    %1884 = vrot.lane.b32.xlu0 %v1848, 122
    %v1885 = vpop.permute.xlu0 %1884
    %1886 = vrot.lane.b32.xlu0 %v1852, 122
    %v1887 = vpop.permute.xlu0 %1886
    %vm1888 = vcmask 998400
    %v1889 = vsel %vm1888, %v1885, %v1887
    %v1893 = vmul.f32 %v1881, %v1885
    %v1894 = vmul.f32 %v1882, %v1889
    %v1895 = vmul.f32 %v1883, %v1887
    %1899 = vrot.lane.b32.xlu0 %v1893, 6
    %v1900 = vpop.permute.xlu0 %1899
    %1901 = vrot.lane.b32.xlu0 %v1894, 6
    %v1902 = vpop.permute.xlu0 %1901
    %1903 = vrot.lane.b32.xlu0 %v1895, 6
    %v1904 = vpop.permute.xlu0 %1903
    %vm1905 = vcmask 48128
    %v1906 = vsel %vm1905, %v1900, %v1902
    %v1907 = vsel %vm1905, %v1902, %v1904
    %1910 = vst [vmem:[#allocation8 + $0x50] sm:$0xff] %v1906
    %1911 = vst [vmem:[#allocation8 + $0x58] sm:$0xff] %v1907
    %s1912 = scalar_lea.vmem %s2, 3
    %v1913 = vld [vmem:[%s1912] ss:$8 sm:$0x3]
    %v1914 = vld [vmem:[#allocation4 + $0x8] sm:$0xff]
    %v1915 = vld [vmem:[#allocation4 + $0x10] sm:$0xff]
    %v1916 = vld [vmem:[#allocation4 + $0x18] sm:$0xff]
    %v1918 = vlaneseq
    %v1919 = vshrl.u32 %v1918, 7
    %v1920 = vsub.s32 0, %v1919
    %v1921 = vrot.slane %v1913, %v1920
    %v1922 = vlaneseq
    %v1923 = vshrl.u32 %v1922, 7
    %v1924 = vsub.s32 1, %v1923
    %v1925 = vrot.slane %v1913, %v1924
    %1926 = vrot.lane.b32.xlu0 %v1921, 6
    %v1927 = vpop.permute.xlu0 %1926
    %1928 = vrot.lane.b32.xlu0 %v1925, 6
    %v1929 = vpop.permute.xlu0 %1928
    %v1930 = vsel %vm1905, %v1927, %v1929
    %v1934 = vmul.f32 %v1914, %v1927
    %v1935 = vmul.f32 %v1915, %v1930
    %v1936 = vmul.f32 %v1916, %v1929
    %1940 = vrot.lane.b32.xlu0 %v1934, 122
    %v1941 = vpop.permute.xlu0 %1940
    %1942 = vrot.lane.b32.xlu0 %v1935, 122
    %v1943 = vpop.permute.xlu0 %1942
    %1944 = vrot.lane.b32.xlu0 %v1936, 122
    %v1945 = vpop.permute.xlu0 %1944
    %v1946 = vsel %vm1888, %v1941, %v1943
    %v1947 = vsel %vm1888, %v1943, %v1945
    %1950 = vst [vmem:[#allocation8 + $0x60] sm:$0xff] %v1946
    %1951 = vst [vmem:[#allocation8 + $0x68] sm:$0xff] %v1947
    %v1952 = vld [vmem:[#allocation4 + $0x28] sm:$0xff]
    %v1953 = vld [vmem:[#allocation4 + $0x30] sm:$0xff]
    %v1954 = vld [vmem:[#allocation4 + $0x38] sm:$0xff]
    %1955 = vrot.lane.b32.xlu0 %v1921, 22
    %v1956 = vpop.permute.xlu0 %1955
    %1957 = vrot.lane.b32.xlu0 %v1925, 22
    %v1958 = vpop.permute.xlu0 %1957
    %v1959 = vsel %vm1874, %v1956, %v1958
    %v1963 = vmul.f32 %v1952, %v1956
    %v1964 = vmul.f32 %v1953, %v1959
    %v1965 = vmul.f32 %v1954, %v1958
    %1969 = vrot.lane.b32.xlu0 %v1963, 106
    %v1970 = vpop.permute.xlu0 %1969
    %1971 = vrot.lane.b32.xlu0 %v1964, 106
    %v1972 = vpop.permute.xlu0 %1971
    %1973 = vrot.lane.b32.xlu0 %v1965, 106
    %v1974 = vpop.permute.xlu0 %1973
    %v1975 = vsel %vm1857, %v1970, %v1972
    %v1976 = vsel %vm1857, %v1972, %v1974
    %1979 = vst [vmem:[#allocation8 + $0x70] sm:$0xff] %v1975
    %1980 = vst [vmem:[#allocation8 + $0x78] sm:$0xff] %v1976
    %s1981 = scalar_lea.vmem %s2, 4
    %v1982 = vld [vmem:[%s1981] ss:$8 sm:$0x3]
    %v1983 = vld [vmem:[#allocation4 + $0x8] sm:$0xff]
    %v1984 = vld [vmem:[#allocation4 + $0x10] sm:$0xff]
    %v1985 = vld [vmem:[#allocation4 + $0x18] sm:$0xff]
    %v1987 = vlaneseq
    %v1988 = vshrl.u32 %v1987, 7
    %v1989 = vsub.s32 0, %v1988
    %v1990 = vrot.slane %v1982, %v1989
    %v1991 = vlaneseq
    %v1992 = vshrl.u32 %v1991, 7
    %v1993 = vsub.s32 1, %v1992
    %v1994 = vrot.slane %v1982, %v1993
    %1995 = vrot.lane.b32.xlu0 %v1990, 8
    %v1996 = vpop.permute.xlu0 %1995
    %1997 = vrot.lane.b32.xlu0 %v1994, 8
    %v1998 = vpop.permute.xlu0 %1997
    %v1999 = vsel %vm203, %v1996, %v1998
    %v2003 = vmul.f32 %v1983, %v1996
    %v2004 = vmul.f32 %v1984, %v1999
    %v2005 = vmul.f32 %v1985, %v1998
    %2009 = vrot.lane.b32.xlu0 %v2003, 120
    %v2010 = vpop.permute.xlu0 %2009
    %2011 = vrot.lane.b32.xlu0 %v2004, 120
    %v2012 = vpop.permute.xlu0 %2011
    %2013 = vrot.lane.b32.xlu0 %v2005, 120
    %v2014 = vpop.permute.xlu0 %2013
    %v2015 = vsel %vm310, %v2010, %v2012
    %v2016 = vsel %vm310, %v2012, %v2014
    %2019 = vst [vmem:[#allocation8 + $0x80] sm:$0xff] %v2015
    %2020 = vst [vmem:[#allocation8 + $0x88] sm:$0xff] %v2016
    %v2021 = vld [vmem:[#allocation4 + $0x28] sm:$0xff]
    %v2022 = vld [vmem:[#allocation4 + $0x30] sm:$0xff]
    %v2023 = vld [vmem:[#allocation4 + $0x38] sm:$0xff]
    %2024 = vrot.lane.b32.xlu0 %v1990, 24
    %v2025 = vpop.permute.xlu0 %2024
    %2026 = vrot.lane.b32.xlu0 %v1994, 24
    %v2027 = vpop.permute.xlu0 %2026
    %v2028 = vsel %vm219, %v2025, %v2027
    %v2032 = vmul.f32 %v2021, %v2025
    %v2033 = vmul.f32 %v2022, %v2028
    %v2034 = vmul.f32 %v2023, %v2027
    %2038 = vrot.lane.b32.xlu0 %v2032, 104
    %v2039 = vpop.permute.xlu0 %2038
    %2040 = vrot.lane.b32.xlu0 %v2033, 104
    %v2041 = vpop.permute.xlu0 %2040
    %2042 = vrot.lane.b32.xlu0 %v2034, 104
    %v2043 = vpop.permute.xlu0 %2042
    %v2044 = vsel %vm542, %v2039, %v2041
    %v2045 = vsel %vm542, %v2041, %v2043
    %2048 = vst [vmem:[#allocation8 + $0x90] sm:$0xff] %v2044
    %2049 = vst [vmem:[#allocation8 + $0x98] sm:$0xff] %v2045
    %s2050 = scalar_lea.vmem %s2, 5
    %v2051 = vld [vmem:[%s2050] ss:$8 sm:$0x3]
    %v2052 = vld [vmem:[#allocation4 + $0x8] sm:$0xff]
    %v2053 = vld [vmem:[#allocation4 + $0x10] sm:$0xff]
    %v2054 = vld [vmem:[#allocation4 + $0x18] sm:$0xff]
    %v2056 = vlaneseq
    %v2057 = vshrl.u32 %v2056, 7
    %v2058 = vsub.s32 0, %v2057
    %v2059 = vrot.slane %v2051, %v2058
    %v2060 = vlaneseq
    %v2061 = vshrl.u32 %v2060, 7
    %v2062 = vsub.s32 1, %v2061
    %v2063 = vrot.slane %v2051, %v2062
    %2064 = vrot.lane.b32.xlu0 %v2059, 10
    %v2065 = vpop.permute.xlu0 %2064
    %2066 = vrot.lane.b32.xlu0 %v2063, 10
    %v2067 = vpop.permute.xlu0 %2066
    %v2068 = vsel %vm1763, %v2065, %v2067
    %v2072 = vmul.f32 %v2052, %v2065
    %v2073 = vmul.f32 %v2053, %v2068
    %v2074 = vmul.f32 %v2054, %v2067
    %2078 = vrot.lane.b32.xlu0 %v2072, 118
    %v2079 = vpop.permute.xlu0 %2078
    %2080 = vrot.lane.b32.xlu0 %v2073, 118
    %v2081 = vpop.permute.xlu0 %2080
    %2082 = vrot.lane.b32.xlu0 %v2074, 118
    %v2083 = vpop.permute.xlu0 %2082
    %v2084 = vsel %vm1746, %v2079, %v2081
    %v2085 = vsel %vm1746, %v2081, %v2083
    %2088 = vst [vmem:[#allocation8 + $0xa0] sm:$0xff] %v2084
    %2089 = vst [vmem:[#allocation8 + $0xa8] sm:$0xff] %v2085
    %v2090 = vld [vmem:[#allocation4 + $0x28] sm:$0xff]
    %v2091 = vld [vmem:[#allocation4 + $0x30] sm:$0xff]
    %v2092 = vld [vmem:[#allocation4 + $0x38] sm:$0xff]
    %2093 = vrot.lane.b32.xlu0 %v2059, 26
    %v2094 = vpop.permute.xlu0 %2093
    %2095 = vrot.lane.b32.xlu0 %v2063, 26
    %v2096 = vpop.permute.xlu0 %2095
    %v2097 = vsel %vm1732, %v2094, %v2096
    %v2101 = vmul.f32 %v2090, %v2094
    %v2102 = vmul.f32 %v2091, %v2097
    %v2103 = vmul.f32 %v2092, %v2096
    %2107 = vrot.lane.b32.xlu0 %v2101, 102
    %v2108 = vpop.permute.xlu0 %2107
    %2109 = vrot.lane.b32.xlu0 %v2102, 102
    %v2110 = vpop.permute.xlu0 %2109
    %2111 = vrot.lane.b32.xlu0 %v2103, 102
    %v2112 = vpop.permute.xlu0 %2111
    %v2113 = vsel %vm1715, %v2108, %v2110
    %v2114 = vsel %vm1715, %v2110, %v2112
    %2117 = vst [vmem:[#allocation8 + $0xb0] sm:$0xff] %v2113
    %2118 = vst [vmem:[#allocation8 + $0xb8] sm:$0xff] %v2114
    %s2119 = scalar_lea.vmem %s2, 6
    %v2120 = vld [vmem:[%s2119] ss:$8 sm:$0x3]
    %v2121 = vld [vmem:[#allocation4 + $0x8] sm:$0xff]
    %v2122 = vld [vmem:[#allocation4 + $0x10] sm:$0xff]
    %v2123 = vld [vmem:[#allocation4 + $0x18] sm:$0xff]
    %v2125 = vlaneseq
    %v2126 = vshrl.u32 %v2125, 7
    %v2127 = vsub.s32 0, %v2126
    %v2128 = vrot.slane %v2120, %v2127
    %v2129 = vlaneseq
    %v2130 = vshrl.u32 %v2129, 7
    %v2131 = vsub.s32 1, %v2130
    %v2132 = vrot.slane %v2120, %v2131
    %2133 = vrot.lane.b32.xlu0 %v2128, 38
    %v2134 = vpop.permute.xlu0 %2133
    %2135 = vrot.lane.b32.xlu0 %v2132, 38
    %v2136 = vpop.permute.xlu0 %2135
    %vm2137 = vcmask 310272
    %v2138 = vsel %vm2137, %v2134, %v2136
    %v2142 = vmul.f32 %v2121, %v2134
    %v2143 = vmul.f32 %v2122, %v2138
    %v2144 = vmul.f32 %v2123, %v2136
    %2148 = vrot.lane.b32.xlu0 %v2142, 90
    %v2149 = vpop.permute.xlu0 %2148
    %2150 = vrot.lane.b32.xlu0 %v2143, 90
    %v2151 = vpop.permute.xlu0 %2150
    %2152 = vrot.lane.b32.xlu0 %v2144, 90
    %v2153 = vpop.permute.xlu0 %2152
    %vm2154 = vcmask 736256
    %v2155 = vsel %vm2154, %v2149, %v2151
    %v2156 = vsel %vm2154, %v2151, %v2153
    %2159 = vst [vmem:[#allocation8 + $0xc0] sm:$0xff] %v2155
    %2160 = vst [vmem:[#allocation8 + $0xc8] sm:$0xff] %v2156
    %v2161 = vld [vmem:[#allocation4 + $0x28] sm:$0xff]
    %v2162 = vld [vmem:[#allocation4 + $0x30] sm:$0xff]
    %v2163 = vld [vmem:[#allocation4 + $0x38] sm:$0xff]
    %2164 = vrot.lane.b32.xlu0 %v2128, 54
    %v2165 = vpop.permute.xlu0 %2164
    %2166 = vrot.lane.b32.xlu0 %v2132, 54
    %v2167 = vpop.permute.xlu0 %2166
    %vm2168 = vcmask 441344
    %v2169 = vsel %vm2168, %v2165, %v2167
    %v2173 = vmul.f32 %v2161, %v2165
    %v2174 = vmul.f32 %v2162, %v2169
    %v2175 = vmul.f32 %v2163, %v2167
    %2179 = vrot.lane.b32.xlu0 %v2173, 74
    %v2180 = vpop.permute.xlu0 %2179
    %2181 = vrot.lane.b32.xlu0 %v2174, 74
    %v2182 = vpop.permute.xlu0 %2181
    %2183 = vrot.lane.b32.xlu0 %v2175, 74
    %v2184 = vpop.permute.xlu0 %2183
    %vm2185 = vcmask 605184
    %v2186 = vsel %vm2185, %v2180, %v2182
    %v2187 = vsel %vm2185, %v2182, %v2184
    %2190 = vst [vmem:[#allocation8 + $0xd0] sm:$0xff] %v2186
    %2191 = vst [vmem:[#allocation8 + $0xd8] sm:$0xff] %v2187
    %s2192 = scalar_lea.vmem %s2, 7
    %v2193 = vld [vmem:[%s2192] ss:$8 sm:$0x3]
    %v2194 = vld [vmem:[#allocation4 + $0x8] sm:$0xff]
    %v2195 = vld [vmem:[#allocation4 + $0x10] sm:$0xff]
    %v2196 = vld [vmem:[#allocation4 + $0x18] sm:$0xff]
    %v2198 = vlaneseq
    %v2199 = vshrl.u32 %v2198, 7
    %v2200 = vsub.s32 0, %v2199
    %v2201 = vrot.slane %v2193, %v2200
    %v2202 = vlaneseq
    %v2203 = vshrl.u32 %v2202, 7
    %v2204 = vsub.s32 1, %v2203
    %v2205 = vrot.slane %v2193, %v2204
    %2206 = vrot.lane.b32.xlu0 %v2201, 40
    %v2207 = vpop.permute.xlu0 %2206
    %2208 = vrot.lane.b32.xlu0 %v2205, 40
    %v2209 = vpop.permute.xlu0 %2208
    %v2210 = vsel %vm722, %v2207, %v2209
    %v2214 = vmul.f32 %v2194, %v2207
    %v2215 = vmul.f32 %v2195, %v2210
    %v2216 = vmul.f32 %v2196, %v2209
    %2220 = vrot.lane.b32.xlu0 %v2214, 88
    %v2221 = vpop.permute.xlu0 %2220
    %2222 = vrot.lane.b32.xlu0 %v2215, 88
    %v2223 = vpop.permute.xlu0 %2222
    %2224 = vrot.lane.b32.xlu0 %v2216, 88
    %v2225 = vpop.permute.xlu0 %2224
    %v2226 = vsel %vm738, %v2221, %v2223
    %v2227 = vsel %vm738, %v2223, %v2225
    %2230 = vst [vmem:[#allocation8 + $0xe0] sm:$0xff] %v2226
    %2231 = vst [vmem:[#allocation8 + $0xe8] sm:$0xff] %v2227
    %v2232 = vld [vmem:[#allocation4 + $0x28] sm:$0xff]
    %v2233 = vld [vmem:[#allocation4 + $0x30] sm:$0xff]
    %v2234 = vld [vmem:[#allocation4 + $0x38] sm:$0xff]
    %2235 = vrot.lane.b32.xlu0 %v2201, 56
    %v2236 = vpop.permute.xlu0 %2235
    %2237 = vrot.lane.b32.xlu0 %v2205, 56
    %v2238 = vpop.permute.xlu0 %2237
    %vm2239 = vcmask 457728
    %v2240 = vsel %vm2239, %v2236, %v2238
    %v2244 = vmul.f32 %v2232, %v2236
    %v2245 = vmul.f32 %v2233, %v2240
    %v2246 = vmul.f32 %v2234, %v2238
    %2250 = vrot.lane.b32.xlu0 %v2244, 72
    %v2251 = vpop.permute.xlu0 %2250
    %2252 = vrot.lane.b32.xlu0 %v2245, 72
    %v2253 = vpop.permute.xlu0 %2252
    %2254 = vrot.lane.b32.xlu0 %v2246, 72
    %v2255 = vpop.permute.xlu0 %2254
    %vm2256 = vcmask 588800
    %v2257 = vsel %vm2256, %v2251, %v2253
    %v2258 = vsel %vm2256, %v2253, %v2255
    %2261 = vst [vmem:[#allocation8 + $0xf0] sm:$0xff] %v2257
    %2262 = vst [vmem:[#allocation8 + $0xf8] sm:$0xff] %v2258
    %s2263 = scalar_lea.vmem %s2, 16
    %v2264 = vld [vmem:[%s2263] ss:$8 sm:$0x3]
    %v2265 = vld [vmem:[#allocation4 + $0x8] sm:$0xff]
    %v2266 = vld [vmem:[#allocation4 + $0x10] sm:$0xff]
    %v2267 = vld [vmem:[#allocation4 + $0x18] sm:$0xff]
    %v2269 = vlaneseq
    %v2270 = vshrl.u32 %v2269, 7
    %v2271 = vsub.s32 0, %v2270
    %v2272 = vrot.slane %v2264, %v2271
    %v2273 = vlaneseq
    %v2274 = vshrl.u32 %v2273, 7
    %v2275 = vsub.s32 1, %v2274
    %v2276 = vrot.slane %v2264, %v2275
    %2277 = vrot.lane.b32.xlu0 %v2272, 42
    %v2278 = vpop.permute.xlu0 %2277
    %2279 = vrot.lane.b32.xlu0 %v2276, 42
    %v2280 = vpop.permute.xlu0 %2279
    %vm2281 = vcmask 343040
    %v2282 = vsel %vm2281, %v2278, %v2280
    %v2286 = vmul.f32 %v2265, %v2278
    %v2287 = vmul.f32 %v2266, %v2282
    %v2288 = vmul.f32 %v2267, %v2280
    %2292 = vrot.lane.b32.xlu0 %v2286, 86
    %v2293 = vpop.permute.xlu0 %2292
    %2294 = vrot.lane.b32.xlu0 %v2287, 86
    %v2295 = vpop.permute.xlu0 %2294
    %2296 = vrot.lane.b32.xlu0 %v2288, 86
    %v2297 = vpop.permute.xlu0 %2296
    %vm2298 = vcmask 703488
    %v2299 = vsel %vm2298, %v2293, %v2295
    %v2300 = vsel %vm2298, %v2295, %v2297
    %2303 = vst [vmem:[#allocation8 + $0x100] sm:$0xff] %v2299
    %2304 = vst [vmem:[#allocation8 + $0x108] sm:$0xff] %v2300
    %v2305 = vld [vmem:[#allocation4 + $0x28] sm:$0xff]
    %v2306 = vld [vmem:[#allocation4 + $0x30] sm:$0xff]
    %v2307 = vld [vmem:[#allocation4 + $0x38] sm:$0xff]
    %2308 = vrot.lane.b32.xlu0 %v2272, 58
    %v2309 = vpop.permute.xlu0 %2308
    %2310 = vrot.lane.b32.xlu0 %v2276, 58
    %v2311 = vpop.permute.xlu0 %2310
    %vm2312 = vcmask 474112
    %v2313 = vsel %vm2312, %v2309, %v2311
    %v2317 = vmul.f32 %v2305, %v2309
    %v2318 = vmul.f32 %v2306, %v2313
    %v2319 = vmul.f32 %v2307, %v2311
    %2323 = vrot.lane.b32.xlu0 %v2317, 70
    %v2324 = vpop.permute.xlu0 %2323
    %2325 = vrot.lane.b32.xlu0 %v2318, 70
    %v2326 = vpop.permute.xlu0 %2325
    %2327 = vrot.lane.b32.xlu0 %v2319, 70
    %v2328 = vpop.permute.xlu0 %2327
    %vm2329 = vcmask 572416
    %v2330 = vsel %vm2329, %v2324, %v2326
    %v2331 = vsel %vm2329, %v2326, %v2328
    %2334 = vst [vmem:[#allocation8 + $0x110] sm:$0xff] %v2330
    %2335 = vst [vmem:[#allocation8 + $0x118] sm:$0xff] %v2331
    %v2336 = vld [vmem:[#allocation8] sm:$0xff]
    %v2337 = vld [vmem:[#allocation8 + $0x8] sm:$0xff]
    %v2338 = vld [vmem:[#allocation8 + $0x10] sm:$0xff]
    %v2339 = vld [vmem:[#allocation8 + $0x18] sm:$0xff]
    %v2340 = vld [vmem:[#allocation8 + $0x20] sm:$0xff]
    %v2341 = vld [vmem:[#allocation8 + $0x28] sm:$0xff]
    %v2342 = vld [vmem:[#allocation8 + $0x30] sm:$0xff]
    %v2343 = vld [vmem:[#allocation8 + $0x38] sm:$0xff]
    %v2344 = vld [vmem:[#allocation8 + $0x40] sm:$0xff]
    %v2345 = vld [vmem:[#allocation8 + $0x48] sm:$0xff]
    %v2346 = vld [vmem:[#allocation8 + $0x50] sm:$0xff]
    %v2347 = vld [vmem:[#allocation8 + $0x58] sm:$0xff]
    %v2348 = vld [vmem:[#allocation8 + $0x60] sm:$0xff]
    %v2349 = vld [vmem:[#allocation8 + $0x68] sm:$0xff]
    %v2350 = vld [vmem:[#allocation8 + $0x70] sm:$0xff]
    %v2351 = vld [vmem:[#allocation8 + $0x78] sm:$0xff]
    %v2352 = vld [vmem:[#allocation8 + $0x80] sm:$0xff]
    %v2353 = vld [vmem:[#allocation8 + $0x88] sm:$0xff]
    %v2354 = vld [vmem:[#allocation8 + $0x90] sm:$0xff]
    %v2355 = vld [vmem:[#allocation8 + $0x98] sm:$0xff]
    %v2356 = vld [vmem:[#allocation8 + $0xa0] sm:$0xff]
    %v2357 = vld [vmem:[#allocation8 + $0xa8] sm:$0xff]
    %v2358 = vld [vmem:[#allocation8 + $0xb0] sm:$0xff]
    %v2359 = vld [vmem:[#allocation8 + $0xb8] sm:$0xff]
    %v2360 = vld [vmem:[#allocation8 + $0xc0] sm:$0xff]
    %v2361 = vld [vmem:[#allocation8 + $0xc8] sm:$0xff]
    %v2362 = vld [vmem:[#allocation8 + $0xd0] sm:$0xff]
    %v2363 = vld [vmem:[#allocation8 + $0xd8] sm:$0xff]
    %v2364 = vld [vmem:[#allocation8 + $0xe0] sm:$0xff]
    %v2365 = vld [vmem:[#allocation8 + $0xe8] sm:$0xff]
    %v2366 = vld [vmem:[#allocation8 + $0xf0] sm:$0xff]
    %v2367 = vld [vmem:[#allocation8 + $0xf8] sm:$0xff]
    %v2368 = vld [vmem:[#allocation8 + $0x100] sm:$0xff]
    %v2369 = vld [vmem:[#allocation8 + $0x108] sm:$0xff]
    %v2370 = vld [vmem:[#allocation8 + $0x110] sm:$0xff]
    %v2371 = vld [vmem:[#allocation8 + $0x118] sm:$0xff]
    %v2372 = vpack.c.bf16 %v2340, %v2336
    %v2373 = vpack.c.bf16 %v2341, %v2337
    %v2374 = vpack.c.bf16 %v2342, %v2338
    %v2375 = vpack.c.bf16 %v2343, %v2339
    %v2376 = vpack.c.bf16 %v2348, %v2344
    %v2377 = vpack.c.bf16 %v2349, %v2345
    %v2378 = vpack.c.bf16 %v2350, %v2346
    %v2379 = vpack.c.bf16 %v2351, %v2347
    %v2380 = vpack.c.bf16 %v2356, %v2352
    %v2381 = vpack.c.bf16 %v2357, %v2353
    %v2382 = vpack.c.bf16 %v2358, %v2354
    %v2383 = vpack.c.bf16 %v2359, %v2355
    %v2384 = vpack.c.bf16 %v2364, %v2360
    %v2385 = vpack.c.bf16 %v2365, %v2361
    %v2386 = vpack.c.bf16 %v2366, %v2362
    %v2387 = vpack.c.bf16 %v2367, %v2363
    %v2388 = vpack.c.bf16 %v2368, %v2368
    %v2389 = vpack.c.bf16 %v2369, %v2369
    %v2390 = vpack.c.bf16 %v2370, %v2370
    %v2391 = vpack.c.bf16 %v2371, %v2371
    %v2392 = vld [vmem:[#allocation16] sm:$0xf]
    %v2393 = vld [vmem:[#allocation17] sm:$0xff]
    %2395 = vset.pattern.permute.xlu0 0
    %2396 = vperm.xlu0 %2395, %v2393
    %v2397 = vpop.permute.xlu0 %2396
    %v2400 = vsel %vm2256, %v2392, 0
    %vm2402 = vcmask 1043456
    %v2404 = vsel %vm2402, %v2388, 0
    %v2407 = vsel %vm2402, %v2389, 0
    %v2410 = vsel %vm2402, %v2390, 0
    %v2413 = vsel %vm2402, %v2391, 0
    %2415 = vmatprep.subr.bf16.mxu0 %v2373
    %2416 = vmatpush1.bf16.msra.mxu0 %v2372
    %2417 = vmatprep.subr.bf16.mxu0 %v2377
    %2418 = vmatpush1.bf16.msra.mxu0 %v2376
    %2419 = vmatprep.subr.bf16.mxu0 %v2381
    %2420 = vmatpush1.bf16.msra.mxu0 %v2380
    %2421 = vmatprep.subr.bf16.mxu0 %v2385
    %2422 = vmatpush1.bf16.msra.mxu0 %v2384
    %2423 = vmatprep.subr.bf16.mxu0 %v2407
    %2424 = vmatpush1.bf16.msra.mxu0 %v2404
    %2425 = vmatprep.subr.bf16.mxu0 0
    %2426 = vmatpush1.bf16.msra.mxu0 0
    %2427 = vmatprep.subr.bf16.mxu0 0
    %2428 = vmatpush1.bf16.msra.mxu0 0
    %2429 = vmatprep.subr.bf16.mxu0 0
    %2430 = vmatpush1.bf16.msra.mxu0 0
    %2431 = vmatprep.subr.bf16.mxu0 0
    %2432 = vmatpush1.bf16.msra.mxu0 0
    %2433 = vmatprep.subr.bf16.mxu0 0
    %2434 = vmatpush1.bf16.msra.mxu0 0
    %2435 = vmatprep.subr.bf16.mxu0 0
    %2436 = vmatpush1.bf16.msra.mxu0 0
    %2437 = vmatprep.subr.bf16.mxu0 0
    %2438 = vmatpush1.bf16.msra.mxu0 0
    %2439 = vmatprep.subr.bf16.mxu0 0
    %2440 = vmatpush1.bf16.msra.mxu0 0
    %2441 = vmatprep.subr.bf16.mxu0 0
    %2442 = vmatpush1.bf16.msra.mxu0 0
    %2443 = vmatprep.subr.bf16.mxu0 0
    %2444 = vmatpush1.bf16.msra.mxu0 0
    %2445 = vmatprep.subr.bf16.mxu0 0
    %2446 = vmatpush1.bf16.msra.mxu0 0
    %2447 = vmatprep.mubr.bf16.mxu0 0
    %2448 = vmatmul.mubr.bf16.gmra.mrb[0].mxu0 %v2400
    %v2449 = vpop.f32.mrb[0].mxu0
    %v2450 = vadd.f32 %v2397, %v2449
    %v2451 = vpop.f32.mrb[0].mxu0
    %v2452 = vadd.f32 %v2397, %v2451
    %v2453 = vpop.f32.mrb[0].mxu0
    %v2454 = vpop.f32.mrb[0].mxu0
    %2455 = vdwg.mxu0
    %2456 = vmatprep.subr.bf16.mxu0 %v2375
    %2457 = vmatpush1.bf16.msra.mxu0 %v2374
    %2458 = vmatprep.subr.bf16.mxu0 %v2379
    %2459 = vmatpush1.bf16.msra.mxu0 %v2378
    %2460 = vmatprep.subr.bf16.mxu0 %v2383
    %2461 = vmatpush1.bf16.msra.mxu0 %v2382
    %2462 = vmatprep.subr.bf16.mxu0 %v2387
    %2463 = vmatpush1.bf16.msra.mxu0 %v2386
    %2464 = vmatprep.subr.bf16.mxu0 %v2413
    %2465 = vmatpush1.bf16.msra.mxu0 %v2410
    %2466 = vmatprep.subr.bf16.mxu0 0
    %2467 = vmatpush1.bf16.msra.mxu0 0
    %2468 = vmatprep.subr.bf16.mxu0 0
    %2469 = vmatpush1.bf16.msra.mxu0 0
    %2470 = vmatprep.subr.bf16.mxu0 0
    %2471 = vmatpush1.bf16.msra.mxu0 0
    %2472 = vmatprep.subr.bf16.mxu0 0
    %2473 = vmatpush1.bf16.msra.mxu0 0
    %2474 = vmatprep.subr.bf16.mxu0 0
    %2475 = vmatpush1.bf16.msra.mxu0 0
    %2476 = vmatprep.subr.bf16.mxu0 0
    %2477 = vmatpush1.bf16.msra.mxu0 0
    %2478 = vmatprep.subr.bf16.mxu0 0
    %2479 = vmatpush1.bf16.msra.mxu0 0
    %2480 = vmatprep.subr.bf16.mxu0 0
    %2481 = vmatpush1.bf16.msra.mxu0 0
    %2482 = vmatprep.subr.bf16.mxu0 0
    %2483 = vmatpush1.bf16.msra.mxu0 0
    %2484 = vmatprep.subr.bf16.mxu0 0
    %2485 = vmatpush1.bf16.msra.mxu0 0
    %2486 = vmatprep.subr.bf16.mxu0 0
    %2487 = vmatpush1.bf16.msra.mxu0 0
    %2488 = vmatprep.mubr.bf16.mxu0 0
    %2489 = vmatmul.mubr.bf16.gmra.mrb[0].mxu0 %v2400
    %v2490 = vpop.f32.mrb[0].mxu0
    %v2491 = vadd.f32 %v2397, %v2490
    %v2492 = vpop.f32.mrb[0].mxu0
    %v2493 = vadd.f32 %v2397, %v2492
    %v2494 = vpop.f32.mrb[0].mxu0
    %v2495 = vpop.f32.mrb[0].mxu0
    %2496 = vdwg.mxu0
    %v2497 = vmax.f32 %v2450, 0.0
    %v2498 = vmax.f32 %v2452, 0.0
    %v2499 = vmax.f32 %v2491, 0.0
    %v2500 = vmax.f32 %v2493, 0.0
    %2503 = vrot.lane.b32.xlu0 %v2497, 8
    %v2504 = vpop.permute.xlu0 %2503
    %2505 = vrot.lane.b32.xlu0 %v2498, 8
    %v2506 = vpop.permute.xlu0 %2505
    %v2507 = vsel %vm203, %v2504, %v2506
    %2511 = vst.msk [vmem:[#allocation5 + $0x8] sm:$0xff] %vm1680, %v2504
    %2512 = vst [vmem:[#allocation5 + $0x10] sm:$0xff] %v2507
    %2513 = vst.msk [vmem:[#allocation5 + $0x18] sm:$0xff] %vm203, %v2506
    %2516 = vrot.lane.b32.xlu0 %v2499, 24
    %v2517 = vpop.permute.xlu0 %2516
    %2518 = vrot.lane.b32.xlu0 %v2500, 24
    %v2519 = vpop.permute.xlu0 %2518
    %v2520 = vsel %vm219, %v2517, %v2519
    %2524 = vst.msk [vmem:[#allocation5 + $0x28] sm:$0xff] %vm1694, %v2517
    %2525 = vst [vmem:[#allocation5 + $0x30] sm:$0xff] %v2520
    %2526 = vst.msk [vmem:[#allocation5 + $0x38] sm:$0xff] %vm219, %v2519
    %v2527 = vld [vmem:[%s3] ss:$8 sm:$0x3]
    %v2528 = vld [vmem:[#allocation5] sm:$0xff]
    %v2529 = vld [vmem:[#allocation5 + $0x8] sm:$0xff]
    %v2530 = vld [vmem:[#allocation5 + $0x10] sm:$0xff]
    %v2532 = vlaneseq
    %v2533 = vshrl.u32 %v2532, 7
    %v2534 = vsub.s32 0, %v2533
    %v2535 = vrot.slane %v2527, %v2534
    %v2536 = vlaneseq
    %v2537 = vshrl.u32 %v2536, 7
    %v2538 = vsub.s32 1, %v2537
    %v2539 = vrot.slane %v2527, %v2538
    %2540 = vrot.lane.b32.xlu0 %v2535, 68
    %v2541 = vpop.permute.xlu0 %2540
    %2542 = vrot.lane.b32.xlu0 %v2539, 68
    %v2543 = vpop.permute.xlu0 %2542
    %vm2544 = vcmask 556032
    %v2545 = vsel %vm2544, %v2541, %v2543
    %v2549 = vmul.f32 %v2528, %v2541
    %v2550 = vmul.f32 %v2529, %v2545
    %v2551 = vmul.f32 %v2530, %v2543
    %2555 = vrot.lane.b32.xlu0 %v2549, 60
    %v2556 = vpop.permute.xlu0 %2555
    %2557 = vrot.lane.b32.xlu0 %v2550, 60
    %v2558 = vpop.permute.xlu0 %2557
    %2559 = vrot.lane.b32.xlu0 %v2551, 60
    %v2560 = vpop.permute.xlu0 %2559
    %vm2561 = vcmask 490496
    %v2562 = vsel %vm2561, %v2556, %v2558
    %v2563 = vsel %vm2561, %v2558, %v2560
    %2566 = vst [vmem:[#allocation8] sm:$0xff] %v2562
    %2567 = vst [vmem:[#allocation8 + $0x8] sm:$0xff] %v2563
    %v2568 = vld [vmem:[#allocation5 + $0x20] sm:$0xff]
    %v2569 = vld [vmem:[#allocation5 + $0x28] sm:$0xff]
    %v2570 = vld [vmem:[#allocation5 + $0x30] sm:$0xff]
    %2571 = vrot.lane.b32.xlu0 %v2535, 84
    %v2572 = vpop.permute.xlu0 %2571
    %2573 = vrot.lane.b32.xlu0 %v2539, 84
    %v2574 = vpop.permute.xlu0 %2573
    %vm2575 = vcmask 687104
    %v2576 = vsel %vm2575, %v2572, %v2574
    %v2580 = vmul.f32 %v2568, %v2572
    %v2581 = vmul.f32 %v2569, %v2576
    %v2582 = vmul.f32 %v2570, %v2574
    %2586 = vrot.lane.b32.xlu0 %v2580, 44
    %v2587 = vpop.permute.xlu0 %2586
    %2588 = vrot.lane.b32.xlu0 %v2581, 44
    %v2589 = vpop.permute.xlu0 %2588
    %2590 = vrot.lane.b32.xlu0 %v2582, 44
    %v2591 = vpop.permute.xlu0 %2590
    %vm2592 = vcmask 359424
    %v2593 = vsel %vm2592, %v2587, %v2589
    %v2594 = vsel %vm2592, %v2589, %v2591
    %2597 = vst [vmem:[#allocation8 + $0x10] sm:$0xff] %v2593
    %2598 = vst [vmem:[#allocation8 + $0x18] sm:$0xff] %v2594
    %s2599 = scalar_lea.vmem %s3, 1
    %v2600 = vld [vmem:[%s2599] ss:$8 sm:$0x3]
    %v2601 = vld [vmem:[#allocation5] sm:$0xff]
    %v2602 = vld [vmem:[#allocation5 + $0x8] sm:$0xff]
    %v2603 = vld [vmem:[#allocation5 + $0x10] sm:$0xff]
    %v2605 = vlaneseq
    %v2606 = vshrl.u32 %v2605, 7
    %v2607 = vsub.s32 0, %v2606
    %v2608 = vrot.slane %v2600, %v2607
    %v2609 = vlaneseq
    %v2610 = vshrl.u32 %v2609, 7
    %v2611 = vsub.s32 1, %v2610
    %v2612 = vrot.slane %v2600, %v2611
    %2613 = vrot.lane.b32.xlu0 %v2608, 72
    %v2614 = vpop.permute.xlu0 %2613
    %2615 = vrot.lane.b32.xlu0 %v2612, 72
    %v2616 = vpop.permute.xlu0 %2615
    %v2617 = vsel %vm2256, %v2614, %v2616
    %v2621 = vmul.f32 %v2601, %v2614
    %v2622 = vmul.f32 %v2602, %v2617
    %v2623 = vmul.f32 %v2603, %v2616
    %2627 = vrot.lane.b32.xlu0 %v2621, 56
    %v2628 = vpop.permute.xlu0 %2627
    %2629 = vrot.lane.b32.xlu0 %v2622, 56
    %v2630 = vpop.permute.xlu0 %2629
    %2631 = vrot.lane.b32.xlu0 %v2623, 56
    %v2632 = vpop.permute.xlu0 %2631
    %v2633 = vsel %vm2239, %v2628, %v2630
    %v2634 = vsel %vm2239, %v2630, %v2632
    %2637 = vst [vmem:[#allocation8 + $0x20] sm:$0xff] %v2633
    %2638 = vst [vmem:[#allocation8 + $0x28] sm:$0xff] %v2634
    %v2639 = vld [vmem:[#allocation5 + $0x20] sm:$0xff]
    %v2640 = vld [vmem:[#allocation5 + $0x28] sm:$0xff]
    %v2641 = vld [vmem:[#allocation5 + $0x30] sm:$0xff]
    %2642 = vrot.lane.b32.xlu0 %v2608, 88
    %v2643 = vpop.permute.xlu0 %2642
    %2644 = vrot.lane.b32.xlu0 %v2612, 88
    %v2645 = vpop.permute.xlu0 %2644
    %v2646 = vsel %vm738, %v2643, %v2645
    %v2650 = vmul.f32 %v2639, %v2643
    %v2651 = vmul.f32 %v2640, %v2646
    %v2652 = vmul.f32 %v2641, %v2645
    %2656 = vrot.lane.b32.xlu0 %v2650, 40
    %v2657 = vpop.permute.xlu0 %2656
    %2658 = vrot.lane.b32.xlu0 %v2651, 40
    %v2659 = vpop.permute.xlu0 %2658
    %2660 = vrot.lane.b32.xlu0 %v2652, 40
    %v2661 = vpop.permute.xlu0 %2660
    %v2662 = vsel %vm722, %v2657, %v2659
    %v2663 = vsel %vm722, %v2659, %v2661
    %2666 = vst [vmem:[#allocation8 + $0x30] sm:$0xff] %v2662
    %2667 = vst [vmem:[#allocation8 + $0x38] sm:$0xff] %v2663
    %s2668 = scalar_lea.vmem %s3, 2
    %v2669 = vld [vmem:[%s2668] ss:$8 sm:$0x3]
    %v2670 = vld [vmem:[#allocation5] sm:$0xff]
    %v2671 = vld [vmem:[#allocation5 + $0x8] sm:$0xff]
    %v2672 = vld [vmem:[#allocation5 + $0x10] sm:$0xff]
    %v2674 = vlaneseq
    %v2675 = vshrl.u32 %v2674, 7
    %v2676 = vsub.s32 0, %v2675
    %v2677 = vrot.slane %v2669, %v2676
    %v2678 = vlaneseq
    %v2679 = vshrl.u32 %v2678, 7
    %v2680 = vsub.s32 1, %v2679
    %v2681 = vrot.slane %v2669, %v2680
    %2682 = vrot.lane.b32.xlu0 %v2677, 76
    %v2683 = vpop.permute.xlu0 %2682
    %2684 = vrot.lane.b32.xlu0 %v2681, 76
    %v2685 = vpop.permute.xlu0 %2684
    %vm2686 = vcmask 621568
    %v2687 = vsel %vm2686, %v2683, %v2685
    %v2691 = vmul.f32 %v2670, %v2683
    %v2692 = vmul.f32 %v2671, %v2687
    %v2693 = vmul.f32 %v2672, %v2685
    %2697 = vrot.lane.b32.xlu0 %v2691, 52
    %v2698 = vpop.permute.xlu0 %2697
    %2699 = vrot.lane.b32.xlu0 %v2692, 52
    %v2700 = vpop.permute.xlu0 %2699
    %2701 = vrot.lane.b32.xlu0 %v2693, 52
    %v2702 = vpop.permute.xlu0 %2701
    %vm2703 = vcmask 424960
    %v2704 = vsel %vm2703, %v2698, %v2700
    %v2705 = vsel %vm2703, %v2700, %v2702
    %2708 = vst [vmem:[#allocation8 + $0x40] sm:$0xff] %v2704
    %2709 = vst [vmem:[#allocation8 + $0x48] sm:$0xff] %v2705
    %v2710 = vld [vmem:[#allocation5 + $0x20] sm:$0xff]
    %v2711 = vld [vmem:[#allocation5 + $0x28] sm:$0xff]
    %v2712 = vld [vmem:[#allocation5 + $0x30] sm:$0xff]
    %2713 = vrot.lane.b32.xlu0 %v2677, 92
    %v2714 = vpop.permute.xlu0 %2713
    %2715 = vrot.lane.b32.xlu0 %v2681, 92
    %v2716 = vpop.permute.xlu0 %2715
    %vm2717 = vcmask 752640
    %v2718 = vsel %vm2717, %v2714, %v2716
    %v2722 = vmul.f32 %v2710, %v2714
    %v2723 = vmul.f32 %v2711, %v2718
    %v2724 = vmul.f32 %v2712, %v2716
    %2728 = vrot.lane.b32.xlu0 %v2722, 36
    %v2729 = vpop.permute.xlu0 %2728
    %2730 = vrot.lane.b32.xlu0 %v2723, 36
    %v2731 = vpop.permute.xlu0 %2730
    %2732 = vrot.lane.b32.xlu0 %v2724, 36
    %v2733 = vpop.permute.xlu0 %2732
    %v2734 = vsel %vm848, %v2729, %v2731
    %v2735 = vsel %vm848, %v2731, %v2733
    %2738 = vst [vmem:[#allocation8 + $0x50] sm:$0xff] %v2734
    %2739 = vst [vmem:[#allocation8 + $0x58] sm:$0xff] %v2735
    %s2740 = scalar_lea.vmem %s3, 3
    %v2741 = vld [vmem:[%s2740] ss:$8 sm:$0x3]
    %v2742 = vld [vmem:[#allocation5 + $0x8] sm:$0xff]
    %v2743 = vld [vmem:[#allocation5 + $0x10] sm:$0xff]
    %v2744 = vld [vmem:[#allocation5 + $0x18] sm:$0xff]
    %v2746 = vlaneseq
    %v2747 = vshrl.u32 %v2746, 7
    %v2748 = vsub.s32 0, %v2747
    %v2749 = vrot.slane %v2741, %v2748
    %v2750 = vlaneseq
    %v2751 = vshrl.u32 %v2750, 7
    %v2752 = vsub.s32 1, %v2751
    %v2753 = vrot.slane %v2741, %v2752
    %2754 = vrot.lane.b32.xlu0 %v2749, 4
    %v2755 = vpop.permute.xlu0 %2754
    %2756 = vrot.lane.b32.xlu0 %v2753, 4
    %v2757 = vpop.permute.xlu0 %2756
    %vm2758 = vcmask 31744
    %v2759 = vsel %vm2758, %v2755, %v2757
    %v2763 = vmul.f32 %v2742, %v2755
    %v2764 = vmul.f32 %v2743, %v2759
    %v2765 = vmul.f32 %v2744, %v2757
    %2769 = vrot.lane.b32.xlu0 %v2763, 124
    %v2770 = vpop.permute.xlu0 %2769
    %2771 = vrot.lane.b32.xlu0 %v2764, 124
    %v2772 = vpop.permute.xlu0 %2771
    %2773 = vrot.lane.b32.xlu0 %v2765, 124
    %v2774 = vpop.permute.xlu0 %2773
    %vm2775 = vcmask 1014784
    %v2776 = vsel %vm2775, %v2770, %v2772
    %v2777 = vsel %vm2775, %v2772, %v2774
    %2780 = vst [vmem:[#allocation8 + $0x60] sm:$0xff] %v2776
    %2781 = vst [vmem:[#allocation8 + $0x68] sm:$0xff] %v2777
    %v2782 = vld [vmem:[#allocation5 + $0x28] sm:$0xff]
    %v2783 = vld [vmem:[#allocation5 + $0x30] sm:$0xff]
    %v2784 = vld [vmem:[#allocation5 + $0x38] sm:$0xff]
    %2785 = vrot.lane.b32.xlu0 %v2749, 20
    %v2786 = vpop.permute.xlu0 %2785
    %2787 = vrot.lane.b32.xlu0 %v2753, 20
    %v2788 = vpop.permute.xlu0 %2787
    %vm2789 = vcmask 162816
    %v2790 = vsel %vm2789, %v2786, %v2788
    %v2794 = vmul.f32 %v2782, %v2786
    %v2795 = vmul.f32 %v2783, %v2790
    %v2796 = vmul.f32 %v2784, %v2788
    %2800 = vrot.lane.b32.xlu0 %v2794, 108
    %v2801 = vpop.permute.xlu0 %2800
    %2802 = vrot.lane.b32.xlu0 %v2795, 108
    %v2803 = vpop.permute.xlu0 %2802
    %2804 = vrot.lane.b32.xlu0 %v2796, 108
    %v2805 = vpop.permute.xlu0 %2804
    %vm2806 = vcmask 883712
    %v2807 = vsel %vm2806, %v2801, %v2803
    %v2808 = vsel %vm2806, %v2803, %v2805
    %2811 = vst [vmem:[#allocation8 + $0x70] sm:$0xff] %v2807
    %2812 = vst [vmem:[#allocation8 + $0x78] sm:$0xff] %v2808
    %s2813 = scalar_lea.vmem %s3, 4
    %v2814 = vld [vmem:[%s2813] ss:$8 sm:$0x3]
    %v2815 = vld [vmem:[#allocation5 + $0x8] sm:$0xff]
    %v2816 = vld [vmem:[#allocation5 + $0x10] sm:$0xff]
    %v2817 = vld [vmem:[#allocation5 + $0x18] sm:$0xff]
    %v2819 = vlaneseq
    %v2820 = vshrl.u32 %v2819, 7
    %v2821 = vsub.s32 0, %v2820
    %v2822 = vrot.slane %v2814, %v2821
    %v2823 = vlaneseq
    %v2824 = vshrl.u32 %v2823, 7
    %v2825 = vsub.s32 1, %v2824
    %v2826 = vrot.slane %v2814, %v2825
    %2827 = vrot.lane.b32.xlu0 %v2822, 8
    %v2828 = vpop.permute.xlu0 %2827
    %2829 = vrot.lane.b32.xlu0 %v2826, 8
    %v2830 = vpop.permute.xlu0 %2829
    %v2831 = vsel %vm203, %v2828, %v2830
    %v2835 = vmul.f32 %v2815, %v2828
    %v2836 = vmul.f32 %v2816, %v2831
    %v2837 = vmul.f32 %v2817, %v2830
    %2841 = vrot.lane.b32.xlu0 %v2835, 120
    %v2842 = vpop.permute.xlu0 %2841
    %2843 = vrot.lane.b32.xlu0 %v2836, 120
    %v2844 = vpop.permute.xlu0 %2843
    %2845 = vrot.lane.b32.xlu0 %v2837, 120
    %v2846 = vpop.permute.xlu0 %2845
    %v2847 = vsel %vm310, %v2842, %v2844
    %v2848 = vsel %vm310, %v2844, %v2846
    %2851 = vst [vmem:[#allocation8 + $0x80] sm:$0xff] %v2847
    %2852 = vst [vmem:[#allocation8 + $0x88] sm:$0xff] %v2848
    %v2853 = vld [vmem:[#allocation5 + $0x28] sm:$0xff]
    %v2854 = vld [vmem:[#allocation5 + $0x30] sm:$0xff]
    %v2855 = vld [vmem:[#allocation5 + $0x38] sm:$0xff]
    %2856 = vrot.lane.b32.xlu0 %v2822, 24
    %v2857 = vpop.permute.xlu0 %2856
    %2858 = vrot.lane.b32.xlu0 %v2826, 24
    %v2859 = vpop.permute.xlu0 %2858
    %v2860 = vsel %vm219, %v2857, %v2859
    %v2864 = vmul.f32 %v2853, %v2857
    %v2865 = vmul.f32 %v2854, %v2860
    %v2866 = vmul.f32 %v2855, %v2859
    %2870 = vrot.lane.b32.xlu0 %v2864, 104
    %v2871 = vpop.permute.xlu0 %2870
    %2872 = vrot.lane.b32.xlu0 %v2865, 104
    %v2873 = vpop.permute.xlu0 %2872
    %2874 = vrot.lane.b32.xlu0 %v2866, 104
    %v2875 = vpop.permute.xlu0 %2874
    %v2876 = vsel %vm542, %v2871, %v2873
    %v2877 = vsel %vm542, %v2873, %v2875
    %2880 = vst [vmem:[#allocation8 + $0x90] sm:$0xff] %v2876
    %2881 = vst [vmem:[#allocation8 + $0x98] sm:$0xff] %v2877
    %s2882 = scalar_lea.vmem %s3, 5
    %v2883 = vld [vmem:[%s2882] ss:$8 sm:$0x3]
    %v2884 = vld [vmem:[#allocation5 + $0x8] sm:$0xff]
    %v2885 = vld [vmem:[#allocation5 + $0x10] sm:$0xff]
    %v2886 = vld [vmem:[#allocation5 + $0x18] sm:$0xff]
    %v2888 = vlaneseq
    %v2889 = vshrl.u32 %v2888, 7
    %v2890 = vsub.s32 0, %v2889
    %v2891 = vrot.slane %v2883, %v2890
    %v2892 = vlaneseq
    %v2893 = vshrl.u32 %v2892, 7
    %v2894 = vsub.s32 1, %v2893
    %v2895 = vrot.slane %v2883, %v2894
    %2896 = vrot.lane.b32.xlu0 %v2891, 12
    %v2897 = vpop.permute.xlu0 %2896
    %2898 = vrot.lane.b32.xlu0 %v2895, 12
    %v2899 = vpop.permute.xlu0 %2898
    %vm2900 = vcmask 97280
    %v2901 = vsel %vm2900, %v2897, %v2899
    %v2905 = vmul.f32 %v2884, %v2897
    %v2906 = vmul.f32 %v2885, %v2901
    %v2907 = vmul.f32 %v2886, %v2899
    %2911 = vrot.lane.b32.xlu0 %v2905, 116
    %v2912 = vpop.permute.xlu0 %2911
    %2913 = vrot.lane.b32.xlu0 %v2906, 116
    %v2914 = vpop.permute.xlu0 %2913
    %2915 = vrot.lane.b32.xlu0 %v2907, 116
    %v2916 = vpop.permute.xlu0 %2915
    %vm2917 = vcmask 949248
    %v2918 = vsel %vm2917, %v2912, %v2914
    %v2919 = vsel %vm2917, %v2914, %v2916
    %2922 = vst [vmem:[#allocation8 + $0xa0] sm:$0xff] %v2918
    %2923 = vst [vmem:[#allocation8 + $0xa8] sm:$0xff] %v2919
    %v2924 = vld [vmem:[#allocation5 + $0x28] sm:$0xff]
    %v2925 = vld [vmem:[#allocation5 + $0x30] sm:$0xff]
    %v2926 = vld [vmem:[#allocation5 + $0x38] sm:$0xff]
    %2927 = vrot.lane.b32.xlu0 %v2891, 28
    %v2928 = vpop.permute.xlu0 %2927
    %2929 = vrot.lane.b32.xlu0 %v2895, 28
    %v2930 = vpop.permute.xlu0 %2929
    %vm2931 = vcmask 228352
    %v2932 = vsel %vm2931, %v2928, %v2930
    %v2936 = vmul.f32 %v2924, %v2928
    %v2937 = vmul.f32 %v2925, %v2932
    %v2938 = vmul.f32 %v2926, %v2930
    %2942 = vrot.lane.b32.xlu0 %v2936, 100
    %v2943 = vpop.permute.xlu0 %2942
    %2944 = vrot.lane.b32.xlu0 %v2937, 100
    %v2945 = vpop.permute.xlu0 %2944
    %2946 = vrot.lane.b32.xlu0 %v2938, 100
    %v2947 = vpop.permute.xlu0 %2946
    %vm2948 = vcmask 818176
    %v2949 = vsel %vm2948, %v2943, %v2945
    %v2950 = vsel %vm2948, %v2945, %v2947
    %2953 = vst [vmem:[#allocation8 + $0xb0] sm:$0xff] %v2949
    %2954 = vst [vmem:[#allocation8 + $0xb8] sm:$0xff] %v2950
    %s2955 = scalar_lea.vmem %s3, 6
    %v2956 = vld [vmem:[%s2955] ss:$8 sm:$0x3]
    %v2957 = vld [vmem:[#allocation5 + $0x8] sm:$0xff]
    %v2958 = vld [vmem:[#allocation5 + $0x10] sm:$0xff]
    %v2959 = vld [vmem:[#allocation5 + $0x18] sm:$0xff]
    %v2961 = vlaneseq
    %v2962 = vshrl.u32 %v2961, 7
    %v2963 = vsub.s32 0, %v2962
    %v2964 = vrot.slane %v2956, %v2963
    %v2965 = vlaneseq
    %v2966 = vshrl.u32 %v2965, 7
    %v2967 = vsub.s32 1, %v2966
    %v2968 = vrot.slane %v2956, %v2967
    %2969 = vrot.lane.b32.xlu0 %v2964, 68
    %v2970 = vpop.permute.xlu0 %2969
    %2971 = vrot.lane.b32.xlu0 %v2968, 68
    %v2972 = vpop.permute.xlu0 %2971
    %v2973 = vsel %vm2544, %v2970, %v2972
    %v2977 = vmul.f32 %v2957, %v2970
    %v2978 = vmul.f32 %v2958, %v2973
    %v2979 = vmul.f32 %v2959, %v2972
    %2983 = vrot.lane.b32.xlu0 %v2977, 60
    %v2984 = vpop.permute.xlu0 %2983
    %2985 = vrot.lane.b32.xlu0 %v2978, 60
    %v2986 = vpop.permute.xlu0 %2985
    %2987 = vrot.lane.b32.xlu0 %v2979, 60
    %v2988 = vpop.permute.xlu0 %2987
    %v2989 = vsel %vm2561, %v2984, %v2986
    %v2990 = vsel %vm2561, %v2986, %v2988
    %2993 = vst [vmem:[#allocation8 + $0xc0] sm:$0xff] %v2989
    %2994 = vst [vmem:[#allocation8 + $0xc8] sm:$0xff] %v2990
    %v2995 = vld [vmem:[#allocation5 + $0x28] sm:$0xff]
    %v2996 = vld [vmem:[#allocation5 + $0x30] sm:$0xff]
    %v2997 = vld [vmem:[#allocation5 + $0x38] sm:$0xff]
    %2998 = vrot.lane.b32.xlu0 %v2964, 84
    %v2999 = vpop.permute.xlu0 %2998
    %3000 = vrot.lane.b32.xlu0 %v2968, 84
    %v3001 = vpop.permute.xlu0 %3000
    %v3002 = vsel %vm2575, %v2999, %v3001
    %v3006 = vmul.f32 %v2995, %v2999
    %v3007 = vmul.f32 %v2996, %v3002
    %v3008 = vmul.f32 %v2997, %v3001
    %3012 = vrot.lane.b32.xlu0 %v3006, 44
    %v3013 = vpop.permute.xlu0 %3012
    %3014 = vrot.lane.b32.xlu0 %v3007, 44
    %v3015 = vpop.permute.xlu0 %3014
    %3016 = vrot.lane.b32.xlu0 %v3008, 44
    %v3017 = vpop.permute.xlu0 %3016
    %v3018 = vsel %vm2592, %v3013, %v3015
    %v3019 = vsel %vm2592, %v3015, %v3017
    %3022 = vst [vmem:[#allocation8 + $0xd0] sm:$0xff] %v3018
    %3023 = vst [vmem:[#allocation8 + $0xd8] sm:$0xff] %v3019
    %s3024 = scalar_lea.vmem %s3, 7
    %v3025 = vld [vmem:[%s3024] ss:$8 sm:$0x3]
    %v3026 = vld [vmem:[#allocation5 + $0x8] sm:$0xff]
    %v3027 = vld [vmem:[#allocation5 + $0x10] sm:$0xff]
    %v3028 = vld [vmem:[#allocation5 + $0x18] sm:$0xff]
    %v3030 = vlaneseq
    %v3031 = vshrl.u32 %v3030, 7
    %v3032 = vsub.s32 0, %v3031
    %v3033 = vrot.slane %v3025, %v3032
    %v3034 = vlaneseq
    %v3035 = vshrl.u32 %v3034, 7
    %v3036 = vsub.s32 1, %v3035
    %v3037 = vrot.slane %v3025, %v3036
    %3038 = vrot.lane.b32.xlu0 %v3033, 72
    %v3039 = vpop.permute.xlu0 %3038
    %3040 = vrot.lane.b32.xlu0 %v3037, 72
    %v3041 = vpop.permute.xlu0 %3040
    %v3042 = vsel %vm2256, %v3039, %v3041
    %v3046 = vmul.f32 %v3026, %v3039
    %v3047 = vmul.f32 %v3027, %v3042
    %v3048 = vmul.f32 %v3028, %v3041
    %3052 = vrot.lane.b32.xlu0 %v3046, 56
    %v3053 = vpop.permute.xlu0 %3052
    %3054 = vrot.lane.b32.xlu0 %v3047, 56
    %v3055 = vpop.permute.xlu0 %3054
    %3056 = vrot.lane.b32.xlu0 %v3048, 56
    %v3057 = vpop.permute.xlu0 %3056
    %v3058 = vsel %vm2239, %v3053, %v3055
    %v3059 = vsel %vm2239, %v3055, %v3057
    %3062 = vst [vmem:[#allocation8 + $0xe0] sm:$0xff] %v3058
    %3063 = vst [vmem:[#allocation8 + $0xe8] sm:$0xff] %v3059
    %v3064 = vld [vmem:[#allocation5 + $0x28] sm:$0xff]
    %v3065 = vld [vmem:[#allocation5 + $0x30] sm:$0xff]
    %v3066 = vld [vmem:[#allocation5 + $0x38] sm:$0xff]
    %3067 = vrot.lane.b32.xlu0 %v3033, 88
    %v3068 = vpop.permute.xlu0 %3067
    %3069 = vrot.lane.b32.xlu0 %v3037, 88
    %v3070 = vpop.permute.xlu0 %3069
    %v3071 = vsel %vm738, %v3068, %v3070
    %v3075 = vmul.f32 %v3064, %v3068
    %v3076 = vmul.f32 %v3065, %v3071
    %v3077 = vmul.f32 %v3066, %v3070
    %3081 = vrot.lane.b32.xlu0 %v3075, 40
    %v3082 = vpop.permute.xlu0 %3081
    %3083 = vrot.lane.b32.xlu0 %v3076, 40
    %v3084 = vpop.permute.xlu0 %3083
    %3085 = vrot.lane.b32.xlu0 %v3077, 40
    %v3086 = vpop.permute.xlu0 %3085
    %v3087 = vsel %vm722, %v3082, %v3084
    %v3088 = vsel %vm722, %v3084, %v3086
    %3091 = vst [vmem:[#allocation8 + $0xf0] sm:$0xff] %v3087
    %3092 = vst [vmem:[#allocation8 + $0xf8] sm:$0xff] %v3088
    %s3093 = scalar_lea.vmem %s3, 16
    %v3094 = vld [vmem:[%s3093] ss:$8 sm:$0x3]
    %v3095 = vld [vmem:[#allocation5 + $0x8] sm:$0xff]
    %v3096 = vld [vmem:[#allocation5 + $0x10] sm:$0xff]
    %v3097 = vld [vmem:[#allocation5 + $0x18] sm:$0xff]
    %v3099 = vlaneseq
    %v3100 = vshrl.u32 %v3099, 7
    %v3101 = vsub.s32 0, %v3100
    %v3102 = vrot.slane %v3094, %v3101
    %v3103 = vlaneseq
    %v3104 = vshrl.u32 %v3103, 7
    %v3105 = vsub.s32 1, %v3104
    %v3106 = vrot.slane %v3094, %v3105
    %3107 = vrot.lane.b32.xlu0 %v3102, 76
    %v3108 = vpop.permute.xlu0 %3107
    %3109 = vrot.lane.b32.xlu0 %v3106, 76
    %v3110 = vpop.permute.xlu0 %3109
    %v3111 = vsel %vm2686, %v3108, %v3110
    %v3115 = vmul.f32 %v3095, %v3108
    %v3116 = vmul.f32 %v3096, %v3111
    %v3117 = vmul.f32 %v3097, %v3110
    %3121 = vrot.lane.b32.xlu0 %v3115, 52
    %v3122 = vpop.permute.xlu0 %3121
    %3123 = vrot.lane.b32.xlu0 %v3116, 52
    %v3124 = vpop.permute.xlu0 %3123
    %3125 = vrot.lane.b32.xlu0 %v3117, 52
    %v3126 = vpop.permute.xlu0 %3125
    %v3127 = vsel %vm2703, %v3122, %v3124
    %v3128 = vsel %vm2703, %v3124, %v3126
    %3131 = vst [vmem:[#allocation8 + $0x100] sm:$0xff] %v3127
    %3132 = vst [vmem:[#allocation8 + $0x108] sm:$0xff] %v3128
    %v3133 = vld [vmem:[#allocation5 + $0x28] sm:$0xff]
    %v3134 = vld [vmem:[#allocation5 + $0x30] sm:$0xff]
    %v3135 = vld [vmem:[#allocation5 + $0x38] sm:$0xff]
    %3136 = vrot.lane.b32.xlu0 %v3102, 92
    %v3137 = vpop.permute.xlu0 %3136
    %3138 = vrot.lane.b32.xlu0 %v3106, 92
    %v3139 = vpop.permute.xlu0 %3138
    %v3140 = vsel %vm2717, %v3137, %v3139
    %v3144 = vmul.f32 %v3133, %v3137
    %v3145 = vmul.f32 %v3134, %v3140
    %v3146 = vmul.f32 %v3135, %v3139
    %3150 = vrot.lane.b32.xlu0 %v3144, 36
    %v3151 = vpop.permute.xlu0 %3150
    %3152 = vrot.lane.b32.xlu0 %v3145, 36
    %v3153 = vpop.permute.xlu0 %3152
    %3154 = vrot.lane.b32.xlu0 %v3146, 36
    %v3155 = vpop.permute.xlu0 %3154
    %v3156 = vsel %vm848, %v3151, %v3153
    %v3157 = vsel %vm848, %v3153, %v3155
    %3160 = vst [vmem:[#allocation8 + $0x110] sm:$0xff] %v3156
    %3161 = vst [vmem:[#allocation8 + $0x118] sm:$0xff] %v3157
    %v3162 = vld [vmem:[#allocation8] sm:$0xff]
    %v3163 = vld [vmem:[#allocation8 + $0x8] sm:$0xff]
    %v3164 = vld [vmem:[#allocation8 + $0x10] sm:$0xff]
    %v3165 = vld [vmem:[#allocation8 + $0x18] sm:$0xff]
    %v3166 = vld [vmem:[#allocation8 + $0x20] sm:$0xff]
    %v3167 = vld [vmem:[#allocation8 + $0x28] sm:$0xff]
    %v3168 = vld [vmem:[#allocation8 + $0x30] sm:$0xff]
    %v3169 = vld [vmem:[#allocation8 + $0x38] sm:$0xff]
    %v3170 = vld [vmem:[#allocation8 + $0x40] sm:$0xff]
    %v3171 = vld [vmem:[#allocation8 + $0x48] sm:$0xff]
    %v3172 = vld [vmem:[#allocation8 + $0x50] sm:$0xff]
    %v3173 = vld [vmem:[#allocation8 + $0x58] sm:$0xff]
    %v3174 = vld [vmem:[#allocation8 + $0x60] sm:$0xff]
    %v3175 = vld [vmem:[#allocation8 + $0x68] sm:$0xff]
    %v3176 = vld [vmem:[#allocation8 + $0x70] sm:$0xff]
    %v3177 = vld [vmem:[#allocation8 + $0x78] sm:$0xff]
    %v3178 = vld [vmem:[#allocation8 + $0x80] sm:$0xff]
    %v3179 = vld [vmem:[#allocation8 + $0x88] sm:$0xff]
    %v3180 = vld [vmem:[#allocation8 + $0x90] sm:$0xff]
    %v3181 = vld [vmem:[#allocation8 + $0x98] sm:$0xff]
    %v3182 = vld [vmem:[#allocation8 + $0xa0] sm:$0xff]
    %v3183 = vld [vmem:[#allocation8 + $0xa8] sm:$0xff]
    %v3184 = vld [vmem:[#allocation8 + $0xb0] sm:$0xff]
    %v3185 = vld [vmem:[#allocation8 + $0xb8] sm:$0xff]
    %v3186 = vld [vmem:[#allocation8 + $0xc0] sm:$0xff]
    %v3187 = vld [vmem:[#allocation8 + $0xc8] sm:$0xff]
    %v3188 = vld [vmem:[#allocation8 + $0xd0] sm:$0xff]
    %v3189 = vld [vmem:[#allocation8 + $0xd8] sm:$0xff]
    %v3190 = vld [vmem:[#allocation8 + $0xe0] sm:$0xff]
    %v3191 = vld [vmem:[#allocation8 + $0xe8] sm:$0xff]
    %v3192 = vld [vmem:[#allocation8 + $0xf0] sm:$0xff]
    %v3193 = vld [vmem:[#allocation8 + $0xf8] sm:$0xff]
    %v3194 = vld [vmem:[#allocation8 + $0x100] sm:$0xff]
    %v3195 = vld [vmem:[#allocation8 + $0x108] sm:$0xff]
    %v3196 = vld [vmem:[#allocation8 + $0x110] sm:$0xff]
    %v3197 = vld [vmem:[#allocation8 + $0x118] sm:$0xff]
    %v3198 = vpack.c.bf16 %v3166, %v3162
    %v3199 = vpack.c.bf16 %v3167, %v3163
    %v3200 = vpack.c.bf16 %v3168, %v3164
    %v3201 = vpack.c.bf16 %v3169, %v3165
    %v3202 = vpack.c.bf16 %v3174, %v3170
    %v3203 = vpack.c.bf16 %v3175, %v3171
    %v3204 = vpack.c.bf16 %v3176, %v3172
    %v3205 = vpack.c.bf16 %v3177, %v3173
    %v3206 = vpack.c.bf16 %v3182, %v3178
    %v3207 = vpack.c.bf16 %v3183, %v3179
    %v3208 = vpack.c.bf16 %v3184, %v3180
    %v3209 = vpack.c.bf16 %v3185, %v3181
    %v3210 = vpack.c.bf16 %v3190, %v3186
    %v3211 = vpack.c.bf16 %v3191, %v3187
    %v3212 = vpack.c.bf16 %v3192, %v3188
    %v3213 = vpack.c.bf16 %v3193, %v3189
    %v3214 = vpack.c.bf16 %v3194, %v3194
    %v3215 = vpack.c.bf16 %v3195, %v3195
    %v3216 = vpack.c.bf16 %v3196, %v3196
    %v3217 = vpack.c.bf16 %v3197, %v3197
    %v3218 = vld [vmem:[#allocation19] sm:$0xf]
    %v3219 = vld [vmem:[%s12] sm:$0xff]
    %3221 = vset.pattern.permute.xlu0 0
    %3222 = vperm.xlu0 %3221, %v3219
    %v3223 = vpop.permute.xlu0 %3222
    %v3226 = vsel %vm2256, %v3218, 0
    %v3229 = vsel %vm2402, %v3214, 0
    %v3232 = vsel %vm2402, %v3215, 0
    %v3235 = vsel %vm2402, %v3216, 0
    %v3238 = vsel %vm2402, %v3217, 0
    %3240 = vmatprep.subr.bf16.mxu0 %v3199
    %3241 = vmatpush1.bf16.msra.mxu0 %v3198
    %3242 = vmatprep.subr.bf16.mxu0 %v3203
    %3243 = vmatpush1.bf16.msra.mxu0 %v3202
    %3244 = vmatprep.subr.bf16.mxu0 %v3207
    %3245 = vmatpush1.bf16.msra.mxu0 %v3206
    %3246 = vmatprep.subr.bf16.mxu0 %v3211
    %3247 = vmatpush1.bf16.msra.mxu0 %v3210
    %3248 = vmatprep.subr.bf16.mxu0 %v3232
    %3249 = vmatpush1.bf16.msra.mxu0 %v3229
    %3250 = vmatprep.subr.bf16.mxu0 0
    %3251 = vmatpush1.bf16.msra.mxu0 0
    %3252 = vmatprep.subr.bf16.mxu0 0
    %3253 = vmatpush1.bf16.msra.mxu0 0
    %3254 = vmatprep.subr.bf16.mxu0 0
    %3255 = vmatpush1.bf16.msra.mxu0 0
    %3256 = vmatprep.subr.bf16.mxu0 0
    %3257 = vmatpush1.bf16.msra.mxu0 0
    %3258 = vmatprep.subr.bf16.mxu0 0
    %3259 = vmatpush1.bf16.msra.mxu0 0
    %3260 = vmatprep.subr.bf16.mxu0 0
    %3261 = vmatpush1.bf16.msra.mxu0 0
    %3262 = vmatprep.subr.bf16.mxu0 0
    %3263 = vmatpush1.bf16.msra.mxu0 0
    %3264 = vmatprep.subr.bf16.mxu0 0
    %3265 = vmatpush1.bf16.msra.mxu0 0
    %3266 = vmatprep.subr.bf16.mxu0 0
    %3267 = vmatpush1.bf16.msra.mxu0 0
    %3268 = vmatprep.subr.bf16.mxu0 0
    %3269 = vmatpush1.bf16.msra.mxu0 0
    %3270 = vmatprep.subr.bf16.mxu0 0
    %3271 = vmatpush1.bf16.msra.mxu0 0
    %3272 = vmatprep.mubr.bf16.mxu0 0
    %3273 = vmatmul.mubr.bf16.gmra.mrb[0].mxu0 %v3226
    %v3274 = vpop.f32.mrb[0].mxu0
    %v3275 = vadd.f32 %v3223, %v3274
    %v3276 = vpop.f32.mrb[0].mxu0
    %v3277 = vadd.f32 %v3223, %v3276
    %v3278 = vpop.f32.mrb[0].mxu0
    %v3279 = vpop.f32.mrb[0].mxu0
    %3280 = vdwg.mxu0
    %3281 = vmatprep.subr.bf16.mxu0 %v3201
    %3282 = vmatpush1.bf16.msra.mxu0 %v3200
    %3283 = vmatprep.subr.bf16.mxu0 %v3205
    %3284 = vmatpush1.bf16.msra.mxu0 %v3204
    %3285 = vmatprep.subr.bf16.mxu0 %v3209
    %3286 = vmatpush1.bf16.msra.mxu0 %v3208
    %3287 = vmatprep.subr.bf16.mxu0 %v3213
    %3288 = vmatpush1.bf16.msra.mxu0 %v3212
    %3289 = vmatprep.subr.bf16.mxu0 %v3238
    %3290 = vmatpush1.bf16.msra.mxu0 %v3235
    %3291 = vmatprep.subr.bf16.mxu0 0
    %3292 = vmatpush1.bf16.msra.mxu0 0
    %3293 = vmatprep.subr.bf16.mxu0 0
    %3294 = vmatpush1.bf16.msra.mxu0 0
    %3295 = vmatprep.subr.bf16.mxu0 0
    %3296 = vmatpush1.bf16.msra.mxu0 0
    %3297 = vmatprep.subr.bf16.mxu0 0
    %3298 = vmatpush1.bf16.msra.mxu0 0
    %3299 = vmatprep.subr.bf16.mxu0 0
    %3300 = vmatpush1.bf16.msra.mxu0 0
    %3301 = vmatprep.subr.bf16.mxu0 0
    %3302 = vmatpush1.bf16.msra.mxu0 0
    %3303 = vmatprep.subr.bf16.mxu0 0
    %3304 = vmatpush1.bf16.msra.mxu0 0
    %3305 = vmatprep.subr.bf16.mxu0 0
    %3306 = vmatpush1.bf16.msra.mxu0 0
    %3307 = vmatprep.subr.bf16.mxu0 0
    %3308 = vmatpush1.bf16.msra.mxu0 0
    %3309 = vmatprep.subr.bf16.mxu0 0
    %3310 = vmatpush1.bf16.msra.mxu0 0
    %3311 = vmatprep.subr.bf16.mxu0 0
    %3312 = vmatpush1.bf16.msra.mxu0 0
    %3313 = vmatprep.mubr.bf16.mxu0 0
    %3314 = vmatmul.mubr.bf16.gmra.mrb[0].mxu0 %v3226
    %v3315 = vpop.f32.mrb[0].mxu0
    %v3316 = vadd.f32 %v3223, %v3315
    %v3317 = vpop.f32.mrb[0].mxu0
    %v3318 = vadd.f32 %v3223, %v3317
    %v3319 = vpop.f32.mrb[0].mxu0
    %v3320 = vpop.f32.mrb[0].mxu0
    %3321 = vdwg.mxu0
    %v3322 = vmax.f32 %v3275, 0.0
    %v3323 = vmax.f32 %v3277, 0.0
    %v3324 = vmax.f32 %v3316, 0.0
    %v3325 = vmax.f32 %v3318, 0.0
    %3328 = vrot.lane.b32.xlu0 %v3322, 8
    %v3329 = vpop.permute.xlu0 %3328
    %3330 = vrot.lane.b32.xlu0 %v3323, 8
    %v3331 = vpop.permute.xlu0 %3330
    %v3332 = vsel %vm203, %v3329, %v3331
    %3336 = vst.msk [vmem:[#allocation6 + $0x8] sm:$0xff] %vm1680, %v3329
    %3337 = vst [vmem:[#allocation6 + $0x10] sm:$0xff] %v3332
    %3338 = vst.msk [vmem:[#allocation6 + $0x18] sm:$0xff] %vm203, %v3331
    %3341 = vrot.lane.b32.xlu0 %v3324, 24
    %v3342 = vpop.permute.xlu0 %3341
    %3343 = vrot.lane.b32.xlu0 %v3325, 24
    %v3344 = vpop.permute.xlu0 %3343
    %v3345 = vsel %vm219, %v3342, %v3344
    %3349 = vst.msk [vmem:[#allocation6 + $0x28] sm:$0xff] %vm1694, %v3342
    %3350 = vst [vmem:[#allocation6 + $0x30] sm:$0xff] %v3345
    %3351 = vst.msk [vmem:[#allocation6 + $0x38] sm:$0xff] %vm219, %v3344
    %v3352 = vld [vmem:[%s4] ss:$8 sm:$0x3]
    %v3353 = vld [vmem:[#allocation6] sm:$0xff]
    %v3354 = vld [vmem:[#allocation6 + $0x8] sm:$0xff]
    %v3356 = vlaneseq
    %v3357 = vshrl.u32 %v3356, 7
    %v3358 = vsub.s32 0, %v3357
    %v3359 = vrot.slane %v3352, %v3358
    %v3360 = vlaneseq
    %v3361 = vshrl.u32 %v3360, 7
    %v3362 = vsub.s32 1, %v3361
    %v3363 = vrot.slane %v3352, %v3362
    %v3366 = vmul.f32 %v3353, %v3359
    %v3367 = vmul.f32 %v3354, %v3363
    %3368 = vst [vmem:[#allocation8] sm:$0xff] %v3366
    %3369 = vst [vmem:[#allocation8 + $0x8] sm:$0xff] %v3367
    %v3370 = vld [vmem:[#allocation6 + $0x20] sm:$0xff]
    %v3371 = vld [vmem:[#allocation6 + $0x28] sm:$0xff]
    %v3372 = vld [vmem:[#allocation6 + $0x30] sm:$0xff]
    %3373 = vrot.lane.b32.xlu0 %v3359, 16
    %v3374 = vpop.permute.xlu0 %3373
    %3375 = vrot.lane.b32.xlu0 %v3363, 16
    %v3376 = vpop.permute.xlu0 %3375
    %vm3377 = vcmask 130048
    %v3378 = vsel %vm3377, %v3374, %v3376
    %v3382 = vmul.f32 %v3370, %v3374
    %v3383 = vmul.f32 %v3371, %v3378
    %v3384 = vmul.f32 %v3372, %v3376
    %3388 = vrot.lane.b32.xlu0 %v3382, 112
    %v3389 = vpop.permute.xlu0 %3388
    %3390 = vrot.lane.b32.xlu0 %v3383, 112
    %v3391 = vpop.permute.xlu0 %3390
    %3392 = vrot.lane.b32.xlu0 %v3384, 112
    %v3393 = vpop.permute.xlu0 %3392
    %vm3394 = vcmask 916480
    %v3395 = vsel %vm3394, %v3389, %v3391
    %v3396 = vsel %vm3394, %v3391, %v3393
    %3399 = vst [vmem:[#allocation8 + $0x10] sm:$0xff] %v3395
    %3400 = vst [vmem:[#allocation8 + $0x18] sm:$0xff] %v3396
    %s3401 = scalar_lea.vmem %s4, 1
    %v3402 = vld [vmem:[%s3401] ss:$8 sm:$0x3]
    %v3403 = vld [vmem:[#allocation6] sm:$0xff]
    %v3404 = vld [vmem:[#allocation6 + $0x8] sm:$0xff]
    %v3405 = vld [vmem:[#allocation6 + $0x10] sm:$0xff]
    %v3407 = vlaneseq
    %v3408 = vshrl.u32 %v3407, 7
    %v3409 = vsub.s32 0, %v3408
    %v3410 = vrot.slane %v3402, %v3409
    %v3411 = vlaneseq
    %v3412 = vshrl.u32 %v3411, 7
    %v3413 = vsub.s32 1, %v3412
    %v3414 = vrot.slane %v3402, %v3413
    %3415 = vrot.lane.b32.xlu0 %v3410, 8
    %v3416 = vpop.permute.xlu0 %3415
    %3417 = vrot.lane.b32.xlu0 %v3414, 8
    %v3418 = vpop.permute.xlu0 %3417
    %v3419 = vsel %vm203, %v3416, %v3418
    %v3423 = vmul.f32 %v3403, %v3416
    %v3424 = vmul.f32 %v3404, %v3419
    %v3425 = vmul.f32 %v3405, %v3418
    %3429 = vrot.lane.b32.xlu0 %v3423, 120
    %v3430 = vpop.permute.xlu0 %3429
    %3431 = vrot.lane.b32.xlu0 %v3424, 120
    %v3432 = vpop.permute.xlu0 %3431
    %3433 = vrot.lane.b32.xlu0 %v3425, 120
    %v3434 = vpop.permute.xlu0 %3433
    %v3435 = vsel %vm310, %v3430, %v3432
    %v3436 = vsel %vm310, %v3432, %v3434
    %3439 = vst [vmem:[#allocation8 + $0x20] sm:$0xff] %v3435
    %3440 = vst [vmem:[#allocation8 + $0x28] sm:$0xff] %v3436
    %v3441 = vld [vmem:[#allocation6 + $0x20] sm:$0xff]
    %v3442 = vld [vmem:[#allocation6 + $0x28] sm:$0xff]
    %v3443 = vld [vmem:[#allocation6 + $0x30] sm:$0xff]
    %3444 = vrot.lane.b32.xlu0 %v3410, 24
    %v3445 = vpop.permute.xlu0 %3444
    %3446 = vrot.lane.b32.xlu0 %v3414, 24
    %v3447 = vpop.permute.xlu0 %3446
    %v3448 = vsel %vm219, %v3445, %v3447
    %v3452 = vmul.f32 %v3441, %v3445
    %v3453 = vmul.f32 %v3442, %v3448
    %v3454 = vmul.f32 %v3443, %v3447
    %3458 = vrot.lane.b32.xlu0 %v3452, 104
    %v3459 = vpop.permute.xlu0 %3458
    %3460 = vrot.lane.b32.xlu0 %v3453, 104
    %v3461 = vpop.permute.xlu0 %3460
    %3462 = vrot.lane.b32.xlu0 %v3454, 104
    %v3463 = vpop.permute.xlu0 %3462
    %v3464 = vsel %vm542, %v3459, %v3461
    %v3465 = vsel %vm542, %v3461, %v3463
    %3468 = vst [vmem:[#allocation8 + $0x30] sm:$0xff] %v3464
    %3469 = vst [vmem:[#allocation8 + $0x38] sm:$0xff] %v3465
    %s3470 = scalar_lea.vmem %s4, 2
    %v3471 = vld [vmem:[%s3470] ss:$8 sm:$0x3]
    %v3472 = vld [vmem:[#allocation6] sm:$0xff]
    %v3473 = vld [vmem:[#allocation6 + $0x8] sm:$0xff]
    %v3474 = vld [vmem:[#allocation6 + $0x10] sm:$0xff]
    %v3476 = vlaneseq
    %v3477 = vshrl.u32 %v3476, 7
    %v3478 = vsub.s32 0, %v3477
    %v3479 = vrot.slane %v3471, %v3478
    %v3480 = vlaneseq
    %v3481 = vshrl.u32 %v3480, 7
    %v3482 = vsub.s32 1, %v3481
    %v3483 = vrot.slane %v3471, %v3482
    %3484 = vrot.lane.b32.xlu0 %v3479, 16
    %v3485 = vpop.permute.xlu0 %3484
    %3486 = vrot.lane.b32.xlu0 %v3483, 16
    %v3487 = vpop.permute.xlu0 %3486
    %v3488 = vsel %vm3377, %v3485, %v3487
    %v3492 = vmul.f32 %v3472, %v3485
    %v3493 = vmul.f32 %v3473, %v3488
    %v3494 = vmul.f32 %v3474, %v3487
    %3498 = vrot.lane.b32.xlu0 %v3492, 112
    %v3499 = vpop.permute.xlu0 %3498
    %3500 = vrot.lane.b32.xlu0 %v3493, 112
    %v3501 = vpop.permute.xlu0 %3500
    %3502 = vrot.lane.b32.xlu0 %v3494, 112
    %v3503 = vpop.permute.xlu0 %3502
    %v3504 = vsel %vm3394, %v3499, %v3501
    %v3505 = vsel %vm3394, %v3501, %v3503
    %3508 = vst [vmem:[#allocation8 + $0x40] sm:$0xff] %v3504
    %3509 = vst [vmem:[#allocation8 + $0x48] sm:$0xff] %v3505
    %v3510 = vld [vmem:[#allocation6 + $0x20] sm:$0xff]
    %v3511 = vld [vmem:[#allocation6 + $0x28] sm:$0xff]
    %v3512 = vld [vmem:[#allocation6 + $0x30] sm:$0xff]
    %3513 = vrot.lane.b32.xlu0 %v3479, 32
    %v3514 = vpop.permute.xlu0 %3513
    %3515 = vrot.lane.b32.xlu0 %v3483, 32
    %v3516 = vpop.permute.xlu0 %3515
    %v3517 = vsel %vm169, %v3514, %v3516
    %v3521 = vmul.f32 %v3510, %v3514
    %v3522 = vmul.f32 %v3511, %v3517
    %v3523 = vmul.f32 %v3512, %v3516
    %3527 = vrot.lane.b32.xlu0 %v3521, 96
    %v3528 = vpop.permute.xlu0 %3527
    %3529 = vrot.lane.b32.xlu0 %v3522, 96
    %v3530 = vpop.permute.xlu0 %3529
    %3531 = vrot.lane.b32.xlu0 %v3523, 96
    %v3532 = vpop.permute.xlu0 %3531
    %vm3533 = vcmask 785408
    %v3534 = vsel %vm3533, %v3528, %v3530
    %v3535 = vsel %vm3533, %v3530, %v3532
    %3538 = vst [vmem:[#allocation8 + $0x50] sm:$0xff] %v3534
    %3539 = vst [vmem:[#allocation8 + $0x58] sm:$0xff] %v3535
    %s3540 = scalar_lea.vmem %s4, 3
    %v3541 = vld [vmem:[%s3540] ss:$8 sm:$0x3]
    %v3542 = vld [vmem:[#allocation6 + $0x8] sm:$0xff]
    %v3543 = vld [vmem:[#allocation6 + $0x10] sm:$0xff]
    %v3545 = vlaneseq
    %v3546 = vshrl.u32 %v3545, 7
    %v3547 = vsub.s32 0, %v3546
    %v3548 = vrot.slane %v3541, %v3547
    %v3549 = vlaneseq
    %v3550 = vshrl.u32 %v3549, 7
    %v3551 = vsub.s32 1, %v3550
    %v3552 = vrot.slane %v3541, %v3551
    %v3555 = vmul.f32 %v3542, %v3548
    %v3556 = vmul.f32 %v3543, %v3552
    %3557 = vst [vmem:[#allocation8 + $0x60] sm:$0xff] %v3555
    %3558 = vst [vmem:[#allocation8 + $0x68] sm:$0xff] %v3556
    %v3559 = vld [vmem:[#allocation6 + $0x28] sm:$0xff]
    %v3560 = vld [vmem:[#allocation6 + $0x30] sm:$0xff]
    %v3561 = vld [vmem:[#allocation6 + $0x38] sm:$0xff]
    %3562 = vrot.lane.b32.xlu0 %v3548, 16
    %v3563 = vpop.permute.xlu0 %3562
    %3564 = vrot.lane.b32.xlu0 %v3552, 16
    %v3565 = vpop.permute.xlu0 %3564
    %v3566 = vsel %vm3377, %v3563, %v3565
    %v3570 = vmul.f32 %v3559, %v3563
    %v3571 = vmul.f32 %v3560, %v3566
    %v3572 = vmul.f32 %v3561, %v3565
    %3576 = vrot.lane.b32.xlu0 %v3570, 112
    %v3577 = vpop.permute.xlu0 %3576
    %3578 = vrot.lane.b32.xlu0 %v3571, 112
    %v3579 = vpop.permute.xlu0 %3578
    %3580 = vrot.lane.b32.xlu0 %v3572, 112
    %v3581 = vpop.permute.xlu0 %3580
    %v3582 = vsel %vm3394, %v3577, %v3579
    %v3583 = vsel %vm3394, %v3579, %v3581
    %3586 = vst [vmem:[#allocation8 + $0x70] sm:$0xff] %v3582
    %3587 = vst [vmem:[#allocation8 + $0x78] sm:$0xff] %v3583
    %s3588 = scalar_lea.vmem %s4, 4
    %v3589 = vld [vmem:[%s3588] ss:$8 sm:$0x3]
    %v3590 = vld [vmem:[#allocation6 + $0x8] sm:$0xff]
    %v3591 = vld [vmem:[#allocation6 + $0x10] sm:$0xff]
    %v3592 = vld [vmem:[#allocation6 + $0x18] sm:$0xff]
    %v3594 = vlaneseq
    %v3595 = vshrl.u32 %v3594, 7
    %v3596 = vsub.s32 0, %v3595
    %v3597 = vrot.slane %v3589, %v3596
    %v3598 = vlaneseq
    %v3599 = vshrl.u32 %v3598, 7
    %v3600 = vsub.s32 1, %v3599
    %v3601 = vrot.slane %v3589, %v3600
    %3602 = vrot.lane.b32.xlu0 %v3597, 8
    %v3603 = vpop.permute.xlu0 %3602
    %3604 = vrot.lane.b32.xlu0 %v3601, 8
    %v3605 = vpop.permute.xlu0 %3604
    %v3606 = vsel %vm203, %v3603, %v3605
    %v3610 = vmul.f32 %v3590, %v3603
    %v3611 = vmul.f32 %v3591, %v3606
    %v3612 = vmul.f32 %v3592, %v3605
    %3616 = vrot.lane.b32.xlu0 %v3610, 120
    %v3617 = vpop.permute.xlu0 %3616
    %3618 = vrot.lane.b32.xlu0 %v3611, 120
    %v3619 = vpop.permute.xlu0 %3618
    %3620 = vrot.lane.b32.xlu0 %v3612, 120
    %v3621 = vpop.permute.xlu0 %3620
    %v3622 = vsel %vm310, %v3617, %v3619
    %v3623 = vsel %vm310, %v3619, %v3621
    %3626 = vst [vmem:[#allocation8 + $0x80] sm:$0xff] %v3622
    %3627 = vst [vmem:[#allocation8 + $0x88] sm:$0xff] %v3623
    %v3628 = vld [vmem:[#allocation6 + $0x28] sm:$0xff]
    %v3629 = vld [vmem:[#allocation6 + $0x30] sm:$0xff]
    %v3630 = vld [vmem:[#allocation6 + $0x38] sm:$0xff]
    %3631 = vrot.lane.b32.xlu0 %v3597, 24
    %v3632 = vpop.permute.xlu0 %3631
    %3633 = vrot.lane.b32.xlu0 %v3601, 24
    %v3634 = vpop.permute.xlu0 %3633
    %v3635 = vsel %vm219, %v3632, %v3634
    %v3639 = vmul.f32 %v3628, %v3632
    %v3640 = vmul.f32 %v3629, %v3635
    %v3641 = vmul.f32 %v3630, %v3634
    %3645 = vrot.lane.b32.xlu0 %v3639, 104
    %v3646 = vpop.permute.xlu0 %3645
    %3647 = vrot.lane.b32.xlu0 %v3640, 104
    %v3648 = vpop.permute.xlu0 %3647
    %3649 = vrot.lane.b32.xlu0 %v3641, 104
    %v3650 = vpop.permute.xlu0 %3649
    %v3651 = vsel %vm542, %v3646, %v3648
    %v3652 = vsel %vm542, %v3648, %v3650
    %3655 = vst [vmem:[#allocation8 + $0x90] sm:$0xff] %v3651
    %3656 = vst [vmem:[#allocation8 + $0x98] sm:$0xff] %v3652
    %s3657 = scalar_lea.vmem %s4, 5
    %v3658 = vld [vmem:[%s3657] ss:$8 sm:$0x3]
    %v3659 = vld [vmem:[#allocation6 + $0x8] sm:$0xff]
    %v3660 = vld [vmem:[#allocation6 + $0x10] sm:$0xff]
    %v3661 = vld [vmem:[#allocation6 + $0x18] sm:$0xff]
    %v3663 = vlaneseq
    %v3664 = vshrl.u32 %v3663, 7
    %v3665 = vsub.s32 0, %v3664
    %v3666 = vrot.slane %v3658, %v3665
    %v3667 = vlaneseq
    %v3668 = vshrl.u32 %v3667, 7
    %v3669 = vsub.s32 1, %v3668
    %v3670 = vrot.slane %v3658, %v3669
    %3671 = vrot.lane.b32.xlu0 %v3666, 16
    %v3672 = vpop.permute.xlu0 %3671
    %3673 = vrot.lane.b32.xlu0 %v3670, 16
    %v3674 = vpop.permute.xlu0 %3673
    %v3675 = vsel %vm3377, %v3672, %v3674
    %v3679 = vmul.f32 %v3659, %v3672
    %v3680 = vmul.f32 %v3660, %v3675
    %v3681 = vmul.f32 %v3661, %v3674
    %3685 = vrot.lane.b32.xlu0 %v3679, 112
    %v3686 = vpop.permute.xlu0 %3685
    %3687 = vrot.lane.b32.xlu0 %v3680, 112
    %v3688 = vpop.permute.xlu0 %3687
    %3689 = vrot.lane.b32.xlu0 %v3681, 112
    %v3690 = vpop.permute.xlu0 %3689
    %v3691 = vsel %vm3394, %v3686, %v3688
    %v3692 = vsel %vm3394, %v3688, %v3690
    %3695 = vst [vmem:[#allocation8 + $0xa0] sm:$0xff] %v3691
    %3696 = vst [vmem:[#allocation8 + $0xa8] sm:$0xff] %v3692
    %v3697 = vld [vmem:[#allocation6 + $0x28] sm:$0xff]
    %v3698 = vld [vmem:[#allocation6 + $0x30] sm:$0xff]
    %v3699 = vld [vmem:[#allocation6 + $0x38] sm:$0xff]
    %3700 = vrot.lane.b32.xlu0 %v3666, 32
    %v3701 = vpop.permute.xlu0 %3700
    %3702 = vrot.lane.b32.xlu0 %v3670, 32
    %v3703 = vpop.permute.xlu0 %3702
    %v3704 = vsel %vm169, %v3701, %v3703
    %v3708 = vmul.f32 %v3697, %v3701
    %v3709 = vmul.f32 %v3698, %v3704
    %v3710 = vmul.f32 %v3699, %v3703
    %3714 = vrot.lane.b32.xlu0 %v3708, 96
    %v3715 = vpop.permute.xlu0 %3714
    %3716 = vrot.lane.b32.xlu0 %v3709, 96
    %v3717 = vpop.permute.xlu0 %3716
    %3718 = vrot.lane.b32.xlu0 %v3710, 96
    %v3719 = vpop.permute.xlu0 %3718
    %v3720 = vsel %vm3533, %v3715, %v3717
    %v3721 = vsel %vm3533, %v3717, %v3719
    %3724 = vst [vmem:[#allocation8 + $0xb0] sm:$0xff] %v3720
    %3725 = vst [vmem:[#allocation8 + $0xb8] sm:$0xff] %v3721
    %s3726 = scalar_lea.vmem %s4, 6
    %v3727 = vld [vmem:[%s3726] ss:$8 sm:$0x3]
    %v3728 = vld [vmem:[#allocation6 + $0x10] sm:$0xff]
    %v3729 = vld [vmem:[#allocation6 + $0x18] sm:$0xff]
    %v3731 = vlaneseq
    %v3732 = vshrl.u32 %v3731, 7
    %v3733 = vsub.s32 0, %v3732
    %v3734 = vrot.slane %v3727, %v3733
    %v3735 = vlaneseq
    %v3736 = vshrl.u32 %v3735, 7
    %v3737 = vsub.s32 1, %v3736
    %v3738 = vrot.slane %v3727, %v3737
    %v3741 = vmul.f32 %v3728, %v3734
    %v3742 = vmul.f32 %v3729, %v3738
    %3743 = vst [vmem:[#allocation8 + $0xc0] sm:$0xff] %v3741
    %3744 = vst [vmem:[#allocation8 + $0xc8] sm:$0xff] %v3742
    %v3745 = vld [vmem:[#allocation6 + $0x30] sm:$0xff]
    %v3746 = vld [vmem:[#allocation6 + $0x38] sm:$0xff]
    %v3747 = vld [vmem:[#allocation6 + $0x40] sm:$0xff]
    %3748 = vrot.lane.b32.xlu0 %v3734, 16
    %v3749 = vpop.permute.xlu0 %3748
    %3750 = vrot.lane.b32.xlu0 %v3738, 16
    %v3751 = vpop.permute.xlu0 %3750
    %v3752 = vsel %vm3377, %v3749, %v3751
    %v3756 = vmul.f32 %v3745, %v3749
    %v3757 = vmul.f32 %v3746, %v3752
    %v3758 = vmul.f32 %v3747, %v3751
    %3762 = vrot.lane.b32.xlu0 %v3756, 112
    %v3763 = vpop.permute.xlu0 %3762
    %3764 = vrot.lane.b32.xlu0 %v3757, 112
    %v3765 = vpop.permute.xlu0 %3764
    %3766 = vrot.lane.b32.xlu0 %v3758, 112
    %v3767 = vpop.permute.xlu0 %3766
    %v3768 = vsel %vm3394, %v3763, %v3765
    %v3769 = vsel %vm3394, %v3765, %v3767
    %3772 = vst [vmem:[#allocation8 + $0xd0] sm:$0xff] %v3768
    %3773 = vst [vmem:[#allocation8 + $0xd8] sm:$0xff] %v3769
    %s3774 = scalar_lea.vmem %s4, 7
    %v3775 = vld [vmem:[%s3774] ss:$8 sm:$0x3]
    %v3776 = vld [vmem:[#allocation6 + $0x10] sm:$0xff]
    %v3777 = vld [vmem:[#allocation6 + $0x18] sm:$0xff]
    %v3778 = vld [vmem:[#allocation6 + $0x20] sm:$0xff]
    %v3780 = vlaneseq
    %v3781 = vshrl.u32 %v3780, 7
    %v3782 = vsub.s32 0, %v3781
    %v3783 = vrot.slane %v3775, %v3782
    %v3784 = vlaneseq
    %v3785 = vshrl.u32 %v3784, 7
    %v3786 = vsub.s32 1, %v3785
    %v3787 = vrot.slane %v3775, %v3786
    %3788 = vrot.lane.b32.xlu0 %v3783, 8
    %v3789 = vpop.permute.xlu0 %3788
    %3790 = vrot.lane.b32.xlu0 %v3787, 8
    %v3791 = vpop.permute.xlu0 %3790
    %v3792 = vsel %vm203, %v3789, %v3791
    %v3796 = vmul.f32 %v3776, %v3789
    %v3797 = vmul.f32 %v3777, %v3792
    %v3798 = vmul.f32 %v3778, %v3791
    %3802 = vrot.lane.b32.xlu0 %v3796, 120
    %v3803 = vpop.permute.xlu0 %3802
    %3804 = vrot.lane.b32.xlu0 %v3797, 120
    %v3805 = vpop.permute.xlu0 %3804
    %3806 = vrot.lane.b32.xlu0 %v3798, 120
    %v3807 = vpop.permute.xlu0 %3806
    %v3808 = vsel %vm310, %v3803, %v3805
    %v3809 = vsel %vm310, %v3805, %v3807
    %3812 = vst [vmem:[#allocation8 + $0xe0] sm:$0xff] %v3808
    %3813 = vst [vmem:[#allocation8 + $0xe8] sm:$0xff] %v3809
    %v3814 = vld [vmem:[#allocation6 + $0x30] sm:$0xff]
    %v3815 = vld [vmem:[#allocation6 + $0x38] sm:$0xff]
    %v3816 = vld [vmem:[#allocation6 + $0x40] sm:$0xff]
    %3817 = vrot.lane.b32.xlu0 %v3783, 24
    %v3818 = vpop.permute.xlu0 %3817
    %3819 = vrot.lane.b32.xlu0 %v3787, 24
    %v3820 = vpop.permute.xlu0 %3819
    %v3821 = vsel %vm219, %v3818, %v3820
    %v3825 = vmul.f32 %v3814, %v3818
    %v3826 = vmul.f32 %v3815, %v3821
    %v3827 = vmul.f32 %v3816, %v3820
    %3831 = vrot.lane.b32.xlu0 %v3825, 104
    %v3832 = vpop.permute.xlu0 %3831
    %3833 = vrot.lane.b32.xlu0 %v3826, 104
    %v3834 = vpop.permute.xlu0 %3833
    %3835 = vrot.lane.b32.xlu0 %v3827, 104
    %v3836 = vpop.permute.xlu0 %3835
    %v3837 = vsel %vm542, %v3832, %v3834
    %v3838 = vsel %vm542, %v3834, %v3836
    %3841 = vst [vmem:[#allocation8 + $0xf0] sm:$0xff] %v3837
    %3842 = vst [vmem:[#allocation8 + $0xf8] sm:$0xff] %v3838
    %s3843 = scalar_lea.vmem %s4, 16
    %v3844 = vld [vmem:[%s3843] ss:$8 sm:$0x3]
    %v3845 = vld [vmem:[#allocation6 + $0x10] sm:$0xff]
    %v3846 = vld [vmem:[#allocation6 + $0x18] sm:$0xff]
    %v3847 = vld [vmem:[#allocation6 + $0x20] sm:$0xff]
    %v3849 = vlaneseq
    %v3850 = vshrl.u32 %v3849, 7
    %v3851 = vsub.s32 0, %v3850
    %v3852 = vrot.slane %v3844, %v3851
    %v3853 = vlaneseq
    %v3854 = vshrl.u32 %v3853, 7
    %v3855 = vsub.s32 1, %v3854
    %v3856 = vrot.slane %v3844, %v3855
    %3857 = vrot.lane.b32.xlu0 %v3852, 16
    %v3858 = vpop.permute.xlu0 %3857
    %3859 = vrot.lane.b32.xlu0 %v3856, 16
    %v3860 = vpop.permute.xlu0 %3859
    %v3861 = vsel %vm3377, %v3858, %v3860
    %v3865 = vmul.f32 %v3845, %v3858
    %v3866 = vmul.f32 %v3846, %v3861
    %v3867 = vmul.f32 %v3847, %v3860
    %3871 = vrot.lane.b32.xlu0 %v3865, 112
    %v3872 = vpop.permute.xlu0 %3871
    %3873 = vrot.lane.b32.xlu0 %v3866, 112
    %v3874 = vpop.permute.xlu0 %3873
    %3875 = vrot.lane.b32.xlu0 %v3867, 112
    %v3876 = vpop.permute.xlu0 %3875
    %v3877 = vsel %vm3394, %v3872, %v3874
    %v3878 = vsel %vm3394, %v3874, %v3876
    %3881 = vst [vmem:[#allocation8 + $0x100] sm:$0xff] %v3877
    %3882 = vst [vmem:[#allocation8 + $0x108] sm:$0xff] %v3878
    %v3883 = vld [vmem:[#allocation6 + $0x30] sm:$0xff]
    %v3884 = vld [vmem:[#allocation6 + $0x38] sm:$0xff]
    %v3885 = vld [vmem:[#allocation6 + $0x40] sm:$0xff]
    %3886 = vrot.lane.b32.xlu0 %v3852, 32
    %v3887 = vpop.permute.xlu0 %3886
    %3888 = vrot.lane.b32.xlu0 %v3856, 32
    %v3889 = vpop.permute.xlu0 %3888
    %v3890 = vsel %vm169, %v3887, %v3889
    %v3894 = vmul.f32 %v3883, %v3887
    %v3895 = vmul.f32 %v3884, %v3890
    %v3896 = vmul.f32 %v3885, %v3889
    %3900 = vrot.lane.b32.xlu0 %v3894, 96
    %v3901 = vpop.permute.xlu0 %3900
    %3902 = vrot.lane.b32.xlu0 %v3895, 96
    %v3903 = vpop.permute.xlu0 %3902
    %3904 = vrot.lane.b32.xlu0 %v3896, 96
    %v3905 = vpop.permute.xlu0 %3904
    %v3906 = vsel %vm3533, %v3901, %v3903
    %v3907 = vsel %vm3533, %v3903, %v3905
    %3910 = vst [vmem:[#allocation8 + $0x110] sm:$0xff] %v3906
    %3911 = vst [vmem:[#allocation8 + $0x118] sm:$0xff] %v3907
    %v3912 = vld [vmem:[#allocation8] sm:$0xff]
    %v3913 = vld [vmem:[#allocation8 + $0x8] sm:$0xff]
    %v3914 = vld [vmem:[#allocation8 + $0x10] sm:$0xff]
    %v3915 = vld [vmem:[#allocation8 + $0x18] sm:$0xff]
    %v3916 = vld [vmem:[#allocation8 + $0x20] sm:$0xff]
    %v3917 = vld [vmem:[#allocation8 + $0x28] sm:$0xff]
    %v3918 = vld [vmem:[#allocation8 + $0x30] sm:$0xff]
    %v3919 = vld [vmem:[#allocation8 + $0x38] sm:$0xff]
    %v3920 = vld [vmem:[#allocation8 + $0x40] sm:$0xff]
    %v3921 = vld [vmem:[#allocation8 + $0x48] sm:$0xff]
    %v3922 = vld [vmem:[#allocation8 + $0x50] sm:$0xff]
    %v3923 = vld [vmem:[#allocation8 + $0x58] sm:$0xff]
    %v3924 = vld [vmem:[#allocation8 + $0x60] sm:$0xff]
    %v3925 = vld [vmem:[#allocation8 + $0x68] sm:$0xff]
    %v3926 = vld [vmem:[#allocation8 + $0x70] sm:$0xff]
    %v3927 = vld [vmem:[#allocation8 + $0x78] sm:$0xff]
    %v3928 = vld [vmem:[#allocation8 + $0x80] sm:$0xff]
    %v3929 = vld [vmem:[#allocation8 + $0x88] sm:$0xff]
    %v3930 = vld [vmem:[#allocation8 + $0x90] sm:$0xff]
    %v3931 = vld [vmem:[#allocation8 + $0x98] sm:$0xff]
    %v3932 = vld [vmem:[#allocation8 + $0xa0] sm:$0xff]
    %v3933 = vld [vmem:[#allocation8 + $0xa8] sm:$0xff]
    %v3934 = vld [vmem:[#allocation8 + $0xb0] sm:$0xff]
    %v3935 = vld [vmem:[#allocation8 + $0xb8] sm:$0xff]
    %v3936 = vld [vmem:[#allocation8 + $0xc0] sm:$0xff]
    %v3937 = vld [vmem:[#allocation8 + $0xc8] sm:$0xff]
    %v3938 = vld [vmem:[#allocation8 + $0xd0] sm:$0xff]
    %v3939 = vld [vmem:[#allocation8 + $0xd8] sm:$0xff]
    %v3940 = vld [vmem:[#allocation8 + $0xe0] sm:$0xff]
    %v3941 = vld [vmem:[#allocation8 + $0xe8] sm:$0xff]
    %v3942 = vld [vmem:[#allocation8 + $0xf0] sm:$0xff]
    %v3943 = vld [vmem:[#allocation8 + $0xf8] sm:$0xff]
    %v3944 = vld [vmem:[#allocation8 + $0x100] sm:$0xff]
    %v3945 = vld [vmem:[#allocation8 + $0x108] sm:$0xff]
    %v3946 = vld [vmem:[#allocation8 + $0x110] sm:$0xff]
    %v3947 = vld [vmem:[#allocation8 + $0x118] sm:$0xff]
    %v3948 = vpack.c.bf16 %v3916, %v3912
    %v3949 = vpack.c.bf16 %v3917, %v3913
    %v3950 = vpack.c.bf16 %v3918, %v3914
    %v3951 = vpack.c.bf16 %v3919, %v3915
    %v3952 = vpack.c.bf16 %v3924, %v3920
    %v3953 = vpack.c.bf16 %v3925, %v3921
    %v3954 = vpack.c.bf16 %v3926, %v3922
    %v3955 = vpack.c.bf16 %v3927, %v3923
    %v3956 = vpack.c.bf16 %v3932, %v3928
    %v3957 = vpack.c.bf16 %v3933, %v3929
    %v3958 = vpack.c.bf16 %v3934, %v3930
    %v3959 = vpack.c.bf16 %v3935, %v3931
    %v3960 = vpack.c.bf16 %v3940, %v3936
    %v3961 = vpack.c.bf16 %v3941, %v3937
    %v3962 = vpack.c.bf16 %v3942, %v3938
    %v3963 = vpack.c.bf16 %v3943, %v3939
    %v3964 = vpack.c.bf16 %v3944, %v3944
    %v3965 = vpack.c.bf16 %v3945, %v3945
    %v3966 = vpack.c.bf16 %v3946, %v3946
    %v3967 = vpack.c.bf16 %v3947, %v3947
    %v3968 = vld [vmem:[%s13] sm:$0xf]
    %v3969 = vld [vmem:[%s14] sm:$0xff]
    %3971 = vset.pattern.permute.xlu0 0
    %3972 = vperm.xlu0 %3971, %v3969
    %v3973 = vpop.permute.xlu0 %3972
    %v3976 = vsel %vm2256, %v3968, 0
    %v3979 = vsel %vm2402, %v3964, 0
    %v3982 = vsel %vm2402, %v3965, 0
    %v3985 = vsel %vm2402, %v3966, 0
    %v3988 = vsel %vm2402, %v3967, 0
    %3990 = vmatprep.subr.bf16.mxu0 %v3949
    %3991 = vmatpush1.bf16.msra.mxu0 %v3948
    %3992 = vmatprep.subr.bf16.mxu0 %v3953
    %3993 = vmatpush1.bf16.msra.mxu0 %v3952
    %3994 = vmatprep.subr.bf16.mxu0 %v3957
    %3995 = vmatpush1.bf16.msra.mxu0 %v3956
    %3996 = vmatprep.subr.bf16.mxu0 %v3961
    %3997 = vmatpush1.bf16.msra.mxu0 %v3960
    %3998 = vmatprep.subr.bf16.mxu0 %v3982
    %3999 = vmatpush1.bf16.msra.mxu0 %v3979
    %4000 = vmatprep.subr.bf16.mxu0 0
    %4001 = vmatpush1.bf16.msra.mxu0 0
    %4002 = vmatprep.subr.bf16.mxu0 0
    %4003 = vmatpush1.bf16.msra.mxu0 0
    %4004 = vmatprep.subr.bf16.mxu0 0
    %4005 = vmatpush1.bf16.msra.mxu0 0
    %4006 = vmatprep.subr.bf16.mxu0 0
    %4007 = vmatpush1.bf16.msra.mxu0 0
    %4008 = vmatprep.subr.bf16.mxu0 0
    %4009 = vmatpush1.bf16.msra.mxu0 0
    %4010 = vmatprep.subr.bf16.mxu0 0
    %4011 = vmatpush1.bf16.msra.mxu0 0
    %4012 = vmatprep.subr.bf16.mxu0 0
    %4013 = vmatpush1.bf16.msra.mxu0 0
    %4014 = vmatprep.subr.bf16.mxu0 0
    %4015 = vmatpush1.bf16.msra.mxu0 0
    %4016 = vmatprep.subr.bf16.mxu0 0
    %4017 = vmatpush1.bf16.msra.mxu0 0
    %4018 = vmatprep.subr.bf16.mxu0 0
    %4019 = vmatpush1.bf16.msra.mxu0 0
    %4020 = vmatprep.subr.bf16.mxu0 0
    %4021 = vmatpush1.bf16.msra.mxu0 0
    %4022 = vmatprep.mubr.bf16.mxu0 0
    %4023 = vmatmul.mubr.bf16.gmra.mrb[0].mxu0 %v3976
    %v4024 = vpop.f32.mrb[0].mxu0
    %v4025 = vadd.f32 %v3973, %v4024
    %v4026 = vpop.f32.mrb[0].mxu0
    %v4027 = vadd.f32 %v3973, %v4026
    %v4028 = vpop.f32.mrb[0].mxu0
    %v4029 = vpop.f32.mrb[0].mxu0
    %4030 = vdwg.mxu0
    %4031 = vmatprep.subr.bf16.mxu0 %v3951
    %4032 = vmatpush1.bf16.msra.mxu0 %v3950
    %4033 = vmatprep.subr.bf16.mxu0 %v3955
    %4034 = vmatpush1.bf16.msra.mxu0 %v3954
    %4035 = vmatprep.subr.bf16.mxu0 %v3959
    %4036 = vmatpush1.bf16.msra.mxu0 %v3958
    %4037 = vmatprep.subr.bf16.mxu0 %v3963
    %4038 = vmatpush1.bf16.msra.mxu0 %v3962
    %4039 = vmatprep.subr.bf16.mxu0 %v3988
    %4040 = vmatpush1.bf16.msra.mxu0 %v3985
    %4041 = vmatprep.subr.bf16.mxu0 0
    %4042 = vmatpush1.bf16.msra.mxu0 0
    %4043 = vmatprep.subr.bf16.mxu0 0
    %4044 = vmatpush1.bf16.msra.mxu0 0
    %4045 = vmatprep.subr.bf16.mxu0 0
    %4046 = vmatpush1.bf16.msra.mxu0 0
    %4047 = vmatprep.subr.bf16.mxu0 0
    %4048 = vmatpush1.bf16.msra.mxu0 0
    %4049 = vmatprep.subr.bf16.mxu0 0
    %4050 = vmatpush1.bf16.msra.mxu0 0
    %4051 = vmatprep.subr.bf16.mxu0 0
    %4052 = vmatpush1.bf16.msra.mxu0 0
    %4053 = vmatprep.subr.bf16.mxu0 0
    %4054 = vmatpush1.bf16.msra.mxu0 0
    %4055 = vmatprep.subr.bf16.mxu0 0
    %4056 = vmatpush1.bf16.msra.mxu0 0
    %4057 = vmatprep.subr.bf16.mxu0 0
    %4058 = vmatpush1.bf16.msra.mxu0 0
    %4059 = vmatprep.subr.bf16.mxu0 0
    %4060 = vmatpush1.bf16.msra.mxu0 0
    %4061 = vmatprep.subr.bf16.mxu0 0
    %4062 = vmatpush1.bf16.msra.mxu0 0
    %4063 = vmatprep.mubr.bf16.mxu0 0
    %4064 = vmatmul.mubr.bf16.gmra.mrb[0].mxu0 %v3976
    %v4065 = vpop.f32.mrb[0].mxu0
    %v4066 = vadd.f32 %v3973, %v4065
    %v4067 = vpop.f32.mrb[0].mxu0
    %v4068 = vadd.f32 %v3973, %v4067
    %v4069 = vpop.f32.mrb[0].mxu0
    %v4070 = vpop.f32.mrb[0].mxu0
    %4071 = vdwg.mxu0
    %v4072 = vmax.f32 %v4025, 0.0
    %v4073 = vmax.f32 %v4027, 0.0
    %v4074 = vmax.f32 %v4066, 0.0
    %v4075 = vmax.f32 %v4068, 0.0
    %4078 = vrot.lane.b32.xlu0 %v4072, 8
    %v4079 = vpop.permute.xlu0 %4078
    %4080 = vrot.lane.b32.xlu0 %v4073, 8
    %v4081 = vpop.permute.xlu0 %4080
    %v4082 = vsel %vm203, %v4079, %v4081
    %4086 = vst.msk [vmem:[#allocation7 + $0x8] sm:$0xff] %vm1680, %v4079
    %4087 = vst [vmem:[#allocation7 + $0x10] sm:$0xff] %v4082
    %4088 = vst.msk [vmem:[#allocation7 + $0x18] sm:$0xff] %vm203, %v4081
    %4091 = vrot.lane.b32.xlu0 %v4074, 24
    %v4092 = vpop.permute.xlu0 %4091
    %4093 = vrot.lane.b32.xlu0 %v4075, 24
    %v4094 = vpop.permute.xlu0 %4093
    %v4095 = vsel %vm219, %v4092, %v4094
    %4099 = vst.msk [vmem:[#allocation7 + $0x28] sm:$0xff] %vm1694, %v4092
    %4100 = vst [vmem:[#allocation7 + $0x30] sm:$0xff] %v4095
    %4101 = vst.msk [vmem:[#allocation7 + $0x38] sm:$0xff] %vm219, %v4094
    %v4102 = vld [vmem:[%s3] ss:$8 sm:$0x3]
    %v4103 = vld [vmem:[#allocation6] sm:$0xff]
    %v4104 = vld [vmem:[#allocation6 + $0x8] sm:$0xff]
    %v4105 = vld [vmem:[#allocation6 + $0x10] sm:$0xff]
    %v4107 = vlaneseq
    %v4108 = vshrl.u32 %v4107, 7
    %v4109 = vsub.s32 0, %v4108
    %v4110 = vrot.slane %v4102, %v4109
    %v4111 = vlaneseq
    %v4112 = vshrl.u32 %v4111, 7
    %v4113 = vsub.s32 1, %v4112
    %v4114 = vrot.slane %v4102, %v4113
    %4115 = vrot.lane.b32.xlu0 %v4110, 68
    %v4116 = vpop.permute.xlu0 %4115
    %4117 = vrot.lane.b32.xlu0 %v4114, 68
    %v4118 = vpop.permute.xlu0 %4117
    %v4119 = vsel %vm2544, %v4116, %v4118
    %v4123 = vmul.f32 %v4103, %v4116
    %v4124 = vmul.f32 %v4104, %v4119
    %v4125 = vmul.f32 %v4105, %v4118
    %4129 = vrot.lane.b32.xlu0 %v4123, 60
    %v4130 = vpop.permute.xlu0 %4129
    %4131 = vrot.lane.b32.xlu0 %v4124, 60
    %v4132 = vpop.permute.xlu0 %4131
    %4133 = vrot.lane.b32.xlu0 %v4125, 60
    %v4134 = vpop.permute.xlu0 %4133
    %v4135 = vsel %vm2561, %v4130, %v4132
    %v4136 = vsel %vm2561, %v4132, %v4134
    %4139 = vst [vmem:[#allocation8] sm:$0xff] %v4135
    %4140 = vst [vmem:[#allocation8 + $0x8] sm:$0xff] %v4136
    %v4141 = vld [vmem:[#allocation6 + $0x20] sm:$0xff]
    %v4142 = vld [vmem:[#allocation6 + $0x28] sm:$0xff]
    %v4143 = vld [vmem:[#allocation6 + $0x30] sm:$0xff]
    %4144 = vrot.lane.b32.xlu0 %v4110, 84
    %v4145 = vpop.permute.xlu0 %4144
    %4146 = vrot.lane.b32.xlu0 %v4114, 84
    %v4147 = vpop.permute.xlu0 %4146
    %v4148 = vsel %vm2575, %v4145, %v4147
    %v4152 = vmul.f32 %v4141, %v4145
    %v4153 = vmul.f32 %v4142, %v4148
    %v4154 = vmul.f32 %v4143, %v4147
    %4158 = vrot.lane.b32.xlu0 %v4152, 44
    %v4159 = vpop.permute.xlu0 %4158
    %4160 = vrot.lane.b32.xlu0 %v4153, 44
    %v4161 = vpop.permute.xlu0 %4160
    %4162 = vrot.lane.b32.xlu0 %v4154, 44
    %v4163 = vpop.permute.xlu0 %4162
    %v4164 = vsel %vm2592, %v4159, %v4161
    %v4165 = vsel %vm2592, %v4161, %v4163
    %4168 = vst [vmem:[#allocation8 + $0x10] sm:$0xff] %v4164
    %4169 = vst [vmem:[#allocation8 + $0x18] sm:$0xff] %v4165
    %v4170 = vld [vmem:[#allocation7] sm:$0xff]
    %v4171 = vld [vmem:[#allocation7 + $0x8] sm:$0xff]
    %v4172 = vld [vmem:[#allocation7 + $0x10] sm:$0xff]
    %v4173 = vmul.f32 %v4170, %v4116
    %v4174 = vmul.f32 %v4171, %v4119
    %v4175 = vmul.f32 %v4172, %v4118
    %4179 = vrot.lane.b32.xlu0 %v4173, 60
    %v4180 = vpop.permute.xlu0 %4179
    %4181 = vrot.lane.b32.xlu0 %v4174, 60
    %v4182 = vpop.permute.xlu0 %4181
    %4183 = vrot.lane.b32.xlu0 %v4175, 60
    %v4184 = vpop.permute.xlu0 %4183
    %v4185 = vsel %vm2561, %v4180, %v4182
    %v4186 = vsel %vm2561, %v4182, %v4184
    %4189 = vst [vmem:[#allocation8 + $0x20] sm:$0xff] %v4185
    %4190 = vst [vmem:[#allocation8 + $0x28] sm:$0xff] %v4186
    %v4191 = vld [vmem:[#allocation7 + $0x20] sm:$0xff]
    %v4192 = vld [vmem:[#allocation7 + $0x28] sm:$0xff]
    %v4193 = vld [vmem:[#allocation7 + $0x30] sm:$0xff]
    %v4194 = vmul.f32 %v4191, %v4145
    %v4195 = vmul.f32 %v4192, %v4148
    %v4196 = vmul.f32 %v4193, %v4147
    %4200 = vrot.lane.b32.xlu0 %v4194, 44
    %v4201 = vpop.permute.xlu0 %4200
    %4202 = vrot.lane.b32.xlu0 %v4195, 44
    %v4203 = vpop.permute.xlu0 %4202
    %4204 = vrot.lane.b32.xlu0 %v4196, 44
    %v4205 = vpop.permute.xlu0 %4204
    %v4206 = vsel %vm2592, %v4201, %v4203
    %v4207 = vsel %vm2592, %v4203, %v4205
    %4210 = vst [vmem:[#allocation8 + $0x30] sm:$0xff] %v4206
    %4211 = vst [vmem:[#allocation8 + $0x38] sm:$0xff] %v4207
    %v4212 = vld [vmem:[%s2599] ss:$8 sm:$0x3]
    %v4213 = vld [vmem:[#allocation6] sm:$0xff]
    %v4214 = vld [vmem:[#allocation6 + $0x8] sm:$0xff]
    %v4215 = vld [vmem:[#allocation6 + $0x10] sm:$0xff]
    %v4217 = vlaneseq
    %v4218 = vshrl.u32 %v4217, 7
    %v4219 = vsub.s32 0, %v4218
    %v4220 = vrot.slane %v4212, %v4219
    %v4221 = vlaneseq
    %v4222 = vshrl.u32 %v4221, 7
    %v4223 = vsub.s32 1, %v4222
    %v4224 = vrot.slane %v4212, %v4223
    %4225 = vrot.lane.b32.xlu0 %v4220, 72
    %v4226 = vpop.permute.xlu0 %4225
    %4227 = vrot.lane.b32.xlu0 %v4224, 72
    %v4228 = vpop.permute.xlu0 %4227
    %v4229 = vsel %vm2256, %v4226, %v4228
    %v4233 = vmul.f32 %v4213, %v4226
    %v4234 = vmul.f32 %v4214, %v4229
    %v4235 = vmul.f32 %v4215, %v4228
    %4239 = vrot.lane.b32.xlu0 %v4233, 56
    %v4240 = vpop.permute.xlu0 %4239
    %4241 = vrot.lane.b32.xlu0 %v4234, 56
    %v4242 = vpop.permute.xlu0 %4241
    %4243 = vrot.lane.b32.xlu0 %v4235, 56
    %v4244 = vpop.permute.xlu0 %4243
    %v4245 = vsel %vm2239, %v4240, %v4242
    %v4246 = vsel %vm2239, %v4242, %v4244
    %4249 = vst [vmem:[#allocation8 + $0x40] sm:$0xff] %v4245
    %4250 = vst [vmem:[#allocation8 + $0x48] sm:$0xff] %v4246
    %v4251 = vld [vmem:[#allocation6 + $0x20] sm:$0xff]
    %v4252 = vld [vmem:[#allocation6 + $0x28] sm:$0xff]
    %v4253 = vld [vmem:[#allocation6 + $0x30] sm:$0xff]
    %4254 = vrot.lane.b32.xlu0 %v4220, 88
    %v4255 = vpop.permute.xlu0 %4254
    %4256 = vrot.lane.b32.xlu0 %v4224, 88
    %v4257 = vpop.permute.xlu0 %4256
    %v4258 = vsel %vm738, %v4255, %v4257
    %v4262 = vmul.f32 %v4251, %v4255
    %v4263 = vmul.f32 %v4252, %v4258
    %v4264 = vmul.f32 %v4253, %v4257
    %4268 = vrot.lane.b32.xlu0 %v4262, 40
    %v4269 = vpop.permute.xlu0 %4268
    %4270 = vrot.lane.b32.xlu0 %v4263, 40
    %v4271 = vpop.permute.xlu0 %4270
    %4272 = vrot.lane.b32.xlu0 %v4264, 40
    %v4273 = vpop.permute.xlu0 %4272
    %v4274 = vsel %vm722, %v4269, %v4271
    %v4275 = vsel %vm722, %v4271, %v4273
    %4278 = vst [vmem:[#allocation8 + $0x50] sm:$0xff] %v4274
    %4279 = vst [vmem:[#allocation8 + $0x58] sm:$0xff] %v4275
    %v4280 = vld [vmem:[#allocation7] sm:$0xff]
    %v4281 = vld [vmem:[#allocation7 + $0x8] sm:$0xff]
    %v4282 = vld [vmem:[#allocation7 + $0x10] sm:$0xff]
    %v4283 = vmul.f32 %v4280, %v4226
    %v4284 = vmul.f32 %v4281, %v4229
    %v4285 = vmul.f32 %v4282, %v4228
    %4289 = vrot.lane.b32.xlu0 %v4283, 56
    %v4290 = vpop.permute.xlu0 %4289
    %4291 = vrot.lane.b32.xlu0 %v4284, 56
    %v4292 = vpop.permute.xlu0 %4291
    %4293 = vrot.lane.b32.xlu0 %v4285, 56
    %v4294 = vpop.permute.xlu0 %4293
    %v4295 = vsel %vm2239, %v4290, %v4292
    %v4296 = vsel %vm2239, %v4292, %v4294
    %4299 = vst [vmem:[#allocation8 + $0x60] sm:$0xff] %v4295
    %4300 = vst [vmem:[#allocation8 + $0x68] sm:$0xff] %v4296
    %v4301 = vld [vmem:[#allocation7 + $0x20] sm:$0xff]
    %v4302 = vld [vmem:[#allocation7 + $0x28] sm:$0xff]
    %v4303 = vld [vmem:[#allocation7 + $0x30] sm:$0xff]
    %v4304 = vmul.f32 %v4301, %v4255
    %v4305 = vmul.f32 %v4302, %v4258
    %v4306 = vmul.f32 %v4303, %v4257
    %4310 = vrot.lane.b32.xlu0 %v4304, 40
    %v4311 = vpop.permute.xlu0 %4310
    %4312 = vrot.lane.b32.xlu0 %v4305, 40
    %v4313 = vpop.permute.xlu0 %4312
    %4314 = vrot.lane.b32.xlu0 %v4306, 40
    %v4315 = vpop.permute.xlu0 %4314
    %v4316 = vsel %vm722, %v4311, %v4313
    %v4317 = vsel %vm722, %v4313, %v4315
    %4320 = vst [vmem:[#allocation8 + $0x70] sm:$0xff] %v4316
    %4321 = vst [vmem:[#allocation8 + $0x78] sm:$0xff] %v4317
    %v4322 = vld [vmem:[%s2668] ss:$8 sm:$0x3]
    %v4323 = vld [vmem:[#allocation6] sm:$0xff]
    %v4324 = vld [vmem:[#allocation6 + $0x8] sm:$0xff]
    %v4325 = vld [vmem:[#allocation6 + $0x10] sm:$0xff]
    %v4327 = vlaneseq
    %v4328 = vshrl.u32 %v4327, 7
    %v4329 = vsub.s32 0, %v4328
    %v4330 = vrot.slane %v4322, %v4329
    %v4331 = vlaneseq
    %v4332 = vshrl.u32 %v4331, 7
    %v4333 = vsub.s32 1, %v4332
    %v4334 = vrot.slane %v4322, %v4333
    %4335 = vrot.lane.b32.xlu0 %v4330, 76
    %v4336 = vpop.permute.xlu0 %4335
    %4337 = vrot.lane.b32.xlu0 %v4334, 76
    %v4338 = vpop.permute.xlu0 %4337
    %v4339 = vsel %vm2686, %v4336, %v4338
    %v4343 = vmul.f32 %v4323, %v4336
    %v4344 = vmul.f32 %v4324, %v4339
    %v4345 = vmul.f32 %v4325, %v4338
    %4349 = vrot.lane.b32.xlu0 %v4343, 52
    %v4350 = vpop.permute.xlu0 %4349
    %4351 = vrot.lane.b32.xlu0 %v4344, 52
    %v4352 = vpop.permute.xlu0 %4351
    %4353 = vrot.lane.b32.xlu0 %v4345, 52
    %v4354 = vpop.permute.xlu0 %4353
    %v4355 = vsel %vm2703, %v4350, %v4352
    %v4356 = vsel %vm2703, %v4352, %v4354
    %4359 = vst [vmem:[#allocation8 + $0x80] sm:$0xff] %v4355
    %4360 = vst [vmem:[#allocation8 + $0x88] sm:$0xff] %v4356
    %v4361 = vld [vmem:[#allocation6 + $0x20] sm:$0xff]
    %v4362 = vld [vmem:[#allocation6 + $0x28] sm:$0xff]
    %v4363 = vld [vmem:[#allocation6 + $0x30] sm:$0xff]
    %4364 = vrot.lane.b32.xlu0 %v4330, 92
    %v4365 = vpop.permute.xlu0 %4364
    %4366 = vrot.lane.b32.xlu0 %v4334, 92
    %v4367 = vpop.permute.xlu0 %4366
    %v4368 = vsel %vm2717, %v4365, %v4367
    %v4372 = vmul.f32 %v4361, %v4365
    %v4373 = vmul.f32 %v4362, %v4368
    %v4374 = vmul.f32 %v4363, %v4367
    %4378 = vrot.lane.b32.xlu0 %v4372, 36
    %v4379 = vpop.permute.xlu0 %4378
    %4380 = vrot.lane.b32.xlu0 %v4373, 36
    %v4381 = vpop.permute.xlu0 %4380
    %4382 = vrot.lane.b32.xlu0 %v4374, 36
    %v4383 = vpop.permute.xlu0 %4382
    %v4384 = vsel %vm848, %v4379, %v4381
    %v4385 = vsel %vm848, %v4381, %v4383
    %4388 = vst [vmem:[#allocation8 + $0x90] sm:$0xff] %v4384
    %4389 = vst [vmem:[#allocation8 + $0x98] sm:$0xff] %v4385
    %v4390 = vld [vmem:[#allocation7] sm:$0xff]
    %v4391 = vld [vmem:[#allocation7 + $0x8] sm:$0xff]
    %v4392 = vld [vmem:[#allocation7 + $0x10] sm:$0xff]
    %v4393 = vmul.f32 %v4390, %v4336
    %v4394 = vmul.f32 %v4391, %v4339
    %v4395 = vmul.f32 %v4392, %v4338
    %4399 = vrot.lane.b32.xlu0 %v4393, 52
    %v4400 = vpop.permute.xlu0 %4399
    %4401 = vrot.lane.b32.xlu0 %v4394, 52
    %v4402 = vpop.permute.xlu0 %4401
    %4403 = vrot.lane.b32.xlu0 %v4395, 52
    %v4404 = vpop.permute.xlu0 %4403
    %v4405 = vsel %vm2703, %v4400, %v4402
    %v4406 = vsel %vm2703, %v4402, %v4404
    %4409 = vst [vmem:[#allocation8 + $0xa0] sm:$0xff] %v4405
    %4410 = vst [vmem:[#allocation8 + $0xa8] sm:$0xff] %v4406
    %v4411 = vld [vmem:[#allocation7 + $0x20] sm:$0xff]
    %v4412 = vld [vmem:[#allocation7 + $0x28] sm:$0xff]
    %v4413 = vld [vmem:[#allocation7 + $0x30] sm:$0xff]
    %v4414 = vmul.f32 %v4411, %v4365
    %v4415 = vmul.f32 %v4412, %v4368
    %v4416 = vmul.f32 %v4413, %v4367
    %4420 = vrot.lane.b32.xlu0 %v4414, 36
    %v4421 = vpop.permute.xlu0 %4420
    %4422 = vrot.lane.b32.xlu0 %v4415, 36
    %v4423 = vpop.permute.xlu0 %4422
    %4424 = vrot.lane.b32.xlu0 %v4416, 36
    %v4425 = vpop.permute.xlu0 %4424
    %v4426 = vsel %vm848, %v4421, %v4423
    %v4427 = vsel %vm848, %v4423, %v4425
    %4430 = vst [vmem:[#allocation8 + $0xb0] sm:$0xff] %v4426
    %4431 = vst [vmem:[#allocation8 + $0xb8] sm:$0xff] %v4427
    %v4432 = vld [vmem:[%s2740] ss:$8 sm:$0x3]
    %v4433 = vld [vmem:[#allocation6 + $0x8] sm:$0xff]
    %v4434 = vld [vmem:[#allocation6 + $0x10] sm:$0xff]
    %v4435 = vld [vmem:[#allocation6 + $0x18] sm:$0xff]
    %v4437 = vlaneseq
    %v4438 = vshrl.u32 %v4437, 7
    %v4439 = vsub.s32 0, %v4438
    %v4440 = vrot.slane %v4432, %v4439
    %v4441 = vlaneseq
    %v4442 = vshrl.u32 %v4441, 7
    %v4443 = vsub.s32 1, %v4442
    %v4444 = vrot.slane %v4432, %v4443
    %4445 = vrot.lane.b32.xlu0 %v4440, 4
    %v4446 = vpop.permute.xlu0 %4445
    %4447 = vrot.lane.b32.xlu0 %v4444, 4
    %v4448 = vpop.permute.xlu0 %4447
    %v4449 = vsel %vm2758, %v4446, %v4448
    %v4453 = vmul.f32 %v4433, %v4446
    %v4454 = vmul.f32 %v4434, %v4449
    %v4455 = vmul.f32 %v4435, %v4448
    %4459 = vrot.lane.b32.xlu0 %v4453, 124
    %v4460 = vpop.permute.xlu0 %4459
    %4461 = vrot.lane.b32.xlu0 %v4454, 124
    %v4462 = vpop.permute.xlu0 %4461
    %4463 = vrot.lane.b32.xlu0 %v4455, 124
    %v4464 = vpop.permute.xlu0 %4463
    %v4465 = vsel %vm2775, %v4460, %v4462
    %v4466 = vsel %vm2775, %v4462, %v4464
    %4469 = vst [vmem:[#allocation8 + $0xc0] sm:$0xff] %v4465
    %4470 = vst [vmem:[#allocation8 + $0xc8] sm:$0xff] %v4466
    %v4471 = vld [vmem:[#allocation6 + $0x28] sm:$0xff]
    %v4472 = vld [vmem:[#allocation6 + $0x30] sm:$0xff]
    %v4473 = vld [vmem:[#allocation6 + $0x38] sm:$0xff]
    %4474 = vrot.lane.b32.xlu0 %v4440, 20
    %v4475 = vpop.permute.xlu0 %4474
    %4476 = vrot.lane.b32.xlu0 %v4444, 20
    %v4477 = vpop.permute.xlu0 %4476
    %v4478 = vsel %vm2789, %v4475, %v4477
    %v4482 = vmul.f32 %v4471, %v4475
    %v4483 = vmul.f32 %v4472, %v4478
    %v4484 = vmul.f32 %v4473, %v4477
    %4488 = vrot.lane.b32.xlu0 %v4482, 108
    %v4489 = vpop.permute.xlu0 %4488
    %4490 = vrot.lane.b32.xlu0 %v4483, 108
    %v4491 = vpop.permute.xlu0 %4490
    %4492 = vrot.lane.b32.xlu0 %v4484, 108
    %v4493 = vpop.permute.xlu0 %4492
    %v4494 = vsel %vm2806, %v4489, %v4491
    %v4495 = vsel %vm2806, %v4491, %v4493
    %4498 = vst [vmem:[#allocation8 + $0xd0] sm:$0xff] %v4494
    %4499 = vst [vmem:[#allocation8 + $0xd8] sm:$0xff] %v4495
    %v4500 = vld [vmem:[#allocation7 + $0x8] sm:$0xff]
    %v4501 = vld [vmem:[#allocation7 + $0x10] sm:$0xff]
    %v4502 = vld [vmem:[#allocation7 + $0x18] sm:$0xff]
    %v4503 = vmul.f32 %v4500, %v4446
    %v4504 = vmul.f32 %v4501, %v4449
    %v4505 = vmul.f32 %v4502, %v4448
    %4509 = vrot.lane.b32.xlu0 %v4503, 124
    %v4510 = vpop.permute.xlu0 %4509
    %4511 = vrot.lane.b32.xlu0 %v4504, 124
    %v4512 = vpop.permute.xlu0 %4511
    %4513 = vrot.lane.b32.xlu0 %v4505, 124
    %v4514 = vpop.permute.xlu0 %4513
    %v4515 = vsel %vm2775, %v4510, %v4512
    %v4516 = vsel %vm2775, %v4512, %v4514
    %4519 = vst [vmem:[#allocation8 + $0xe0] sm:$0xff] %v4515
    %4520 = vst [vmem:[#allocation8 + $0xe8] sm:$0xff] %v4516
    %v4521 = vld [vmem:[#allocation7 + $0x28] sm:$0xff]
    %v4522 = vld [vmem:[#allocation7 + $0x30] sm:$0xff]
    %v4523 = vld [vmem:[#allocation7 + $0x38] sm:$0xff]
    %v4524 = vmul.f32 %v4521, %v4475
    %v4525 = vmul.f32 %v4522, %v4478
    %v4526 = vmul.f32 %v4523, %v4477
    %4530 = vrot.lane.b32.xlu0 %v4524, 108
    %v4531 = vpop.permute.xlu0 %4530
    %4532 = vrot.lane.b32.xlu0 %v4525, 108
    %v4533 = vpop.permute.xlu0 %4532
    %4534 = vrot.lane.b32.xlu0 %v4526, 108
    %v4535 = vpop.permute.xlu0 %4534
    %v4536 = vsel %vm2806, %v4531, %v4533
    %v4537 = vsel %vm2806, %v4533, %v4535
    %4540 = vst [vmem:[#allocation8 + $0xf0] sm:$0xff] %v4536
    %4541 = vst [vmem:[#allocation8 + $0xf8] sm:$0xff] %v4537
    %v4542 = vld [vmem:[%s2813] ss:$8 sm:$0x3]
    %v4543 = vld [vmem:[#allocation6 + $0x8] sm:$0xff]
    %v4544 = vld [vmem:[#allocation6 + $0x10] sm:$0xff]
    %v4545 = vld [vmem:[#allocation6 + $0x18] sm:$0xff]
    %v4547 = vlaneseq
    %v4548 = vshrl.u32 %v4547, 7
    %v4549 = vsub.s32 0, %v4548
    %v4550 = vrot.slane %v4542, %v4549
    %v4551 = vlaneseq
    %v4552 = vshrl.u32 %v4551, 7
    %v4553 = vsub.s32 1, %v4552
    %v4554 = vrot.slane %v4542, %v4553
    %4555 = vrot.lane.b32.xlu0 %v4550, 8
    %v4556 = vpop.permute.xlu0 %4555
    %4557 = vrot.lane.b32.xlu0 %v4554, 8
    %v4558 = vpop.permute.xlu0 %4557
    %v4559 = vsel %vm203, %v4556, %v4558
    %v4563 = vmul.f32 %v4543, %v4556
    %v4564 = vmul.f32 %v4544, %v4559
    %v4565 = vmul.f32 %v4545, %v4558
    %4569 = vrot.lane.b32.xlu0 %v4563, 120
    %v4570 = vpop.permute.xlu0 %4569
    %4571 = vrot.lane.b32.xlu0 %v4564, 120
    %v4572 = vpop.permute.xlu0 %4571
    %4573 = vrot.lane.b32.xlu0 %v4565, 120
    %v4574 = vpop.permute.xlu0 %4573
    %v4575 = vsel %vm310, %v4570, %v4572
    %v4576 = vsel %vm310, %v4572, %v4574
    %4579 = vst [vmem:[#allocation8 + $0x100] sm:$0xff] %v4575
    %4580 = vst [vmem:[#allocation8 + $0x108] sm:$0xff] %v4576
    %v4581 = vld [vmem:[#allocation6 + $0x28] sm:$0xff]
    %v4582 = vld [vmem:[#allocation6 + $0x30] sm:$0xff]
    %v4583 = vld [vmem:[#allocation6 + $0x38] sm:$0xff]
    %4584 = vrot.lane.b32.xlu0 %v4550, 24
    %v4585 = vpop.permute.xlu0 %4584
    %4586 = vrot.lane.b32.xlu0 %v4554, 24
    %v4587 = vpop.permute.xlu0 %4586
    %v4588 = vsel %vm219, %v4585, %v4587
    %v4592 = vmul.f32 %v4581, %v4585
    %v4593 = vmul.f32 %v4582, %v4588
    %v4594 = vmul.f32 %v4583, %v4587
    %4598 = vrot.lane.b32.xlu0 %v4592, 104
    %v4599 = vpop.permute.xlu0 %4598
    %4600 = vrot.lane.b32.xlu0 %v4593, 104
    %v4601 = vpop.permute.xlu0 %4600
    %4602 = vrot.lane.b32.xlu0 %v4594, 104
    %v4603 = vpop.permute.xlu0 %4602
    %v4604 = vsel %vm542, %v4599, %v4601
    %v4605 = vsel %vm542, %v4601, %v4603
    %4608 = vst [vmem:[#allocation8 + $0x110] sm:$0xff] %v4604
    %4609 = vst [vmem:[#allocation8 + $0x118] sm:$0xff] %v4605
    %v4610 = vld [vmem:[#allocation7 + $0x8] sm:$0xff]
    %v4611 = vld [vmem:[#allocation7 + $0x10] sm:$0xff]
    %v4612 = vld [vmem:[#allocation7 + $0x18] sm:$0xff]
    %v4613 = vmul.f32 %v4610, %v4556
    %v4614 = vmul.f32 %v4611, %v4559
    %v4615 = vmul.f32 %v4612, %v4558
    %4619 = vrot.lane.b32.xlu0 %v4613, 120
    %v4620 = vpop.permute.xlu0 %4619
    %4621 = vrot.lane.b32.xlu0 %v4614, 120
    %v4622 = vpop.permute.xlu0 %4621
    %4623 = vrot.lane.b32.xlu0 %v4615, 120
    %v4624 = vpop.permute.xlu0 %4623
    %v4625 = vsel %vm310, %v4620, %v4622
    %v4626 = vsel %vm310, %v4622, %v4624
    %4629 = vst [vmem:[#allocation8 + $0x120] sm:$0xff] %v4625
    %4630 = vst [vmem:[#allocation8 + $0x128] sm:$0xff] %v4626
    %v4631 = vld [vmem:[#allocation7 + $0x28] sm:$0xff]
    %v4632 = vld [vmem:[#allocation7 + $0x30] sm:$0xff]
    %v4633 = vld [vmem:[#allocation7 + $0x38] sm:$0xff]
    %v4634 = vmul.f32 %v4631, %v4585
    %v4635 = vmul.f32 %v4632, %v4588
    %v4636 = vmul.f32 %v4633, %v4587
    %4640 = vrot.lane.b32.xlu0 %v4634, 104
    %v4641 = vpop.permute.xlu0 %4640
    %4642 = vrot.lane.b32.xlu0 %v4635, 104
    %v4643 = vpop.permute.xlu0 %4642
    %4644 = vrot.lane.b32.xlu0 %v4636, 104
    %v4645 = vpop.permute.xlu0 %4644
    %v4646 = vsel %vm542, %v4641, %v4643
    %v4647 = vsel %vm542, %v4643, %v4645
    %4650 = vst [vmem:[#allocation8 + $0x130] sm:$0xff] %v4646
    %4651 = vst [vmem:[#allocation8 + $0x138] sm:$0xff] %v4647
    %v4652 = vld [vmem:[%s2882] ss:$8 sm:$0x3]
    %v4653 = vld [vmem:[#allocation6 + $0x8] sm:$0xff]
    %v4654 = vld [vmem:[#allocation6 + $0x10] sm:$0xff]
    %v4655 = vld [vmem:[#allocation6 + $0x18] sm:$0xff]
    %v4657 = vlaneseq
    %v4658 = vshrl.u32 %v4657, 7
    %v4659 = vsub.s32 0, %v4658
    %v4660 = vrot.slane %v4652, %v4659
    %v4661 = vlaneseq
    %v4662 = vshrl.u32 %v4661, 7
    %v4663 = vsub.s32 1, %v4662
    %v4664 = vrot.slane %v4652, %v4663
    %4665 = vrot.lane.b32.xlu0 %v4660, 12
    %v4666 = vpop.permute.xlu0 %4665
    %4667 = vrot.lane.b32.xlu0 %v4664, 12
    %v4668 = vpop.permute.xlu0 %4667
    %v4669 = vsel %vm2900, %v4666, %v4668
    %v4673 = vmul.f32 %v4653, %v4666
    %v4674 = vmul.f32 %v4654, %v4669
    %v4675 = vmul.f32 %v4655, %v4668
    %4679 = vrot.lane.b32.xlu0 %v4673, 116
    %v4680 = vpop.permute.xlu0 %4679
    %4681 = vrot.lane.b32.xlu0 %v4674, 116
    %v4682 = vpop.permute.xlu0 %4681
    %4683 = vrot.lane.b32.xlu0 %v4675, 116
    %v4684 = vpop.permute.xlu0 %4683
    %v4685 = vsel %vm2917, %v4680, %v4682
    %v4686 = vsel %vm2917, %v4682, %v4684
    %4689 = vst [vmem:[#allocation8 + $0x140] sm:$0xff] %v4685
    %4690 = vst [vmem:[#allocation8 + $0x148] sm:$0xff] %v4686
    %v4691 = vld [vmem:[#allocation6 + $0x28] sm:$0xff]
    %v4692 = vld [vmem:[#allocation6 + $0x30] sm:$0xff]
    %v4693 = vld [vmem:[#allocation6 + $0x38] sm:$0xff]
    %4694 = vrot.lane.b32.xlu0 %v4660, 28
    %v4695 = vpop.permute.xlu0 %4694
    %4696 = vrot.lane.b32.xlu0 %v4664, 28
    %v4697 = vpop.permute.xlu0 %4696
    %v4698 = vsel %vm2931, %v4695, %v4697
    %v4702 = vmul.f32 %v4691, %v4695
    %v4703 = vmul.f32 %v4692, %v4698
    %v4704 = vmul.f32 %v4693, %v4697
    %4708 = vrot.lane.b32.xlu0 %v4702, 100
    %v4709 = vpop.permute.xlu0 %4708
    %4710 = vrot.lane.b32.xlu0 %v4703, 100
    %v4711 = vpop.permute.xlu0 %4710
    %4712 = vrot.lane.b32.xlu0 %v4704, 100
    %v4713 = vpop.permute.xlu0 %4712
    %v4714 = vsel %vm2948, %v4709, %v4711
    %v4715 = vsel %vm2948, %v4711, %v4713
    %4718 = vst [vmem:[#allocation8 + $0x150] sm:$0xff] %v4714
    %4719 = vst [vmem:[#allocation8 + $0x158] sm:$0xff] %v4715
    %v4720 = vld [vmem:[#allocation7 + $0x8] sm:$0xff]
    %v4721 = vld [vmem:[#allocation7 + $0x10] sm:$0xff]
    %v4722 = vld [vmem:[#allocation7 + $0x18] sm:$0xff]
    %v4723 = vmul.f32 %v4720, %v4666
    %v4724 = vmul.f32 %v4721, %v4669
    %v4725 = vmul.f32 %v4722, %v4668
    %4729 = vrot.lane.b32.xlu0 %v4723, 116
    %v4730 = vpop.permute.xlu0 %4729
    %4731 = vrot.lane.b32.xlu0 %v4724, 116
    %v4732 = vpop.permute.xlu0 %4731
    %4733 = vrot.lane.b32.xlu0 %v4725, 116
    %v4734 = vpop.permute.xlu0 %4733
    %v4735 = vsel %vm2917, %v4730, %v4732
    %v4736 = vsel %vm2917, %v4732, %v4734
    %4739 = vst [vmem:[#allocation8 + $0x160] sm:$0xff] %v4735
    %4740 = vst [vmem:[#allocation8 + $0x168] sm:$0xff] %v4736
    %v4741 = vld [vmem:[#allocation7 + $0x28] sm:$0xff]
    %v4742 = vld [vmem:[#allocation7 + $0x30] sm:$0xff]
    %v4743 = vld [vmem:[#allocation7 + $0x38] sm:$0xff]
    %v4744 = vmul.f32 %v4741, %v4695
    %v4745 = vmul.f32 %v4742, %v4698
    %v4746 = vmul.f32 %v4743, %v4697
    %4750 = vrot.lane.b32.xlu0 %v4744, 100
    %v4751 = vpop.permute.xlu0 %4750
    %4752 = vrot.lane.b32.xlu0 %v4745, 100
    %v4753 = vpop.permute.xlu0 %4752
    %4754 = vrot.lane.b32.xlu0 %v4746, 100
    %v4755 = vpop.permute.xlu0 %4754
    %v4756 = vsel %vm2948, %v4751, %v4753
    %v4757 = vsel %vm2948, %v4753, %v4755
    %4760 = vst [vmem:[#allocation8 + $0x170] sm:$0xff] %v4756
    %4761 = vst [vmem:[#allocation8 + $0x178] sm:$0xff] %v4757
    %v4762 = vld [vmem:[%s2955] ss:$8 sm:$0x3]
    %v4763 = vld [vmem:[#allocation6 + $0x8] sm:$0xff]
    %v4764 = vld [vmem:[#allocation6 + $0x10] sm:$0xff]
    %v4765 = vld [vmem:[#allocation6 + $0x18] sm:$0xff]
    %v4767 = vlaneseq
    %v4768 = vshrl.u32 %v4767, 7
    %v4769 = vsub.s32 0, %v4768
    %v4770 = vrot.slane %v4762, %v4769
    %v4771 = vlaneseq
    %v4772 = vshrl.u32 %v4771, 7
    %v4773 = vsub.s32 1, %v4772
    %v4774 = vrot.slane %v4762, %v4773
    %4775 = vrot.lane.b32.xlu0 %v4770, 68
    %v4776 = vpop.permute.xlu0 %4775
    %4777 = vrot.lane.b32.xlu0 %v4774, 68
    %v4778 = vpop.permute.xlu0 %4777
    %v4779 = vsel %vm2544, %v4776, %v4778
    %v4783 = vmul.f32 %v4763, %v4776
    %v4784 = vmul.f32 %v4764, %v4779
    %v4785 = vmul.f32 %v4765, %v4778
    %4789 = vrot.lane.b32.xlu0 %v4783, 60
    %v4790 = vpop.permute.xlu0 %4789
    %4791 = vrot.lane.b32.xlu0 %v4784, 60
    %v4792 = vpop.permute.xlu0 %4791
    %4793 = vrot.lane.b32.xlu0 %v4785, 60
    %v4794 = vpop.permute.xlu0 %4793
    %v4795 = vsel %vm2561, %v4790, %v4792
    %v4796 = vsel %vm2561, %v4792, %v4794
    %4799 = vst [vmem:[#allocation8 + $0x180] sm:$0xff] %v4795
    %4800 = vst [vmem:[#allocation8 + $0x188] sm:$0xff] %v4796
    %v4801 = vld [vmem:[#allocation6 + $0x28] sm:$0xff]
    %v4802 = vld [vmem:[#allocation6 + $0x30] sm:$0xff]
    %v4803 = vld [vmem:[#allocation6 + $0x38] sm:$0xff]
    %4804 = vrot.lane.b32.xlu0 %v4770, 84
    %v4805 = vpop.permute.xlu0 %4804
    %4806 = vrot.lane.b32.xlu0 %v4774, 84
    %v4807 = vpop.permute.xlu0 %4806
    %v4808 = vsel %vm2575, %v4805, %v4807
    %v4812 = vmul.f32 %v4801, %v4805
    %v4813 = vmul.f32 %v4802, %v4808
    %v4814 = vmul.f32 %v4803, %v4807
    %4818 = vrot.lane.b32.xlu0 %v4812, 44
    %v4819 = vpop.permute.xlu0 %4818
    %4820 = vrot.lane.b32.xlu0 %v4813, 44
    %v4821 = vpop.permute.xlu0 %4820
    %4822 = vrot.lane.b32.xlu0 %v4814, 44
    %v4823 = vpop.permute.xlu0 %4822
    %v4824 = vsel %vm2592, %v4819, %v4821
    %v4825 = vsel %vm2592, %v4821, %v4823
    %4828 = vst [vmem:[#allocation8 + $0x190] sm:$0xff] %v4824
    %4829 = vst [vmem:[#allocation8 + $0x198] sm:$0xff] %v4825
    %v4830 = vld [vmem:[#allocation7 + $0x8] sm:$0xff]
    %v4831 = vld [vmem:[#allocation7 + $0x10] sm:$0xff]
    %v4832 = vld [vmem:[#allocation7 + $0x18] sm:$0xff]
    %v4833 = vmul.f32 %v4830, %v4776
    %v4834 = vmul.f32 %v4831, %v4779
    %v4835 = vmul.f32 %v4832, %v4778
    %4839 = vrot.lane.b32.xlu0 %v4833, 60
    %v4840 = vpop.permute.xlu0 %4839
    %4841 = vrot.lane.b32.xlu0 %v4834, 60
    %v4842 = vpop.permute.xlu0 %4841
    %4843 = vrot.lane.b32.xlu0 %v4835, 60
    %v4844 = vpop.permute.xlu0 %4843
    %v4845 = vsel %vm2561, %v4840, %v4842
    %v4846 = vsel %vm2561, %v4842, %v4844
    %4849 = vst [vmem:[#allocation8 + $0x1a0] sm:$0xff] %v4845
    %4850 = vst [vmem:[#allocation8 + $0x1a8] sm:$0xff] %v4846
    %v4851 = vld [vmem:[#allocation7 + $0x28] sm:$0xff]
    %v4852 = vld [vmem:[#allocation7 + $0x30] sm:$0xff]
    %v4853 = vld [vmem:[#allocation7 + $0x38] sm:$0xff]
    %v4854 = vmul.f32 %v4851, %v4805
    %v4855 = vmul.f32 %v4852, %v4808
    %v4856 = vmul.f32 %v4853, %v4807
    %4860 = vrot.lane.b32.xlu0 %v4854, 44
    %v4861 = vpop.permute.xlu0 %4860
    %4862 = vrot.lane.b32.xlu0 %v4855, 44
    %v4863 = vpop.permute.xlu0 %4862
    %4864 = vrot.lane.b32.xlu0 %v4856, 44
    %v4865 = vpop.permute.xlu0 %4864
    %v4866 = vsel %vm2592, %v4861, %v4863
    %v4867 = vsel %vm2592, %v4863, %v4865
    %4870 = vst [vmem:[#allocation8 + $0x1b0] sm:$0xff] %v4866
    %4871 = vst [vmem:[#allocation8 + $0x1b8] sm:$0xff] %v4867
    %v4872 = vld [vmem:[%s3024] ss:$8 sm:$0x3]
    %v4873 = vld [vmem:[#allocation6 + $0x8] sm:$0xff]
    %v4874 = vld [vmem:[#allocation6 + $0x10] sm:$0xff]
    %v4875 = vld [vmem:[#allocation6 + $0x18] sm:$0xff]
    %v4877 = vlaneseq
    %v4878 = vshrl.u32 %v4877, 7
    %v4879 = vsub.s32 0, %v4878
    %v4880 = vrot.slane %v4872, %v4879
    %v4881 = vlaneseq
    %v4882 = vshrl.u32 %v4881, 7
    %v4883 = vsub.s32 1, %v4882
    %v4884 = vrot.slane %v4872, %v4883
    %4885 = vrot.lane.b32.xlu0 %v4880, 72
    %v4886 = vpop.permute.xlu0 %4885
    %4887 = vrot.lane.b32.xlu0 %v4884, 72
    %v4888 = vpop.permute.xlu0 %4887
    %v4889 = vsel %vm2256, %v4886, %v4888
    %v4893 = vmul.f32 %v4873, %v4886
    %v4894 = vmul.f32 %v4874, %v4889
    %v4895 = vmul.f32 %v4875, %v4888
    %4899 = vrot.lane.b32.xlu0 %v4893, 56
    %v4900 = vpop.permute.xlu0 %4899
    %4901 = vrot.lane.b32.xlu0 %v4894, 56
    %v4902 = vpop.permute.xlu0 %4901
    %4903 = vrot.lane.b32.xlu0 %v4895, 56
    %v4904 = vpop.permute.xlu0 %4903
    %v4905 = vsel %vm2239, %v4900, %v4902
    %v4906 = vsel %vm2239, %v4902, %v4904
    %4909 = vst [vmem:[#allocation8 + $0x1c0] sm:$0xff] %v4905
    %4910 = vst [vmem:[#allocation8 + $0x1c8] sm:$0xff] %v4906
    %v4911 = vld [vmem:[#allocation6 + $0x28] sm:$0xff]
    %v4912 = vld [vmem:[#allocation6 + $0x30] sm:$0xff]
    %v4913 = vld [vmem:[#allocation6 + $0x38] sm:$0xff]
    %4914 = vrot.lane.b32.xlu0 %v4880, 88
    %v4915 = vpop.permute.xlu0 %4914
    %4916 = vrot.lane.b32.xlu0 %v4884, 88
    %v4917 = vpop.permute.xlu0 %4916
    %v4918 = vsel %vm738, %v4915, %v4917
    %v4922 = vmul.f32 %v4911, %v4915
    %v4923 = vmul.f32 %v4912, %v4918
    %v4924 = vmul.f32 %v4913, %v4917
    %4928 = vrot.lane.b32.xlu0 %v4922, 40
    %v4929 = vpop.permute.xlu0 %4928
    %4930 = vrot.lane.b32.xlu0 %v4923, 40
    %v4931 = vpop.permute.xlu0 %4930
    %4932 = vrot.lane.b32.xlu0 %v4924, 40
    %v4933 = vpop.permute.xlu0 %4932
    %v4934 = vsel %vm722, %v4929, %v4931
    %v4935 = vsel %vm722, %v4931, %v4933
    %4938 = vst [vmem:[#allocation8 + $0x1d0] sm:$0xff] %v4934
    %4939 = vst [vmem:[#allocation8 + $0x1d8] sm:$0xff] %v4935
    %v4940 = vld [vmem:[#allocation7 + $0x8] sm:$0xff]
    %v4941 = vld [vmem:[#allocation7 + $0x10] sm:$0xff]
    %v4942 = vld [vmem:[#allocation7 + $0x18] sm:$0xff]
    %v4943 = vmul.f32 %v4940, %v4886
    %v4944 = vmul.f32 %v4941, %v4889
    %v4945 = vmul.f32 %v4942, %v4888
    %4949 = vrot.lane.b32.xlu0 %v4943, 56
    %v4950 = vpop.permute.xlu0 %4949
    %4951 = vrot.lane.b32.xlu0 %v4944, 56
    %v4952 = vpop.permute.xlu0 %4951
    %4953 = vrot.lane.b32.xlu0 %v4945, 56
    %v4954 = vpop.permute.xlu0 %4953
    %v4955 = vsel %vm2239, %v4950, %v4952
    %v4956 = vsel %vm2239, %v4952, %v4954
    %4959 = vst [vmem:[#allocation8 + $0x1e0] sm:$0xff] %v4955
    %4960 = vst [vmem:[#allocation8 + $0x1e8] sm:$0xff] %v4956
    %v4961 = vld [vmem:[#allocation7 + $0x28] sm:$0xff]
    %v4962 = vld [vmem:[#allocation7 + $0x30] sm:$0xff]
    %v4963 = vld [vmem:[#allocation7 + $0x38] sm:$0xff]
    %v4964 = vmul.f32 %v4961, %v4915
    %v4965 = vmul.f32 %v4962, %v4918
    %v4966 = vmul.f32 %v4963, %v4917
    %4970 = vrot.lane.b32.xlu0 %v4964, 40
    %v4971 = vpop.permute.xlu0 %4970
    %4972 = vrot.lane.b32.xlu0 %v4965, 40
    %v4973 = vpop.permute.xlu0 %4972
    %4974 = vrot.lane.b32.xlu0 %v4966, 40
    %v4975 = vpop.permute.xlu0 %4974
    %v4976 = vsel %vm722, %v4971, %v4973
    %v4977 = vsel %vm722, %v4973, %v4975
    %4980 = vst [vmem:[#allocation8 + $0x1f0] sm:$0xff] %v4976
    %4981 = vst [vmem:[#allocation8 + $0x1f8] sm:$0xff] %v4977
    %v4982 = vld [vmem:[%s3093] ss:$8 sm:$0x3]
    %v4983 = vld [vmem:[#allocation6 + $0x8] sm:$0xff]
    %v4984 = vld [vmem:[#allocation6 + $0x10] sm:$0xff]
    %v4985 = vld [vmem:[#allocation6 + $0x18] sm:$0xff]
    %v4987 = vlaneseq
    %v4988 = vshrl.u32 %v4987, 7
    %v4989 = vsub.s32 0, %v4988
    %v4990 = vrot.slane %v4982, %v4989
    %v4991 = vlaneseq
    %v4992 = vshrl.u32 %v4991, 7
    %v4993 = vsub.s32 1, %v4992
    %v4994 = vrot.slane %v4982, %v4993
    %4995 = vrot.lane.b32.xlu0 %v4990, 76
    %v4996 = vpop.permute.xlu0 %4995
    %4997 = vrot.lane.b32.xlu0 %v4994, 76
    %v4998 = vpop.permute.xlu0 %4997
    %v4999 = vsel %vm2686, %v4996, %v4998
    %v5003 = vmul.f32 %v4983, %v4996
    %v5004 = vmul.f32 %v4984, %v4999
    %v5005 = vmul.f32 %v4985, %v4998
    %5009 = vrot.lane.b32.xlu0 %v5003, 52
    %v5010 = vpop.permute.xlu0 %5009
    %5011 = vrot.lane.b32.xlu0 %v5004, 52
    %v5012 = vpop.permute.xlu0 %5011
    %5013 = vrot.lane.b32.xlu0 %v5005, 52
    %v5014 = vpop.permute.xlu0 %5013
    %v5015 = vsel %vm2703, %v5010, %v5012
    %v5016 = vsel %vm2703, %v5012, %v5014
    %5019 = vst [vmem:[#allocation8 + $0x200] sm:$0xff] %v5015
    %5020 = vst [vmem:[#allocation8 + $0x208] sm:$0xff] %v5016
    %v5021 = vld [vmem:[#allocation6 + $0x28] sm:$0xff]
    %v5022 = vld [vmem:[#allocation6 + $0x30] sm:$0xff]
    %v5023 = vld [vmem:[#allocation6 + $0x38] sm:$0xff]
    %5024 = vrot.lane.b32.xlu0 %v4990, 92
    %v5025 = vpop.permute.xlu0 %5024
    %5026 = vrot.lane.b32.xlu0 %v4994, 92
    %v5027 = vpop.permute.xlu0 %5026
    %v5028 = vsel %vm2717, %v5025, %v5027
    %v5032 = vmul.f32 %v5021, %v5025
    %v5033 = vmul.f32 %v5022, %v5028
    %v5034 = vmul.f32 %v5023, %v5027
    %5038 = vrot.lane.b32.xlu0 %v5032, 36
    %v5039 = vpop.permute.xlu0 %5038
    %5040 = vrot.lane.b32.xlu0 %v5033, 36
    %v5041 = vpop.permute.xlu0 %5040
    %5042 = vrot.lane.b32.xlu0 %v5034, 36
    %v5043 = vpop.permute.xlu0 %5042
    %v5044 = vsel %vm848, %v5039, %v5041
    %v5045 = vsel %vm848, %v5041, %v5043
    %5048 = vst [vmem:[#allocation8 + $0x210] sm:$0xff] %v5044
    %5049 = vst [vmem:[#allocation8 + $0x218] sm:$0xff] %v5045
    %v5050 = vld [vmem:[#allocation7 + $0x8] sm:$0xff]
    %v5051 = vld [vmem:[#allocation7 + $0x10] sm:$0xff]
    %v5052 = vld [vmem:[#allocation7 + $0x18] sm:$0xff]
    %v5053 = vmul.f32 %v5050, %v4996
    %v5054 = vmul.f32 %v5051, %v4999
    %v5055 = vmul.f32 %v5052, %v4998
    %5059 = vrot.lane.b32.xlu0 %v5053, 52
    %v5060 = vpop.permute.xlu0 %5059
    %5061 = vrot.lane.b32.xlu0 %v5054, 52
    %v5062 = vpop.permute.xlu0 %5061
    %5063 = vrot.lane.b32.xlu0 %v5055, 52
    %v5064 = vpop.permute.xlu0 %5063
    %v5065 = vsel %vm2703, %v5060, %v5062
    %v5066 = vsel %vm2703, %v5062, %v5064
    %5069 = vst [vmem:[#allocation8 + $0x220] sm:$0xff] %v5065
    %5070 = vst [vmem:[#allocation8 + $0x228] sm:$0xff] %v5066
    %v5071 = vld [vmem:[#allocation7 + $0x28] sm:$0xff]
    %v5072 = vld [vmem:[#allocation7 + $0x30] sm:$0xff]
    %v5073 = vld [vmem:[#allocation7 + $0x38] sm:$0xff]
    %v5074 = vmul.f32 %v5071, %v5025
    %v5075 = vmul.f32 %v5072, %v5028
    %v5076 = vmul.f32 %v5073, %v5027
    %5080 = vrot.lane.b32.xlu0 %v5074, 36
    %v5081 = vpop.permute.xlu0 %5080
    %5082 = vrot.lane.b32.xlu0 %v5075, 36
    %v5083 = vpop.permute.xlu0 %5082
    %5084 = vrot.lane.b32.xlu0 %v5076, 36
    %v5085 = vpop.permute.xlu0 %5084
    %v5086 = vsel %vm848, %v5081, %v5083
    %v5087 = vsel %vm848, %v5083, %v5085
    %5090 = vst [vmem:[#allocation8 + $0x230] sm:$0xff] %v5086
    %5091 = vst [vmem:[#allocation8 + $0x238] sm:$0xff] %v5087
    %v5092 = vld [vmem:[#allocation8] sm:$0xff]
    %v5093 = vld [vmem:[#allocation8 + $0x8] sm:$0xff]
    %v5094 = vld [vmem:[#allocation8 + $0x10] sm:$0xff]
    %v5095 = vld [vmem:[#allocation8 + $0x18] sm:$0xff]
    %v5096 = vld [vmem:[#allocation8 + $0x20] sm:$0xff]
    %v5097 = vld [vmem:[#allocation8 + $0x28] sm:$0xff]
    %v5098 = vld [vmem:[#allocation8 + $0x30] sm:$0xff]
    %v5099 = vld [vmem:[#allocation8 + $0x38] sm:$0xff]
    %v5100 = vld [vmem:[#allocation8 + $0x40] sm:$0xff]
    %v5101 = vld [vmem:[#allocation8 + $0x48] sm:$0xff]
    %v5102 = vld [vmem:[#allocation8 + $0x50] sm:$0xff]
    %v5103 = vld [vmem:[#allocation8 + $0x58] sm:$0xff]
    %v5104 = vld [vmem:[#allocation8 + $0x60] sm:$0xff]
    %v5105 = vld [vmem:[#allocation8 + $0x68] sm:$0xff]
    %v5106 = vld [vmem:[#allocation8 + $0x70] sm:$0xff]
    %v5107 = vld [vmem:[#allocation8 + $0x78] sm:$0xff]
    %v5108 = vld [vmem:[#allocation8 + $0x80] sm:$0xff]
    %v5109 = vld [vmem:[#allocation8 + $0x88] sm:$0xff]
    %v5110 = vld [vmem:[#allocation8 + $0x90] sm:$0xff]
    %v5111 = vld [vmem:[#allocation8 + $0x98] sm:$0xff]
    %v5112 = vld [vmem:[#allocation8 + $0xa0] sm:$0xff]
    %v5113 = vld [vmem:[#allocation8 + $0xa8] sm:$0xff]
    %v5114 = vld [vmem:[#allocation8 + $0xb0] sm:$0xff]
    %v5115 = vld [vmem:[#allocation8 + $0xb8] sm:$0xff]
    %v5116 = vld [vmem:[#allocation8 + $0xc0] sm:$0xff]
    %v5117 = vld [vmem:[#allocation8 + $0xc8] sm:$0xff]
    %v5118 = vld [vmem:[#allocation8 + $0xd0] sm:$0xff]
    %v5119 = vld [vmem:[#allocation8 + $0xd8] sm:$0xff]
    %v5120 = vld [vmem:[#allocation8 + $0xe0] sm:$0xff]
    %v5121 = vld [vmem:[#allocation8 + $0xe8] sm:$0xff]
    %v5122 = vld [vmem:[#allocation8 + $0xf0] sm:$0xff]
    %v5123 = vld [vmem:[#allocation8 + $0xf8] sm:$0xff]
    %v5124 = vld [vmem:[#allocation8 + $0x100] sm:$0xff]
    %v5125 = vld [vmem:[#allocation8 + $0x108] sm:$0xff]
    %v5126 = vld [vmem:[#allocation8 + $0x110] sm:$0xff]
    %v5127 = vld [vmem:[#allocation8 + $0x118] sm:$0xff]
    %v5128 = vld [vmem:[#allocation8 + $0x120] sm:$0xff]
    %v5129 = vld [vmem:[#allocation8 + $0x128] sm:$0xff]
    %v5130 = vld [vmem:[#allocation8 + $0x130] sm:$0xff]
    %v5131 = vld [vmem:[#allocation8 + $0x138] sm:$0xff]
    %v5132 = vld [vmem:[#allocation8 + $0x140] sm:$0xff]
    %v5133 = vld [vmem:[#allocation8 + $0x148] sm:$0xff]
    %v5134 = vld [vmem:[#allocation8 + $0x150] sm:$0xff]
    %v5135 = vld [vmem:[#allocation8 + $0x158] sm:$0xff]
    %v5136 = vld [vmem:[#allocation8 + $0x160] sm:$0xff]
    %v5137 = vld [vmem:[#allocation8 + $0x168] sm:$0xff]
    %v5138 = vld [vmem:[#allocation8 + $0x170] sm:$0xff]
    %v5139 = vld [vmem:[#allocation8 + $0x178] sm:$0xff]
    %v5140 = vld [vmem:[#allocation8 + $0x180] sm:$0xff]
    %v5141 = vld [vmem:[#allocation8 + $0x188] sm:$0xff]
    %v5142 = vld [vmem:[#allocation8 + $0x190] sm:$0xff]
    %v5143 = vld [vmem:[#allocation8 + $0x198] sm:$0xff]
    %v5144 = vld [vmem:[#allocation8 + $0x1a0] sm:$0xff]
    %v5145 = vld [vmem:[#allocation8 + $0x1a8] sm:$0xff]
    %v5146 = vld [vmem:[#allocation8 + $0x1b0] sm:$0xff]
    %v5147 = vld [vmem:[#allocation8 + $0x1b8] sm:$0xff]
    %v5148 = vld [vmem:[#allocation8 + $0x1c0] sm:$0xff]
    %v5149 = vld [vmem:[#allocation8 + $0x1c8] sm:$0xff]
    %v5150 = vld [vmem:[#allocation8 + $0x1d0] sm:$0xff]
    %v5151 = vld [vmem:[#allocation8 + $0x1d8] sm:$0xff]
    %v5152 = vld [vmem:[#allocation8 + $0x1e0] sm:$0xff]
    %v5153 = vld [vmem:[#allocation8 + $0x1e8] sm:$0xff]
    %v5154 = vld [vmem:[#allocation8 + $0x1f0] sm:$0xff]
    %v5155 = vld [vmem:[#allocation8 + $0x1f8] sm:$0xff]
    %v5156 = vld [vmem:[#allocation8 + $0x200] sm:$0xff]
    %v5157 = vld [vmem:[#allocation8 + $0x208] sm:$0xff]
    %v5158 = vld [vmem:[#allocation8 + $0x210] sm:$0xff]
    %v5159 = vld [vmem:[#allocation8 + $0x218] sm:$0xff]
    %v5160 = vld [vmem:[#allocation8 + $0x220] sm:$0xff]
    %v5161 = vld [vmem:[#allocation8 + $0x228] sm:$0xff]
    %v5162 = vld [vmem:[#allocation8 + $0x230] sm:$0xff]
    %v5163 = vld [vmem:[#allocation8 + $0x238] sm:$0xff]
    %v5164 = vpack.c.bf16 %v5096, %v5092
    %v5165 = vpack.c.bf16 %v5097, %v5093
    %v5166 = vpack.c.bf16 %v5098, %v5094
    %v5167 = vpack.c.bf16 %v5099, %v5095
    %v5168 = vpack.c.bf16 %v5104, %v5100
    %v5169 = vpack.c.bf16 %v5105, %v5101
    %v5170 = vpack.c.bf16 %v5106, %v5102
    %v5171 = vpack.c.bf16 %v5107, %v5103
    %v5172 = vpack.c.bf16 %v5112, %v5108
    %v5173 = vpack.c.bf16 %v5113, %v5109
    %v5174 = vpack.c.bf16 %v5114, %v5110
    %v5175 = vpack.c.bf16 %v5115, %v5111
    %v5176 = vpack.c.bf16 %v5120, %v5116
    %v5177 = vpack.c.bf16 %v5121, %v5117
    %v5178 = vpack.c.bf16 %v5122, %v5118
    %v5179 = vpack.c.bf16 %v5123, %v5119
    %v5180 = vpack.c.bf16 %v5128, %v5124
    %v5181 = vpack.c.bf16 %v5129, %v5125
    %v5182 = vpack.c.bf16 %v5130, %v5126
    %v5183 = vpack.c.bf16 %v5131, %v5127
    %v5184 = vpack.c.bf16 %v5136, %v5132
    %v5185 = vpack.c.bf16 %v5137, %v5133
    %v5186 = vpack.c.bf16 %v5138, %v5134
    %v5187 = vpack.c.bf16 %v5139, %v5135
    %v5188 = vpack.c.bf16 %v5144, %v5140
    %v5189 = vpack.c.bf16 %v5145, %v5141
    %v5190 = vpack.c.bf16 %v5146, %v5142
    %v5191 = vpack.c.bf16 %v5147, %v5143
    %v5192 = vpack.c.bf16 %v5152, %v5148
    %v5193 = vpack.c.bf16 %v5153, %v5149
    %v5194 = vpack.c.bf16 %v5154, %v5150
    %v5195 = vpack.c.bf16 %v5155, %v5151
    %v5196 = vpack.c.bf16 %v5160, %v5156
    %v5197 = vpack.c.bf16 %v5161, %v5157
    %v5198 = vpack.c.bf16 %v5162, %v5158
    %v5199 = vpack.c.bf16 %v5163, %v5159
    %v5200 = vld [vmem:[%s15] sm:$0xff]
    %v5201 = vld [vmem:[%s16] sm:$0xff]
    %5203 = vset.pattern.permute.xlu0 0
    %5204 = vperm.xlu0 %5203, %v5201
    %v5205 = vpop.permute.xlu0 %5204
    %v5208 = vunpack.c.l.b16 %v5200
    %v5209 = vunpack.c.h.b16 %v5200
    %v5210 = vpack.c.b16 %v5208, %v5208
    %v5211 = vpack.c.b16 %v5209, %v5209
    %v5214 = vsel %vm3377, %v5211, 0
    %5216 = vmatprep.subr.bf16.mxu0 %v5165
    %5217 = vmatpush1.bf16.msra.mxu0 %v5164
    %5218 = vmatprep.subr.bf16.mxu0 %v5169
    %5219 = vmatpush1.bf16.msra.mxu0 %v5168
    %5220 = vmatprep.subr.bf16.mxu0 %v5173
    %5221 = vmatpush1.bf16.msra.mxu0 %v5172
    %5222 = vmatprep.subr.bf16.mxu0 %v5177
    %5223 = vmatpush1.bf16.msra.mxu0 %v5176
    %5224 = vmatprep.subr.bf16.mxu0 %v5181
    %5225 = vmatpush1.bf16.msra.mxu0 %v5180
    %5226 = vmatprep.subr.bf16.mxu0 %v5185
    %5227 = vmatpush1.bf16.msra.mxu0 %v5184
    %5228 = vmatprep.subr.bf16.mxu0 %v5189
    %5229 = vmatpush1.bf16.msra.mxu0 %v5188
    %5230 = vmatprep.subr.bf16.mxu0 %v5193
    %5231 = vmatpush1.bf16.msra.mxu0 %v5192
    %5232 = vmatprep.subr.bf16.mxu0 %v5197
    %5233 = vmatpush1.bf16.msra.mxu0 %v5196
    %5234 = vmatprep.subr.bf16.mxu0 0
    %5235 = vmatpush1.bf16.msra.mxu0 0
    %5236 = vmatprep.subr.bf16.mxu0 0
    %5237 = vmatpush1.bf16.msra.mxu0 0
    %5238 = vmatprep.subr.bf16.mxu0 0
    %5239 = vmatpush1.bf16.msra.mxu0 0
    %5240 = vmatprep.subr.bf16.mxu0 0
    %5241 = vmatpush1.bf16.msra.mxu0 0
    %5242 = vmatprep.subr.bf16.mxu0 0
    %5243 = vmatpush1.bf16.msra.mxu0 0
    %5244 = vmatprep.subr.bf16.mxu0 0
    %5245 = vmatpush1.bf16.msra.mxu0 0
    %5246 = vmatprep.subr.bf16.mxu0 0
    %5247 = vmatpush1.bf16.msra.mxu0 0
    %5248 = vmatprep.mubr.bf16.mxu0 %v5214
    %5249 = vmatmul.mubr.bf16.gmra.mrb[0].mxu0 %v5210
    %v5250 = vpop.f32.mrb[0].mxu0
    %v5251 = vadd.f32 %v5205, %v5250
    %v5252 = vpop.f32.mrb[0].mxu0
    %v5253 = vadd.f32 %v5205, %v5252
    %v5254 = vpop.f32.mrb[0].mxu0
    %v5255 = vpop.f32.mrb[0].mxu0
    %5256 = vdwg.mxu0
    %5257 = vmatprep.subr.bf16.mxu0 %v5167
    %5258 = vmatpush1.bf16.msra.mxu0 %v5166
    %5259 = vmatprep.subr.bf16.mxu0 %v5171
    %5260 = vmatpush1.bf16.msra.mxu0 %v5170
    %5261 = vmatprep.subr.bf16.mxu0 %v5175
    %5262 = vmatpush1.bf16.msra.mxu0 %v5174
    %5263 = vmatprep.subr.bf16.mxu0 %v5179
    %5264 = vmatpush1.bf16.msra.mxu0 %v5178
    %5265 = vmatprep.subr.bf16.mxu0 %v5183
    %5266 = vmatpush1.bf16.msra.mxu0 %v5182
    %5267 = vmatprep.subr.bf16.mxu0 %v5187
    %5268 = vmatpush1.bf16.msra.mxu0 %v5186
    %5269 = vmatprep.subr.bf16.mxu0 %v5191
    %5270 = vmatpush1.bf16.msra.mxu0 %v5190
    %5271 = vmatprep.subr.bf16.mxu0 %v5195
    %5272 = vmatpush1.bf16.msra.mxu0 %v5194
    %5273 = vmatprep.subr.bf16.mxu0 %v5199
    %5274 = vmatpush1.bf16.msra.mxu0 %v5198
    %5275 = vmatprep.subr.bf16.mxu0 0
    %5276 = vmatpush1.bf16.msra.mxu0 0
    %5277 = vmatprep.subr.bf16.mxu0 0
    %5278 = vmatpush1.bf16.msra.mxu0 0
    %5279 = vmatprep.subr.bf16.mxu0 0
    %5280 = vmatpush1.bf16.msra.mxu0 0
    %5281 = vmatprep.subr.bf16.mxu0 0
    %5282 = vmatpush1.bf16.msra.mxu0 0
    %5283 = vmatprep.subr.bf16.mxu0 0
    %5284 = vmatpush1.bf16.msra.mxu0 0
    %5285 = vmatprep.subr.bf16.mxu0 0
    %5286 = vmatpush1.bf16.msra.mxu0 0
    %5287 = vmatprep.subr.bf16.mxu0 0
    %5288 = vmatpush1.bf16.msra.mxu0 0
    %5289 = vmatprep.mubr.bf16.mxu0 %v5214
    %5290 = vmatmul.mubr.bf16.gmra.mrb[0].mxu0 %v5210
    %v5291 = vpop.f32.mrb[0].mxu0
    %v5292 = vadd.f32 %v5205, %v5291
    %v5293 = vpop.f32.mrb[0].mxu0
    %v5294 = vadd.f32 %v5205, %v5293
    %v5295 = vpop.f32.mrb[0].mxu0
    %v5296 = vpop.f32.mrb[0].mxu0
    %5297 = vdwg.mxu0
    %v5298 = vmax.f32 %v5251, 0.0
    %v5299 = vmax.f32 %v5253, 0.0
    %v5300 = vmax.f32 %v5292, 0.0
    %v5301 = vmax.f32 %v5294, 0.0
    %5304 = vrot.lane.b32.xlu0 %v5298, 8
    %v5305 = vpop.permute.xlu0 %5304
    %5306 = vrot.lane.b32.xlu0 %v5299, 8
    %v5307 = vpop.permute.xlu0 %5306
    %v5308 = vsel %vm203, %v5305, %v5307
    %5312 = vst.msk [vmem:[#allocation7 + $0x8] sm:$0xff] %vm1680, %v5305
    %5313 = vst [vmem:[#allocation7 + $0x10] sm:$0xff] %v5308
    %5314 = vst.msk [vmem:[#allocation7 + $0x18] sm:$0xff] %vm203, %v5307
    %5317 = vrot.lane.b32.xlu0 %v5300, 24
    %v5318 = vpop.permute.xlu0 %5317
    %5319 = vrot.lane.b32.xlu0 %v5301, 24
    %v5320 = vpop.permute.xlu0 %5319
    %v5321 = vsel %vm219, %v5318, %v5320
    %5325 = vst.msk [vmem:[#allocation7 + $0x28] sm:$0xff] %vm1694, %v5318
    %5326 = vst [vmem:[#allocation7 + $0x30] sm:$0xff] %v5321
    %5327 = vst.msk [vmem:[#allocation7 + $0x38] sm:$0xff] %vm219, %v5320
    %v5328 = vld [vmem:[%s2] ss:$8 sm:$0x3]
    %v5329 = vld [vmem:[#allocation5] sm:$0xff]
    %v5330 = vld [vmem:[#allocation5 + $0x8] sm:$0xff]
    %v5331 = vld [vmem:[#allocation5 + $0x10] sm:$0xff]
    %v5333 = vlaneseq
    %v5334 = vshrl.u32 %v5333, 7
    %v5335 = vsub.s32 0, %v5334
    %v5336 = vrot.slane %v5328, %v5335
    %v5337 = vlaneseq
    %v5338 = vshrl.u32 %v5337, 7
    %v5339 = vsub.s32 1, %v5338
    %v5340 = vrot.slane %v5328, %v5339
    %5341 = vrot.lane.b32.xlu0 %v5336, 102
    %v5342 = vpop.permute.xlu0 %5341
    %5343 = vrot.lane.b32.xlu0 %v5340, 102
    %v5344 = vpop.permute.xlu0 %5343
    %v5345 = vsel %vm1715, %v5342, %v5344
    %v5349 = vmul.f32 %v5329, %v5342
    %v5350 = vmul.f32 %v5330, %v5345
    %v5351 = vmul.f32 %v5331, %v5344
    %5355 = vrot.lane.b32.xlu0 %v5349, 26
    %v5356 = vpop.permute.xlu0 %5355
    %5357 = vrot.lane.b32.xlu0 %v5350, 26
    %v5358 = vpop.permute.xlu0 %5357
    %5359 = vrot.lane.b32.xlu0 %v5351, 26
    %v5360 = vpop.permute.xlu0 %5359
    %v5361 = vsel %vm1732, %v5356, %v5358
    %v5362 = vsel %vm1732, %v5358, %v5360
    %5365 = vst [vmem:[#allocation8] sm:$0xff] %v5361
    %5366 = vst [vmem:[#allocation8 + $0x8] sm:$0xff] %v5362
    %v5367 = vld [vmem:[#allocation5 + $0x20] sm:$0xff]
    %v5368 = vld [vmem:[#allocation5 + $0x28] sm:$0xff]
    %v5369 = vld [vmem:[#allocation5 + $0x30] sm:$0xff]
    %5370 = vrot.lane.b32.xlu0 %v5336, 118
    %v5371 = vpop.permute.xlu0 %5370
    %5372 = vrot.lane.b32.xlu0 %v5340, 118
    %v5373 = vpop.permute.xlu0 %5372
    %v5374 = vsel %vm1746, %v5371, %v5373
    %v5378 = vmul.f32 %v5367, %v5371
    %v5379 = vmul.f32 %v5368, %v5374
    %v5380 = vmul.f32 %v5369, %v5373
    %5384 = vrot.lane.b32.xlu0 %v5378, 10
    %v5385 = vpop.permute.xlu0 %5384
    %5386 = vrot.lane.b32.xlu0 %v5379, 10
    %v5387 = vpop.permute.xlu0 %5386
    %5388 = vrot.lane.b32.xlu0 %v5380, 10
    %v5389 = vpop.permute.xlu0 %5388
    %v5390 = vsel %vm1763, %v5385, %v5387
    %v5391 = vsel %vm1763, %v5387, %v5389
    %5394 = vst [vmem:[#allocation8 + $0x10] sm:$0xff] %v5390
    %5395 = vst [vmem:[#allocation8 + $0x18] sm:$0xff] %v5391
    %v5396 = vld [vmem:[#allocation7] sm:$0xff]
    %v5397 = vld [vmem:[#allocation7 + $0x8] sm:$0xff]
    %v5398 = vld [vmem:[#allocation7 + $0x10] sm:$0xff]
    %v5399 = vmul.f32 %v5396, %v5342
    %v5400 = vmul.f32 %v5397, %v5345
    %v5401 = vmul.f32 %v5398, %v5344
    %5405 = vrot.lane.b32.xlu0 %v5399, 26
    %v5406 = vpop.permute.xlu0 %5405
    %5407 = vrot.lane.b32.xlu0 %v5400, 26
    %v5408 = vpop.permute.xlu0 %5407
    %5409 = vrot.lane.b32.xlu0 %v5401, 26
    %v5410 = vpop.permute.xlu0 %5409
    %v5411 = vsel %vm1732, %v5406, %v5408
    %v5412 = vsel %vm1732, %v5408, %v5410
    %5415 = vst [vmem:[#allocation8 + $0x20] sm:$0xff] %v5411
    %5416 = vst [vmem:[#allocation8 + $0x28] sm:$0xff] %v5412
    %v5417 = vld [vmem:[#allocation7 + $0x20] sm:$0xff]
    %v5418 = vld [vmem:[#allocation7 + $0x28] sm:$0xff]
    %v5419 = vld [vmem:[#allocation7 + $0x30] sm:$0xff]
    %v5420 = vmul.f32 %v5417, %v5371
    %v5421 = vmul.f32 %v5418, %v5374
    %v5422 = vmul.f32 %v5419, %v5373
    %5426 = vrot.lane.b32.xlu0 %v5420, 10
    %v5427 = vpop.permute.xlu0 %5426
    %5428 = vrot.lane.b32.xlu0 %v5421, 10
    %v5429 = vpop.permute.xlu0 %5428
    %5430 = vrot.lane.b32.xlu0 %v5422, 10
    %v5431 = vpop.permute.xlu0 %5430
    %v5432 = vsel %vm1763, %v5427, %v5429
    %v5433 = vsel %vm1763, %v5429, %v5431
    %5436 = vst [vmem:[#allocation8 + $0x30] sm:$0xff] %v5432
    %5437 = vst [vmem:[#allocation8 + $0x38] sm:$0xff] %v5433
    %v5438 = vld [vmem:[%s1770] ss:$8 sm:$0x3]
    %v5439 = vld [vmem:[#allocation5] sm:$0xff]
    %v5440 = vld [vmem:[#allocation5 + $0x8] sm:$0xff]
    %v5441 = vld [vmem:[#allocation5 + $0x10] sm:$0xff]
    %v5443 = vlaneseq
    %v5444 = vshrl.u32 %v5443, 7
    %v5445 = vsub.s32 0, %v5444
    %v5446 = vrot.slane %v5438, %v5445
    %v5447 = vlaneseq
    %v5448 = vshrl.u32 %v5447, 7
    %v5449 = vsub.s32 1, %v5448
    %v5450 = vrot.slane %v5438, %v5449
    %5451 = vrot.lane.b32.xlu0 %v5446, 104
    %v5452 = vpop.permute.xlu0 %5451
    %5453 = vrot.lane.b32.xlu0 %v5450, 104
    %v5454 = vpop.permute.xlu0 %5453
    %v5455 = vsel %vm542, %v5452, %v5454
    %v5459 = vmul.f32 %v5439, %v5452
    %v5460 = vmul.f32 %v5440, %v5455
    %v5461 = vmul.f32 %v5441, %v5454
    %5465 = vrot.lane.b32.xlu0 %v5459, 24
    %v5466 = vpop.permute.xlu0 %5465
    %5467 = vrot.lane.b32.xlu0 %v5460, 24
    %v5468 = vpop.permute.xlu0 %5467
    %5469 = vrot.lane.b32.xlu0 %v5461, 24
    %v5470 = vpop.permute.xlu0 %5469
    %v5471 = vsel %vm219, %v5466, %v5468
    %v5472 = vsel %vm219, %v5468, %v5470
    %5475 = vst [vmem:[#allocation8 + $0x40] sm:$0xff] %v5471
    %5476 = vst [vmem:[#allocation8 + $0x48] sm:$0xff] %v5472
    %v5477 = vld [vmem:[#allocation5 + $0x20] sm:$0xff]
    %v5478 = vld [vmem:[#allocation5 + $0x28] sm:$0xff]
    %v5479 = vld [vmem:[#allocation5 + $0x30] sm:$0xff]
    %5480 = vrot.lane.b32.xlu0 %v5446, 120
    %v5481 = vpop.permute.xlu0 %5480
    %5482 = vrot.lane.b32.xlu0 %v5450, 120
    %v5483 = vpop.permute.xlu0 %5482
    %v5484 = vsel %vm310, %v5481, %v5483
    %v5488 = vmul.f32 %v5477, %v5481
    %v5489 = vmul.f32 %v5478, %v5484
    %v5490 = vmul.f32 %v5479, %v5483
    %5494 = vrot.lane.b32.xlu0 %v5488, 8
    %v5495 = vpop.permute.xlu0 %5494
    %5496 = vrot.lane.b32.xlu0 %v5489, 8
    %v5497 = vpop.permute.xlu0 %5496
    %5498 = vrot.lane.b32.xlu0 %v5490, 8
    %v5499 = vpop.permute.xlu0 %5498
    %v5500 = vsel %vm203, %v5495, %v5497
    %v5501 = vsel %vm203, %v5497, %v5499
    %5504 = vst [vmem:[#allocation8 + $0x50] sm:$0xff] %v5500
    %5505 = vst [vmem:[#allocation8 + $0x58] sm:$0xff] %v5501
    %v5506 = vld [vmem:[#allocation7] sm:$0xff]
    %v5507 = vld [vmem:[#allocation7 + $0x8] sm:$0xff]
    %v5508 = vld [vmem:[#allocation7 + $0x10] sm:$0xff]
    %v5509 = vmul.f32 %v5506, %v5452
    %v5510 = vmul.f32 %v5507, %v5455
    %v5511 = vmul.f32 %v5508, %v5454
    %5515 = vrot.lane.b32.xlu0 %v5509, 24
    %v5516 = vpop.permute.xlu0 %5515
    %5517 = vrot.lane.b32.xlu0 %v5510, 24
    %v5518 = vpop.permute.xlu0 %5517
    %5519 = vrot.lane.b32.xlu0 %v5511, 24
    %v5520 = vpop.permute.xlu0 %5519
    %v5521 = vsel %vm219, %v5516, %v5518
    %v5522 = vsel %vm219, %v5518, %v5520
    %5525 = vst [vmem:[#allocation8 + $0x60] sm:$0xff] %v5521
    %5526 = vst [vmem:[#allocation8 + $0x68] sm:$0xff] %v5522
    %v5527 = vld [vmem:[#allocation7 + $0x20] sm:$0xff]
    %v5528 = vld [vmem:[#allocation7 + $0x28] sm:$0xff]
    %v5529 = vld [vmem:[#allocation7 + $0x30] sm:$0xff]
    %v5530 = vmul.f32 %v5527, %v5481
    %v5531 = vmul.f32 %v5528, %v5484
    %v5532 = vmul.f32 %v5529, %v5483
    %5536 = vrot.lane.b32.xlu0 %v5530, 8
    %v5537 = vpop.permute.xlu0 %5536
    %5538 = vrot.lane.b32.xlu0 %v5531, 8
    %v5539 = vpop.permute.xlu0 %5538
    %5540 = vrot.lane.b32.xlu0 %v5532, 8
    %v5541 = vpop.permute.xlu0 %5540
    %v5542 = vsel %vm203, %v5537, %v5539
    %v5543 = vsel %vm203, %v5539, %v5541
    %5546 = vst [vmem:[#allocation8 + $0x70] sm:$0xff] %v5542
    %5547 = vst [vmem:[#allocation8 + $0x78] sm:$0xff] %v5543
    %v5548 = vld [vmem:[%s1839] ss:$8 sm:$0x3]
    %v5549 = vld [vmem:[#allocation5] sm:$0xff]
    %v5550 = vld [vmem:[#allocation5 + $0x8] sm:$0xff]
    %v5551 = vld [vmem:[#allocation5 + $0x10] sm:$0xff]
    %v5553 = vlaneseq
    %v5554 = vshrl.u32 %v5553, 7
    %v5555 = vsub.s32 0, %v5554
    %v5556 = vrot.slane %v5548, %v5555
    %v5557 = vlaneseq
    %v5558 = vshrl.u32 %v5557, 7
    %v5559 = vsub.s32 1, %v5558
    %v5560 = vrot.slane %v5548, %v5559
    %5561 = vrot.lane.b32.xlu0 %v5556, 106
    %v5562 = vpop.permute.xlu0 %5561
    %5563 = vrot.lane.b32.xlu0 %v5560, 106
    %v5564 = vpop.permute.xlu0 %5563
    %v5565 = vsel %vm1857, %v5562, %v5564
    %v5569 = vmul.f32 %v5549, %v5562
    %v5570 = vmul.f32 %v5550, %v5565
    %v5571 = vmul.f32 %v5551, %v5564
    %5575 = vrot.lane.b32.xlu0 %v5569, 22
    %v5576 = vpop.permute.xlu0 %5575
    %5577 = vrot.lane.b32.xlu0 %v5570, 22
    %v5578 = vpop.permute.xlu0 %5577
    %5579 = vrot.lane.b32.xlu0 %v5571, 22
    %v5580 = vpop.permute.xlu0 %5579
    %v5581 = vsel %vm1874, %v5576, %v5578
    %v5582 = vsel %vm1874, %v5578, %v5580
    %5585 = vst [vmem:[#allocation8 + $0x80] sm:$0xff] %v5581
    %5586 = vst [vmem:[#allocation8 + $0x88] sm:$0xff] %v5582
    %v5587 = vld [vmem:[#allocation5 + $0x20] sm:$0xff]
    %v5588 = vld [vmem:[#allocation5 + $0x28] sm:$0xff]
    %v5589 = vld [vmem:[#allocation5 + $0x30] sm:$0xff]
    %5590 = vrot.lane.b32.xlu0 %v5556, 122
    %v5591 = vpop.permute.xlu0 %5590
    %5592 = vrot.lane.b32.xlu0 %v5560, 122
    %v5593 = vpop.permute.xlu0 %5592
    %v5594 = vsel %vm1888, %v5591, %v5593
    %v5598 = vmul.f32 %v5587, %v5591
    %v5599 = vmul.f32 %v5588, %v5594
    %v5600 = vmul.f32 %v5589, %v5593
    %5604 = vrot.lane.b32.xlu0 %v5598, 6
    %v5605 = vpop.permute.xlu0 %5604
    %5606 = vrot.lane.b32.xlu0 %v5599, 6
    %v5607 = vpop.permute.xlu0 %5606
    %5608 = vrot.lane.b32.xlu0 %v5600, 6
    %v5609 = vpop.permute.xlu0 %5608
    %v5610 = vsel %vm1905, %v5605, %v5607
    %v5611 = vsel %vm1905, %v5607, %v5609
    %5614 = vst [vmem:[#allocation8 + $0x90] sm:$0xff] %v5610
    %5615 = vst [vmem:[#allocation8 + $0x98] sm:$0xff] %v5611
    %v5616 = vld [vmem:[#allocation7] sm:$0xff]
    %v5617 = vld [vmem:[#allocation7 + $0x8] sm:$0xff]
    %v5618 = vld [vmem:[#allocation7 + $0x10] sm:$0xff]
    %v5619 = vmul.f32 %v5616, %v5562
    %v5620 = vmul.f32 %v5617, %v5565
    %v5621 = vmul.f32 %v5618, %v5564
    %5625 = vrot.lane.b32.xlu0 %v5619, 22
    %v5626 = vpop.permute.xlu0 %5625
    %5627 = vrot.lane.b32.xlu0 %v5620, 22
    %v5628 = vpop.permute.xlu0 %5627
    %5629 = vrot.lane.b32.xlu0 %v5621, 22
    %v5630 = vpop.permute.xlu0 %5629
    %v5631 = vsel %vm1874, %v5626, %v5628
    %v5632 = vsel %vm1874, %v5628, %v5630
    %5635 = vst [vmem:[#allocation8 + $0xa0] sm:$0xff] %v5631
    %5636 = vst [vmem:[#allocation8 + $0xa8] sm:$0xff] %v5632
    %v5637 = vld [vmem:[#allocation7 + $0x20] sm:$0xff]
    %v5638 = vld [vmem:[#allocation7 + $0x28] sm:$0xff]
    %v5639 = vld [vmem:[#allocation7 + $0x30] sm:$0xff]
    %v5640 = vmul.f32 %v5637, %v5591
    %v5641 = vmul.f32 %v5638, %v5594
    %v5642 = vmul.f32 %v5639, %v5593
    %5646 = vrot.lane.b32.xlu0 %v5640, 6
    %v5647 = vpop.permute.xlu0 %5646
    %5648 = vrot.lane.b32.xlu0 %v5641, 6
    %v5649 = vpop.permute.xlu0 %5648
    %5650 = vrot.lane.b32.xlu0 %v5642, 6
    %v5651 = vpop.permute.xlu0 %5650
    %v5652 = vsel %vm1905, %v5647, %v5649
    %v5653 = vsel %vm1905, %v5649, %v5651
    %5656 = vst [vmem:[#allocation8 + $0xb0] sm:$0xff] %v5652
    %5657 = vst [vmem:[#allocation8 + $0xb8] sm:$0xff] %v5653
    %v5658 = vld [vmem:[%s1912] ss:$8 sm:$0x3]
    %v5659 = vld [vmem:[#allocation5 + $0x8] sm:$0xff]
    %v5660 = vld [vmem:[#allocation5 + $0x10] sm:$0xff]
    %v5661 = vld [vmem:[#allocation5 + $0x18] sm:$0xff]
    %v5663 = vlaneseq
    %v5664 = vshrl.u32 %v5663, 7
    %v5665 = vsub.s32 0, %v5664
    %v5666 = vrot.slane %v5658, %v5665
    %v5667 = vlaneseq
    %v5668 = vshrl.u32 %v5667, 7
    %v5669 = vsub.s32 1, %v5668
    %v5670 = vrot.slane %v5658, %v5669
    %5671 = vrot.lane.b32.xlu0 %v5666, 6
    %v5672 = vpop.permute.xlu0 %5671
    %5673 = vrot.lane.b32.xlu0 %v5670, 6
    %v5674 = vpop.permute.xlu0 %5673
    %v5675 = vsel %vm1905, %v5672, %v5674
    %v5679 = vmul.f32 %v5659, %v5672
    %v5680 = vmul.f32 %v5660, %v5675
    %v5681 = vmul.f32 %v5661, %v5674
    %5685 = vrot.lane.b32.xlu0 %v5679, 122
    %v5686 = vpop.permute.xlu0 %5685
    %5687 = vrot.lane.b32.xlu0 %v5680, 122
    %v5688 = vpop.permute.xlu0 %5687
    %5689 = vrot.lane.b32.xlu0 %v5681, 122
    %v5690 = vpop.permute.xlu0 %5689
    %v5691 = vsel %vm1888, %v5686, %v5688
    %v5692 = vsel %vm1888, %v5688, %v5690
    %5695 = vst [vmem:[#allocation8 + $0xc0] sm:$0xff] %v5691
    %5696 = vst [vmem:[#allocation8 + $0xc8] sm:$0xff] %v5692
    %v5697 = vld [vmem:[#allocation5 + $0x28] sm:$0xff]
    %v5698 = vld [vmem:[#allocation5 + $0x30] sm:$0xff]
    %v5699 = vld [vmem:[#allocation5 + $0x38] sm:$0xff]
    %5700 = vrot.lane.b32.xlu0 %v5666, 22
    %v5701 = vpop.permute.xlu0 %5700
    %5702 = vrot.lane.b32.xlu0 %v5670, 22
    %v5703 = vpop.permute.xlu0 %5702
    %v5704 = vsel %vm1874, %v5701, %v5703
    %v5708 = vmul.f32 %v5697, %v5701
    %v5709 = vmul.f32 %v5698, %v5704
    %v5710 = vmul.f32 %v5699, %v5703
    %5714 = vrot.lane.b32.xlu0 %v5708, 106
    %v5715 = vpop.permute.xlu0 %5714
    %5716 = vrot.lane.b32.xlu0 %v5709, 106
    %v5717 = vpop.permute.xlu0 %5716
    %5718 = vrot.lane.b32.xlu0 %v5710, 106
    %v5719 = vpop.permute.xlu0 %5718
    %v5720 = vsel %vm1857, %v5715, %v5717
    %v5721 = vsel %vm1857, %v5717, %v5719
    %5724 = vst [vmem:[#allocation8 + $0xd0] sm:$0xff] %v5720
    %5725 = vst [vmem:[#allocation8 + $0xd8] sm:$0xff] %v5721
    %v5726 = vld [vmem:[#allocation7 + $0x8] sm:$0xff]
    %v5727 = vld [vmem:[#allocation7 + $0x10] sm:$0xff]
    %v5728 = vld [vmem:[#allocation7 + $0x18] sm:$0xff]
    %v5729 = vmul.f32 %v5726, %v5672
    %v5730 = vmul.f32 %v5727, %v5675
    %v5731 = vmul.f32 %v5728, %v5674
    %5735 = vrot.lane.b32.xlu0 %v5729, 122
    %v5736 = vpop.permute.xlu0 %5735
    %5737 = vrot.lane.b32.xlu0 %v5730, 122
    %v5738 = vpop.permute.xlu0 %5737
    %5739 = vrot.lane.b32.xlu0 %v5731, 122
    %v5740 = vpop.permute.xlu0 %5739
    %v5741 = vsel %vm1888, %v5736, %v5738
    %v5742 = vsel %vm1888, %v5738, %v5740
    %5745 = vst [vmem:[#allocation8 + $0xe0] sm:$0xff] %v5741
    %5746 = vst [vmem:[#allocation8 + $0xe8] sm:$0xff] %v5742
    %v5747 = vld [vmem:[#allocation7 + $0x28] sm:$0xff]
    %v5748 = vld [vmem:[#allocation7 + $0x30] sm:$0xff]
    %v5749 = vld [vmem:[#allocation7 + $0x38] sm:$0xff]
    %v5750 = vmul.f32 %v5747, %v5701
    %v5751 = vmul.f32 %v5748, %v5704
    %v5752 = vmul.f32 %v5749, %v5703
    %5756 = vrot.lane.b32.xlu0 %v5750, 106
    %v5757 = vpop.permute.xlu0 %5756
    %5758 = vrot.lane.b32.xlu0 %v5751, 106
    %v5759 = vpop.permute.xlu0 %5758
    %5760 = vrot.lane.b32.xlu0 %v5752, 106
    %v5761 = vpop.permute.xlu0 %5760
    %v5762 = vsel %vm1857, %v5757, %v5759
    %v5763 = vsel %vm1857, %v5759, %v5761
    %5766 = vst [vmem:[#allocation8 + $0xf0] sm:$0xff] %v5762
    %5767 = vst [vmem:[#allocation8 + $0xf8] sm:$0xff] %v5763
    %v5768 = vld [vmem:[%s1981] ss:$8 sm:$0x3]
    %v5769 = vld [vmem:[#allocation5 + $0x8] sm:$0xff]
    %v5770 = vld [vmem:[#allocation5 + $0x10] sm:$0xff]
    %v5771 = vld [vmem:[#allocation5 + $0x18] sm:$0xff]
    %v5773 = vlaneseq
    %v5774 = vshrl.u32 %v5773, 7
    %v5775 = vsub.s32 0, %v5774
    %v5776 = vrot.slane %v5768, %v5775
    %v5777 = vlaneseq
    %v5778 = vshrl.u32 %v5777, 7
    %v5779 = vsub.s32 1, %v5778
    %v5780 = vrot.slane %v5768, %v5779
    %5781 = vrot.lane.b32.xlu0 %v5776, 8
    %v5782 = vpop.permute.xlu0 %5781
    %5783 = vrot.lane.b32.xlu0 %v5780, 8
    %v5784 = vpop.permute.xlu0 %5783
    %v5785 = vsel %vm203, %v5782, %v5784
    %v5789 = vmul.f32 %v5769, %v5782
    %v5790 = vmul.f32 %v5770, %v5785
    %v5791 = vmul.f32 %v5771, %v5784
    %5795 = vrot.lane.b32.xlu0 %v5789, 120
    %v5796 = vpop.permute.xlu0 %5795
    %5797 = vrot.lane.b32.xlu0 %v5790, 120
    %v5798 = vpop.permute.xlu0 %5797
    %5799 = vrot.lane.b32.xlu0 %v5791, 120
    %v5800 = vpop.permute.xlu0 %5799
    %v5801 = vsel %vm310, %v5796, %v5798
    %v5802 = vsel %vm310, %v5798, %v5800
    %5805 = vst [vmem:[#allocation8 + $0x100] sm:$0xff] %v5801
    %5806 = vst [vmem:[#allocation8 + $0x108] sm:$0xff] %v5802
    %v5807 = vld [vmem:[#allocation5 + $0x28] sm:$0xff]
    %v5808 = vld [vmem:[#allocation5 + $0x30] sm:$0xff]
    %v5809 = vld [vmem:[#allocation5 + $0x38] sm:$0xff]
    %5810 = vrot.lane.b32.xlu0 %v5776, 24
    %v5811 = vpop.permute.xlu0 %5810
    %5812 = vrot.lane.b32.xlu0 %v5780, 24
    %v5813 = vpop.permute.xlu0 %5812
    %v5814 = vsel %vm219, %v5811, %v5813
    %v5818 = vmul.f32 %v5807, %v5811
    %v5819 = vmul.f32 %v5808, %v5814
    %v5820 = vmul.f32 %v5809, %v5813
    %5824 = vrot.lane.b32.xlu0 %v5818, 104
    %v5825 = vpop.permute.xlu0 %5824
    %5826 = vrot.lane.b32.xlu0 %v5819, 104
    %v5827 = vpop.permute.xlu0 %5826
    %5828 = vrot.lane.b32.xlu0 %v5820, 104
    %v5829 = vpop.permute.xlu0 %5828
    %v5830 = vsel %vm542, %v5825, %v5827
    %v5831 = vsel %vm542, %v5827, %v5829
    %5834 = vst [vmem:[#allocation8 + $0x110] sm:$0xff] %v5830
    %5835 = vst [vmem:[#allocation8 + $0x118] sm:$0xff] %v5831
    %v5836 = vld [vmem:[#allocation7 + $0x8] sm:$0xff]
    %v5837 = vld [vmem:[#allocation7 + $0x10] sm:$0xff]
    %v5838 = vld [vmem:[#allocation7 + $0x18] sm:$0xff]
    %v5839 = vmul.f32 %v5836, %v5782
    %v5840 = vmul.f32 %v5837, %v5785
    %v5841 = vmul.f32 %v5838, %v5784
    %5845 = vrot.lane.b32.xlu0 %v5839, 120
    %v5846 = vpop.permute.xlu0 %5845
    %5847 = vrot.lane.b32.xlu0 %v5840, 120
    %v5848 = vpop.permute.xlu0 %5847
    %5849 = vrot.lane.b32.xlu0 %v5841, 120
    %v5850 = vpop.permute.xlu0 %5849
    %v5851 = vsel %vm310, %v5846, %v5848
    %v5852 = vsel %vm310, %v5848, %v5850
    %5855 = vst [vmem:[#allocation8 + $0x120] sm:$0xff] %v5851
    %5856 = vst [vmem:[#allocation8 + $0x128] sm:$0xff] %v5852
    %v5857 = vld [vmem:[#allocation7 + $0x28] sm:$0xff]
    %v5858 = vld [vmem:[#allocation7 + $0x30] sm:$0xff]
    %v5859 = vld [vmem:[#allocation7 + $0x38] sm:$0xff]
    %v5860 = vmul.f32 %v5857, %v5811
    %v5861 = vmul.f32 %v5858, %v5814
    %v5862 = vmul.f32 %v5859, %v5813
    %5866 = vrot.lane.b32.xlu0 %v5860, 104
    %v5867 = vpop.permute.xlu0 %5866
    %5868 = vrot.lane.b32.xlu0 %v5861, 104
    %v5869 = vpop.permute.xlu0 %5868
    %5870 = vrot.lane.b32.xlu0 %v5862, 104
    %v5871 = vpop.permute.xlu0 %5870
    %v5872 = vsel %vm542, %v5867, %v5869
    %v5873 = vsel %vm542, %v5869, %v5871
    %5876 = vst [vmem:[#allocation8 + $0x130] sm:$0xff] %v5872
    %5877 = vst [vmem:[#allocation8 + $0x138] sm:$0xff] %v5873
    %v5878 = vld [vmem:[%s2050] ss:$8 sm:$0x3]
    %v5879 = vld [vmem:[#allocation5 + $0x8] sm:$0xff]
    %v5880 = vld [vmem:[#allocation5 + $0x10] sm:$0xff]
    %v5881 = vld [vmem:[#allocation5 + $0x18] sm:$0xff]
    %v5883 = vlaneseq
    %v5884 = vshrl.u32 %v5883, 7
    %v5885 = vsub.s32 0, %v5884
    %v5886 = vrot.slane %v5878, %v5885
    %v5887 = vlaneseq
    %v5888 = vshrl.u32 %v5887, 7
    %v5889 = vsub.s32 1, %v5888
    %v5890 = vrot.slane %v5878, %v5889
    %5891 = vrot.lane.b32.xlu0 %v5886, 10
    %v5892 = vpop.permute.xlu0 %5891
    %5893 = vrot.lane.b32.xlu0 %v5890, 10
    %v5894 = vpop.permute.xlu0 %5893
    %v5895 = vsel %vm1763, %v5892, %v5894
    %v5899 = vmul.f32 %v5879, %v5892
    %v5900 = vmul.f32 %v5880, %v5895
    %v5901 = vmul.f32 %v5881, %v5894
    %5905 = vrot.lane.b32.xlu0 %v5899, 118
    %v5906 = vpop.permute.xlu0 %5905
    %5907 = vrot.lane.b32.xlu0 %v5900, 118
    %v5908 = vpop.permute.xlu0 %5907
    %5909 = vrot.lane.b32.xlu0 %v5901, 118
    %v5910 = vpop.permute.xlu0 %5909
    %v5911 = vsel %vm1746, %v5906, %v5908
    %v5912 = vsel %vm1746, %v5908, %v5910
    %5915 = vst [vmem:[#allocation8 + $0x140] sm:$0xff] %v5911
    %5916 = vst [vmem:[#allocation8 + $0x148] sm:$0xff] %v5912
    %v5917 = vld [vmem:[#allocation5 + $0x28] sm:$0xff]
    %v5918 = vld [vmem:[#allocation5 + $0x30] sm:$0xff]
    %v5919 = vld [vmem:[#allocation5 + $0x38] sm:$0xff]
    %5920 = vrot.lane.b32.xlu0 %v5886, 26
    %v5921 = vpop.permute.xlu0 %5920
    %5922 = vrot.lane.b32.xlu0 %v5890, 26
    %v5923 = vpop.permute.xlu0 %5922
    %v5924 = vsel %vm1732, %v5921, %v5923
    %v5928 = vmul.f32 %v5917, %v5921
    %v5929 = vmul.f32 %v5918, %v5924
    %v5930 = vmul.f32 %v5919, %v5923
    %5934 = vrot.lane.b32.xlu0 %v5928, 102
    %v5935 = vpop.permute.xlu0 %5934
    %5936 = vrot.lane.b32.xlu0 %v5929, 102
    %v5937 = vpop.permute.xlu0 %5936
    %5938 = vrot.lane.b32.xlu0 %v5930, 102
    %v5939 = vpop.permute.xlu0 %5938
    %v5940 = vsel %vm1715, %v5935, %v5937
    %v5941 = vsel %vm1715, %v5937, %v5939
    %5944 = vst [vmem:[#allocation8 + $0x150] sm:$0xff] %v5940
    %5945 = vst [vmem:[#allocation8 + $0x158] sm:$0xff] %v5941
    %v5946 = vld [vmem:[#allocation7 + $0x8] sm:$0xff]
    %v5947 = vld [vmem:[#allocation7 + $0x10] sm:$0xff]
    %v5948 = vld [vmem:[#allocation7 + $0x18] sm:$0xff]
    %v5949 = vmul.f32 %v5946, %v5892
    %v5950 = vmul.f32 %v5947, %v5895
    %v5951 = vmul.f32 %v5948, %v5894
    %5955 = vrot.lane.b32.xlu0 %v5949, 118
    %v5956 = vpop.permute.xlu0 %5955
    %5957 = vrot.lane.b32.xlu0 %v5950, 118
    %v5958 = vpop.permute.xlu0 %5957
    %5959 = vrot.lane.b32.xlu0 %v5951, 118
    %v5960 = vpop.permute.xlu0 %5959
    %v5961 = vsel %vm1746, %v5956, %v5958
    %v5962 = vsel %vm1746, %v5958, %v5960
    %5965 = vst [vmem:[#allocation8 + $0x160] sm:$0xff] %v5961
    %5966 = vst [vmem:[#allocation8 + $0x168] sm:$0xff] %v5962
    %v5967 = vld [vmem:[#allocation7 + $0x28] sm:$0xff]
    %v5968 = vld [vmem:[#allocation7 + $0x30] sm:$0xff]
    %v5969 = vld [vmem:[#allocation7 + $0x38] sm:$0xff]
    %v5970 = vmul.f32 %v5967, %v5921
    %v5971 = vmul.f32 %v5968, %v5924
    %v5972 = vmul.f32 %v5969, %v5923
    %5976 = vrot.lane.b32.xlu0 %v5970, 102
    %v5977 = vpop.permute.xlu0 %5976
    %5978 = vrot.lane.b32.xlu0 %v5971, 102
    %v5979 = vpop.permute.xlu0 %5978
    %5980 = vrot.lane.b32.xlu0 %v5972, 102
    %v5981 = vpop.permute.xlu0 %5980
    %v5982 = vsel %vm1715, %v5977, %v5979
    %v5983 = vsel %vm1715, %v5979, %v5981
    %5986 = vst [vmem:[#allocation8 + $0x170] sm:$0xff] %v5982
    %5987 = vst [vmem:[#allocation8 + $0x178] sm:$0xff] %v5983
    %v5988 = vld [vmem:[%s2119] ss:$8 sm:$0x3]
    %v5989 = vld [vmem:[#allocation5 + $0x8] sm:$0xff]
    %v5990 = vld [vmem:[#allocation5 + $0x10] sm:$0xff]
    %v5991 = vld [vmem:[#allocation5 + $0x18] sm:$0xff]
    %v5993 = vlaneseq
    %v5994 = vshrl.u32 %v5993, 7
    %v5995 = vsub.s32 0, %v5994
    %v5996 = vrot.slane %v5988, %v5995
    %v5997 = vlaneseq
    %v5998 = vshrl.u32 %v5997, 7
    %v5999 = vsub.s32 1, %v5998
    %v6000 = vrot.slane %v5988, %v5999
    %6001 = vrot.lane.b32.xlu0 %v5996, 38
    %v6002 = vpop.permute.xlu0 %6001
    %6003 = vrot.lane.b32.xlu0 %v6000, 38
    %v6004 = vpop.permute.xlu0 %6003
    %v6005 = vsel %vm2137, %v6002, %v6004
    %v6009 = vmul.f32 %v5989, %v6002
    %v6010 = vmul.f32 %v5990, %v6005
    %v6011 = vmul.f32 %v5991, %v6004
    %6015 = vrot.lane.b32.xlu0 %v6009, 90
    %v6016 = vpop.permute.xlu0 %6015
    %6017 = vrot.lane.b32.xlu0 %v6010, 90
    %v6018 = vpop.permute.xlu0 %6017
    %6019 = vrot.lane.b32.xlu0 %v6011, 90
    %v6020 = vpop.permute.xlu0 %6019
    %v6021 = vsel %vm2154, %v6016, %v6018
    %v6022 = vsel %vm2154, %v6018, %v6020
    %6025 = vst [vmem:[#allocation8 + $0x180] sm:$0xff] %v6021
    %6026 = vst [vmem:[#allocation8 + $0x188] sm:$0xff] %v6022
    %v6027 = vld [vmem:[#allocation5 + $0x28] sm:$0xff]
    %v6028 = vld [vmem:[#allocation5 + $0x30] sm:$0xff]
    %v6029 = vld [vmem:[#allocation5 + $0x38] sm:$0xff]
    %6030 = vrot.lane.b32.xlu0 %v5996, 54
    %v6031 = vpop.permute.xlu0 %6030
    %6032 = vrot.lane.b32.xlu0 %v6000, 54
    %v6033 = vpop.permute.xlu0 %6032
    %v6034 = vsel %vm2168, %v6031, %v6033
    %v6038 = vmul.f32 %v6027, %v6031
    %v6039 = vmul.f32 %v6028, %v6034
    %v6040 = vmul.f32 %v6029, %v6033
    %6044 = vrot.lane.b32.xlu0 %v6038, 74
    %v6045 = vpop.permute.xlu0 %6044
    %6046 = vrot.lane.b32.xlu0 %v6039, 74
    %v6047 = vpop.permute.xlu0 %6046
    %6048 = vrot.lane.b32.xlu0 %v6040, 74
    %v6049 = vpop.permute.xlu0 %6048
    %v6050 = vsel %vm2185, %v6045, %v6047
    %v6051 = vsel %vm2185, %v6047, %v6049
    %6054 = vst [vmem:[#allocation8 + $0x190] sm:$0xff] %v6050
    %6055 = vst [vmem:[#allocation8 + $0x198] sm:$0xff] %v6051
    %v6056 = vld [vmem:[#allocation7 + $0x8] sm:$0xff]
    %v6057 = vld [vmem:[#allocation7 + $0x10] sm:$0xff]
    %v6058 = vld [vmem:[#allocation7 + $0x18] sm:$0xff]
    %v6059 = vmul.f32 %v6056, %v6002
    %v6060 = vmul.f32 %v6057, %v6005
    %v6061 = vmul.f32 %v6058, %v6004
    %6065 = vrot.lane.b32.xlu0 %v6059, 90
    %v6066 = vpop.permute.xlu0 %6065
    %6067 = vrot.lane.b32.xlu0 %v6060, 90
    %v6068 = vpop.permute.xlu0 %6067
    %6069 = vrot.lane.b32.xlu0 %v6061, 90
    %v6070 = vpop.permute.xlu0 %6069
    %v6071 = vsel %vm2154, %v6066, %v6068
    %v6072 = vsel %vm2154, %v6068, %v6070
    %6075 = vst [vmem:[#allocation8 + $0x1a0] sm:$0xff] %v6071
    %6076 = vst [vmem:[#allocation8 + $0x1a8] sm:$0xff] %v6072
    %v6077 = vld [vmem:[#allocation7 + $0x28] sm:$0xff]
    %v6078 = vld [vmem:[#allocation7 + $0x30] sm:$0xff]
    %v6079 = vld [vmem:[#allocation7 + $0x38] sm:$0xff]
    %v6080 = vmul.f32 %v6077, %v6031
    %v6081 = vmul.f32 %v6078, %v6034
    %v6082 = vmul.f32 %v6079, %v6033
    %6086 = vrot.lane.b32.xlu0 %v6080, 74
    %v6087 = vpop.permute.xlu0 %6086
    %6088 = vrot.lane.b32.xlu0 %v6081, 74
    %v6089 = vpop.permute.xlu0 %6088
    %6090 = vrot.lane.b32.xlu0 %v6082, 74
    %v6091 = vpop.permute.xlu0 %6090
    %v6092 = vsel %vm2185, %v6087, %v6089
    %v6093 = vsel %vm2185, %v6089, %v6091
    %6096 = vst [vmem:[#allocation8 + $0x1b0] sm:$0xff] %v6092
    %6097 = vst [vmem:[#allocation8 + $0x1b8] sm:$0xff] %v6093
    %v6098 = vld [vmem:[%s2192] ss:$8 sm:$0x3]
    %v6099 = vld [vmem:[#allocation5 + $0x8] sm:$0xff]
    %v6100 = vld [vmem:[#allocation5 + $0x10] sm:$0xff]
    %v6101 = vld [vmem:[#allocation5 + $0x18] sm:$0xff]
    %v6103 = vlaneseq
    %v6104 = vshrl.u32 %v6103, 7
    %v6105 = vsub.s32 0, %v6104
    %v6106 = vrot.slane %v6098, %v6105
    %v6107 = vlaneseq
    %v6108 = vshrl.u32 %v6107, 7
    %v6109 = vsub.s32 1, %v6108
    %v6110 = vrot.slane %v6098, %v6109
    %6111 = vrot.lane.b32.xlu0 %v6106, 40
    %v6112 = vpop.permute.xlu0 %6111
    %6113 = vrot.lane.b32.xlu0 %v6110, 40
    %v6114 = vpop.permute.xlu0 %6113
    %v6115 = vsel %vm722, %v6112, %v6114
    %v6119 = vmul.f32 %v6099, %v6112
    %v6120 = vmul.f32 %v6100, %v6115
    %v6121 = vmul.f32 %v6101, %v6114
    %6125 = vrot.lane.b32.xlu0 %v6119, 88
    %v6126 = vpop.permute.xlu0 %6125
    %6127 = vrot.lane.b32.xlu0 %v6120, 88
    %v6128 = vpop.permute.xlu0 %6127
    %6129 = vrot.lane.b32.xlu0 %v6121, 88
    %v6130 = vpop.permute.xlu0 %6129
    %v6131 = vsel %vm738, %v6126, %v6128
    %v6132 = vsel %vm738, %v6128, %v6130
    %6135 = vst [vmem:[#allocation8 + $0x1c0] sm:$0xff] %v6131
    %6136 = vst [vmem:[#allocation8 + $0x1c8] sm:$0xff] %v6132
    %v6137 = vld [vmem:[#allocation5 + $0x28] sm:$0xff]
    %v6138 = vld [vmem:[#allocation5 + $0x30] sm:$0xff]
    %v6139 = vld [vmem:[#allocation5 + $0x38] sm:$0xff]
    %6140 = vrot.lane.b32.xlu0 %v6106, 56
    %v6141 = vpop.permute.xlu0 %6140
    %6142 = vrot.lane.b32.xlu0 %v6110, 56
    %v6143 = vpop.permute.xlu0 %6142
    %v6144 = vsel %vm2239, %v6141, %v6143
    %v6148 = vmul.f32 %v6137, %v6141
    %v6149 = vmul.f32 %v6138, %v6144
    %v6150 = vmul.f32 %v6139, %v6143
    %6154 = vrot.lane.b32.xlu0 %v6148, 72
    %v6155 = vpop.permute.xlu0 %6154
    %6156 = vrot.lane.b32.xlu0 %v6149, 72
    %v6157 = vpop.permute.xlu0 %6156
    %6158 = vrot.lane.b32.xlu0 %v6150, 72
    %v6159 = vpop.permute.xlu0 %6158
    %v6160 = vsel %vm2256, %v6155, %v6157
    %v6161 = vsel %vm2256, %v6157, %v6159
    %6164 = vst [vmem:[#allocation8 + $0x1d0] sm:$0xff] %v6160
    %6165 = vst [vmem:[#allocation8 + $0x1d8] sm:$0xff] %v6161
    %v6166 = vld [vmem:[#allocation7 + $0x8] sm:$0xff]
    %v6167 = vld [vmem:[#allocation7 + $0x10] sm:$0xff]
    %v6168 = vld [vmem:[#allocation7 + $0x18] sm:$0xff]
    %v6169 = vmul.f32 %v6166, %v6112
    %v6170 = vmul.f32 %v6167, %v6115
    %v6171 = vmul.f32 %v6168, %v6114
    %6175 = vrot.lane.b32.xlu0 %v6169, 88
    %v6176 = vpop.permute.xlu0 %6175
    %6177 = vrot.lane.b32.xlu0 %v6170, 88
    %v6178 = vpop.permute.xlu0 %6177
    %6179 = vrot.lane.b32.xlu0 %v6171, 88
    %v6180 = vpop.permute.xlu0 %6179
    %v6181 = vsel %vm738, %v6176, %v6178
    %v6182 = vsel %vm738, %v6178, %v6180
    %6185 = vst [vmem:[#allocation8 + $0x1e0] sm:$0xff] %v6181
    %6186 = vst [vmem:[#allocation8 + $0x1e8] sm:$0xff] %v6182
    %v6187 = vld [vmem:[#allocation7 + $0x28] sm:$0xff]
    %v6188 = vld [vmem:[#allocation7 + $0x30] sm:$0xff]
    %v6189 = vld [vmem:[#allocation7 + $0x38] sm:$0xff]
    %v6190 = vmul.f32 %v6187, %v6141
    %v6191 = vmul.f32 %v6188, %v6144
    %v6192 = vmul.f32 %v6189, %v6143
    %6196 = vrot.lane.b32.xlu0 %v6190, 72
    %v6197 = vpop.permute.xlu0 %6196
    %6198 = vrot.lane.b32.xlu0 %v6191, 72
    %v6199 = vpop.permute.xlu0 %6198
    %6200 = vrot.lane.b32.xlu0 %v6192, 72
    %v6201 = vpop.permute.xlu0 %6200
    %v6202 = vsel %vm2256, %v6197, %v6199
    %v6203 = vsel %vm2256, %v6199, %v6201
    %6206 = vst [vmem:[#allocation8 + $0x1f0] sm:$0xff] %v6202
    %6207 = vst [vmem:[#allocation8 + $0x1f8] sm:$0xff] %v6203
    %v6208 = vld [vmem:[%s2263] ss:$8 sm:$0x3]
    %v6209 = vld [vmem:[#allocation5 + $0x8] sm:$0xff]
    %v6210 = vld [vmem:[#allocation5 + $0x10] sm:$0xff]
    %v6211 = vld [vmem:[#allocation5 + $0x18] sm:$0xff]
    %v6213 = vlaneseq
    %v6214 = vshrl.u32 %v6213, 7
    %v6215 = vsub.s32 0, %v6214
    %v6216 = vrot.slane %v6208, %v6215
    %v6217 = vlaneseq
    %v6218 = vshrl.u32 %v6217, 7
    %v6219 = vsub.s32 1, %v6218
    %v6220 = vrot.slane %v6208, %v6219
    %6221 = vrot.lane.b32.xlu0 %v6216, 42
    %v6222 = vpop.permute.xlu0 %6221
    %6223 = vrot.lane.b32.xlu0 %v6220, 42
    %v6224 = vpop.permute.xlu0 %6223
    %v6225 = vsel %vm2281, %v6222, %v6224
    %v6229 = vmul.f32 %v6209, %v6222
    %v6230 = vmul.f32 %v6210, %v6225
    %v6231 = vmul.f32 %v6211, %v6224
    %6235 = vrot.lane.b32.xlu0 %v6229, 86
    %v6236 = vpop.permute.xlu0 %6235
    %6237 = vrot.lane.b32.xlu0 %v6230, 86
    %v6238 = vpop.permute.xlu0 %6237
    %6239 = vrot.lane.b32.xlu0 %v6231, 86
    %v6240 = vpop.permute.xlu0 %6239
    %v6241 = vsel %vm2298, %v6236, %v6238
    %v6242 = vsel %vm2298, %v6238, %v6240
    %6245 = vst [vmem:[#allocation8 + $0x200] sm:$0xff] %v6241
    %6246 = vst [vmem:[#allocation8 + $0x208] sm:$0xff] %v6242
    %v6247 = vld [vmem:[#allocation5 + $0x28] sm:$0xff]
    %v6248 = vld [vmem:[#allocation5 + $0x30] sm:$0xff]
    %v6249 = vld [vmem:[#allocation5 + $0x38] sm:$0xff]
    %6250 = vrot.lane.b32.xlu0 %v6216, 58
    %v6251 = vpop.permute.xlu0 %6250
    %6252 = vrot.lane.b32.xlu0 %v6220, 58
    %v6253 = vpop.permute.xlu0 %6252
    %v6254 = vsel %vm2312, %v6251, %v6253
    %v6258 = vmul.f32 %v6247, %v6251
    %v6259 = vmul.f32 %v6248, %v6254
    %v6260 = vmul.f32 %v6249, %v6253
    %6264 = vrot.lane.b32.xlu0 %v6258, 70
    %v6265 = vpop.permute.xlu0 %6264
    %6266 = vrot.lane.b32.xlu0 %v6259, 70
    %v6267 = vpop.permute.xlu0 %6266
    %6268 = vrot.lane.b32.xlu0 %v6260, 70
    %v6269 = vpop.permute.xlu0 %6268
    %v6270 = vsel %vm2329, %v6265, %v6267
    %v6271 = vsel %vm2329, %v6267, %v6269
    %6274 = vst [vmem:[#allocation8 + $0x210] sm:$0xff] %v6270
    %6275 = vst [vmem:[#allocation8 + $0x218] sm:$0xff] %v6271
    %v6276 = vld [vmem:[#allocation7 + $0x8] sm:$0xff]
    %v6277 = vld [vmem:[#allocation7 + $0x10] sm:$0xff]
    %v6278 = vld [vmem:[#allocation7 + $0x18] sm:$0xff]
    %v6279 = vmul.f32 %v6276, %v6222
    %v6280 = vmul.f32 %v6277, %v6225
    %v6281 = vmul.f32 %v6278, %v6224
    %6285 = vrot.lane.b32.xlu0 %v6279, 86
    %v6286 = vpop.permute.xlu0 %6285
    %6287 = vrot.lane.b32.xlu0 %v6280, 86
    %v6288 = vpop.permute.xlu0 %6287
    %6289 = vrot.lane.b32.xlu0 %v6281, 86
    %v6290 = vpop.permute.xlu0 %6289
    %v6291 = vsel %vm2298, %v6286, %v6288
    %v6292 = vsel %vm2298, %v6288, %v6290
    %6295 = vst [vmem:[#allocation8 + $0x220] sm:$0xff] %v6291
    %6296 = vst [vmem:[#allocation8 + $0x228] sm:$0xff] %v6292
    %v6297 = vld [vmem:[#allocation7 + $0x28] sm:$0xff]
    %v6298 = vld [vmem:[#allocation7 + $0x30] sm:$0xff]
    %v6299 = vld [vmem:[#allocation7 + $0x38] sm:$0xff]
    %v6300 = vmul.f32 %v6297, %v6251
    %v6301 = vmul.f32 %v6298, %v6254
    %v6302 = vmul.f32 %v6299, %v6253
    %6306 = vrot.lane.b32.xlu0 %v6300, 70
    %v6307 = vpop.permute.xlu0 %6306
    %6308 = vrot.lane.b32.xlu0 %v6301, 70
    %v6309 = vpop.permute.xlu0 %6308
    %6310 = vrot.lane.b32.xlu0 %v6302, 70
    %v6311 = vpop.permute.xlu0 %6310
    %v6312 = vsel %vm2329, %v6307, %v6309
    %v6313 = vsel %vm2329, %v6309, %v6311
    %6316 = vst [vmem:[#allocation8 + $0x230] sm:$0xff] %v6312
    %6317 = vst [vmem:[#allocation8 + $0x238] sm:$0xff] %v6313
    %v6318 = vld [vmem:[#allocation8] sm:$0xff]
    %v6319 = vld [vmem:[#allocation8 + $0x8] sm:$0xff]
    %v6320 = vld [vmem:[#allocation8 + $0x10] sm:$0xff]
    %v6321 = vld [vmem:[#allocation8 + $0x18] sm:$0xff]
    %v6322 = vld [vmem:[#allocation8 + $0x20] sm:$0xff]
    %v6323 = vld [vmem:[#allocation8 + $0x28] sm:$0xff]
    %v6324 = vld [vmem:[#allocation8 + $0x30] sm:$0xff]
    %v6325 = vld [vmem:[#allocation8 + $0x38] sm:$0xff]
    %v6326 = vld [vmem:[#allocation8 + $0x40] sm:$0xff]
    %v6327 = vld [vmem:[#allocation8 + $0x48] sm:$0xff]
    %v6328 = vld [vmem:[#allocation8 + $0x50] sm:$0xff]
    %v6329 = vld [vmem:[#allocation8 + $0x58] sm:$0xff]
    %v6330 = vld [vmem:[#allocation8 + $0x60] sm:$0xff]
    %v6331 = vld [vmem:[#allocation8 + $0x68] sm:$0xff]
    %v6332 = vld [vmem:[#allocation8 + $0x70] sm:$0xff]
    %v6333 = vld [vmem:[#allocation8 + $0x78] sm:$0xff]
    %v6334 = vld [vmem:[#allocation8 + $0x80] sm:$0xff]
    %v6335 = vld [vmem:[#allocation8 + $0x88] sm:$0xff]
    %v6336 = vld [vmem:[#allocation8 + $0x90] sm:$0xff]
    %v6337 = vld [vmem:[#allocation8 + $0x98] sm:$0xff]
    %v6338 = vld [vmem:[#allocation8 + $0xa0] sm:$0xff]
    %v6339 = vld [vmem:[#allocation8 + $0xa8] sm:$0xff]
    %v6340 = vld [vmem:[#allocation8 + $0xb0] sm:$0xff]
    %v6341 = vld [vmem:[#allocation8 + $0xb8] sm:$0xff]
    %v6342 = vld [vmem:[#allocation8 + $0xc0] sm:$0xff]
    %v6343 = vld [vmem:[#allocation8 + $0xc8] sm:$0xff]
    %v6344 = vld [vmem:[#allocation8 + $0xd0] sm:$0xff]
    %v6345 = vld [vmem:[#allocation8 + $0xd8] sm:$0xff]
    %v6346 = vld [vmem:[#allocation8 + $0xe0] sm:$0xff]
    %v6347 = vld [vmem:[#allocation8 + $0xe8] sm:$0xff]
    %v6348 = vld [vmem:[#allocation8 + $0xf0] sm:$0xff]
    %v6349 = vld [vmem:[#allocation8 + $0xf8] sm:$0xff]
    %v6350 = vld [vmem:[#allocation8 + $0x100] sm:$0xff]
    %v6351 = vld [vmem:[#allocation8 + $0x108] sm:$0xff]
    %v6352 = vld [vmem:[#allocation8 + $0x110] sm:$0xff]
    %v6353 = vld [vmem:[#allocation8 + $0x118] sm:$0xff]
    %v6354 = vld [vmem:[#allocation8 + $0x120] sm:$0xff]
    %v6355 = vld [vmem:[#allocation8 + $0x128] sm:$0xff]
    %v6356 = vld [vmem:[#allocation8 + $0x130] sm:$0xff]
    %v6357 = vld [vmem:[#allocation8 + $0x138] sm:$0xff]
    %v6358 = vld [vmem:[#allocation8 + $0x140] sm:$0xff]
    %v6359 = vld [vmem:[#allocation8 + $0x148] sm:$0xff]
    %v6360 = vld [vmem:[#allocation8 + $0x150] sm:$0xff]
    %v6361 = vld [vmem:[#allocation8 + $0x158] sm:$0xff]
    %v6362 = vld [vmem:[#allocation8 + $0x160] sm:$0xff]
    %v6363 = vld [vmem:[#allocation8 + $0x168] sm:$0xff]
    %v6364 = vld [vmem:[#allocation8 + $0x170] sm:$0xff]
    %v6365 = vld [vmem:[#allocation8 + $0x178] sm:$0xff]
    %v6366 = vld [vmem:[#allocation8 + $0x180] sm:$0xff]
    %v6367 = vld [vmem:[#allocation8 + $0x188] sm:$0xff]
    %v6368 = vld [vmem:[#allocation8 + $0x190] sm:$0xff]
    %v6369 = vld [vmem:[#allocation8 + $0x198] sm:$0xff]
    %v6370 = vld [vmem:[#allocation8 + $0x1a0] sm:$0xff]
    %v6371 = vld [vmem:[#allocation8 + $0x1a8] sm:$0xff]
    %v6372 = vld [vmem:[#allocation8 + $0x1b0] sm:$0xff]
    %v6373 = vld [vmem:[#allocation8 + $0x1b8] sm:$0xff]
    %v6374 = vld [vmem:[#allocation8 + $0x1c0] sm:$0xff]
    %v6375 = vld [vmem:[#allocation8 + $0x1c8] sm:$0xff]
    %v6376 = vld [vmem:[#allocation8 + $0x1d0] sm:$0xff]
    %v6377 = vld [vmem:[#allocation8 + $0x1d8] sm:$0xff]
    %v6378 = vld [vmem:[#allocation8 + $0x1e0] sm:$0xff]
    %v6379 = vld [vmem:[#allocation8 + $0x1e8] sm:$0xff]
    %v6380 = vld [vmem:[#allocation8 + $0x1f0] sm:$0xff]
    %v6381 = vld [vmem:[#allocation8 + $0x1f8] sm:$0xff]
    %v6382 = vld [vmem:[#allocation8 + $0x200] sm:$0xff]
    %v6383 = vld [vmem:[#allocation8 + $0x208] sm:$0xff]
    %v6384 = vld [vmem:[#allocation8 + $0x210] sm:$0xff]
    %v6385 = vld [vmem:[#allocation8 + $0x218] sm:$0xff]
    %v6386 = vld [vmem:[#allocation8 + $0x220] sm:$0xff]
    %v6387 = vld [vmem:[#allocation8 + $0x228] sm:$0xff]
    %v6388 = vld [vmem:[#allocation8 + $0x230] sm:$0xff]
    %v6389 = vld [vmem:[#allocation8 + $0x238] sm:$0xff]
    %v6390 = vpack.c.bf16 %v6322, %v6318
    %v6391 = vpack.c.bf16 %v6323, %v6319
    %v6392 = vpack.c.bf16 %v6324, %v6320
    %v6393 = vpack.c.bf16 %v6325, %v6321
    %v6394 = vpack.c.bf16 %v6330, %v6326
    %v6395 = vpack.c.bf16 %v6331, %v6327
    %v6396 = vpack.c.bf16 %v6332, %v6328
    %v6397 = vpack.c.bf16 %v6333, %v6329
    %v6398 = vpack.c.bf16 %v6338, %v6334
    %v6399 = vpack.c.bf16 %v6339, %v6335
    %v6400 = vpack.c.bf16 %v6340, %v6336
    %v6401 = vpack.c.bf16 %v6341, %v6337
    %v6402 = vpack.c.bf16 %v6346, %v6342
    %v6403 = vpack.c.bf16 %v6347, %v6343
    %v6404 = vpack.c.bf16 %v6348, %v6344
    %v6405 = vpack.c.bf16 %v6349, %v6345
    %v6406 = vpack.c.bf16 %v6354, %v6350
    %v6407 = vpack.c.bf16 %v6355, %v6351
    %v6408 = vpack.c.bf16 %v6356, %v6352
    %v6409 = vpack.c.bf16 %v6357, %v6353
    %v6410 = vpack.c.bf16 %v6362, %v6358
    %v6411 = vpack.c.bf16 %v6363, %v6359
    %v6412 = vpack.c.bf16 %v6364, %v6360
    %v6413 = vpack.c.bf16 %v6365, %v6361
    %v6414 = vpack.c.bf16 %v6370, %v6366
    %v6415 = vpack.c.bf16 %v6371, %v6367
    %v6416 = vpack.c.bf16 %v6372, %v6368
    %v6417 = vpack.c.bf16 %v6373, %v6369
    %v6418 = vpack.c.bf16 %v6378, %v6374
    %v6419 = vpack.c.bf16 %v6379, %v6375
    %v6420 = vpack.c.bf16 %v6380, %v6376
    %v6421 = vpack.c.bf16 %v6381, %v6377
    %v6422 = vpack.c.bf16 %v6386, %v6382
    %v6423 = vpack.c.bf16 %v6387, %v6383
    %v6424 = vpack.c.bf16 %v6388, %v6384
    %v6425 = vpack.c.bf16 %v6389, %v6385
    %v6426 = vld [vmem:[%s17] sm:$0xff]
    %v6427 = vld [vmem:[%s18] sm:$0xff]
    %6429 = vset.pattern.permute.xlu0 0
    %6430 = vperm.xlu0 %6429, %v6427
    %v6431 = vpop.permute.xlu0 %6430
    %v6434 = vunpack.c.l.b16 %v6426
    %v6435 = vunpack.c.h.b16 %v6426
    %v6436 = vpack.c.b16 %v6434, %v6434
    %v6437 = vpack.c.b16 %v6435, %v6435
    %v6440 = vsel %vm3377, %v6437, 0
    %6442 = vmatprep.subr.bf16.mxu0 %v6391
    %6443 = vmatpush1.bf16.msra.mxu0 %v6390
    %6444 = vmatprep.subr.bf16.mxu0 %v6395
    %6445 = vmatpush1.bf16.msra.mxu0 %v6394
    %6446 = vmatprep.subr.bf16.mxu0 %v6399
    %6447 = vmatpush1.bf16.msra.mxu0 %v6398
    %6448 = vmatprep.subr.bf16.mxu0 %v6403
    %6449 = vmatpush1.bf16.msra.mxu0 %v6402
    %6450 = vmatprep.subr.bf16.mxu0 %v6407
    %6451 = vmatpush1.bf16.msra.mxu0 %v6406
    %6452 = vmatprep.subr.bf16.mxu0 %v6411
    %6453 = vmatpush1.bf16.msra.mxu0 %v6410
    %6454 = vmatprep.subr.bf16.mxu0 %v6415
    %6455 = vmatpush1.bf16.msra.mxu0 %v6414
    %6456 = vmatprep.subr.bf16.mxu0 %v6419
    %6457 = vmatpush1.bf16.msra.mxu0 %v6418
    %6458 = vmatprep.subr.bf16.mxu0 %v6423
    %6459 = vmatpush1.bf16.msra.mxu0 %v6422
    %6460 = vmatprep.subr.bf16.mxu0 0
    %6461 = vmatpush1.bf16.msra.mxu0 0
    %6462 = vmatprep.subr.bf16.mxu0 0
    %6463 = vmatpush1.bf16.msra.mxu0 0
    %6464 = vmatprep.subr.bf16.mxu0 0
    %6465 = vmatpush1.bf16.msra.mxu0 0
    %6466 = vmatprep.subr.bf16.mxu0 0
    %6467 = vmatpush1.bf16.msra.mxu0 0
    %6468 = vmatprep.subr.bf16.mxu0 0
    %6469 = vmatpush1.bf16.msra.mxu0 0
    %6470 = vmatprep.subr.bf16.mxu0 0
    %6471 = vmatpush1.bf16.msra.mxu0 0
    %6472 = vmatprep.subr.bf16.mxu0 0
    %6473 = vmatpush1.bf16.msra.mxu0 0
    %6474 = vmatprep.mubr.bf16.mxu0 %v6440
    %6475 = vmatmul.mubr.bf16.gmra.mrb[0].mxu0 %v6436
    %v6476 = vpop.f32.mrb[0].mxu0
    %v6477 = vadd.f32 %v6431, %v6476
    %v6478 = vpop.f32.mrb[0].mxu0
    %v6479 = vadd.f32 %v6431, %v6478
    %v6480 = vpop.f32.mrb[0].mxu0
    %v6481 = vpop.f32.mrb[0].mxu0
    %6482 = vdwg.mxu0
    %6483 = vmatprep.subr.bf16.mxu0 %v6393
    %6484 = vmatpush1.bf16.msra.mxu0 %v6392
    %6485 = vmatprep.subr.bf16.mxu0 %v6397
    %6486 = vmatpush1.bf16.msra.mxu0 %v6396
    %6487 = vmatprep.subr.bf16.mxu0 %v6401
    %6488 = vmatpush1.bf16.msra.mxu0 %v6400
    %6489 = vmatprep.subr.bf16.mxu0 %v6405
    %6490 = vmatpush1.bf16.msra.mxu0 %v6404
    %6491 = vmatprep.subr.bf16.mxu0 %v6409
    %6492 = vmatpush1.bf16.msra.mxu0 %v6408
    %6493 = vmatprep.subr.bf16.mxu0 %v6413
    %6494 = vmatpush1.bf16.msra.mxu0 %v6412
    %6495 = vmatprep.subr.bf16.mxu0 %v6417
    %6496 = vmatpush1.bf16.msra.mxu0 %v6416
    %6497 = vmatprep.subr.bf16.mxu0 %v6421
    %6498 = vmatpush1.bf16.msra.mxu0 %v6420
    %6499 = vmatprep.subr.bf16.mxu0 %v6425
    %6500 = vmatpush1.bf16.msra.mxu0 %v6424
    %6501 = vmatprep.subr.bf16.mxu0 0
    %6502 = vmatpush1.bf16.msra.mxu0 0
    %6503 = vmatprep.subr.bf16.mxu0 0
    %6504 = vmatpush1.bf16.msra.mxu0 0
    %6505 = vmatprep.subr.bf16.mxu0 0
    %6506 = vmatpush1.bf16.msra.mxu0 0
    %6507 = vmatprep.subr.bf16.mxu0 0
    %6508 = vmatpush1.bf16.msra.mxu0 0
    %6509 = vmatprep.subr.bf16.mxu0 0
    %6510 = vmatpush1.bf16.msra.mxu0 0
    %6511 = vmatprep.subr.bf16.mxu0 0
    %6512 = vmatpush1.bf16.msra.mxu0 0
    %6513 = vmatprep.subr.bf16.mxu0 0
    %6514 = vmatpush1.bf16.msra.mxu0 0
    %6515 = vmatprep.mubr.bf16.mxu0 %v6440
    %6516 = vmatmul.mubr.bf16.gmra.mrb[0].mxu0 %v6436
    %v6517 = vpop.f32.mrb[0].mxu0
    %v6518 = vadd.f32 %v6431, %v6517
    %v6519 = vpop.f32.mrb[0].mxu0
    %v6520 = vadd.f32 %v6431, %v6519
    %v6521 = vpop.f32.mrb[0].mxu0
    %v6522 = vpop.f32.mrb[0].mxu0
    %6523 = vdwg.mxu0
    %v6524 = vmax.f32 %v6477, 0.0
    %v6525 = vmax.f32 %v6479, 0.0
    %v6526 = vmax.f32 %v6518, 0.0
    %v6527 = vmax.f32 %v6520, 0.0
    %6530 = vrot.lane.b32.xlu0 %v6524, 8
    %v6531 = vpop.permute.xlu0 %6530
    %6532 = vrot.lane.b32.xlu0 %v6525, 8
    %v6533 = vpop.permute.xlu0 %6532
    %v6534 = vsel %vm203, %v6531, %v6533
    %6538 = vst.msk [vmem:[#allocation7 + $0x8] sm:$0xff] %vm1680, %v6531
    %6539 = vst [vmem:[#allocation7 + $0x10] sm:$0xff] %v6534
    %6540 = vst.msk [vmem:[#allocation7 + $0x18] sm:$0xff] %vm203, %v6533
    %6543 = vrot.lane.b32.xlu0 %v6526, 24
    %v6544 = vpop.permute.xlu0 %6543
    %6545 = vrot.lane.b32.xlu0 %v6527, 24
    %v6546 = vpop.permute.xlu0 %6545
    %v6547 = vsel %vm219, %v6544, %v6546
    %6551 = vst.msk [vmem:[#allocation7 + $0x28] sm:$0xff] %vm1694, %v6544
    %6552 = vst [vmem:[#allocation7 + $0x30] sm:$0xff] %v6547
    %6553 = vst.msk [vmem:[#allocation7 + $0x38] sm:$0xff] %vm219, %v6546
    %v6554 = vld [vmem:[%s1] ss:$8 sm:$0x3]
    %v6555 = vld [vmem:[#allocation4] sm:$0xff]
    %v6556 = vld [vmem:[#allocation4 + $0x8] sm:$0xff]
    %v6557 = vld [vmem:[#allocation4 + $0x10] sm:$0xff]
    %v6559 = vlaneseq
    %v6560 = vshrl.u32 %v6559, 7
    %v6561 = vsub.s32 0, %v6560
    %v6562 = vrot.slane %v6554, %v6561
    %v6563 = vlaneseq
    %v6564 = vshrl.u32 %v6563, 7
    %v6565 = vsub.s32 1, %v6564
    %v6566 = vrot.slane %v6554, %v6565
    %6567 = vrot.lane.b32.xlu0 %v6562, 119
    %v6568 = vpop.permute.xlu0 %6567
    %6569 = vrot.lane.b32.xlu0 %v6566, 119
    %v6570 = vpop.permute.xlu0 %6569
    %v6571 = vsel %vm244, %v6568, %v6570
    %v6575 = vmul.f32 %v6555, %v6568
    %v6576 = vmul.f32 %v6556, %v6571
    %v6577 = vmul.f32 %v6557, %v6570
    %6581 = vrot.lane.b32.xlu0 %v6575, 9
    %v6582 = vpop.permute.xlu0 %6581
    %6583 = vrot.lane.b32.xlu0 %v6576, 9
    %v6584 = vpop.permute.xlu0 %6583
    %6585 = vrot.lane.b32.xlu0 %v6577, 9
    %v6586 = vpop.permute.xlu0 %6585
    %v6587 = vsel %vm259, %v6582, %v6584
    %v6588 = vsel %vm259, %v6584, %v6586
    %6591 = vst [vmem:[#allocation8] sm:$0xff] %v6587
    %6592 = vst [vmem:[#allocation8 + $0x8] sm:$0xff] %v6588
    %v6593 = vld [vmem:[#allocation4 + $0x28] sm:$0xff]
    %v6594 = vld [vmem:[#allocation4 + $0x30] sm:$0xff]
    %v6595 = vld [vmem:[#allocation4 + $0x38] sm:$0xff]
    %6596 = vrot.lane.b32.xlu0 %v6562, 7
    %v6597 = vpop.permute.xlu0 %6596
    %6598 = vrot.lane.b32.xlu0 %v6566, 7
    %v6599 = vpop.permute.xlu0 %6598
    %v6600 = vsel %vm271, %v6597, %v6599
    %v6604 = vmul.f32 %v6593, %v6597
    %v6605 = vmul.f32 %v6594, %v6600
    %v6606 = vmul.f32 %v6595, %v6599
    %6610 = vrot.lane.b32.xlu0 %v6604, 121
    %v6611 = vpop.permute.xlu0 %6610
    %6612 = vrot.lane.b32.xlu0 %v6605, 121
    %v6613 = vpop.permute.xlu0 %6612
    %6614 = vrot.lane.b32.xlu0 %v6606, 121
    %v6615 = vpop.permute.xlu0 %6614
    %v6616 = vsel %vm286, %v6611, %v6613
    %v6617 = vsel %vm286, %v6613, %v6615
    %6620 = vst [vmem:[#allocation8 + $0x10] sm:$0xff] %v6616
    %6621 = vst [vmem:[#allocation8 + $0x18] sm:$0xff] %v6617
    %v6622 = vld [vmem:[#allocation7] sm:$0xff]
    %v6623 = vld [vmem:[#allocation7 + $0x8] sm:$0xff]
    %v6624 = vld [vmem:[#allocation7 + $0x10] sm:$0xff]
    %v6625 = vmul.f32 %v6622, %v6568
    %v6626 = vmul.f32 %v6623, %v6571
    %v6627 = vmul.f32 %v6624, %v6570
    %6631 = vrot.lane.b32.xlu0 %v6625, 9
    %v6632 = vpop.permute.xlu0 %6631
    %6633 = vrot.lane.b32.xlu0 %v6626, 9
    %v6634 = vpop.permute.xlu0 %6633
    %6635 = vrot.lane.b32.xlu0 %v6627, 9
    %v6636 = vpop.permute.xlu0 %6635
    %v6637 = vsel %vm259, %v6632, %v6634
    %v6638 = vsel %vm259, %v6634, %v6636
    %6641 = vst [vmem:[#allocation8 + $0x20] sm:$0xff] %v6637
    %6642 = vst [vmem:[#allocation8 + $0x28] sm:$0xff] %v6638
    %v6643 = vld [vmem:[#allocation7 + $0x28] sm:$0xff]
    %v6644 = vld [vmem:[#allocation7 + $0x30] sm:$0xff]
    %v6645 = vld [vmem:[#allocation7 + $0x38] sm:$0xff]
    %v6646 = vmul.f32 %v6643, %v6597
    %v6647 = vmul.f32 %v6644, %v6600
    %v6648 = vmul.f32 %v6645, %v6599
    %6652 = vrot.lane.b32.xlu0 %v6646, 121
    %v6653 = vpop.permute.xlu0 %6652
    %6654 = vrot.lane.b32.xlu0 %v6647, 121
    %v6655 = vpop.permute.xlu0 %6654
    %6656 = vrot.lane.b32.xlu0 %v6648, 121
    %v6657 = vpop.permute.xlu0 %6656
    %v6658 = vsel %vm286, %v6653, %v6655
    %v6659 = vsel %vm286, %v6655, %v6657
    %6662 = vst [vmem:[#allocation8 + $0x30] sm:$0xff] %v6658
    %6663 = vst [vmem:[#allocation8 + $0x38] sm:$0xff] %v6659
    %v6664 = vld [vmem:[%s293] ss:$8 sm:$0x3]
    %v6665 = vld [vmem:[#allocation4] sm:$0xff]
    %v6666 = vld [vmem:[#allocation4 + $0x8] sm:$0xff]
    %v6667 = vld [vmem:[#allocation4 + $0x10] sm:$0xff]
    %v6669 = vlaneseq
    %v6670 = vshrl.u32 %v6669, 7
    %v6671 = vsub.s32 0, %v6670
    %v6672 = vrot.slane %v6664, %v6671
    %v6673 = vlaneseq
    %v6674 = vshrl.u32 %v6673, 7
    %v6675 = vsub.s32 1, %v6674
    %v6676 = vrot.slane %v6664, %v6675
    %6677 = vrot.lane.b32.xlu0 %v6672, 120
    %v6678 = vpop.permute.xlu0 %6677
    %6679 = vrot.lane.b32.xlu0 %v6676, 120
    %v6680 = vpop.permute.xlu0 %6679
    %v6681 = vsel %vm310, %v6678, %v6680
    %v6685 = vmul.f32 %v6665, %v6678
    %v6686 = vmul.f32 %v6666, %v6681
    %v6687 = vmul.f32 %v6667, %v6680
    %6691 = vrot.lane.b32.xlu0 %v6685, 8
    %v6692 = vpop.permute.xlu0 %6691
    %6693 = vrot.lane.b32.xlu0 %v6686, 8
    %v6694 = vpop.permute.xlu0 %6693
    %6695 = vrot.lane.b32.xlu0 %v6687, 8
    %v6696 = vpop.permute.xlu0 %6695
    %v6697 = vsel %vm203, %v6692, %v6694
    %v6698 = vsel %vm203, %v6694, %v6696
    %6701 = vst [vmem:[#allocation8 + $0x40] sm:$0xff] %v6697
    %6702 = vst [vmem:[#allocation8 + $0x48] sm:$0xff] %v6698
    %v6703 = vld [vmem:[#allocation4 + $0x28] sm:$0xff]
    %v6704 = vld [vmem:[#allocation4 + $0x30] sm:$0xff]
    %v6705 = vld [vmem:[#allocation4 + $0x38] sm:$0xff]
    %6706 = vrot.lane.b32.xlu0 %v6672, 8
    %v6707 = vpop.permute.xlu0 %6706
    %6708 = vrot.lane.b32.xlu0 %v6676, 8
    %v6709 = vpop.permute.xlu0 %6708
    %v6710 = vsel %vm203, %v6707, %v6709
    %v6714 = vmul.f32 %v6703, %v6707
    %v6715 = vmul.f32 %v6704, %v6710
    %v6716 = vmul.f32 %v6705, %v6709
    %6720 = vrot.lane.b32.xlu0 %v6714, 120
    %v6721 = vpop.permute.xlu0 %6720
    %6722 = vrot.lane.b32.xlu0 %v6715, 120
    %v6723 = vpop.permute.xlu0 %6722
    %6724 = vrot.lane.b32.xlu0 %v6716, 120
    %v6725 = vpop.permute.xlu0 %6724
    %v6726 = vsel %vm310, %v6721, %v6723
    %v6727 = vsel %vm310, %v6723, %v6725
    %6730 = vst [vmem:[#allocation8 + $0x50] sm:$0xff] %v6726
    %6731 = vst [vmem:[#allocation8 + $0x58] sm:$0xff] %v6727
    %v6732 = vld [vmem:[#allocation7] sm:$0xff]
    %v6733 = vld [vmem:[#allocation7 + $0x8] sm:$0xff]
    %v6734 = vld [vmem:[#allocation7 + $0x10] sm:$0xff]
    %v6735 = vmul.f32 %v6732, %v6678
    %v6736 = vmul.f32 %v6733, %v6681
    %v6737 = vmul.f32 %v6734, %v6680
    %6741 = vrot.lane.b32.xlu0 %v6735, 8
    %v6742 = vpop.permute.xlu0 %6741
    %6743 = vrot.lane.b32.xlu0 %v6736, 8
    %v6744 = vpop.permute.xlu0 %6743
    %6745 = vrot.lane.b32.xlu0 %v6737, 8
    %v6746 = vpop.permute.xlu0 %6745
    %v6747 = vsel %vm203, %v6742, %v6744
    %v6748 = vsel %vm203, %v6744, %v6746
    %6751 = vst [vmem:[#allocation8 + $0x60] sm:$0xff] %v6747
    %6752 = vst [vmem:[#allocation8 + $0x68] sm:$0xff] %v6748
    %v6753 = vld [vmem:[#allocation7 + $0x28] sm:$0xff]
    %v6754 = vld [vmem:[#allocation7 + $0x30] sm:$0xff]
    %v6755 = vld [vmem:[#allocation7 + $0x38] sm:$0xff]
    %v6756 = vmul.f32 %v6753, %v6707
    %v6757 = vmul.f32 %v6754, %v6710
    %v6758 = vmul.f32 %v6755, %v6709
    %6762 = vrot.lane.b32.xlu0 %v6756, 120
    %v6763 = vpop.permute.xlu0 %6762
    %6764 = vrot.lane.b32.xlu0 %v6757, 120
    %v6765 = vpop.permute.xlu0 %6764
    %6766 = vrot.lane.b32.xlu0 %v6758, 120
    %v6767 = vpop.permute.xlu0 %6766
    %v6768 = vsel %vm310, %v6763, %v6765
    %v6769 = vsel %vm310, %v6765, %v6767
    %6772 = vst [vmem:[#allocation8 + $0x70] sm:$0xff] %v6768
    %6773 = vst [vmem:[#allocation8 + $0x78] sm:$0xff] %v6769
    %v6774 = vld [vmem:[%s358] ss:$8 sm:$0x3]
    %v6775 = vld [vmem:[#allocation4] sm:$0xff]
    %v6776 = vld [vmem:[#allocation4 + $0x8] sm:$0xff]
    %v6777 = vld [vmem:[#allocation4 + $0x10] sm:$0xff]
    %v6779 = vlaneseq
    %v6780 = vshrl.u32 %v6779, 7
    %v6781 = vsub.s32 0, %v6780
    %v6782 = vrot.slane %v6774, %v6781
    %v6783 = vlaneseq
    %v6784 = vshrl.u32 %v6783, 7
    %v6785 = vsub.s32 1, %v6784
    %v6786 = vrot.slane %v6774, %v6785
    %6787 = vrot.lane.b32.xlu0 %v6782, 121
    %v6788 = vpop.permute.xlu0 %6787
    %6789 = vrot.lane.b32.xlu0 %v6786, 121
    %v6790 = vpop.permute.xlu0 %6789
    %v6791 = vsel %vm286, %v6788, %v6790
    %v6795 = vmul.f32 %v6775, %v6788
    %v6796 = vmul.f32 %v6776, %v6791
    %v6797 = vmul.f32 %v6777, %v6790
    %6801 = vrot.lane.b32.xlu0 %v6795, 7
    %v6802 = vpop.permute.xlu0 %6801
    %6803 = vrot.lane.b32.xlu0 %v6796, 7
    %v6804 = vpop.permute.xlu0 %6803
    %6805 = vrot.lane.b32.xlu0 %v6797, 7
    %v6806 = vpop.permute.xlu0 %6805
    %v6807 = vsel %vm271, %v6802, %v6804
    %v6808 = vsel %vm271, %v6804, %v6806
    %6811 = vst [vmem:[#allocation8 + $0x80] sm:$0xff] %v6807
    %6812 = vst [vmem:[#allocation8 + $0x88] sm:$0xff] %v6808
    %v6813 = vld [vmem:[#allocation4 + $0x28] sm:$0xff]
    %v6814 = vld [vmem:[#allocation4 + $0x30] sm:$0xff]
    %v6815 = vld [vmem:[#allocation4 + $0x38] sm:$0xff]
    %6816 = vrot.lane.b32.xlu0 %v6782, 9
    %v6817 = vpop.permute.xlu0 %6816
    %6818 = vrot.lane.b32.xlu0 %v6786, 9
    %v6819 = vpop.permute.xlu0 %6818
    %v6820 = vsel %vm259, %v6817, %v6819
    %v6824 = vmul.f32 %v6813, %v6817
    %v6825 = vmul.f32 %v6814, %v6820
    %v6826 = vmul.f32 %v6815, %v6819
    %6830 = vrot.lane.b32.xlu0 %v6824, 119
    %v6831 = vpop.permute.xlu0 %6830
    %6832 = vrot.lane.b32.xlu0 %v6825, 119
    %v6833 = vpop.permute.xlu0 %6832
    %6834 = vrot.lane.b32.xlu0 %v6826, 119
    %v6835 = vpop.permute.xlu0 %6834
    %v6836 = vsel %vm244, %v6831, %v6833
    %v6837 = vsel %vm244, %v6833, %v6835
    %6840 = vst [vmem:[#allocation8 + $0x90] sm:$0xff] %v6836
    %6841 = vst [vmem:[#allocation8 + $0x98] sm:$0xff] %v6837
    %v6842 = vld [vmem:[#allocation7] sm:$0xff]
    %v6843 = vld [vmem:[#allocation7 + $0x8] sm:$0xff]
    %v6844 = vld [vmem:[#allocation7 + $0x10] sm:$0xff]
    %v6845 = vmul.f32 %v6842, %v6788
    %v6846 = vmul.f32 %v6843, %v6791
    %v6847 = vmul.f32 %v6844, %v6790
    %6851 = vrot.lane.b32.xlu0 %v6845, 7
    %v6852 = vpop.permute.xlu0 %6851
    %6853 = vrot.lane.b32.xlu0 %v6846, 7
    %v6854 = vpop.permute.xlu0 %6853
    %6855 = vrot.lane.b32.xlu0 %v6847, 7
    %v6856 = vpop.permute.xlu0 %6855
    %v6857 = vsel %vm271, %v6852, %v6854
    %v6858 = vsel %vm271, %v6854, %v6856
    %6861 = vst [vmem:[#allocation8 + $0xa0] sm:$0xff] %v6857
    %6862 = vst [vmem:[#allocation8 + $0xa8] sm:$0xff] %v6858
    %v6863 = vld [vmem:[#allocation7 + $0x28] sm:$0xff]
    %v6864 = vld [vmem:[#allocation7 + $0x30] sm:$0xff]
    %v6865 = vld [vmem:[#allocation7 + $0x38] sm:$0xff]
    %v6866 = vmul.f32 %v6863, %v6817
    %v6867 = vmul.f32 %v6864, %v6820
    %v6868 = vmul.f32 %v6865, %v6819
    %6872 = vrot.lane.b32.xlu0 %v6866, 119
    %v6873 = vpop.permute.xlu0 %6872
    %6874 = vrot.lane.b32.xlu0 %v6867, 119
    %v6875 = vpop.permute.xlu0 %6874
    %6876 = vrot.lane.b32.xlu0 %v6868, 119
    %v6877 = vpop.permute.xlu0 %6876
    %v6878 = vsel %vm244, %v6873, %v6875
    %v6879 = vsel %vm244, %v6875, %v6877
    %6882 = vst [vmem:[#allocation8 + $0xb0] sm:$0xff] %v6878
    %6883 = vst [vmem:[#allocation8 + $0xb8] sm:$0xff] %v6879
    %v6884 = vld [vmem:[%s420] ss:$8 sm:$0x3]
    %v6885 = vld [vmem:[#allocation4 + $0x8] sm:$0xff]
    %v6886 = vld [vmem:[#allocation4 + $0x10] sm:$0xff]
    %v6887 = vld [vmem:[#allocation4 + $0x18] sm:$0xff]
    %v6889 = vlaneseq
    %v6890 = vshrl.u32 %v6889, 7
    %v6891 = vsub.s32 0, %v6890
    %v6892 = vrot.slane %v6884, %v6891
    %v6893 = vlaneseq
    %v6894 = vshrl.u32 %v6893, 7
    %v6895 = vsub.s32 1, %v6894
    %v6896 = vrot.slane %v6884, %v6895
    %6897 = vrot.lane.b32.xlu0 %v6892, 7
    %v6898 = vpop.permute.xlu0 %6897
    %6899 = vrot.lane.b32.xlu0 %v6896, 7
    %v6900 = vpop.permute.xlu0 %6899
    %v6901 = vsel %vm271, %v6898, %v6900
    %v6905 = vmul.f32 %v6885, %v6898
    %v6906 = vmul.f32 %v6886, %v6901
    %v6907 = vmul.f32 %v6887, %v6900
    %6911 = vrot.lane.b32.xlu0 %v6905, 121
    %v6912 = vpop.permute.xlu0 %6911
    %6913 = vrot.lane.b32.xlu0 %v6906, 121
    %v6914 = vpop.permute.xlu0 %6913
    %6915 = vrot.lane.b32.xlu0 %v6907, 121
    %v6916 = vpop.permute.xlu0 %6915
    %v6917 = vsel %vm286, %v6912, %v6914
    %v6918 = vsel %vm286, %v6914, %v6916
    %6921 = vst [vmem:[#allocation8 + $0xc0] sm:$0xff] %v6917
    %6922 = vst [vmem:[#allocation8 + $0xc8] sm:$0xff] %v6918
    %v6923 = vld [vmem:[#allocation4 + $0x28] sm:$0xff]
    %v6924 = vld [vmem:[#allocation4 + $0x30] sm:$0xff]
    %v6925 = vld [vmem:[#allocation4 + $0x38] sm:$0xff]
    %6926 = vrot.lane.b32.xlu0 %v6892, 23
    %v6927 = vpop.permute.xlu0 %6926
    %6928 = vrot.lane.b32.xlu0 %v6896, 23
    %v6929 = vpop.permute.xlu0 %6928
    %v6930 = vsel %vm463, %v6927, %v6929
    %v6934 = vmul.f32 %v6923, %v6927
    %v6935 = vmul.f32 %v6924, %v6930
    %v6936 = vmul.f32 %v6925, %v6929
    %6940 = vrot.lane.b32.xlu0 %v6934, 105
    %v6941 = vpop.permute.xlu0 %6940
    %6942 = vrot.lane.b32.xlu0 %v6935, 105
    %v6943 = vpop.permute.xlu0 %6942
    %6944 = vrot.lane.b32.xlu0 %v6936, 105
    %v6945 = vpop.permute.xlu0 %6944
    %v6946 = vsel %vm479, %v6941, %v6943
    %v6947 = vsel %vm479, %v6943, %v6945
    %6950 = vst [vmem:[#allocation8 + $0xd0] sm:$0xff] %v6946
    %6951 = vst [vmem:[#allocation8 + $0xd8] sm:$0xff] %v6947
    %v6952 = vld [vmem:[#allocation7 + $0x8] sm:$0xff]
    %v6953 = vld [vmem:[#allocation7 + $0x10] sm:$0xff]
    %v6954 = vld [vmem:[#allocation7 + $0x18] sm:$0xff]
    %v6955 = vmul.f32 %v6952, %v6898
    %v6956 = vmul.f32 %v6953, %v6901
    %v6957 = vmul.f32 %v6954, %v6900
    %6961 = vrot.lane.b32.xlu0 %v6955, 121
    %v6962 = vpop.permute.xlu0 %6961
    %6963 = vrot.lane.b32.xlu0 %v6956, 121
    %v6964 = vpop.permute.xlu0 %6963
    %6965 = vrot.lane.b32.xlu0 %v6957, 121
    %v6966 = vpop.permute.xlu0 %6965
    %v6967 = vsel %vm286, %v6962, %v6964
    %v6968 = vsel %vm286, %v6964, %v6966
    %6971 = vst [vmem:[#allocation8 + $0xe0] sm:$0xff] %v6967
    %6972 = vst [vmem:[#allocation8 + $0xe8] sm:$0xff] %v6968
    %v6973 = vld [vmem:[#allocation7 + $0x28] sm:$0xff]
    %v6974 = vld [vmem:[#allocation7 + $0x30] sm:$0xff]
    %v6975 = vld [vmem:[#allocation7 + $0x38] sm:$0xff]
    %v6976 = vmul.f32 %v6973, %v6927
    %v6977 = vmul.f32 %v6974, %v6930
    %v6978 = vmul.f32 %v6975, %v6929
    %6982 = vrot.lane.b32.xlu0 %v6976, 105
    %v6983 = vpop.permute.xlu0 %6982
    %6984 = vrot.lane.b32.xlu0 %v6977, 105
    %v6985 = vpop.permute.xlu0 %6984
    %6986 = vrot.lane.b32.xlu0 %v6978, 105
    %v6987 = vpop.permute.xlu0 %6986
    %v6988 = vsel %vm479, %v6983, %v6985
    %v6989 = vsel %vm479, %v6985, %v6987
    %6992 = vst [vmem:[#allocation8 + $0xf0] sm:$0xff] %v6988
    %6993 = vst [vmem:[#allocation8 + $0xf8] sm:$0xff] %v6989
    %v6994 = vld [vmem:[%s486] ss:$8 sm:$0x3]
    %v6995 = vld [vmem:[#allocation4 + $0x8] sm:$0xff]
    %v6996 = vld [vmem:[#allocation4 + $0x10] sm:$0xff]
    %v6997 = vld [vmem:[#allocation4 + $0x18] sm:$0xff]
    %v6999 = vlaneseq
    %v7000 = vshrl.u32 %v6999, 7
    %v7001 = vsub.s32 0, %v7000
    %v7002 = vrot.slane %v6994, %v7001
    %v7003 = vlaneseq
    %v7004 = vshrl.u32 %v7003, 7
    %v7005 = vsub.s32 1, %v7004
    %v7006 = vrot.slane %v6994, %v7005
    %7007 = vrot.lane.b32.xlu0 %v7002, 8
    %v7008 = vpop.permute.xlu0 %7007
    %7009 = vrot.lane.b32.xlu0 %v7006, 8
    %v7010 = vpop.permute.xlu0 %7009
    %v7011 = vsel %vm203, %v7008, %v7010
    %v7015 = vmul.f32 %v6995, %v7008
    %v7016 = vmul.f32 %v6996, %v7011
    %v7017 = vmul.f32 %v6997, %v7010
    %7021 = vrot.lane.b32.xlu0 %v7015, 120
    %v7022 = vpop.permute.xlu0 %7021
    %7023 = vrot.lane.b32.xlu0 %v7016, 120
    %v7024 = vpop.permute.xlu0 %7023
    %7025 = vrot.lane.b32.xlu0 %v7017, 120
    %v7026 = vpop.permute.xlu0 %7025
    %v7027 = vsel %vm310, %v7022, %v7024
    %v7028 = vsel %vm310, %v7024, %v7026
    %7031 = vst [vmem:[#allocation8 + $0x100] sm:$0xff] %v7027
    %7032 = vst [vmem:[#allocation8 + $0x108] sm:$0xff] %v7028
    %v7033 = vld [vmem:[#allocation4 + $0x28] sm:$0xff]
    %v7034 = vld [vmem:[#allocation4 + $0x30] sm:$0xff]
    %v7035 = vld [vmem:[#allocation4 + $0x38] sm:$0xff]
    %7036 = vrot.lane.b32.xlu0 %v7002, 24
    %v7037 = vpop.permute.xlu0 %7036
    %7038 = vrot.lane.b32.xlu0 %v7006, 24
    %v7039 = vpop.permute.xlu0 %7038
    %v7040 = vsel %vm219, %v7037, %v7039
    %v7044 = vmul.f32 %v7033, %v7037
    %v7045 = vmul.f32 %v7034, %v7040
    %v7046 = vmul.f32 %v7035, %v7039
    %7050 = vrot.lane.b32.xlu0 %v7044, 104
    %v7051 = vpop.permute.xlu0 %7050
    %7052 = vrot.lane.b32.xlu0 %v7045, 104
    %v7053 = vpop.permute.xlu0 %7052
    %7054 = vrot.lane.b32.xlu0 %v7046, 104
    %v7055 = vpop.permute.xlu0 %7054
    %v7056 = vsel %vm542, %v7051, %v7053
    %v7057 = vsel %vm542, %v7053, %v7055
    %7060 = vst [vmem:[#allocation8 + $0x110] sm:$0xff] %v7056
    %7061 = vst [vmem:[#allocation8 + $0x118] sm:$0xff] %v7057
    %v7062 = vld [vmem:[#allocation7 + $0x8] sm:$0xff]
    %v7063 = vld [vmem:[#allocation7 + $0x10] sm:$0xff]
    %v7064 = vld [vmem:[#allocation7 + $0x18] sm:$0xff]
    %v7065 = vmul.f32 %v7062, %v7008
    %v7066 = vmul.f32 %v7063, %v7011
    %v7067 = vmul.f32 %v7064, %v7010
    %7071 = vrot.lane.b32.xlu0 %v7065, 120
    %v7072 = vpop.permute.xlu0 %7071
    %7073 = vrot.lane.b32.xlu0 %v7066, 120
    %v7074 = vpop.permute.xlu0 %7073
    %7075 = vrot.lane.b32.xlu0 %v7067, 120
    %v7076 = vpop.permute.xlu0 %7075
    %v7077 = vsel %vm310, %v7072, %v7074
    %v7078 = vsel %vm310, %v7074, %v7076
    %7081 = vst [vmem:[#allocation8 + $0x120] sm:$0xff] %v7077
    %7082 = vst [vmem:[#allocation8 + $0x128] sm:$0xff] %v7078
    %v7083 = vld [vmem:[#allocation7 + $0x28] sm:$0xff]
    %v7084 = vld [vmem:[#allocation7 + $0x30] sm:$0xff]
    %v7085 = vld [vmem:[#allocation7 + $0x38] sm:$0xff]
    %v7086 = vmul.f32 %v7083, %v7037
    %v7087 = vmul.f32 %v7084, %v7040
    %v7088 = vmul.f32 %v7085, %v7039
    %7092 = vrot.lane.b32.xlu0 %v7086, 104
    %v7093 = vpop.permute.xlu0 %7092
    %7094 = vrot.lane.b32.xlu0 %v7087, 104
    %v7095 = vpop.permute.xlu0 %7094
    %7096 = vrot.lane.b32.xlu0 %v7088, 104
    %v7097 = vpop.permute.xlu0 %7096
    %v7098 = vsel %vm542, %v7093, %v7095
    %v7099 = vsel %vm542, %v7095, %v7097
    %7102 = vst [vmem:[#allocation8 + $0x130] sm:$0xff] %v7098
    %7103 = vst [vmem:[#allocation8 + $0x138] sm:$0xff] %v7099
    %v7104 = vld [vmem:[%s549] ss:$8 sm:$0x3]
    %v7105 = vld [vmem:[#allocation4 + $0x8] sm:$0xff]
    %v7106 = vld [vmem:[#allocation4 + $0x10] sm:$0xff]
    %v7107 = vld [vmem:[#allocation4 + $0x18] sm:$0xff]
    %v7109 = vlaneseq
    %v7110 = vshrl.u32 %v7109, 7
    %v7111 = vsub.s32 0, %v7110
    %v7112 = vrot.slane %v7104, %v7111
    %v7113 = vlaneseq
    %v7114 = vshrl.u32 %v7113, 7
    %v7115 = vsub.s32 1, %v7114
    %v7116 = vrot.slane %v7104, %v7115
    %7117 = vrot.lane.b32.xlu0 %v7112, 9
    %v7118 = vpop.permute.xlu0 %7117
    %7119 = vrot.lane.b32.xlu0 %v7116, 9
    %v7120 = vpop.permute.xlu0 %7119
    %v7121 = vsel %vm259, %v7118, %v7120
    %v7125 = vmul.f32 %v7105, %v7118
    %v7126 = vmul.f32 %v7106, %v7121
    %v7127 = vmul.f32 %v7107, %v7120
    %7131 = vrot.lane.b32.xlu0 %v7125, 119
    %v7132 = vpop.permute.xlu0 %7131
    %7133 = vrot.lane.b32.xlu0 %v7126, 119
    %v7134 = vpop.permute.xlu0 %7133
    %7135 = vrot.lane.b32.xlu0 %v7127, 119
    %v7136 = vpop.permute.xlu0 %7135
    %v7137 = vsel %vm244, %v7132, %v7134
    %v7138 = vsel %vm244, %v7134, %v7136
    %7141 = vst [vmem:[#allocation8 + $0x140] sm:$0xff] %v7137
    %7142 = vst [vmem:[#allocation8 + $0x148] sm:$0xff] %v7138
    %v7143 = vld [vmem:[#allocation4 + $0x28] sm:$0xff]
    %v7144 = vld [vmem:[#allocation4 + $0x30] sm:$0xff]
    %v7145 = vld [vmem:[#allocation4 + $0x38] sm:$0xff]
    %7146 = vrot.lane.b32.xlu0 %v7112, 25
    %v7147 = vpop.permute.xlu0 %7146
    %7148 = vrot.lane.b32.xlu0 %v7116, 25
    %v7149 = vpop.permute.xlu0 %7148
    %v7150 = vsel %vm592, %v7147, %v7149
    %v7154 = vmul.f32 %v7143, %v7147
    %v7155 = vmul.f32 %v7144, %v7150
    %v7156 = vmul.f32 %v7145, %v7149
    %7160 = vrot.lane.b32.xlu0 %v7154, 103
    %v7161 = vpop.permute.xlu0 %7160
    %7162 = vrot.lane.b32.xlu0 %v7155, 103
    %v7163 = vpop.permute.xlu0 %7162
    %7164 = vrot.lane.b32.xlu0 %v7156, 103
    %v7165 = vpop.permute.xlu0 %7164
    %v7166 = vsel %vm608, %v7161, %v7163
    %v7167 = vsel %vm608, %v7163, %v7165
    %7170 = vst [vmem:[#allocation8 + $0x150] sm:$0xff] %v7166
    %7171 = vst [vmem:[#allocation8 + $0x158] sm:$0xff] %v7167
    %v7172 = vld [vmem:[#allocation7 + $0x8] sm:$0xff]
    %v7173 = vld [vmem:[#allocation7 + $0x10] sm:$0xff]
    %v7174 = vld [vmem:[#allocation7 + $0x18] sm:$0xff]
    %v7175 = vmul.f32 %v7172, %v7118
    %v7176 = vmul.f32 %v7173, %v7121
    %v7177 = vmul.f32 %v7174, %v7120
    %7181 = vrot.lane.b32.xlu0 %v7175, 119
    %v7182 = vpop.permute.xlu0 %7181
    %7183 = vrot.lane.b32.xlu0 %v7176, 119
    %v7184 = vpop.permute.xlu0 %7183
    %7185 = vrot.lane.b32.xlu0 %v7177, 119
    %v7186 = vpop.permute.xlu0 %7185
    %v7187 = vsel %vm244, %v7182, %v7184
    %v7188 = vsel %vm244, %v7184, %v7186
    %7191 = vst [vmem:[#allocation8 + $0x160] sm:$0xff] %v7187
    %7192 = vst [vmem:[#allocation8 + $0x168] sm:$0xff] %v7188
    %v7193 = vld [vmem:[#allocation7 + $0x28] sm:$0xff]
    %v7194 = vld [vmem:[#allocation7 + $0x30] sm:$0xff]
    %v7195 = vld [vmem:[#allocation7 + $0x38] sm:$0xff]
    %v7196 = vmul.f32 %v7193, %v7147
    %v7197 = vmul.f32 %v7194, %v7150
    %v7198 = vmul.f32 %v7195, %v7149
    %7202 = vrot.lane.b32.xlu0 %v7196, 103
    %v7203 = vpop.permute.xlu0 %7202
    %7204 = vrot.lane.b32.xlu0 %v7197, 103
    %v7205 = vpop.permute.xlu0 %7204
    %7206 = vrot.lane.b32.xlu0 %v7198, 103
    %v7207 = vpop.permute.xlu0 %7206
    %v7208 = vsel %vm608, %v7203, %v7205
    %v7209 = vsel %vm608, %v7205, %v7207
    %7212 = vst [vmem:[#allocation8 + $0x170] sm:$0xff] %v7208
    %7213 = vst [vmem:[#allocation8 + $0x178] sm:$0xff] %v7209
    %v7214 = vld [vmem:[%s615] ss:$8 sm:$0x3]
    %v7215 = vld [vmem:[#allocation4 + $0x8] sm:$0xff]
    %v7216 = vld [vmem:[#allocation4 + $0x10] sm:$0xff]
    %v7217 = vld [vmem:[#allocation4 + $0x18] sm:$0xff]
    %v7219 = vlaneseq
    %v7220 = vshrl.u32 %v7219, 7
    %v7221 = vsub.s32 0, %v7220
    %v7222 = vrot.slane %v7214, %v7221
    %v7223 = vlaneseq
    %v7224 = vshrl.u32 %v7223, 7
    %v7225 = vsub.s32 1, %v7224
    %v7226 = vrot.slane %v7214, %v7225
    %7227 = vrot.lane.b32.xlu0 %v7222, 23
    %v7228 = vpop.permute.xlu0 %7227
    %7229 = vrot.lane.b32.xlu0 %v7226, 23
    %v7230 = vpop.permute.xlu0 %7229
    %v7231 = vsel %vm463, %v7228, %v7230
    %v7235 = vmul.f32 %v7215, %v7228
    %v7236 = vmul.f32 %v7216, %v7231
    %v7237 = vmul.f32 %v7217, %v7230
    %7241 = vrot.lane.b32.xlu0 %v7235, 105
    %v7242 = vpop.permute.xlu0 %7241
    %7243 = vrot.lane.b32.xlu0 %v7236, 105
    %v7244 = vpop.permute.xlu0 %7243
    %7245 = vrot.lane.b32.xlu0 %v7237, 105
    %v7246 = vpop.permute.xlu0 %7245
    %v7247 = vsel %vm479, %v7242, %v7244
    %v7248 = vsel %vm479, %v7244, %v7246
    %7251 = vst [vmem:[#allocation8 + $0x180] sm:$0xff] %v7247
    %7252 = vst [vmem:[#allocation8 + $0x188] sm:$0xff] %v7248
    %v7253 = vld [vmem:[#allocation4 + $0x28] sm:$0xff]
    %v7254 = vld [vmem:[#allocation4 + $0x30] sm:$0xff]
    %v7255 = vld [vmem:[#allocation4 + $0x38] sm:$0xff]
    %7256 = vrot.lane.b32.xlu0 %v7222, 39
    %v7257 = vpop.permute.xlu0 %7256
    %7258 = vrot.lane.b32.xlu0 %v7226, 39
    %v7259 = vpop.permute.xlu0 %7258
    %v7260 = vsel %vm657, %v7257, %v7259
    %v7264 = vmul.f32 %v7253, %v7257
    %v7265 = vmul.f32 %v7254, %v7260
    %v7266 = vmul.f32 %v7255, %v7259
    %7270 = vrot.lane.b32.xlu0 %v7264, 89
    %v7271 = vpop.permute.xlu0 %7270
    %7272 = vrot.lane.b32.xlu0 %v7265, 89
    %v7273 = vpop.permute.xlu0 %7272
    %7274 = vrot.lane.b32.xlu0 %v7266, 89
    %v7275 = vpop.permute.xlu0 %7274
    %v7276 = vsel %vm672, %v7271, %v7273
    %v7277 = vsel %vm672, %v7273, %v7275
    %7280 = vst [vmem:[#allocation8 + $0x190] sm:$0xff] %v7276
    %7281 = vst [vmem:[#allocation8 + $0x198] sm:$0xff] %v7277
    %v7282 = vld [vmem:[#allocation7 + $0x8] sm:$0xff]
    %v7283 = vld [vmem:[#allocation7 + $0x10] sm:$0xff]
    %v7284 = vld [vmem:[#allocation7 + $0x18] sm:$0xff]
    %v7285 = vmul.f32 %v7282, %v7228
    %v7286 = vmul.f32 %v7283, %v7231
    %v7287 = vmul.f32 %v7284, %v7230
    %7291 = vrot.lane.b32.xlu0 %v7285, 105
    %v7292 = vpop.permute.xlu0 %7291
    %7293 = vrot.lane.b32.xlu0 %v7286, 105
    %v7294 = vpop.permute.xlu0 %7293
    %7295 = vrot.lane.b32.xlu0 %v7287, 105
    %v7296 = vpop.permute.xlu0 %7295
    %v7297 = vsel %vm479, %v7292, %v7294
    %v7298 = vsel %vm479, %v7294, %v7296
    %7301 = vst [vmem:[#allocation8 + $0x1a0] sm:$0xff] %v7297
    %7302 = vst [vmem:[#allocation8 + $0x1a8] sm:$0xff] %v7298
    %v7303 = vld [vmem:[#allocation7 + $0x28] sm:$0xff]
    %v7304 = vld [vmem:[#allocation7 + $0x30] sm:$0xff]
    %v7305 = vld [vmem:[#allocation7 + $0x38] sm:$0xff]
    %v7306 = vmul.f32 %v7303, %v7257
    %v7307 = vmul.f32 %v7304, %v7260
    %v7308 = vmul.f32 %v7305, %v7259
    %7312 = vrot.lane.b32.xlu0 %v7306, 89
    %v7313 = vpop.permute.xlu0 %7312
    %7314 = vrot.lane.b32.xlu0 %v7307, 89
    %v7315 = vpop.permute.xlu0 %7314
    %7316 = vrot.lane.b32.xlu0 %v7308, 89
    %v7317 = vpop.permute.xlu0 %7316
    %v7318 = vsel %vm672, %v7313, %v7315
    %v7319 = vsel %vm672, %v7315, %v7317
    %7322 = vst [vmem:[#allocation8 + $0x1b0] sm:$0xff] %v7318
    %7323 = vst [vmem:[#allocation8 + $0x1b8] sm:$0xff] %v7319
    %v7324 = vld [vmem:[%s679] ss:$8 sm:$0x3]
    %v7325 = vld [vmem:[#allocation4 + $0x8] sm:$0xff]
    %v7326 = vld [vmem:[#allocation4 + $0x10] sm:$0xff]
    %v7327 = vld [vmem:[#allocation4 + $0x18] sm:$0xff]
    %v7329 = vlaneseq
    %v7330 = vshrl.u32 %v7329, 7
    %v7331 = vsub.s32 0, %v7330
    %v7332 = vrot.slane %v7324, %v7331
    %v7333 = vlaneseq
    %v7334 = vshrl.u32 %v7333, 7
    %v7335 = vsub.s32 1, %v7334
    %v7336 = vrot.slane %v7324, %v7335
    %7337 = vrot.lane.b32.xlu0 %v7332, 24
    %v7338 = vpop.permute.xlu0 %7337
    %7339 = vrot.lane.b32.xlu0 %v7336, 24
    %v7340 = vpop.permute.xlu0 %7339
    %v7341 = vsel %vm219, %v7338, %v7340
    %v7345 = vmul.f32 %v7325, %v7338
    %v7346 = vmul.f32 %v7326, %v7341
    %v7347 = vmul.f32 %v7327, %v7340
    %7351 = vrot.lane.b32.xlu0 %v7345, 104
    %v7352 = vpop.permute.xlu0 %7351
    %7353 = vrot.lane.b32.xlu0 %v7346, 104
    %v7354 = vpop.permute.xlu0 %7353
    %7355 = vrot.lane.b32.xlu0 %v7347, 104
    %v7356 = vpop.permute.xlu0 %7355
    %v7357 = vsel %vm542, %v7352, %v7354
    %v7358 = vsel %vm542, %v7354, %v7356
    %7361 = vst [vmem:[#allocation8 + $0x1c0] sm:$0xff] %v7357
    %7362 = vst [vmem:[#allocation8 + $0x1c8] sm:$0xff] %v7358
    %v7363 = vld [vmem:[#allocation4 + $0x28] sm:$0xff]
    %v7364 = vld [vmem:[#allocation4 + $0x30] sm:$0xff]
    %v7365 = vld [vmem:[#allocation4 + $0x38] sm:$0xff]
    %7366 = vrot.lane.b32.xlu0 %v7332, 40
    %v7367 = vpop.permute.xlu0 %7366
    %7368 = vrot.lane.b32.xlu0 %v7336, 40
    %v7369 = vpop.permute.xlu0 %7368
    %v7370 = vsel %vm722, %v7367, %v7369
    %v7374 = vmul.f32 %v7363, %v7367
    %v7375 = vmul.f32 %v7364, %v7370
    %v7376 = vmul.f32 %v7365, %v7369
    %7380 = vrot.lane.b32.xlu0 %v7374, 88
    %v7381 = vpop.permute.xlu0 %7380
    %7382 = vrot.lane.b32.xlu0 %v7375, 88
    %v7383 = vpop.permute.xlu0 %7382
    %7384 = vrot.lane.b32.xlu0 %v7376, 88
    %v7385 = vpop.permute.xlu0 %7384
    %v7386 = vsel %vm738, %v7381, %v7383
    %v7387 = vsel %vm738, %v7383, %v7385
    %7390 = vst [vmem:[#allocation8 + $0x1d0] sm:$0xff] %v7386
    %7391 = vst [vmem:[#allocation8 + $0x1d8] sm:$0xff] %v7387
    %v7392 = vld [vmem:[#allocation7 + $0x8] sm:$0xff]
    %v7393 = vld [vmem:[#allocation7 + $0x10] sm:$0xff]
    %v7394 = vld [vmem:[#allocation7 + $0x18] sm:$0xff]
    %v7395 = vmul.f32 %v7392, %v7338
    %v7396 = vmul.f32 %v7393, %v7341
    %v7397 = vmul.f32 %v7394, %v7340
    %7401 = vrot.lane.b32.xlu0 %v7395, 104
    %v7402 = vpop.permute.xlu0 %7401
    %7403 = vrot.lane.b32.xlu0 %v7396, 104
    %v7404 = vpop.permute.xlu0 %7403
    %7405 = vrot.lane.b32.xlu0 %v7397, 104
    %v7406 = vpop.permute.xlu0 %7405
    %v7407 = vsel %vm542, %v7402, %v7404
    %v7408 = vsel %vm542, %v7404, %v7406
    %7411 = vst [vmem:[#allocation8 + $0x1e0] sm:$0xff] %v7407
    %7412 = vst [vmem:[#allocation8 + $0x1e8] sm:$0xff] %v7408
    %v7413 = vld [vmem:[#allocation7 + $0x28] sm:$0xff]
    %v7414 = vld [vmem:[#allocation7 + $0x30] sm:$0xff]
    %v7415 = vld [vmem:[#allocation7 + $0x38] sm:$0xff]
    %v7416 = vmul.f32 %v7413, %v7367
    %v7417 = vmul.f32 %v7414, %v7370
    %v7418 = vmul.f32 %v7415, %v7369
    %7422 = vrot.lane.b32.xlu0 %v7416, 88
    %v7423 = vpop.permute.xlu0 %7422
    %7424 = vrot.lane.b32.xlu0 %v7417, 88
    %v7425 = vpop.permute.xlu0 %7424
    %7426 = vrot.lane.b32.xlu0 %v7418, 88
    %v7427 = vpop.permute.xlu0 %7426
    %v7428 = vsel %vm738, %v7423, %v7425
    %v7429 = vsel %vm738, %v7425, %v7427
    %7432 = vst [vmem:[#allocation8 + $0x1f0] sm:$0xff] %v7428
    %7433 = vst [vmem:[#allocation8 + $0x1f8] sm:$0xff] %v7429
    %v7434 = vld [vmem:[%s745] ss:$8 sm:$0x3]
    %v7435 = vld [vmem:[#allocation4 + $0x8] sm:$0xff]
    %v7436 = vld [vmem:[#allocation4 + $0x10] sm:$0xff]
    %v7437 = vld [vmem:[#allocation4 + $0x18] sm:$0xff]
    %v7439 = vlaneseq
    %v7440 = vshrl.u32 %v7439, 7
    %v7441 = vsub.s32 0, %v7440
    %v7442 = vrot.slane %v7434, %v7441
    %v7443 = vlaneseq
    %v7444 = vshrl.u32 %v7443, 7
    %v7445 = vsub.s32 1, %v7444
    %v7446 = vrot.slane %v7434, %v7445
    %7447 = vrot.lane.b32.xlu0 %v7442, 25
    %v7448 = vpop.permute.xlu0 %7447
    %7449 = vrot.lane.b32.xlu0 %v7446, 25
    %v7450 = vpop.permute.xlu0 %7449
    %v7451 = vsel %vm592, %v7448, %v7450
    %v7455 = vmul.f32 %v7435, %v7448
    %v7456 = vmul.f32 %v7436, %v7451
    %v7457 = vmul.f32 %v7437, %v7450
    %7461 = vrot.lane.b32.xlu0 %v7455, 103
    %v7462 = vpop.permute.xlu0 %7461
    %7463 = vrot.lane.b32.xlu0 %v7456, 103
    %v7464 = vpop.permute.xlu0 %7463
    %7465 = vrot.lane.b32.xlu0 %v7457, 103
    %v7466 = vpop.permute.xlu0 %7465
    %v7467 = vsel %vm608, %v7462, %v7464
    %v7468 = vsel %vm608, %v7464, %v7466
    %7471 = vst [vmem:[#allocation8 + $0x200] sm:$0xff] %v7467
    %7472 = vst [vmem:[#allocation8 + $0x208] sm:$0xff] %v7468
    %v7473 = vld [vmem:[#allocation4 + $0x28] sm:$0xff]
    %v7474 = vld [vmem:[#allocation4 + $0x30] sm:$0xff]
    %v7475 = vld [vmem:[#allocation4 + $0x38] sm:$0xff]
    %7476 = vrot.lane.b32.xlu0 %v7442, 41
    %v7477 = vpop.permute.xlu0 %7476
    %7478 = vrot.lane.b32.xlu0 %v7446, 41
    %v7479 = vpop.permute.xlu0 %7478
    %v7480 = vsel %vm787, %v7477, %v7479
    %v7484 = vmul.f32 %v7473, %v7477
    %v7485 = vmul.f32 %v7474, %v7480
    %v7486 = vmul.f32 %v7475, %v7479
    %7490 = vrot.lane.b32.xlu0 %v7484, 87
    %v7491 = vpop.permute.xlu0 %7490
    %7492 = vrot.lane.b32.xlu0 %v7485, 87
    %v7493 = vpop.permute.xlu0 %7492
    %7494 = vrot.lane.b32.xlu0 %v7486, 87
    %v7495 = vpop.permute.xlu0 %7494
    %v7496 = vsel %vm802, %v7491, %v7493
    %v7497 = vsel %vm802, %v7493, %v7495
    %7500 = vst [vmem:[#allocation8 + $0x210] sm:$0xff] %v7496
    %7501 = vst [vmem:[#allocation8 + $0x218] sm:$0xff] %v7497
    %v7502 = vld [vmem:[#allocation7 + $0x8] sm:$0xff]
    %v7503 = vld [vmem:[#allocation7 + $0x10] sm:$0xff]
    %v7504 = vld [vmem:[#allocation7 + $0x18] sm:$0xff]
    %v7505 = vmul.f32 %v7502, %v7448
    %v7506 = vmul.f32 %v7503, %v7451
    %v7507 = vmul.f32 %v7504, %v7450
    %7511 = vrot.lane.b32.xlu0 %v7505, 103
    %v7512 = vpop.permute.xlu0 %7511
    %7513 = vrot.lane.b32.xlu0 %v7506, 103
    %v7514 = vpop.permute.xlu0 %7513
    %7515 = vrot.lane.b32.xlu0 %v7507, 103
    %v7516 = vpop.permute.xlu0 %7515
    %v7517 = vsel %vm608, %v7512, %v7514
    %v7518 = vsel %vm608, %v7514, %v7516
    %7521 = vst [vmem:[#allocation8 + $0x220] sm:$0xff] %v7517
    %7522 = vst [vmem:[#allocation8 + $0x228] sm:$0xff] %v7518
    %v7523 = vld [vmem:[#allocation7 + $0x28] sm:$0xff]
    %v7524 = vld [vmem:[#allocation7 + $0x30] sm:$0xff]
    %v7525 = vld [vmem:[#allocation7 + $0x38] sm:$0xff]
    %v7526 = vmul.f32 %v7523, %v7477
    %v7527 = vmul.f32 %v7524, %v7480
    %v7528 = vmul.f32 %v7525, %v7479
    %7532 = vrot.lane.b32.xlu0 %v7526, 87
    %v7533 = vpop.permute.xlu0 %7532
    %7534 = vrot.lane.b32.xlu0 %v7527, 87
    %v7535 = vpop.permute.xlu0 %7534
    %7536 = vrot.lane.b32.xlu0 %v7528, 87
    %v7537 = vpop.permute.xlu0 %7536
    %v7538 = vsel %vm802, %v7533, %v7535
    %v7539 = vsel %vm802, %v7535, %v7537
    %7542 = vst [vmem:[#allocation8 + $0x230] sm:$0xff] %v7538
    %7543 = vst [vmem:[#allocation8 + $0x238] sm:$0xff] %v7539
    %v7544 = vld [vmem:[#allocation8] sm:$0xff]
    %v7545 = vld [vmem:[#allocation8 + $0x8] sm:$0xff]
    %v7546 = vld [vmem:[#allocation8 + $0x10] sm:$0xff]
    %v7547 = vld [vmem:[#allocation8 + $0x18] sm:$0xff]
    %v7548 = vld [vmem:[#allocation8 + $0x20] sm:$0xff]
    %v7549 = vld [vmem:[#allocation8 + $0x28] sm:$0xff]
    %v7550 = vld [vmem:[#allocation8 + $0x30] sm:$0xff]
    %v7551 = vld [vmem:[#allocation8 + $0x38] sm:$0xff]
    %v7552 = vld [vmem:[#allocation8 + $0x40] sm:$0xff]
    %v7553 = vld [vmem:[#allocation8 + $0x48] sm:$0xff]
    %v7554 = vld [vmem:[#allocation8 + $0x50] sm:$0xff]
    %v7555 = vld [vmem:[#allocation8 + $0x58] sm:$0xff]
    %v7556 = vld [vmem:[#allocation8 + $0x60] sm:$0xff]
    %v7557 = vld [vmem:[#allocation8 + $0x68] sm:$0xff]
    %v7558 = vld [vmem:[#allocation8 + $0x70] sm:$0xff]
    %v7559 = vld [vmem:[#allocation8 + $0x78] sm:$0xff]
    %v7560 = vld [vmem:[#allocation8 + $0x80] sm:$0xff]
    %v7561 = vld [vmem:[#allocation8 + $0x88] sm:$0xff]
    %v7562 = vld [vmem:[#allocation8 + $0x90] sm:$0xff]
    %v7563 = vld [vmem:[#allocation8 + $0x98] sm:$0xff]
    %v7564 = vld [vmem:[#allocation8 + $0xa0] sm:$0xff]
    %v7565 = vld [vmem:[#allocation8 + $0xa8] sm:$0xff]
    %v7566 = vld [vmem:[#allocation8 + $0xb0] sm:$0xff]
    %v7567 = vld [vmem:[#allocation8 + $0xb8] sm:$0xff]
    %v7568 = vld [vmem:[#allocation8 + $0xc0] sm:$0xff]
    %v7569 = vld [vmem:[#allocation8 + $0xc8] sm:$0xff]
    %v7570 = vld [vmem:[#allocation8 + $0xd0] sm:$0xff]
    %v7571 = vld [vmem:[#allocation8 + $0xd8] sm:$0xff]
    %v7572 = vld [vmem:[#allocation8 + $0xe0] sm:$0xff]
    %v7573 = vld [vmem:[#allocation8 + $0xe8] sm:$0xff]
    %v7574 = vld [vmem:[#allocation8 + $0xf0] sm:$0xff]
    %v7575 = vld [vmem:[#allocation8 + $0xf8] sm:$0xff]
    %v7576 = vld [vmem:[#allocation8 + $0x100] sm:$0xff]
    %v7577 = vld [vmem:[#allocation8 + $0x108] sm:$0xff]
    %v7578 = vld [vmem:[#allocation8 + $0x110] sm:$0xff]
    %v7579 = vld [vmem:[#allocation8 + $0x118] sm:$0xff]
    %v7580 = vld [vmem:[#allocation8 + $0x120] sm:$0xff]
    %v7581 = vld [vmem:[#allocation8 + $0x128] sm:$0xff]
    %v7582 = vld [vmem:[#allocation8 + $0x130] sm:$0xff]
    %v7583 = vld [vmem:[#allocation8 + $0x138] sm:$0xff]
    %v7584 = vld [vmem:[#allocation8 + $0x140] sm:$0xff]
    %v7585 = vld [vmem:[#allocation8 + $0x148] sm:$0xff]
    %v7586 = vld [vmem:[#allocation8 + $0x150] sm:$0xff]
    %v7587 = vld [vmem:[#allocation8 + $0x158] sm:$0xff]
    %v7588 = vld [vmem:[#allocation8 + $0x160] sm:$0xff]
    %v7589 = vld [vmem:[#allocation8 + $0x168] sm:$0xff]
    %v7590 = vld [vmem:[#allocation8 + $0x170] sm:$0xff]
    %v7591 = vld [vmem:[#allocation8 + $0x178] sm:$0xff]
    %v7592 = vld [vmem:[#allocation8 + $0x180] sm:$0xff]
    %v7593 = vld [vmem:[#allocation8 + $0x188] sm:$0xff]
    %v7594 = vld [vmem:[#allocation8 + $0x190] sm:$0xff]
    %v7595 = vld [vmem:[#allocation8 + $0x198] sm:$0xff]
    %v7596 = vld [vmem:[#allocation8 + $0x1a0] sm:$0xff]
    %v7597 = vld [vmem:[#allocation8 + $0x1a8] sm:$0xff]
    %v7598 = vld [vmem:[#allocation8 + $0x1b0] sm:$0xff]
    %v7599 = vld [vmem:[#allocation8 + $0x1b8] sm:$0xff]
    %v7600 = vld [vmem:[#allocation8 + $0x1c0] sm:$0xff]
    %v7601 = vld [vmem:[#allocation8 + $0x1c8] sm:$0xff]
    %v7602 = vld [vmem:[#allocation8 + $0x1d0] sm:$0xff]
    %v7603 = vld [vmem:[#allocation8 + $0x1d8] sm:$0xff]
    %v7604 = vld [vmem:[#allocation8 + $0x1e0] sm:$0xff]
    %v7605 = vld [vmem:[#allocation8 + $0x1e8] sm:$0xff]
    %v7606 = vld [vmem:[#allocation8 + $0x1f0] sm:$0xff]
    %v7607 = vld [vmem:[#allocation8 + $0x1f8] sm:$0xff]
    %v7608 = vld [vmem:[#allocation8 + $0x200] sm:$0xff]
    %v7609 = vld [vmem:[#allocation8 + $0x208] sm:$0xff]
    %v7610 = vld [vmem:[#allocation8 + $0x210] sm:$0xff]
    %v7611 = vld [vmem:[#allocation8 + $0x218] sm:$0xff]
    %v7612 = vld [vmem:[#allocation8 + $0x220] sm:$0xff]
    %v7613 = vld [vmem:[#allocation8 + $0x228] sm:$0xff]
    %v7614 = vld [vmem:[#allocation8 + $0x230] sm:$0xff]
    %v7615 = vld [vmem:[#allocation8 + $0x238] sm:$0xff]
    %v7616 = vpack.c.bf16 %v7548, %v7544
    %v7617 = vpack.c.bf16 %v7549, %v7545
    %v7618 = vpack.c.bf16 %v7550, %v7546
    %v7619 = vpack.c.bf16 %v7551, %v7547
    %v7620 = vpack.c.bf16 %v7556, %v7552
    %v7621 = vpack.c.bf16 %v7557, %v7553
    %v7622 = vpack.c.bf16 %v7558, %v7554
    %v7623 = vpack.c.bf16 %v7559, %v7555
    %v7624 = vpack.c.bf16 %v7564, %v7560
    %v7625 = vpack.c.bf16 %v7565, %v7561
    %v7626 = vpack.c.bf16 %v7566, %v7562
    %v7627 = vpack.c.bf16 %v7567, %v7563
    %v7628 = vpack.c.bf16 %v7572, %v7568
    %v7629 = vpack.c.bf16 %v7573, %v7569
    %v7630 = vpack.c.bf16 %v7574, %v7570
    %v7631 = vpack.c.bf16 %v7575, %v7571
    %v7632 = vpack.c.bf16 %v7580, %v7576
    %v7633 = vpack.c.bf16 %v7581, %v7577
    %v7634 = vpack.c.bf16 %v7582, %v7578
    %v7635 = vpack.c.bf16 %v7583, %v7579
    %v7636 = vpack.c.bf16 %v7588, %v7584
    %v7637 = vpack.c.bf16 %v7589, %v7585
    %v7638 = vpack.c.bf16 %v7590, %v7586
    %v7639 = vpack.c.bf16 %v7591, %v7587
    %v7640 = vpack.c.bf16 %v7596, %v7592
    %v7641 = vpack.c.bf16 %v7597, %v7593
    %v7642 = vpack.c.bf16 %v7598, %v7594
    %v7643 = vpack.c.bf16 %v7599, %v7595
    %v7644 = vpack.c.bf16 %v7604, %v7600
    %v7645 = vpack.c.bf16 %v7605, %v7601
    %v7646 = vpack.c.bf16 %v7606, %v7602
    %v7647 = vpack.c.bf16 %v7607, %v7603
    %v7648 = vpack.c.bf16 %v7612, %v7608
    %v7649 = vpack.c.bf16 %v7613, %v7609
    %v7650 = vpack.c.bf16 %v7614, %v7610
    %v7651 = vpack.c.bf16 %v7615, %v7611
    %v7652 = vld [vmem:[%s19] sm:$0xf]
    %v7653 = vld [vmem:[%s20] sm:$0xf]
    %7655 = vset.pattern.permute.xlu0 0
    %7656 = vperm.xlu0 %7655, %v7653
    %v7657 = vpop.permute.xlu0 %7656
    %v7661 = vunpack.c.l.s4 1983009808
    %v7662 = vunpack.c.0.s8 %v7661
    %v7663 = vlaneseq
    %v7664 = vshrl.u32 %v7663, 7
    %v7665 = vsub.s32 %v7662, %v7664
    %v7666 = vrot.slane %v7652, %v7665
    %v7667 = vcombine.high %v7666, %v7666
    %v7670 = vsel %vm3377, %v7667, 0
    %7672 = vmatprep.subr.bf16.mxu0 %v7617
    %7673 = vmatpush1.bf16.msra.mxu0 %v7616
    %7674 = vmatprep.subr.bf16.mxu0 %v7621
    %7675 = vmatpush1.bf16.msra.mxu0 %v7620
    %7676 = vmatprep.subr.bf16.mxu0 %v7625
    %7677 = vmatpush1.bf16.msra.mxu0 %v7624
    %7678 = vmatprep.subr.bf16.mxu0 %v7629
    %7679 = vmatpush1.bf16.msra.mxu0 %v7628
    %7680 = vmatprep.subr.bf16.mxu0 %v7633
    %7681 = vmatpush1.bf16.msra.mxu0 %v7632
    %7682 = vmatprep.subr.bf16.mxu0 %v7637
    %7683 = vmatpush1.bf16.msra.mxu0 %v7636
    %7684 = vmatprep.subr.bf16.mxu0 %v7641
    %7685 = vmatpush1.bf16.msra.mxu0 %v7640
    %7686 = vmatprep.subr.bf16.mxu0 %v7645
    %7687 = vmatpush1.bf16.msra.mxu0 %v7644
    %7688 = vmatprep.subr.bf16.mxu0 %v7649
    %7689 = vmatpush1.bf16.msra.mxu0 %v7648
    %7690 = vmatprep.subr.bf16.mxu0 0
    %7691 = vmatpush1.bf16.msra.mxu0 0
    %7692 = vmatprep.subr.bf16.mxu0 0
    %7693 = vmatpush1.bf16.msra.mxu0 0
    %7694 = vmatprep.subr.bf16.mxu0 0
    %7695 = vmatpush1.bf16.msra.mxu0 0
    %7696 = vmatprep.subr.bf16.mxu0 0
    %7697 = vmatpush1.bf16.msra.mxu0 0
    %7698 = vmatprep.subr.bf16.mxu0 0
    %7699 = vmatpush1.bf16.msra.mxu0 0
    %7700 = vmatprep.subr.bf16.mxu0 0
    %7701 = vmatpush1.bf16.msra.mxu0 0
    %7702 = vmatprep.subr.bf16.mxu0 0
    %7703 = vmatpush1.bf16.msra.mxu0 0
    %7704 = vmatprep.mubr.bf16.mxu0 %v7670
    %7705 = vmatmul.mubr.bf16.gmra.mrb[0].mxu0 %v7666
    %v7706 = vpop.f32.mrb[0].mxu0
    %v7707 = vadd.f32 %v7657, %v7706
    %v7708 = vpop.f32.mrb[0].mxu0
    %v7709 = vadd.f32 %v7657, %v7708
    %v7710 = vpop.f32.mrb[0].mxu0
    %v7711 = vpop.f32.mrb[0].mxu0
    %7712 = vdwg.mxu0
    %7713 = vmatprep.subr.bf16.mxu0 %v7619
    %7714 = vmatpush1.bf16.msra.mxu0 %v7618
    %7715 = vmatprep.subr.bf16.mxu0 %v7623
    %7716 = vmatpush1.bf16.msra.mxu0 %v7622
    %7717 = vmatprep.subr.bf16.mxu0 %v7627
    %7718 = vmatpush1.bf16.msra.mxu0 %v7626
    %7719 = vmatprep.subr.bf16.mxu0 %v7631
    %7720 = vmatpush1.bf16.msra.mxu0 %v7630
    %7721 = vmatprep.subr.bf16.mxu0 %v7635
    %7722 = vmatpush1.bf16.msra.mxu0 %v7634
    %7723 = vmatprep.subr.bf16.mxu0 %v7639
    %7724 = vmatpush1.bf16.msra.mxu0 %v7638
    %7725 = vmatprep.subr.bf16.mxu0 %v7643
    %7726 = vmatpush1.bf16.msra.mxu0 %v7642
    %7727 = vmatprep.subr.bf16.mxu0 %v7647
    %7728 = vmatpush1.bf16.msra.mxu0 %v7646
    %7729 = vmatprep.subr.bf16.mxu0 %v7651
    %7730 = vmatpush1.bf16.msra.mxu0 %v7650
    %7731 = vmatprep.subr.bf16.mxu0 0
    %7732 = vmatpush1.bf16.msra.mxu0 0
    %7733 = vmatprep.subr.bf16.mxu0 0
    %7734 = vmatpush1.bf16.msra.mxu0 0
    %7735 = vmatprep.subr.bf16.mxu0 0
    %7736 = vmatpush1.bf16.msra.mxu0 0
    %7737 = vmatprep.subr.bf16.mxu0 0
    %7738 = vmatpush1.bf16.msra.mxu0 0
    %7739 = vmatprep.subr.bf16.mxu0 0
    %7740 = vmatpush1.bf16.msra.mxu0 0
    %7741 = vmatprep.subr.bf16.mxu0 0
    %7742 = vmatpush1.bf16.msra.mxu0 0
    %7743 = vmatprep.subr.bf16.mxu0 0
    %7744 = vmatpush1.bf16.msra.mxu0 0
    %7745 = vmatprep.mubr.bf16.mxu0 %v7670
    %7746 = vmatmul.mubr.bf16.gmra.mrb[0].mxu0 %v7666
    %v7747 = vpop.f32.mrb[0].mxu0
    %v7748 = vadd.f32 %v7657, %v7747
    %v7749 = vpop.f32.mrb[0].mxu0
    %v7750 = vadd.f32 %v7657, %v7749
    %v7751 = vpop.f32.mrb[0].mxu0
    %v7752 = vpop.f32.mrb[0].mxu0
    %7753 = vdwg.mxu0
    %v7754 = vmax.f32 %v7707, 0.0
    %v7755 = vmax.f32 %v7709, 0.0
    %v7756 = vmax.f32 %v7748, 0.0
    %v7757 = vmax.f32 %v7750, 0.0
    %v7758 = vld [vmem:[#allocation3 + $0x4] sm:$0xff]
    %v7759 = vld [vmem:[#allocation3 + $0xc] sm:$0xf]
    %v7762 = vcombine.high %v7758, %v7758
    %7763 = vrot.lane.b32.xlu0 %v7758, 120
    %v7764 = vpop.permute.xlu0 %7763
    %7765 = vrot.lane.b32.xlu0 %v7762, 120
    %v7766 = vpop.permute.xlu0 %7765
    %7767 = vrot.lane.b32.xlu0 %v7759, 120
    %v7768 = vpop.permute.xlu0 %7767
    %v7769 = vsel %vm310, %v7764, %v7766
    %v7770 = vsel %vm310, %v7766, %v7768
    %v7773 = vadd.f32 %v7754, %v7769
    %v7774 = vadd.f32 %v7755, %v7770
    %v7777 = vcombine.low %v7773, %v7774
    %7779 = vst [vmem:[%s21] sm:$0xff] %v7777
    %v7780 = vld [vmem:[#allocation3 + $0x14] sm:$0xff]
    %v7781 = vld [vmem:[#allocation3 + $0x1c] sm:$0xf]
    %v7784 = vcombine.high %v7780, %v7780
    %7785 = vrot.lane.b32.xlu0 %v7780, 104
    %v7786 = vpop.permute.xlu0 %7785
    %7787 = vrot.lane.b32.xlu0 %v7784, 104
    %v7788 = vpop.permute.xlu0 %7787
    %7789 = vrot.lane.b32.xlu0 %v7781, 104
    %v7790 = vpop.permute.xlu0 %7789
    %v7791 = vsel %vm542, %v7786, %v7788
    %v7792 = vsel %vm542, %v7788, %v7790
    %v7795 = vadd.f32 %v7756, %v7791
    %v7796 = vadd.f32 %v7757, %v7792
    %v7799 = vcombine.low %v7795, %v7796
    %s7801 = scalar_lea.vmem %s21, 8
    %7802 = vst [vmem:[%s7801] sm:$0xff] %v7799
    // Predicated region
    $region114: #{_lambda_.1} parent=1 // pred_check
      _
    $region115: #{_lambda_.1} parent=1 // pred_check_branch
      %7804 = sbr.rel (0) target = $region117
    $region116: #{_lambda_.1} parent=1 // pred_region
      _
    $region117: #{_lambda_.1} parent=1 // pred_fallthru
      _
    // Predicated region
    $region118: #{_lambda_.1} parent=1 // pred_check
      _
    $region119: #{_lambda_.1} parent=1 // pred_check_branch
      %7806 = sbr.rel (0) target = $region121
    $region120: #{_lambda_.1} parent=1 // pred_region
      _
    $region121: #{_lambda_.1} parent=1 // pred_fallthru
      _
    %7807 = vsyncpa [#allocation10], 1
    %7808 = vsyncpa [#allocation12], 1
    %7809 = vsyncpa [#allocation15], 1
    %7810 = vsyncpa [#allocation18], 1

</llo_original>
